<compile_context>
chip_gen: v5e
topology: v5e:2x2
jax: 0.10.0
libtpu: 0.0.40
codegen_flags: <defaults>
</compile_context>

<pallas_src>
import math

import jax
import jax.numpy as jnp
from jax.experimental import pallas as pl
from jax.experimental.pallas import tpu as pltpu


# ----------------------------------------------------------------------------
# In-kernel helpers
# ----------------------------------------------------------------------------
def _zero_halo_ring(pad_ref, h, w, c):
    """Zero only the 1-wide halo ring of a (h+2, w+2, c) f32 scratch.

    The interior is fully overwritten before every use, so a full-tensor zero
    (one whole store pass through the scarce vst slot) is never needed."""
    pad_ref[0:1, :, :] = jnp.zeros((1, w + 2, c), jnp.float32)
    pad_ref[h + 1:h + 2, :, :] = jnp.zeros((1, w + 2, c), jnp.float32)
    pad_ref[:, 0:1, :] = jnp.zeros((h + 2, 1, c), jnp.float32)
    pad_ref[:, w + 1:w + 2, :] = jnp.zeros((h + 2, 1, c), jnp.float32)


def _conv3x3_relu(pad_ref, get_w, bias, h, w, cin):
    """3x3 conv (+bias, +ReLU) from a zero-padded (h+2, w+2, cin) f32 VMEM tile.

    Implemented as 9 accumulated MXU dots on shifted slab views (bf16 operands,
    f32 accumulation) -- no im2col scratch / extra store pass.
    get_w(k) must return the bf16 (cin, cout) weight slab for tap k = 3*dy+dx.
    Returns (h*w, cout) float32 (post-ReLU)."""
    acc = None
    for k in range(9):
        dy, dx = divmod(k, 3)
        slab = pad_ref[dy:dy + h, dx:dx + w, :].reshape(h * w, cin)
        part = jnp.dot(slab.astype(jnp.bfloat16), get_w(k),
                       preferred_element_type=jnp.float32)
        acc = part if acc is None else acc + part
    return jnp.maximum(acc + bias, 0.0)          # bias + ReLU in f32 (VPU)


def _maxpool_3x3_s2_p1(y, h, w, c):
    """max_pool2d(kernel=3, stride=2, padding=1) of y (h, w, c); h, w even.

    Zero padding is equivalent to -inf padding here because y is post-ReLU
    (y >= 0).  Rows are subsampled with a leading-dim reshape; columns with
    three 0/1 selection matmuls (each output picks a single input value)."""
    ho, wo = h // 2, w // 2
    # ---- rows: window {2i-1, 2i, 2i+1} ----
    yr = y.reshape(ho, 2, w, c)                                  # leading split
    ev, od = yr[:, 0], yr[:, 1]                                  # rows 2i, 2i+1
    od_up = jnp.concatenate(
        [jnp.zeros((1, w, c), jnp.float32), od[:-1]], axis=0)    # rows 2i-1
    rm = jnp.maximum(jnp.maximum(ev, od), od_up)                 # (ho, w, c)
    # ---- cols: window {2j-1, 2j, 2j+1} via selection matmuls on the MXU ----
    jj = jax.lax.broadcasted_iota(jnp.int32, (wo, w), 0)
    ww = jax.lax.broadcasted_iota(jnp.int32, (wo, w), 1)
    out = None
    for d in (-1, 0, 1):
        sel = (ww == 2 * jj + d).astype(jnp.float32)             # (wo, w)
        sel = jnp.broadcast_to(sel[None], (ho, wo, w))
        t = jnp.einsum("ijw,iwc->ijc", sel, rm,
                       preferred_element_type=jnp.float32)       # (ho, wo, c)
        out = t if out is None else jnp.maximum(out, t)
    return out


# ----------------------------------------------------------------------------
# Fused kernel: firstconv + ReLU (+ maxpool) + nblock residual blocks
# ----------------------------------------------------------------------------
def _make_down_stack_kernel(H, W, Cin, C, nblock, pool):
    Hp, Wp = (H // 2, W // 2) if pool else (H, W)

    def kernel(x_ref, wf_ref, bf_ref, wb_ref, bb_ref, o_ref, xpad_ref, apad_ref):
        # ---- firstconv + ReLU (halo built in VMEM, ring-only zeroing) ----
        _zero_halo_ring(xpad_ref, H, W, Cin)
        xpad_ref[1:H + 1, 1:W + 1, :] = x_ref[0]
        y = _conv3x3_relu(xpad_ref, lambda k: wf_ref[k], bf_ref[...], H, W, Cin)
        y = y.reshape(H, W, C)

        # ---- maxpool(3, stride=2, pad=1): only strided outputs computed ----
        if pool:
            y = _maxpool_3x3_s2_p1(y, H, W, C)

        # o_ref doubles as the f32 residual-stream buffer: it stays resident in
        # VMEM until this grid step finishes, so no extra scratch and no HBM
        # round trips between residual blocks.
        o_ref[0] = y

        # ---- nblock residual blocks: x + relu(conv1(relu(conv0(x)))) ----
        _zero_halo_ring(apad_ref, Hp, Wp, C)
        for b in range(nblock):
            apad_ref[1:Hp + 1, 1:Wp + 1, :] = o_ref[0]
            hmid = _conv3x3_relu(apad_ref, lambda k, j=2 * b: wb_ref[j, k],
                                 bb_ref[2 * b], Hp, Wp, C)
            apad_ref[1:Hp + 1, 1:Wp + 1, :] = hmid.reshape(Hp, Wp, C)
            res = _conv3x3_relu(apad_ref, lambda k, j=2 * b + 1: wb_ref[j, k],
                                bb_ref[2 * b + 1], Hp, Wp, C)
            # residual add in f32; x is re-read from the resident output block,
            # so it is not kept live across the two convs.
            o_ref[0] = o_ref[0] + res.reshape(Hp, Wp, C)

    return kernel


# ----------------------------------------------------------------------------
# Wrapper
# ----------------------------------------------------------------------------
def cnn_down_stack_forward(params, x_nchw, pool=True):
    x = jnp.transpose(x_nchw, (0, 2, 3, 1)).astype(jnp.float32)   # NCHW -> NHWC
    N, H, W, Cin = x.shape
    wf_hwio, bf = params["firstconv"]
    C = wf_hwio.shape[-1]
    nblock = len(params["blocks"])
    if pool:
        # TODO(synk): odd-H/W pooling ((h+1)//2 outputs) not implemented.
        assert H % 2 == 0 and W % 2 == 0, "pool path assumes even H and W"
    Hp, Wp = (H // 2, W // 2) if pool else (H, W)

    # (3,3,Cin,Cout) -> (9, Cin, Cout) bf16 tap slabs (k = 3*dy + dx).
    wf = wf_hwio.reshape(9, Cin, C).astype(jnp.bfloat16)
    bfv = bf.reshape(1, C).astype(jnp.float32)
    if nblock > 0:
        wb = jnp.stack([w.reshape(9, C, C) for blk in params["blocks"]
                        for (w, _) in blk]).astype(jnp.bfloat16)   # (2*nblock, 9, C, C)
        bb = jnp.stack([b.reshape(1, C) for blk in params["blocks"]
                        for (_, b) in blk]).astype(jnp.float32)    # (2*nblock, 1, C)
    else:  # keep pallas_call inputs non-empty
        wb = jnp.zeros((1, 9, C, C), jnp.bfloat16)
        bb = jnp.zeros((1, 1, C), jnp.float32)
    nw = wb.shape[0]

    out = pl.pallas_call(
        _make_down_stack_kernel(H, W, Cin, C, nblock, pool),
        out_shape=jax.ShapeDtypeStruct((N, Hp, Wp, C), jnp.float32),
        grid=(N,),
        in_specs=[
            pl.BlockSpec((1, H, W, Cin), lambda n: (n, 0, 0, 0)),
            pl.BlockSpec((9, Cin, C), lambda n: (0, 0, 0)),
            pl.BlockSpec((1, C), lambda n: (0, 0)),
            pl.BlockSpec((nw, 9, C, C), lambda n: (0, 0, 0, 0)),
            pl.BlockSpec((nw, 1, C), lambda n: (0, 0, 0)),
        ],
        out_specs=pl.BlockSpec((1, Hp, Wp, C), lambda n: (n, 0, 0, 0)),
        scratch_shapes=[
            pltpu.VMEM((H + 2, W + 2, Cin), jnp.float32),   # padded firstconv input
            pltpu.VMEM((Hp + 2, Wp + 2, C), jnp.float32),   # padded block activations
        ],
        compiler_params=pltpu.CompilerParams(
            dimension_semantics=("parallel",),
            vmem_limit_bytes=48 * 1024 * 1024,
        ),
    )(x, wf, bfv, wb, bb)
    # TODO(synk): post_pool_groups GroupNorm not implemented (module default None).
    return jnp.transpose(out, (0, 3, 1, 2))                       # NHWC -> NCHW


# ----------------------------------------------------------------------------
# Parameter init (mirrors FanInInitReLULayer: w *= init_scale / ||w||, bias=0)
# ----------------------------------------------------------------------------
def _fan_in_conv_init(key, inchan, outchan, init_scale):
    w_oihw = jax.random.normal(key, (outchan, inchan, 3, 3), jnp.float32) * 0.1
    norm = jnp.sqrt(jnp.sum(w_oihw ** 2, axis=(1, 2, 3), keepdims=True))
    w_oihw = w_oihw * (init_scale / norm)
    w_hwio = jnp.transpose(w_oihw, (2, 3, 1, 0))          # OIHW -> HWIO
    b = jnp.zeros((outchan,), jnp.float32)
    return w_hwio, b


def init_cnn_down_stack(key, inchan, nblock, outchan, init_scale=1.0):
    keys = jax.random.split(key, 1 + 2 * nblock)
    params = {"firstconv": _fan_in_conv_init(keys[0], inchan, outchan, 1.0)}
    s = math.sqrt(init_scale / math.sqrt(nblock))         # CnnBasicBlock conv scale
    blocks = []
    for i in range(nblock):
        w0 = _fan_in_conv_init(keys[1 + 2 * i], outchan, outchan, s)
        w1 = _fan_in_conv_init(keys[2 + 2 * i], outchan, outchan, s)
        blocks.append((w0, w1))
    params["blocks"] = blocks
    return params


if __name__ == "__main__":
    inchan, nblock, outchan = 4, 2, 8
    N, H, W = 2, 16, 16

    key = jax.random.PRNGKey(0)
    kp, kx = jax.random.split(key)
    params = init_cnn_down_stack(kp, inchan, nblock, outchan, init_scale=1.0)
    x = jax.random.normal(kx, (N, inchan, H, W), jnp.float32)

    y = cnn_down_stack_forward(params, x, pool=True)
    jax.block_until_ready(y)

    expected = (N, outchan, (H + 1) // 2, (W + 1) // 2)   # CnnDownStack.output_shape()
    assert y.shape == expected, (y.shape, expected)
    print("KERNEL_OK")
</pallas_src>

<mosaic_0001>
module attributes {stable_mosaic.version = 11 : i64} {
  func.func @kernel(%arg0: i32, %arg1: memref<1x16x16x4xf32, #tpu.memory_space<vmem>>, %arg2: memref<9x4x8xbf16, #tpu.memory_space<vmem>>, %arg3: memref<1x8xf32, #tpu.memory_space<vmem>>, %arg4: memref<4x9x8x8xbf16, #tpu.memory_space<vmem>>, %arg5: memref<4x1x8xf32, #tpu.memory_space<vmem>>, %arg6: memref<1x8x8x8xf32, #tpu.memory_space<vmem>>, %arg7: memref<18x18x4xf32, #tpu.memory_space<vmem>>, %arg8: memref<10x10x8xf32, #tpu.memory_space<vmem>>) attributes {dimension_semantics = [#tpu.dimension_semantics<parallel>], iteration_bounds = array<i64: 2>, scalar_prefetch = 0 : i64, scratch_operands = 2 : i64, tpu.core_type = #tpu.core_type<tc>, window_params = [{transform_indices = @transform_0, window_bounds = array<i64: 1, 16, 16, 4>}, {pipeline_mode = #tpu.pipeline_mode<synchronous>, transform_indices = @transform_1, window_bounds = array<i64: 9, 4, 8>}, {pipeline_mode = #tpu.pipeline_mode<synchronous>, transform_indices = @transform_2, window_bounds = array<i64: 1, 8>}, {pipeline_mode = #tpu.pipeline_mode<synchronous>, transform_indices = @transform_3, window_bounds = array<i64: 4, 9, 8, 8>}, {pipeline_mode = #tpu.pipeline_mode<synchronous>, transform_indices = @transform_4, window_bounds = array<i64: 4, 1, 8>}, {transform_indices = @transform_5, window_bounds = array<i64: 1, 8, 8, 8>}]} {
    %cst = arith.constant 0.000000e+00 : f32
    %0 = vector.broadcast %cst : f32 to vector<1x18x4xf32>
    %c0 = arith.constant 0 : index
    %c0_0 = arith.constant 0 : index
    %c0_1 = arith.constant 0 : index
    %1 = vector.load %arg7[%c0, %c0_0, %c0_1] : memref<18x18x4xf32, #tpu.memory_space<vmem>>, vector<1x18x4xf32>
    tpu.vector_store %arg7[%c0, %c0_0, %c0_1], %0 {strides = array<i32>} : memref<18x18x4xf32, #tpu.memory_space<vmem>>, vector<1x18x4xf32>,
    %cst_2 = arith.constant 0.000000e+00 : f32
    %2 = vector.broadcast %cst_2 : f32 to vector<1x18x4xf32>
    %c17 = arith.constant 17 : index
    %c0_3 = arith.constant 0 : index
    %c0_4 = arith.constant 0 : index
    %3 = vector.load %arg7[%c17, %c0_3, %c0_4] : memref<18x18x4xf32, #tpu.memory_space<vmem>>, vector<1x18x4xf32>
    tpu.vector_store %arg7[%c17, %c0_3, %c0_4], %2 {strides = array<i32>} : memref<18x18x4xf32, #tpu.memory_space<vmem>>, vector<1x18x4xf32>,
    %cst_5 = arith.constant 0.000000e+00 : f32
    %4 = vector.broadcast %cst_5 : f32 to vector<18x1x4xf32>
    %c0_6 = arith.constant 0 : index
    %c0_7 = arith.constant 0 : index
    %c0_8 = arith.constant 0 : index
    %5 = vector.load %arg7[%c0_6, %c0_7, %c0_8] : memref<18x18x4xf32, #tpu.memory_space<vmem>>, vector<18x1x4xf32>
    tpu.vector_store %arg7[%c0_6, %c0_7, %c0_8], %4 {strides = array<i32>} : memref<18x18x4xf32, #tpu.memory_space<vmem>>, vector<18x1x4xf32>,
    %cst_9 = arith.constant 0.000000e+00 : f32
    %6 = vector.broadcast %cst_9 : f32 to vector<18x1x4xf32>
    %c0_10 = arith.constant 0 : index
    %c17_11 = arith.constant 17 : index
    %c0_12 = arith.constant 0 : index
    %7 = vector.load %arg7[%c0_10, %c17_11, %c0_12] : memref<18x18x4xf32, #tpu.memory_space<vmem>>, vector<18x1x4xf32>
    tpu.vector_store %arg7[%c0_10, %c17_11, %c0_12], %6 {strides = array<i32>} : memref<18x18x4xf32, #tpu.memory_space<vmem>>, vector<18x1x4xf32>,
    %c0_13 = arith.constant 0 : index
    %c0_14 = arith.constant 0 : index
    %c0_15 = arith.constant 0 : index
    %c0_16 = arith.constant 0 : index
    %8 = vector.load %arg1[%c0_13, %c0_14, %c0_15, %c0_16] : memref<1x16x16x4xf32, #tpu.memory_space<vmem>>, vector<1x16x16x4xf32>
    %9 = vector.shape_cast %8 : vector<1x16x16x4xf32> to vector<16x16x4xf32>
    %c1 = arith.constant 1 : index
    %c1_17 = arith.constant 1 : index
    %c0_18 = arith.constant 0 : index
    %10 = vector.load %arg7[%c1, %c1_17, %c0_18] : memref<18x18x4xf32, #tpu.memory_space<vmem>>, vector<16x16x4xf32>
    tpu.vector_store %arg7[%c1, %c1_17, %c0_18], %9 {strides = array<i32>} : memref<18x18x4xf32, #tpu.memory_space<vmem>>, vector<16x16x4xf32>,
    %c0_19 = arith.constant 0 : index
    %c0_20 = arith.constant 0 : index
    %11 = vector.load %arg3[%c0_19, %c0_20] : memref<1x8xf32, #tpu.memory_space<vmem>>, vector<1x8xf32>
    %c0_21 = arith.constant 0 : index
    %c0_22 = arith.constant 0 : index
    %c0_23 = arith.constant 0 : index
    %12 = vector.load %arg7[%c0_21, %c0_22, %c0_23] : memref<18x18x4xf32, #tpu.memory_space<vmem>>, vector<16x16x4xf32>
    %13 = vector.shape_cast %12 : vector<16x16x4xf32> to vector<256x4xf32>
    %14 = arith.truncf %13 : vector<256x4xf32> to vector<256x4xbf16>
    %c0_24 = arith.constant 0 : index
    %c0_25 = arith.constant 0 : index
    %c0_26 = arith.constant 0 : index
    %15 = vector.load %arg2[%c0_24, %c0_25, %c0_26] : memref<9x4x8xbf16, #tpu.memory_space<vmem>>, vector<1x4x8xbf16>
    %16 = vector.shape_cast %15 : vector<1x4x8xbf16> to vector<4x8xbf16>
    %cst_27 = arith.constant dense<0.000000e+00> : vector<256x8xf32>
    %17 = tpu.matmul %14, %16, %cst_27 {dimension_numbers = #tpu.dot_dimension_numbers<[1], [0], [0], [1], [0, 0, 1, 1], [], []>} : vector<256x4xbf16>, vector<4x8xbf16>, vector<256x8xf32> -> vector<256x8xf32>
    %c0_28 = arith.constant 0 : index
    %c1_29 = arith.constant 1 : index
    %c0_30 = arith.constant 0 : index
    %18 = vector.load %arg7[%c0_28, %c1_29, %c0_30] : memref<18x18x4xf32, #tpu.memory_space<vmem>>, vector<16x16x4xf32>
    %19 = vector.shape_cast %18 : vector<16x16x4xf32> to vector<256x4xf32>
    %20 = arith.truncf %19 : vector<256x4xf32> to vector<256x4xbf16>
    %c1_31 = arith.constant 1 : index
    %c0_32 = arith.constant 0 : index
    %c0_33 = arith.constant 0 : index
    %21 = vector.load %arg2[%c1_31, %c0_32, %c0_33] : memref<9x4x8xbf16, #tpu.memory_space<vmem>>, vector<1x4x8xbf16>
    %22 = vector.shape_cast %21 : vector<1x4x8xbf16> to vector<4x8xbf16>
    %cst_34 = arith.constant dense<0.000000e+00> : vector<256x8xf32>
    %23 = tpu.matmul %20, %22, %cst_34 {dimension_numbers = #tpu.dot_dimension_numbers<[1], [0], [0], [1], [0, 0, 1, 1], [], []>} : vector<256x4xbf16>, vector<4x8xbf16>, vector<256x8xf32> -> vector<256x8xf32>
    %24 = arith.addf %17, %23 : vector<256x8xf32>
    %c0_35 = arith.constant 0 : index
    %c2 = arith.constant 2 : index
    %c0_36 = arith.constant 0 : index
    %25 = vector.load %arg7[%c0_35, %c2, %c0_36] : memref<18x18x4xf32, #tpu.memory_space<vmem>>, vector<16x16x4xf32>
    %26 = vector.shape_cast %25 : vector<16x16x4xf32> to vector<256x4xf32>
    %27 = arith.truncf %26 : vector<256x4xf32> to vector<256x4xbf16>
    %c2_37 = arith.constant 2 : index
    %c0_38 = arith.constant 0 : index
    %c0_39 = arith.constant 0 : index
    %28 = vector.load %arg2[%c2_37, %c0_38, %c0_39] : memref<9x4x8xbf16, #tpu.memory_space<vmem>>, vector<1x4x8xbf16>
    %29 = vector.shape_cast %28 : vector<1x4x8xbf16> to vector<4x8xbf16>
    %cst_40 = arith.constant dense<0.000000e+00> : vector<256x8xf32>
    %30 = tpu.matmul %27, %29, %cst_40 {dimension_numbers = #tpu.dot_dimension_numbers<[1], [0], [0], [1], [0, 0, 1, 1], [], []>} : vector<256x4xbf16>, vector<4x8xbf16>, vector<256x8xf32> -> vector<256x8xf32>
    %31 = arith.addf %24, %30 : vector<256x8xf32>
    %c1_41 = arith.constant 1 : index
    %c0_42 = arith.constant 0 : index
    %c0_43 = arith.constant 0 : index
    %32 = vector.load %arg7[%c1_41, %c0_42, %c0_43] : memref<18x18x4xf32, #tpu.memory_space<vmem>>, vector<16x16x4xf32>
    %33 = vector.shape_cast %32 : vector<16x16x4xf32> to vector<256x4xf32>
    %34 = arith.truncf %33 : vector<256x4xf32> to vector<256x4xbf16>
    %c3 = arith.constant 3 : index
    %c0_44 = arith.constant 0 : index
    %c0_45 = arith.constant 0 : index
    %35 = vector.load %arg2[%c3, %c0_44, %c0_45] : memref<9x4x8xbf16, #tpu.memory_space<vmem>>, vector<1x4x8xbf16>
    %36 = vector.shape_cast %35 : vector<1x4x8xbf16> to vector<4x8xbf16>
    %cst_46 = arith.constant dense<0.000000e+00> : vector<256x8xf32>
    %37 = tpu.matmul %34, %36, %cst_46 {dimension_numbers = #tpu.dot_dimension_numbers<[1], [0], [0], [1], [0, 0, 1, 1], [], []>} : vector<256x4xbf16>, vector<4x8xbf16>, vector<256x8xf32> -> vector<256x8xf32>
    %38 = arith.addf %31, %37 : vector<256x8xf32>
    %c1_47 = arith.constant 1 : index
    %c1_48 = arith.constant 1 : index
    %c0_49 = arith.constant 0 : index
    %39 = vector.load %arg7[%c1_47, %c1_48, %c0_49] : memref<18x18x4xf32, #tpu.memory_space<vmem>>, vector<16x16x4xf32>
    %40 = vector.shape_cast %39 : vector<16x16x4xf32> to vector<256x4xf32>
    %41 = arith.truncf %40 : vector<256x4xf32> to vector<256x4xbf16>
    %c4 = arith.constant 4 : index
    %c0_50 = arith.constant 0 : index
    %c0_51 = arith.constant 0 : index
    %42 = vector.load %arg2[%c4, %c0_50, %c0_51] : memref<9x4x8xbf16, #tpu.memory_space<vmem>>, vector<1x4x8xbf16>
    %43 = vector.shape_cast %42 : vector<1x4x8xbf16> to vector<4x8xbf16>
    %cst_52 = arith.constant dense<0.000000e+00> : vector<256x8xf32>
    %44 = tpu.matmul %41, %43, %cst_52 {dimension_numbers = #tpu.dot_dimension_numbers<[1], [0], [0], [1], [0, 0, 1, 1], [], []>} : vector<256x4xbf16>, vector<4x8xbf16>, vector<256x8xf32> -> vector<256x8xf32>
    %45 = arith.addf %38, %44 : vector<256x8xf32>
    %c1_53 = arith.constant 1 : index
    %c2_54 = arith.constant 2 : index
    %c0_55 = arith.constant 0 : index
    %46 = vector.load %arg7[%c1_53, %c2_54, %c0_55] : memref<18x18x4xf32, #tpu.memory_space<vmem>>, vector<16x16x4xf32>
    %47 = vector.shape_cast %46 : vector<16x16x4xf32> to vector<256x4xf32>
    %48 = arith.truncf %47 : vector<256x4xf32> to vector<256x4xbf16>
    %c5 = arith.constant 5 : index
    %c0_56 = arith.constant 0 : index
    %c0_57 = arith.constant 0 : index
    %49 = vector.load %arg2[%c5, %c0_56, %c0_57] : memref<9x4x8xbf16, #tpu.memory_space<vmem>>, vector<1x4x8xbf16>
    %50 = vector.shape_cast %49 : vector<1x4x8xbf16> to vector<4x8xbf16>
    %cst_58 = arith.constant dense<0.000000e+00> : vector<256x8xf32>
    %51 = tpu.matmul %48, %50, %cst_58 {dimension_numbers = #tpu.dot_dimension_numbers<[1], [0], [0], [1], [0, 0, 1, 1], [], []>} : vector<256x4xbf16>, vector<4x8xbf16>, vector<256x8xf32> -> vector<256x8xf32>
    %52 = arith.addf %45, %51 : vector<256x8xf32>
    %c2_59 = arith.constant 2 : index
    %c0_60 = arith.constant 0 : index
    %c0_61 = arith.constant 0 : index
    %53 = vector.load %arg7[%c2_59, %c0_60, %c0_61] : memref<18x18x4xf32, #tpu.memory_space<vmem>>, vector<16x16x4xf32>
    %54 = vector.shape_cast %53 : vector<16x16x4xf32> to vector<256x4xf32>
    %55 = arith.truncf %54 : vector<256x4xf32> to vector<256x4xbf16>
    %c6 = arith.constant 6 : index
    %c0_62 = arith.constant 0 : index
    %c0_63 = arith.constant 0 : index
    %56 = vector.load %arg2[%c6, %c0_62, %c0_63] : memref<9x4x8xbf16, #tpu.memory_space<vmem>>, vector<1x4x8xbf16>
    %57 = vector.shape_cast %56 : vector<1x4x8xbf16> to vector<4x8xbf16>
    %cst_64 = arith.constant dense<0.000000e+00> : vector<256x8xf32>
    %58 = tpu.matmul %55, %57, %cst_64 {dimension_numbers = #tpu.dot_dimension_numbers<[1], [0], [0], [1], [0, 0, 1, 1], [], []>} : vector<256x4xbf16>, vector<4x8xbf16>, vector<256x8xf32> -> vector<256x8xf32>
    %59 = arith.addf %52, %58 : vector<256x8xf32>
    %c2_65 = arith.constant 2 : index
    %c1_66 = arith.constant 1 : index
    %c0_67 = arith.constant 0 : index
    %60 = vector.load %arg7[%c2_65, %c1_66, %c0_67] : memref<18x18x4xf32, #tpu.memory_space<vmem>>, vector<16x16x4xf32>
    %61 = vector.shape_cast %60 : vector<16x16x4xf32> to vector<256x4xf32>
    %62 = arith.truncf %61 : vector<256x4xf32> to vector<256x4xbf16>
    %c7 = arith.constant 7 : index
    %c0_68 = arith.constant 0 : index
    %c0_69 = arith.constant 0 : index
    %63 = vector.load %arg2[%c7, %c0_68, %c0_69] : memref<9x4x8xbf16, #tpu.memory_space<vmem>>, vector<1x4x8xbf16>
    %64 = vector.shape_cast %63 : vector<1x4x8xbf16> to vector<4x8xbf16>
    %cst_70 = arith.constant dense<0.000000e+00> : vector<256x8xf32>
    %65 = tpu.matmul %62, %64, %cst_70 {dimension_numbers = #tpu.dot_dimension_numbers<[1], [0], [0], [1], [0, 0, 1, 1], [], []>} : vector<256x4xbf16>, vector<4x8xbf16>, vector<256x8xf32> -> vector<256x8xf32>
    %66 = arith.addf %59, %65 : vector<256x8xf32>
    %c2_71 = arith.constant 2 : index
    %c2_72 = arith.constant 2 : index
    %c0_73 = arith.constant 0 : index
    %67 = vector.load %arg7[%c2_71, %c2_72, %c0_73] : memref<18x18x4xf32, #tpu.memory_space<vmem>>, vector<16x16x4xf32>
    %68 = vector.shape_cast %67 : vector<16x16x4xf32> to vector<256x4xf32>
    %69 = arith.truncf %68 : vector<256x4xf32> to vector<256x4xbf16>
    %c8 = arith.constant 8 : index
    %c0_74 = arith.constant 0 : index
    %c0_75 = arith.constant 0 : index
    %70 = vector.load %arg2[%c8, %c0_74, %c0_75] : memref<9x4x8xbf16, #tpu.memory_space<vmem>>, vector<1x4x8xbf16>
    %71 = vector.shape_cast %70 : vector<1x4x8xbf16> to vector<4x8xbf16>
    %cst_76 = arith.constant dense<0.000000e+00> : vector<256x8xf32>
    %72 = tpu.matmul %69, %71, %cst_76 {dimension_numbers = #tpu.dot_dimension_numbers<[1], [0], [0], [1], [0, 0, 1, 1], [], []>} : vector<256x4xbf16>, vector<4x8xbf16>, vector<256x8xf32> -> vector<256x8xf32>
    %73 = arith.addf %66, %72 : vector<256x8xf32>
    %74 = vector.broadcast %11 : vector<1x8xf32> to vector<256x8xf32>
    %75 = arith.addf %73, %74 : vector<256x8xf32>
    %cst_77 = arith.constant 0.000000e+00 : f32
    %76 = vector.broadcast %cst_77 : f32 to vector<256x8xf32>
    %77 = arith.maximumf %75, %76 : vector<256x8xf32>
    %78 = vector.shape_cast %77 : vector<256x8xf32> to vector<16x16x8xf32>
    %79 = vector.shape_cast %78 : vector<16x16x8xf32> to vector<8x2x16x8xf32>
    %80 = vector.extract_strided_slice %79 {offsets = [0, 0, 0, 0], sizes = [8, 1, 16, 8], strides = [1, 1, 1, 1]} : vector<8x2x16x8xf32> to vector<8x1x16x8xf32>
    %81 = vector.shape_cast %80 : vector<8x1x16x8xf32> to vector<8x16x8xf32>
    %82 = vector.extract_strided_slice %79 {offsets = [0, 1, 0, 0], sizes = [8, 1, 16, 8], strides = [1, 1, 1, 1]} : vector<8x2x16x8xf32> to vector<8x1x16x8xf32>
    %83 = vector.shape_cast %82 : vector<8x1x16x8xf32> to vector<8x16x8xf32>
    %cst_78 = arith.constant 0.000000e+00 : f32
    %84 = vector.broadcast %cst_78 : f32 to vector<1x16x8xf32>
    %85 = vector.extract_strided_slice %83 {offsets = [0, 0, 0], sizes = [7, 16, 8], strides = [1, 1, 1]} : vector<8x16x8xf32> to vector<7x16x8xf32>
    %86 = tpu.concatenate %84, %85 in 0 : vector<1x16x8xf32>, vector<7x16x8xf32> -> vector<8x16x8xf32>
    %87 = arith.maximumf %81, %83 : vector<8x16x8xf32>
    %88 = arith.maximumf %87, %86 : vector<8x16x8xf32>
    %89 = tpu.iota {dimensions = array<i32: 0>} : vector<8x16xi32>
    %90 = tpu.iota {dimensions = array<i32: 1>} : vector<8x16xi32>
    %c2_i32 = arith.constant 2 : i32
    %91 = vector.broadcast %c2_i32 : i32 to vector<8x16xi32>
    %92 = arith.muli %91, %89 : vector<8x16xi32>
    %c-1_i32 = arith.constant -1 : i32
    %93 = vector.broadcast %c-1_i32 : i32 to vector<8x16xi32>
    %94 = arith.addi %92, %93 : vector<8x16xi32>
    %95 = arith.cmpi eq, %90, %94 : vector<8x16xi32>
    %96 = arith.extui %95 : vector<8x16xi1> to vector<8x16xi32>
    %97 = arith.sitofp %96 : vector<8x16xi32> to vector<8x16xf32>
    %98 = vector.shape_cast %97 : vector<8x16xf32> to vector<1x8x16xf32>
    %99 = vector.shape_cast %98 : vector<1x8x16xf32> to vector<1x8x16xf32>
    %100 = vector.broadcast %99 : vector<1x8x16xf32> to vector<8x8x16xf32>
    "tpu.trace_start"() <{level = 10 : i32, message = "ijw,iwc->ijc"}> : () -> ()
    %cst_79 = arith.constant dense<0.000000e+00> : vector<8x8x8xf32>
    %101 = tpu.matmul %100, %88, %cst_79 {dimension_numbers = #tpu.dot_dimension_numbers<[2], [1], [1], [2], [0, 0, 0, 1, 1, 2], [0], [0]>} : vector<8x8x16xf32>, vector<8x16x8xf32>, vector<8x8x8xf32> -> vector<8x8x8xf32>
    "tpu.trace_stop"() : () -> ()
    %c2_i32_80 = arith.constant 2 : i32
    %102 = vector.broadcast %c2_i32_80 : i32 to vector<8x16xi32>
    %103 = arith.muli %102, %89 : vector<8x16xi32>
    %c0_i32 = arith.constant 0 : i32
    %104 = vector.broadcast %c0_i32 : i32 to vector<8x16xi32>
    %105 = arith.addi %103, %104 : vector<8x16xi32>
    %106 = arith.cmpi eq, %90, %105 : vector<8x16xi32>
    %107 = arith.extui %106 : vector<8x16xi1> to vector<8x16xi32>
    %108 = arith.sitofp %107 : vector<8x16xi32> to vector<8x16xf32>
    %109 = vector.shape_cast %108 : vector<8x16xf32> to vector<1x8x16xf32>
    %110 = vector.shape_cast %109 : vector<1x8x16xf32> to vector<1x8x16xf32>
    %111 = vector.broadcast %110 : vector<1x8x16xf32> to vector<8x8x16xf32>
    "tpu.trace_start"() <{level = 10 : i32, message = "ijw,iwc->ijc"}> : () -> ()
    %cst_81 = arith.constant dense<0.000000e+00> : vector<8x8x8xf32>
    %112 = tpu.matmul %111, %88, %cst_81 {dimension_numbers = #tpu.dot_dimension_numbers<[2], [1], [1], [2], [0, 0, 0, 1, 1, 2], [0], [0]>} : vector<8x8x16xf32>, vector<8x16x8xf32>, vector<8x8x8xf32> -> vector<8x8x8xf32>
    "tpu.trace_stop"() : () -> ()
    %113 = arith.maximumf %101, %112 : vector<8x8x8xf32>
    %c2_i32_82 = arith.constant 2 : i32
    %114 = vector.broadcast %c2_i32_82 : i32 to vector<8x16xi32>
    %115 = arith.muli %114, %89 : vector<8x16xi32>
    %c1_i32 = arith.constant 1 : i32
    %116 = vector.broadcast %c1_i32 : i32 to vector<8x16xi32>
    %117 = arith.addi %115, %116 : vector<8x16xi32>
    %118 = arith.cmpi eq, %90, %117 : vector<8x16xi32>
    %119 = arith.extui %118 : vector<8x16xi1> to vector<8x16xi32>
    %120 = arith.sitofp %119 : vector<8x16xi32> to vector<8x16xf32>
    %121 = vector.shape_cast %120 : vector<8x16xf32> to vector<1x8x16xf32>
    %122 = vector.shape_cast %121 : vector<1x8x16xf32> to vector<1x8x16xf32>
    %123 = vector.broadcast %122 : vector<1x8x16xf32> to vector<8x8x16xf32>
    "tpu.trace_start"() <{level = 10 : i32, message = "ijw,iwc->ijc"}> : () -> ()
    %cst_83 = arith.constant dense<0.000000e+00> : vector<8x8x8xf32>
    %124 = tpu.matmul %123, %88, %cst_83 {dimension_numbers = #tpu.dot_dimension_numbers<[2], [1], [1], [2], [0, 0, 0, 1, 1, 2], [0], [0]>} : vector<8x8x16xf32>, vector<8x16x8xf32>, vector<8x8x8xf32> -> vector<8x8x8xf32>
    "tpu.trace_stop"() : () -> ()
    %125 = arith.maximumf %113, %124 : vector<8x8x8xf32>
    %c0_84 = arith.constant 0 : index
    %c0_85 = arith.constant 0 : index
    %c0_86 = arith.constant 0 : index
    %c0_87 = arith.constant 0 : index
    %126 = vector.load %arg6[%c0_84, %c0_85, %c0_86, %c0_87] : memref<1x8x8x8xf32, #tpu.memory_space<vmem>>, vector<1x8x8x8xf32>
    %127 = vector.shape_cast %126 : vector<1x8x8x8xf32> to vector<8x8x8xf32>
    %128 = vector.shape_cast %125 : vector<8x8x8xf32> to vector<1x8x8x8xf32>
    tpu.vector_store %arg6[%c0_84, %c0_85, %c0_86, %c0_87], %128 {strides = array<i32>} : memref<1x8x8x8xf32, #tpu.memory_space<vmem>>, vector<1x8x8x8xf32>,
    %cst_88 = arith.constant 0.000000e+00 : f32
    %129 = vector.broadcast %cst_88 : f32 to vector<1x10x8xf32>
    %c0_89 = arith.constant 0 : index
    %c0_90 = arith.constant 0 : index
    %c0_91 = arith.constant 0 : index
    %130 = vector.load %arg8[%c0_89, %c0_90, %c0_91] : memref<10x10x8xf32, #tpu.memory_space<vmem>>, vector<1x10x8xf32>
    tpu.vector_store %arg8[%c0_89, %c0_90, %c0_91], %129 {strides = array<i32>} : memref<10x10x8xf32, #tpu.memory_space<vmem>>, vector<1x10x8xf32>,
    %cst_92 = arith.constant 0.000000e+00 : f32
    %131 = vector.broadcast %cst_92 : f32 to vector<1x10x8xf32>
    %c9 = arith.constant 9 : index
    %c0_93 = arith.constant 0 : index
    %c0_94 = arith.constant 0 : index
    %132 = vector.load %arg8[%c9, %c0_93, %c0_94] : memref<10x10x8xf32, #tpu.memory_space<vmem>>, vector<1x10x8xf32>
    tpu.vector_store %arg8[%c9, %c0_93, %c0_94], %131 {strides = array<i32>} : memref<10x10x8xf32, #tpu.memory_space<vmem>>, vector<1x10x8xf32>,
    %cst_95 = arith.constant 0.000000e+00 : f32
    %133 = vector.broadcast %cst_95 : f32 to vector<10x1x8xf32>
    %c0_96 = arith.constant 0 : index
    %c0_97 = arith.constant 0 : index
    %c0_98 = arith.constant 0 : index
    %134 = vector.load %arg8[%c0_96, %c0_97, %c0_98] : memref<10x10x8xf32, #tpu.memory_space<vmem>>, vector<10x1x8xf32>
    tpu.vector_store %arg8[%c0_96, %c0_97, %c0_98], %133 {strides = array<i32>} : memref<10x10x8xf32, #tpu.memory_space<vmem>>, vector<10x1x8xf32>,
    %cst_99 = arith.constant 0.000000e+00 : f32
    %135 = vector.broadcast %cst_99 : f32 to vector<10x1x8xf32>
    %c0_100 = arith.constant 0 : index
    %c9_101 = arith.constant 9 : index
    %c0_102 = arith.constant 0 : index
    %136 = vector.load %arg8[%c0_100, %c9_101, %c0_102] : memref<10x10x8xf32, #tpu.memory_space<vmem>>, vector<10x1x8xf32>
    tpu.vector_store %arg8[%c0_100, %c9_101, %c0_102], %135 {strides = array<i32>} : memref<10x10x8xf32, #tpu.memory_space<vmem>>, vector<10x1x8xf32>,
    %c0_103 = arith.constant 0 : index
    %c0_104 = arith.constant 0 : index
    %c0_105 = arith.constant 0 : index
    %c0_106 = arith.constant 0 : index
    %137 = vector.load %arg6[%c0_103, %c0_104, %c0_105, %c0_106] : memref<1x8x8x8xf32, #tpu.memory_space<vmem>>, vector<1x8x8x8xf32>
    %138 = vector.shape_cast %137 : vector<1x8x8x8xf32> to vector<8x8x8xf32>
    %c1_107 = arith.constant 1 : index
    %c1_108 = arith.constant 1 : index
    %c0_109 = arith.constant 0 : index
    %139 = vector.load %arg8[%c1_107, %c1_108, %c0_109] : memref<10x10x8xf32, #tpu.memory_space<vmem>>, vector<8x8x8xf32>
    tpu.vector_store %arg8[%c1_107, %c1_108, %c0_109], %138 {strides = array<i32>} : memref<10x10x8xf32, #tpu.memory_space<vmem>>, vector<8x8x8xf32>,
    %c0_110 = arith.constant 0 : index
    %c0_111 = arith.constant 0 : index
    %c0_112 = arith.constant 0 : index
    %140 = vector.load %arg5[%c0_110, %c0_111, %c0_112] : memref<4x1x8xf32, #tpu.memory_space<vmem>>, vector<1x1x8xf32>
    %141 = vector.shape_cast %140 : vector<1x1x8xf32> to vector<1x8xf32>
    %c0_113 = arith.constant 0 : index
    %c0_114 = arith.constant 0 : index
    %c0_115 = arith.constant 0 : index
    %142 = vector.load %arg8[%c0_113, %c0_114, %c0_115] : memref<10x10x8xf32, #tpu.memory_space<vmem>>, vector<8x8x8xf32>
    %143 = vector.shape_cast %142 : vector<8x8x8xf32> to vector<64x8xf32>
    %144 = arith.truncf %143 : vector<64x8xf32> to vector<64x8xbf16>
    %c0_116 = arith.constant 0 : index
    %c0_117 = arith.constant 0 : index
    %c0_118 = arith.constant 0 : index
    %c0_119 = arith.constant 0 : index
    %145 = vector.load %arg4[%c0_116, %c0_117, %c0_118, %c0_119] : memref<4x9x8x8xbf16, #tpu.memory_space<vmem>>, vector<1x1x8x8xbf16>
    %146 = vector.shape_cast %145 : vector<1x1x8x8xbf16> to vector<8x8xbf16>
    %cst_120 = arith.constant dense<0.000000e+00> : vector<64x8xf32>
    %147 = tpu.matmul %144, %146, %cst_120 {dimension_numbers = #tpu.dot_dimension_numbers<[1], [0], [0], [1], [0, 0, 1, 1], [], []>} : vector<64x8xbf16>, vector<8x8xbf16>, vector<64x8xf32> -> vector<64x8xf32>
    %c0_121 = arith.constant 0 : index
    %c1_122 = arith.constant 1 : index
    %c0_123 = arith.constant 0 : index
    %148 = vector.load %arg8[%c0_121, %c1_122, %c0_123] : memref<10x10x8xf32, #tpu.memory_space<vmem>>, vector<8x8x8xf32>
    %149 = vector.shape_cast %148 : vector<8x8x8xf32> to vector<64x8xf32>
    %150 = arith.truncf %149 : vector<64x8xf32> to vector<64x8xbf16>
    %c0_124 = arith.constant 0 : index
    %c1_125 = arith.constant 1 : index
    %c0_126 = arith.constant 0 : index
    %c0_127 = arith.constant 0 : index
    %151 = vector.load %arg4[%c0_124, %c1_125, %c0_126, %c0_127] : memref<4x9x8x8xbf16, #tpu.memory_space<vmem>>, vector<1x1x8x8xbf16>
    %152 = vector.shape_cast %151 : vector<1x1x8x8xbf16> to vector<8x8xbf16>
    %cst_128 = arith.constant dense<0.000000e+00> : vector<64x8xf32>
    %153 = tpu.matmul %150, %152, %cst_128 {dimension_numbers = #tpu.dot_dimension_numbers<[1], [0], [0], [1], [0, 0, 1, 1], [], []>} : vector<64x8xbf16>, vector<8x8xbf16>, vector<64x8xf32> -> vector<64x8xf32>
    %154 = arith.addf %147, %153 : vector<64x8xf32>
    %c0_129 = arith.constant 0 : index
    %c2_130 = arith.constant 2 : index
    %c0_131 = arith.constant 0 : index
    %155 = vector.load %arg8[%c0_129, %c2_130, %c0_131] : memref<10x10x8xf32, #tpu.memory_space<vmem>>, vector<8x8x8xf32>
    %156 = vector.shape_cast %155 : vector<8x8x8xf32> to vector<64x8xf32>
    %157 = arith.truncf %156 : vector<64x8xf32> to vector<64x8xbf16>
    %c0_132 = arith.constant 0 : index
    %c2_133 = arith.constant 2 : index
    %c0_134 = arith.constant 0 : index
    %c0_135 = arith.constant 0 : index
    %158 = vector.load %arg4[%c0_132, %c2_133, %c0_134, %c0_135] : memref<4x9x8x8xbf16, #tpu.memory_space<vmem>>, vector<1x1x8x8xbf16>
    %159 = vector.shape_cast %158 : vector<1x1x8x8xbf16> to vector<8x8xbf16>
    %cst_136 = arith.constant dense<0.000000e+00> : vector<64x8xf32>
    %160 = tpu.matmul %157, %159, %cst_136 {dimension_numbers = #tpu.dot_dimension_numbers<[1], [0], [0], [1], [0, 0, 1, 1], [], []>} : vector<64x8xbf16>, vector<8x8xbf16>, vector<64x8xf32> -> vector<64x8xf32>
    %161 = arith.addf %154, %160 : vector<64x8xf32>
    %c1_137 = arith.constant 1 : index
    %c0_138 = arith.constant 0 : index
    %c0_139 = arith.constant 0 : index
    %162 = vector.load %arg8[%c1_137, %c0_138, %c0_139] : memref<10x10x8xf32, #tpu.memory_space<vmem>>, vector<8x8x8xf32>
    %163 = vector.shape_cast %162 : vector<8x8x8xf32> to vector<64x8xf32>
    %164 = arith.truncf %163 : vector<64x8xf32> to vector<64x8xbf16>
    %c0_140 = arith.constant 0 : index
    %c3_141 = arith.constant 3 : index
    %c0_142 = arith.constant 0 : index
    %c0_143 = arith.constant 0 : index
    %165 = vector.load %arg4[%c0_140, %c3_141, %c0_142, %c0_143] : memref<4x9x8x8xbf16, #tpu.memory_space<vmem>>, vector<1x1x8x8xbf16>
    %166 = vector.shape_cast %165 : vector<1x1x8x8xbf16> to vector<8x8xbf16>
    %cst_144 = arith.constant dense<0.000000e+00> : vector<64x8xf32>
    %167 = tpu.matmul %164, %166, %cst_144 {dimension_numbers = #tpu.dot_dimension_numbers<[1], [0], [0], [1], [0, 0, 1, 1], [], []>} : vector<64x8xbf16>, vector<8x8xbf16>, vector<64x8xf32> -> vector<64x8xf32>
    %168 = arith.addf %161, %167 : vector<64x8xf32>
    %c1_145 = arith.constant 1 : index
    %c1_146 = arith.constant 1 : index
    %c0_147 = arith.constant 0 : index
    %169 = vector.load %arg8[%c1_145, %c1_146, %c0_147] : memref<10x10x8xf32, #tpu.memory_space<vmem>>, vector<8x8x8xf32>
    %170 = vector.shape_cast %169 : vector<8x8x8xf32> to vector<64x8xf32>
    %171 = arith.truncf %170 : vector<64x8xf32> to vector<64x8xbf16>
    %c0_148 = arith.constant 0 : index
    %c4_149 = arith.constant 4 : index
    %c0_150 = arith.constant 0 : index
    %c0_151 = arith.constant 0 : index
    %172 = vector.load %arg4[%c0_148, %c4_149, %c0_150, %c0_151] : memref<4x9x8x8xbf16, #tpu.memory_space<vmem>>, vector<1x1x8x8xbf16>
    %173 = vector.shape_cast %172 : vector<1x1x8x8xbf16> to vector<8x8xbf16>
    %cst_152 = arith.constant dense<0.000000e+00> : vector<64x8xf32>
    %174 = tpu.matmul %171, %173, %cst_152 {dimension_numbers = #tpu.dot_dimension_numbers<[1], [0], [0], [1], [0, 0, 1, 1], [], []>} : vector<64x8xbf16>, vector<8x8xbf16>, vector<64x8xf32> -> vector<64x8xf32>
    %175 = arith.addf %168, %174 : vector<64x8xf32>
    %c1_153 = arith.constant 1 : index
    %c2_154 = arith.constant 2 : index
    %c0_155 = arith.constant 0 : index
    %176 = vector.load %arg8[%c1_153, %c2_154, %c0_155] : memref<10x10x8xf32, #tpu.memory_space<vmem>>, vector<8x8x8xf32>
    %177 = vector.shape_cast %176 : vector<8x8x8xf32> to vector<64x8xf32>
    %178 = arith.truncf %177 : vector<64x8xf32> to vector<64x8xbf16>
    %c0_156 = arith.constant 0 : index
    %c5_157 = arith.constant 5 : index
    %c0_158 = arith.constant 0 : index
    %c0_159 = arith.constant 0 : index
    %179 = vector.load %arg4[%c0_156, %c5_157, %c0_158, %c0_159] : memref<4x9x8x8xbf16, #tpu.memory_space<vmem>>, vector<1x1x8x8xbf16>
    %180 = vector.shape_cast %179 : vector<1x1x8x8xbf16> to vector<8x8xbf16>
    %cst_160 = arith.constant dense<0.000000e+00> : vector<64x8xf32>
    %181 = tpu.matmul %178, %180, %cst_160 {dimension_numbers = #tpu.dot_dimension_numbers<[1], [0], [0], [1], [0, 0, 1, 1], [], []>} : vector<64x8xbf16>, vector<8x8xbf16>, vector<64x8xf32> -> vector<64x8xf32>
    %182 = arith.addf %175, %181 : vector<64x8xf32>
    %c2_161 = arith.constant 2 : index
    %c0_162 = arith.constant 0 : index
    %c0_163 = arith.constant 0 : index
    %183 = vector.load %arg8[%c2_161, %c0_162, %c0_163] : memref<10x10x8xf32, #tpu.memory_space<vmem>>, vector<8x8x8xf32>
    %184 = vector.shape_cast %183 : vector<8x8x8xf32> to vector<64x8xf32>
    %185 = arith.truncf %184 : vector<64x8xf32> to vector<64x8xbf16>
    %c0_164 = arith.constant 0 : index
    %c6_165 = arith.constant 6 : index
    %c0_166 = arith.constant 0 : index
    %c0_167 = arith.constant 0 : index
    %186 = vector.load %arg4[%c0_164, %c6_165, %c0_166, %c0_167] : memref<4x9x8x8xbf16, #tpu.memory_space<vmem>>, vector<1x1x8x8xbf16>
    %187 = vector.shape_cast %186 : vector<1x1x8x8xbf16> to vector<8x8xbf16>
    %cst_168 = arith.constant dense<0.000000e+00> : vector<64x8xf32>
    %188 = tpu.matmul %185, %187, %cst_168 {dimension_numbers = #tpu.dot_dimension_numbers<[1], [0], [0], [1], [0, 0, 1, 1], [], []>} : vector<64x8xbf16>, vector<8x8xbf16>, vector<64x8xf32> -> vector<64x8xf32>
    %189 = arith.addf %182, %188 : vector<64x8xf32>
    %c2_169 = arith.constant 2 : index
    %c1_170 = arith.constant 1 : index
    %c0_171 = arith.constant 0 : index
    %190 = vector.load %arg8[%c2_169, %c1_170, %c0_171] : memref<10x10x8xf32, #tpu.memory_space<vmem>>, vector<8x8x8xf32>
    %191 = vector.shape_cast %190 : vector<8x8x8xf32> to vector<64x8xf32>
    %192 = arith.truncf %191 : vector<64x8xf32> to vector<64x8xbf16>
    %c0_172 = arith.constant 0 : index
    %c7_173 = arith.constant 7 : index
    %c0_174 = arith.constant 0 : index
    %c0_175 = arith.constant 0 : index
    %193 = vector.load %arg4[%c0_172, %c7_173, %c0_174, %c0_175] : memref<4x9x8x8xbf16, #tpu.memory_space<vmem>>, vector<1x1x8x8xbf16>
    %194 = vector.shape_cast %193 : vector<1x1x8x8xbf16> to vector<8x8xbf16>
    %cst_176 = arith.constant dense<0.000000e+00> : vector<64x8xf32>
    %195 = tpu.matmul %192, %194, %cst_176 {dimension_numbers = #tpu.dot_dimension_numbers<[1], [0], [0], [1], [0, 0, 1, 1], [], []>} : vector<64x8xbf16>, vector<8x8xbf16>, vector<64x8xf32> -> vector<64x8xf32>
    %196 = arith.addf %189, %195 : vector<64x8xf32>
    %c2_177 = arith.constant 2 : index
    %c2_178 = arith.constant 2 : index
    %c0_179 = arith.constant 0 : index
    %197 = vector.load %arg8[%c2_177, %c2_178, %c0_179] : memref<10x10x8xf32, #tpu.memory_space<vmem>>, vector<8x8x8xf32>
    %198 = vector.shape_cast %197 : vector<8x8x8xf32> to vector<64x8xf32>
    %199 = arith.truncf %198 : vector<64x8xf32> to vector<64x8xbf16>
    %c0_180 = arith.constant 0 : index
    %c8_181 = arith.constant 8 : index
    %c0_182 = arith.constant 0 : index
    %c0_183 = arith.constant 0 : index
    %200 = vector.load %arg4[%c0_180, %c8_181, %c0_182, %c0_183] : memref<4x9x8x8xbf16, #tpu.memory_space<vmem>>, vector<1x1x8x8xbf16>
    %201 = vector.shape_cast %200 : vector<1x1x8x8xbf16> to vector<8x8xbf16>
    %cst_184 = arith.constant dense<0.000000e+00> : vector<64x8xf32>
    %202 = tpu.matmul %199, %201, %cst_184 {dimension_numbers = #tpu.dot_dimension_numbers<[1], [0], [0], [1], [0, 0, 1, 1], [], []>} : vector<64x8xbf16>, vector<8x8xbf16>, vector<64x8xf32> -> vector<64x8xf32>
    %203 = arith.addf %196, %202 : vector<64x8xf32>
    %204 = vector.broadcast %141 : vector<1x8xf32> to vector<64x8xf32>
    %205 = arith.addf %203, %204 : vector<64x8xf32>
    %cst_185 = arith.constant 0.000000e+00 : f32
    %206 = vector.broadcast %cst_185 : f32 to vector<64x8xf32>
    %207 = arith.maximumf %205, %206 : vector<64x8xf32>
    %208 = vector.shape_cast %207 : vector<64x8xf32> to vector<8x8x8xf32>
    %c1_186 = arith.constant 1 : index
    %c1_187 = arith.constant 1 : index
    %c0_188 = arith.constant 0 : index
    %209 = vector.load %arg8[%c1_186, %c1_187, %c0_188] : memref<10x10x8xf32, #tpu.memory_space<vmem>>, vector<8x8x8xf32>
    tpu.vector_store %arg8[%c1_186, %c1_187, %c0_188], %208 {strides = array<i32>} : memref<10x10x8xf32, #tpu.memory_space<vmem>>, vector<8x8x8xf32>,
    %c1_189 = arith.constant 1 : index
    %c0_190 = arith.constant 0 : index
    %c0_191 = arith.constant 0 : index
    %210 = vector.load %arg5[%c1_189, %c0_190, %c0_191] : memref<4x1x8xf32, #tpu.memory_space<vmem>>, vector<1x1x8xf32>
    %211 = vector.shape_cast %210 : vector<1x1x8xf32> to vector<1x8xf32>
    %c0_192 = arith.constant 0 : index
    %c0_193 = arith.constant 0 : index
    %c0_194 = arith.constant 0 : index
    %212 = vector.load %arg8[%c0_192, %c0_193, %c0_194] : memref<10x10x8xf32, #tpu.memory_space<vmem>>, vector<8x8x8xf32>
    %213 = vector.shape_cast %212 : vector<8x8x8xf32> to vector<64x8xf32>
    %214 = arith.truncf %213 : vector<64x8xf32> to vector<64x8xbf16>
    %c1_195 = arith.constant 1 : index
    %c0_196 = arith.constant 0 : index
    %c0_197 = arith.constant 0 : index
    %c0_198 = arith.constant 0 : index
    %215 = vector.load %arg4[%c1_195, %c0_196, %c0_197, %c0_198] : memref<4x9x8x8xbf16, #tpu.memory_space<vmem>>, vector<1x1x8x8xbf16>
    %216 = vector.shape_cast %215 : vector<1x1x8x8xbf16> to vector<8x8xbf16>
    %cst_199 = arith.constant dense<0.000000e+00> : vector<64x8xf32>
    %217 = tpu.matmul %214, %216, %cst_199 {dimension_numbers = #tpu.dot_dimension_numbers<[1], [0], [0], [1], [0, 0, 1, 1], [], []>} : vector<64x8xbf16>, vector<8x8xbf16>, vector<64x8xf32> -> vector<64x8xf32>
    %c0_200 = arith.constant 0 : index
    %c1_201 = arith.constant 1 : index
    %c0_202 = arith.constant 0 : index
    %218 = vector.load %arg8[%c0_200, %c1_201, %c0_202] : memref<10x10x8xf32, #tpu.memory_space<vmem>>, vector<8x8x8xf32>
    %219 = vector.shape_cast %218 : vector<8x8x8xf32> to vector<64x8xf32>
    %220 = arith.truncf %219 : vector<64x8xf32> to vector<64x8xbf16>
    %c1_203 = arith.constant 1 : index
    %c1_204 = arith.constant 1 : index
    %c0_205 = arith.constant 0 : index
    %c0_206 = arith.constant 0 : index
    %221 = vector.load %arg4[%c1_203, %c1_204, %c0_205, %c0_206] : memref<4x9x8x8xbf16, #tpu.memory_space<vmem>>, vector<1x1x8x8xbf16>
    %222 = vector.shape_cast %221 : vector<1x1x8x8xbf16> to vector<8x8xbf16>
    %cst_207 = arith.constant dense<0.000000e+00> : vector<64x8xf32>
    %223 = tpu.matmul %220, %222, %cst_207 {dimension_numbers = #tpu.dot_dimension_numbers<[1], [0], [0], [1], [0, 0, 1, 1], [], []>} : vector<64x8xbf16>, vector<8x8xbf16>, vector<64x8xf32> -> vector<64x8xf32>
    %224 = arith.addf %217, %223 : vector<64x8xf32>
    %c0_208 = arith.constant 0 : index
    %c2_209 = arith.constant 2 : index
    %c0_210 = arith.constant 0 : index
    %225 = vector.load %arg8[%c0_208, %c2_209, %c0_210] : memref<10x10x8xf32, #tpu.memory_space<vmem>>, vector<8x8x8xf32>
    %226 = vector.shape_cast %225 : vector<8x8x8xf32> to vector<64x8xf32>
    %227 = arith.truncf %226 : vector<64x8xf32> to vector<64x8xbf16>
    %c1_211 = arith.constant 1 : index
    %c2_212 = arith.constant 2 : index
    %c0_213 = arith.constant 0 : index
    %c0_214 = arith.constant 0 : index
    %228 = vector.load %arg4[%c1_211, %c2_212, %c0_213, %c0_214] : memref<4x9x8x8xbf16, #tpu.memory_space<vmem>>, vector<1x1x8x8xbf16>
    %229 = vector.shape_cast %228 : vector<1x1x8x8xbf16> to vector<8x8xbf16>
    %cst_215 = arith.constant dense<0.000000e+00> : vector<64x8xf32>
    %230 = tpu.matmul %227, %229, %cst_215 {dimension_numbers = #tpu.dot_dimension_numbers<[1], [0], [0], [1], [0, 0, 1, 1], [], []>} : vector<64x8xbf16>, vector<8x8xbf16>, vector<64x8xf32> -> vector<64x8xf32>
    %231 = arith.addf %224, %230 : vector<64x8xf32>
    %c1_216 = arith.constant 1 : index
    %c0_217 = arith.constant 0 : index
    %c0_218 = arith.constant 0 : index
    %232 = vector.load %arg8[%c1_216, %c0_217, %c0_218] : memref<10x10x8xf32, #tpu.memory_space<vmem>>, vector<8x8x8xf32>
    %233 = vector.shape_cast %232 : vector<8x8x8xf32> to vector<64x8xf32>
    %234 = arith.truncf %233 : vector<64x8xf32> to vector<64x8xbf16>
    %c1_219 = arith.constant 1 : index
    %c3_220 = arith.constant 3 : index
    %c0_221 = arith.constant 0 : index
    %c0_222 = arith.constant 0 : index
    %235 = vector.load %arg4[%c1_219, %c3_220, %c0_221, %c0_222] : memref<4x9x8x8xbf16, #tpu.memory_space<vmem>>, vector<1x1x8x8xbf16>
    %236 = vector.shape_cast %235 : vector<1x1x8x8xbf16> to vector<8x8xbf16>
    %cst_223 = arith.constant dense<0.000000e+00> : vector<64x8xf32>
    %237 = tpu.matmul %234, %236, %cst_223 {dimension_numbers = #tpu.dot_dimension_numbers<[1], [0], [0], [1], [0, 0, 1, 1], [], []>} : vector<64x8xbf16>, vector<8x8xbf16>, vector<64x8xf32> -> vector<64x8xf32>
    %238 = arith.addf %231, %237 : vector<64x8xf32>
    %c1_224 = arith.constant 1 : index
    %c1_225 = arith.constant 1 : index
    %c0_226 = arith.constant 0 : index
    %239 = vector.load %arg8[%c1_224, %c1_225, %c0_226] : memref<10x10x8xf32, #tpu.memory_space<vmem>>, vector<8x8x8xf32>
    %240 = vector.shape_cast %239 : vector<8x8x8xf32> to vector<64x8xf32>
    %241 = arith.truncf %240 : vector<64x8xf32> to vector<64x8xbf16>
    %c1_227 = arith.constant 1 : index
    %c4_228 = arith.constant 4 : index
    %c0_229 = arith.constant 0 : index
    %c0_230 = arith.constant 0 : index
    %242 = vector.load %arg4[%c1_227, %c4_228, %c0_229, %c0_230] : memref<4x9x8x8xbf16, #tpu.memory_space<vmem>>, vector<1x1x8x8xbf16>
    %243 = vector.shape_cast %242 : vector<1x1x8x8xbf16> to vector<8x8xbf16>
    %cst_231 = arith.constant dense<0.000000e+00> : vector<64x8xf32>
    %244 = tpu.matmul %241, %243, %cst_231 {dimension_numbers = #tpu.dot_dimension_numbers<[1], [0], [0], [1], [0, 0, 1, 1], [], []>} : vector<64x8xbf16>, vector<8x8xbf16>, vector<64x8xf32> -> vector<64x8xf32>
    %245 = arith.addf %238, %244 : vector<64x8xf32>
    %c1_232 = arith.constant 1 : index
    %c2_233 = arith.constant 2 : index
    %c0_234 = arith.constant 0 : index
    %246 = vector.load %arg8[%c1_232, %c2_233, %c0_234] : memref<10x10x8xf32, #tpu.memory_space<vmem>>, vector<8x8x8xf32>
    %247 = vector.shape_cast %246 : vector<8x8x8xf32> to vector<64x8xf32>
    %248 = arith.truncf %247 : vector<64x8xf32> to vector<64x8xbf16>
    %c1_235 = arith.constant 1 : index
    %c5_236 = arith.constant 5 : index
    %c0_237 = arith.constant 0 : index
    %c0_238 = arith.constant 0 : index
    %249 = vector.load %arg4[%c1_235, %c5_236, %c0_237, %c0_238] : memref<4x9x8x8xbf16, #tpu.memory_space<vmem>>, vector<1x1x8x8xbf16>
    %250 = vector.shape_cast %249 : vector<1x1x8x8xbf16> to vector<8x8xbf16>
    %cst_239 = arith.constant dense<0.000000e+00> : vector<64x8xf32>
    %251 = tpu.matmul %248, %250, %cst_239 {dimension_numbers = #tpu.dot_dimension_numbers<[1], [0], [0], [1], [0, 0, 1, 1], [], []>} : vector<64x8xbf16>, vector<8x8xbf16>, vector<64x8xf32> -> vector<64x8xf32>
    %252 = arith.addf %245, %251 : vector<64x8xf32>
    %c2_240 = arith.constant 2 : index
    %c0_241 = arith.constant 0 : index
    %c0_242 = arith.constant 0 : index
    %253 = vector.load %arg8[%c2_240, %c0_241, %c0_242] : memref<10x10x8xf32, #tpu.memory_space<vmem>>, vector<8x8x8xf32>
    %254 = vector.shape_cast %253 : vector<8x8x8xf32> to vector<64x8xf32>
    %255 = arith.truncf %254 : vector<64x8xf32> to vector<64x8xbf16>
    %c1_243 = arith.constant 1 : index
    %c6_244 = arith.constant 6 : index
    %c0_245 = arith.constant 0 : index
    %c0_246 = arith.constant 0 : index
    %256 = vector.load %arg4[%c1_243, %c6_244, %c0_245, %c0_246] : memref<4x9x8x8xbf16, #tpu.memory_space<vmem>>, vector<1x1x8x8xbf16>
    %257 = vector.shape_cast %256 : vector<1x1x8x8xbf16> to vector<8x8xbf16>
    %cst_247 = arith.constant dense<0.000000e+00> : vector<64x8xf32>
    %258 = tpu.matmul %255, %257, %cst_247 {dimension_numbers = #tpu.dot_dimension_numbers<[1], [0], [0], [1], [0, 0, 1, 1], [], []>} : vector<64x8xbf16>, vector<8x8xbf16>, vector<64x8xf32> -> vector<64x8xf32>
    %259 = arith.addf %252, %258 : vector<64x8xf32>
    %c2_248 = arith.constant 2 : index
    %c1_249 = arith.constant 1 : index
    %c0_250 = arith.constant 0 : index
    %260 = vector.load %arg8[%c2_248, %c1_249, %c0_250] : memref<10x10x8xf32, #tpu.memory_space<vmem>>, vector<8x8x8xf32>
    %261 = vector.shape_cast %260 : vector<8x8x8xf32> to vector<64x8xf32>
    %262 = arith.truncf %261 : vector<64x8xf32> to vector<64x8xbf16>
    %c1_251 = arith.constant 1 : index
    %c7_252 = arith.constant 7 : index
    %c0_253 = arith.constant 0 : index
    %c0_254 = arith.constant 0 : index
    %263 = vector.load %arg4[%c1_251, %c7_252, %c0_253, %c0_254] : memref<4x9x8x8xbf16, #tpu.memory_space<vmem>>, vector<1x1x8x8xbf16>
    %264 = vector.shape_cast %263 : vector<1x1x8x8xbf16> to vector<8x8xbf16>
    %cst_255 = arith.constant dense<0.000000e+00> : vector<64x8xf32>
    %265 = tpu.matmul %262, %264, %cst_255 {dimension_numbers = #tpu.dot_dimension_numbers<[1], [0], [0], [1], [0, 0, 1, 1], [], []>} : vector<64x8xbf16>, vector<8x8xbf16>, vector<64x8xf32> -> vector<64x8xf32>
    %266 = arith.addf %259, %265 : vector<64x8xf32>
    %c2_256 = arith.constant 2 : index
    %c2_257 = arith.constant 2 : index
    %c0_258 = arith.constant 0 : index
    %267 = vector.load %arg8[%c2_256, %c2_257, %c0_258] : memref<10x10x8xf32, #tpu.memory_space<vmem>>, vector<8x8x8xf32>
    %268 = vector.shape_cast %267 : vector<8x8x8xf32> to vector<64x8xf32>
    %269 = arith.truncf %268 : vector<64x8xf32> to vector<64x8xbf16>
    %c1_259 = arith.constant 1 : index
    %c8_260 = arith.constant 8 : index
    %c0_261 = arith.constant 0 : index
    %c0_262 = arith.constant 0 : index
    %270 = vector.load %arg4[%c1_259, %c8_260, %c0_261, %c0_262] : memref<4x9x8x8xbf16, #tpu.memory_space<vmem>>, vector<1x1x8x8xbf16>
    %271 = vector.shape_cast %270 : vector<1x1x8x8xbf16> to vector<8x8xbf16>
    %cst_263 = arith.constant dense<0.000000e+00> : vector<64x8xf32>
    %272 = tpu.matmul %269, %271, %cst_263 {dimension_numbers = #tpu.dot_dimension_numbers<[1], [0], [0], [1], [0, 0, 1, 1], [], []>} : vector<64x8xbf16>, vector<8x8xbf16>, vector<64x8xf32> -> vector<64x8xf32>
    %273 = arith.addf %266, %272 : vector<64x8xf32>
    %274 = vector.broadcast %211 : vector<1x8xf32> to vector<64x8xf32>
    %275 = arith.addf %273, %274 : vector<64x8xf32>
    %cst_264 = arith.constant 0.000000e+00 : f32
    %276 = vector.broadcast %cst_264 : f32 to vector<64x8xf32>
    %277 = arith.maximumf %275, %276 : vector<64x8xf32>
    %c0_265 = arith.constant 0 : index
    %c0_266 = arith.constant 0 : index
    %c0_267 = arith.constant 0 : index
    %c0_268 = arith.constant 0 : index
    %278 = vector.load %arg6[%c0_265, %c0_266, %c0_267, %c0_268] : memref<1x8x8x8xf32, #tpu.memory_space<vmem>>, vector<1x8x8x8xf32>
    %279 = vector.shape_cast %278 : vector<1x8x8x8xf32> to vector<8x8x8xf32>
    %280 = vector.shape_cast %277 : vector<64x8xf32> to vector<8x8x8xf32>
    %281 = arith.addf %279, %280 : vector<8x8x8xf32>
    %c0_269 = arith.constant 0 : index
    %c0_270 = arith.constant 0 : index
    %c0_271 = arith.constant 0 : index
    %c0_272 = arith.constant 0 : index
    %282 = vector.load %arg6[%c0_269, %c0_270, %c0_271, %c0_272] : memref<1x8x8x8xf32, #tpu.memory_space<vmem>>, vector<1x8x8x8xf32>
    %283 = vector.shape_cast %282 : vector<1x8x8x8xf32> to vector<8x8x8xf32>
    %284 = vector.shape_cast %281 : vector<8x8x8xf32> to vector<1x8x8x8xf32>
    tpu.vector_store %arg6[%c0_269, %c0_270, %c0_271, %c0_272], %284 {strides = array<i32>} : memref<1x8x8x8xf32, #tpu.memory_space<vmem>>, vector<1x8x8x8xf32>,
    %c0_273 = arith.constant 0 : index
    %c0_274 = arith.constant 0 : index
    %c0_275 = arith.constant 0 : index
    %c0_276 = arith.constant 0 : index
    %285 = vector.load %arg6[%c0_273, %c0_274, %c0_275, %c0_276] : memref<1x8x8x8xf32, #tpu.memory_space<vmem>>, vector<1x8x8x8xf32>
    %286 = vector.shape_cast %285 : vector<1x8x8x8xf32> to vector<8x8x8xf32>
    %c1_277 = arith.constant 1 : index
    %c1_278 = arith.constant 1 : index
    %c0_279 = arith.constant 0 : index
    %287 = vector.load %arg8[%c1_277, %c1_278, %c0_279] : memref<10x10x8xf32, #tpu.memory_space<vmem>>, vector<8x8x8xf32>
    tpu.vector_store %arg8[%c1_277, %c1_278, %c0_279], %286 {strides = array<i32>} : memref<10x10x8xf32, #tpu.memory_space<vmem>>, vector<8x8x8xf32>,
    %c2_280 = arith.constant 2 : index
    %c0_281 = arith.constant 0 : index
    %c0_282 = arith.constant 0 : index
    %288 = vector.load %arg5[%c2_280, %c0_281, %c0_282] : memref<4x1x8xf32, #tpu.memory_space<vmem>>, vector<1x1x8xf32>
    %289 = vector.shape_cast %288 : vector<1x1x8xf32> to vector<1x8xf32>
    %c0_283 = arith.constant 0 : index
    %c0_284 = arith.constant 0 : index
    %c0_285 = arith.constant 0 : index
    %290 = vector.load %arg8[%c0_283, %c0_284, %c0_285] : memref<10x10x8xf32, #tpu.memory_space<vmem>>, vector<8x8x8xf32>
    %291 = vector.shape_cast %290 : vector<8x8x8xf32> to vector<64x8xf32>
    %292 = arith.truncf %291 : vector<64x8xf32> to vector<64x8xbf16>
    %c2_286 = arith.constant 2 : index
    %c0_287 = arith.constant 0 : index
    %c0_288 = arith.constant 0 : index
    %c0_289 = arith.constant 0 : index
    %293 = vector.load %arg4[%c2_286, %c0_287, %c0_288, %c0_289] : memref<4x9x8x8xbf16, #tpu.memory_space<vmem>>, vector<1x1x8x8xbf16>
    %294 = vector.shape_cast %293 : vector<1x1x8x8xbf16> to vector<8x8xbf16>
    %cst_290 = arith.constant dense<0.000000e+00> : vector<64x8xf32>
    %295 = tpu.matmul %292, %294, %cst_290 {dimension_numbers = #tpu.dot_dimension_numbers<[1], [0], [0], [1], [0, 0, 1, 1], [], []>} : vector<64x8xbf16>, vector<8x8xbf16>, vector<64x8xf32> -> vector<64x8xf32>
    %c0_291 = arith.constant 0 : index
    %c1_292 = arith.constant 1 : index
    %c0_293 = arith.constant 0 : index
    %296 = vector.load %arg8[%c0_291, %c1_292, %c0_293] : memref<10x10x8xf32, #tpu.memory_space<vmem>>, vector<8x8x8xf32>
    %297 = vector.shape_cast %296 : vector<8x8x8xf32> to vector<64x8xf32>
    %298 = arith.truncf %297 : vector<64x8xf32> to vector<64x8xbf16>
    %c2_294 = arith.constant 2 : index
    %c1_295 = arith.constant 1 : index
    %c0_296 = arith.constant 0 : index
    %c0_297 = arith.constant 0 : index
    %299 = vector.load %arg4[%c2_294, %c1_295, %c0_296, %c0_297] : memref<4x9x8x8xbf16, #tpu.memory_space<vmem>>, vector<1x1x8x8xbf16>
    %300 = vector.shape_cast %299 : vector<1x1x8x8xbf16> to vector<8x8xbf16>
    %cst_298 = arith.constant dense<0.000000e+00> : vector<64x8xf32>
    %301 = tpu.matmul %298, %300, %cst_298 {dimension_numbers = #tpu.dot_dimension_numbers<[1], [0], [0], [1], [0, 0, 1, 1], [], []>} : vector<64x8xbf16>, vector<8x8xbf16>, vector<64x8xf32> -> vector<64x8xf32>
    %302 = arith.addf %295, %301 : vector<64x8xf32>
    %c0_299 = arith.constant 0 : index
    %c2_300 = arith.constant 2 : index
    %c0_301 = arith.constant 0 : index
    %303 = vector.load %arg8[%c0_299, %c2_300, %c0_301] : memref<10x10x8xf32, #tpu.memory_space<vmem>>, vector<8x8x8xf32>
    %304 = vector.shape_cast %303 : vector<8x8x8xf32> to vector<64x8xf32>
    %305 = arith.truncf %304 : vector<64x8xf32> to vector<64x8xbf16>
    %c2_302 = arith.constant 2 : index
    %c2_303 = arith.constant 2 : index
    %c0_304 = arith.constant 0 : index
    %c0_305 = arith.constant 0 : index
    %306 = vector.load %arg4[%c2_302, %c2_303, %c0_304, %c0_305] : memref<4x9x8x8xbf16, #tpu.memory_space<vmem>>, vector<1x1x8x8xbf16>
    %307 = vector.shape_cast %306 : vector<1x1x8x8xbf16> to vector<8x8xbf16>
    %cst_306 = arith.constant dense<0.000000e+00> : vector<64x8xf32>
    %308 = tpu.matmul %305, %307, %cst_306 {dimension_numbers = #tpu.dot_dimension_numbers<[1], [0], [0], [1], [0, 0, 1, 1], [], []>} : vector<64x8xbf16>, vector<8x8xbf16>, vector<64x8xf32> -> vector<64x8xf32>
    %309 = arith.addf %302, %308 : vector<64x8xf32>
    %c1_307 = arith.constant 1 : index
    %c0_308 = arith.constant 0 : index
    %c0_309 = arith.constant 0 : index
    %310 = vector.load %arg8[%c1_307, %c0_308, %c0_309] : memref<10x10x8xf32, #tpu.memory_space<vmem>>, vector<8x8x8xf32>
    %311 = vector.shape_cast %310 : vector<8x8x8xf32> to vector<64x8xf32>
    %312 = arith.truncf %311 : vector<64x8xf32> to vector<64x8xbf16>
    %c2_310 = arith.constant 2 : index
    %c3_311 = arith.constant 3 : index
    %c0_312 = arith.constant 0 : index
    %c0_313 = arith.constant 0 : index
    %313 = vector.load %arg4[%c2_310, %c3_311, %c0_312, %c0_313] : memref<4x9x8x8xbf16, #tpu.memory_space<vmem>>, vector<1x1x8x8xbf16>
    %314 = vector.shape_cast %313 : vector<1x1x8x8xbf16> to vector<8x8xbf16>
    %cst_314 = arith.constant dense<0.000000e+00> : vector<64x8xf32>
    %315 = tpu.matmul %312, %314, %cst_314 {dimension_numbers = #tpu.dot_dimension_numbers<[1], [0], [0], [1], [0, 0, 1, 1], [], []>} : vector<64x8xbf16>, vector<8x8xbf16>, vector<64x8xf32> -> vector<64x8xf32>
    %316 = arith.addf %309, %315 : vector<64x8xf32>
    %c1_315 = arith.constant 1 : index
    %c1_316 = arith.constant 1 : index
    %c0_317 = arith.constant 0 : index
    %317 = vector.load %arg8[%c1_315, %c1_316, %c0_317] : memref<10x10x8xf32, #tpu.memory_space<vmem>>, vector<8x8x8xf32>
    %318 = vector.shape_cast %317 : vector<8x8x8xf32> to vector<64x8xf32>
    %319 = arith.truncf %318 : vector<64x8xf32> to vector<64x8xbf16>
    %c2_318 = arith.constant 2 : index
    %c4_319 = arith.constant 4 : index
    %c0_320 = arith.constant 0 : index
    %c0_321 = arith.constant 0 : index
    %320 = vector.load %arg4[%c2_318, %c4_319, %c0_320, %c0_321] : memref<4x9x8x8xbf16, #tpu.memory_space<vmem>>, vector<1x1x8x8xbf16>
    %321 = vector.shape_cast %320 : vector<1x1x8x8xbf16> to vector<8x8xbf16>
    %cst_322 = arith.constant dense<0.000000e+00> : vector<64x8xf32>
    %322 = tpu.matmul %319, %321, %cst_322 {dimension_numbers = #tpu.dot_dimension_numbers<[1], [0], [0], [1], [0, 0, 1, 1], [], []>} : vector<64x8xbf16>, vector<8x8xbf16>, vector<64x8xf32> -> vector<64x8xf32>
    %323 = arith.addf %316, %322 : vector<64x8xf32>
    %c1_323 = arith.constant 1 : index
    %c2_324 = arith.constant 2 : index
    %c0_325 = arith.constant 0 : index
    %324 = vector.load %arg8[%c1_323, %c2_324, %c0_325] : memref<10x10x8xf32, #tpu.memory_space<vmem>>, vector<8x8x8xf32>
    %325 = vector.shape_cast %324 : vector<8x8x8xf32> to vector<64x8xf32>
    %326 = arith.truncf %325 : vector<64x8xf32> to vector<64x8xbf16>
    %c2_326 = arith.constant 2 : index
    %c5_327 = arith.constant 5 : index
    %c0_328 = arith.constant 0 : index
    %c0_329 = arith.constant 0 : index
    %327 = vector.load %arg4[%c2_326, %c5_327, %c0_328, %c0_329] : memref<4x9x8x8xbf16, #tpu.memory_space<vmem>>, vector<1x1x8x8xbf16>
    %328 = vector.shape_cast %327 : vector<1x1x8x8xbf16> to vector<8x8xbf16>
    %cst_330 = arith.constant dense<0.000000e+00> : vector<64x8xf32>
    %329 = tpu.matmul %326, %328, %cst_330 {dimension_numbers = #tpu.dot_dimension_numbers<[1], [0], [0], [1], [0, 0, 1, 1], [], []>} : vector<64x8xbf16>, vector<8x8xbf16>, vector<64x8xf32> -> vector<64x8xf32>
    %330 = arith.addf %323, %329 : vector<64x8xf32>
    %c2_331 = arith.constant 2 : index
    %c0_332 = arith.constant 0 : index
    %c0_333 = arith.constant 0 : index
    %331 = vector.load %arg8[%c2_331, %c0_332, %c0_333] : memref<10x10x8xf32, #tpu.memory_space<vmem>>, vector<8x8x8xf32>
    %332 = vector.shape_cast %331 : vector<8x8x8xf32> to vector<64x8xf32>
    %333 = arith.truncf %332 : vector<64x8xf32> to vector<64x8xbf16>
    %c2_334 = arith.constant 2 : index
    %c6_335 = arith.constant 6 : index
    %c0_336 = arith.constant 0 : index
    %c0_337 = arith.constant 0 : index
    %334 = vector.load %arg4[%c2_334, %c6_335, %c0_336, %c0_337] : memref<4x9x8x8xbf16, #tpu.memory_space<vmem>>, vector<1x1x8x8xbf16>
    %335 = vector.shape_cast %334 : vector<1x1x8x8xbf16> to vector<8x8xbf16>
    %cst_338 = arith.constant dense<0.000000e+00> : vector<64x8xf32>
    %336 = tpu.matmul %333, %335, %cst_338 {dimension_numbers = #tpu.dot_dimension_numbers<[1], [0], [0], [1], [0, 0, 1, 1], [], []>} : vector<64x8xbf16>, vector<8x8xbf16>, vector<64x8xf32> -> vector<64x8xf32>
    %337 = arith.addf %330, %336 : vector<64x8xf32>
    %c2_339 = arith.constant 2 : index
    %c1_340 = arith.constant 1 : index
    %c0_341 = arith.constant 0 : index
    %338 = vector.load %arg8[%c2_339, %c1_340, %c0_341] : memref<10x10x8xf32, #tpu.memory_space<vmem>>, vector<8x8x8xf32>
    %339 = vector.shape_cast %338 : vector<8x8x8xf32> to vector<64x8xf32>
    %340 = arith.truncf %339 : vector<64x8xf32> to vector<64x8xbf16>
    %c2_342 = arith.constant 2 : index
    %c7_343 = arith.constant 7 : index
    %c0_344 = arith.constant 0 : index
    %c0_345 = arith.constant 0 : index
    %341 = vector.load %arg4[%c2_342, %c7_343, %c0_344, %c0_345] : memref<4x9x8x8xbf16, #tpu.memory_space<vmem>>, vector<1x1x8x8xbf16>
    %342 = vector.shape_cast %341 : vector<1x1x8x8xbf16> to vector<8x8xbf16>
    %cst_346 = arith.constant dense<0.000000e+00> : vector<64x8xf32>
    %343 = tpu.matmul %340, %342, %cst_346 {dimension_numbers = #tpu.dot_dimension_numbers<[1], [0], [0], [1], [0, 0, 1, 1], [], []>} : vector<64x8xbf16>, vector<8x8xbf16>, vector<64x8xf32> -> vector<64x8xf32>
    %344 = arith.addf %337, %343 : vector<64x8xf32>
    %c2_347 = arith.constant 2 : index
    %c2_348 = arith.constant 2 : index
    %c0_349 = arith.constant 0 : index
    %345 = vector.load %arg8[%c2_347, %c2_348, %c0_349] : memref<10x10x8xf32, #tpu.memory_space<vmem>>, vector<8x8x8xf32>
    %346 = vector.shape_cast %345 : vector<8x8x8xf32> to vector<64x8xf32>
    %347 = arith.truncf %346 : vector<64x8xf32> to vector<64x8xbf16>
    %c2_350 = arith.constant 2 : index
    %c8_351 = arith.constant 8 : index
    %c0_352 = arith.constant 0 : index
    %c0_353 = arith.constant 0 : index
    %348 = vector.load %arg4[%c2_350, %c8_351, %c0_352, %c0_353] : memref<4x9x8x8xbf16, #tpu.memory_space<vmem>>, vector<1x1x8x8xbf16>
    %349 = vector.shape_cast %348 : vector<1x1x8x8xbf16> to vector<8x8xbf16>
    %cst_354 = arith.constant dense<0.000000e+00> : vector<64x8xf32>
    %350 = tpu.matmul %347, %349, %cst_354 {dimension_numbers = #tpu.dot_dimension_numbers<[1], [0], [0], [1], [0, 0, 1, 1], [], []>} : vector<64x8xbf16>, vector<8x8xbf16>, vector<64x8xf32> -> vector<64x8xf32>
    %351 = arith.addf %344, %350 : vector<64x8xf32>
    %352 = vector.broadcast %289 : vector<1x8xf32> to vector<64x8xf32>
    %353 = arith.addf %351, %352 : vector<64x8xf32>
    %cst_355 = arith.constant 0.000000e+00 : f32
    %354 = vector.broadcast %cst_355 : f32 to vector<64x8xf32>
    %355 = arith.maximumf %353, %354 : vector<64x8xf32>
    %356 = vector.shape_cast %355 : vector<64x8xf32> to vector<8x8x8xf32>
    %c1_356 = arith.constant 1 : index
    %c1_357 = arith.constant 1 : index
    %c0_358 = arith.constant 0 : index
    %357 = vector.load %arg8[%c1_356, %c1_357, %c0_358] : memref<10x10x8xf32, #tpu.memory_space<vmem>>, vector<8x8x8xf32>
    tpu.vector_store %arg8[%c1_356, %c1_357, %c0_358], %356 {strides = array<i32>} : memref<10x10x8xf32, #tpu.memory_space<vmem>>, vector<8x8x8xf32>,
    %c3_359 = arith.constant 3 : index
    %c0_360 = arith.constant 0 : index
    %c0_361 = arith.constant 0 : index
    %358 = vector.load %arg5[%c3_359, %c0_360, %c0_361] : memref<4x1x8xf32, #tpu.memory_space<vmem>>, vector<1x1x8xf32>
    %359 = vector.shape_cast %358 : vector<1x1x8xf32> to vector<1x8xf32>
    %c0_362 = arith.constant 0 : index
    %c0_363 = arith.constant 0 : index
    %c0_364 = arith.constant 0 : index
    %360 = vector.load %arg8[%c0_362, %c0_363, %c0_364] : memref<10x10x8xf32, #tpu.memory_space<vmem>>, vector<8x8x8xf32>
    %361 = vector.shape_cast %360 : vector<8x8x8xf32> to vector<64x8xf32>
    %362 = arith.truncf %361 : vector<64x8xf32> to vector<64x8xbf16>
    %c3_365 = arith.constant 3 : index
    %c0_366 = arith.constant 0 : index
    %c0_367 = arith.constant 0 : index
    %c0_368 = arith.constant 0 : index
    %363 = vector.load %arg4[%c3_365, %c0_366, %c0_367, %c0_368] : memref<4x9x8x8xbf16, #tpu.memory_space<vmem>>, vector<1x1x8x8xbf16>
    %364 = vector.shape_cast %363 : vector<1x1x8x8xbf16> to vector<8x8xbf16>
    %cst_369 = arith.constant dense<0.000000e+00> : vector<64x8xf32>
    %365 = tpu.matmul %362, %364, %cst_369 {dimension_numbers = #tpu.dot_dimension_numbers<[1], [0], [0], [1], [0, 0, 1, 1], [], []>} : vector<64x8xbf16>, vector<8x8xbf16>, vector<64x8xf32> -> vector<64x8xf32>
    %c0_370 = arith.constant 0 : index
    %c1_371 = arith.constant 1 : index
    %c0_372 = arith.constant 0 : index
    %366 = vector.load %arg8[%c0_370, %c1_371, %c0_372] : memref<10x10x8xf32, #tpu.memory_space<vmem>>, vector<8x8x8xf32>
    %367 = vector.shape_cast %366 : vector<8x8x8xf32> to vector<64x8xf32>
    %368 = arith.truncf %367 : vector<64x8xf32> to vector<64x8xbf16>
    %c3_373 = arith.constant 3 : index
    %c1_374 = arith.constant 1 : index
    %c0_375 = arith.constant 0 : index
    %c0_376 = arith.constant 0 : index
    %369 = vector.load %arg4[%c3_373, %c1_374, %c0_375, %c0_376] : memref<4x9x8x8xbf16, #tpu.memory_space<vmem>>, vector<1x1x8x8xbf16>
    %370 = vector.shape_cast %369 : vector<1x1x8x8xbf16> to vector<8x8xbf16>
    %cst_377 = arith.constant dense<0.000000e+00> : vector<64x8xf32>
    %371 = tpu.matmul %368, %370, %cst_377 {dimension_numbers = #tpu.dot_dimension_numbers<[1], [0], [0], [1], [0, 0, 1, 1], [], []>} : vector<64x8xbf16>, vector<8x8xbf16>, vector<64x8xf32> -> vector<64x8xf32>
    %372 = arith.addf %365, %371 : vector<64x8xf32>
    %c0_378 = arith.constant 0 : index
    %c2_379 = arith.constant 2 : index
    %c0_380 = arith.constant 0 : index
    %373 = vector.load %arg8[%c0_378, %c2_379, %c0_380] : memref<10x10x8xf32, #tpu.memory_space<vmem>>, vector<8x8x8xf32>
    %374 = vector.shape_cast %373 : vector<8x8x8xf32> to vector<64x8xf32>
    %375 = arith.truncf %374 : vector<64x8xf32> to vector<64x8xbf16>
    %c3_381 = arith.constant 3 : index
    %c2_382 = arith.constant 2 : index
    %c0_383 = arith.constant 0 : index
    %c0_384 = arith.constant 0 : index
    %376 = vector.load %arg4[%c3_381, %c2_382, %c0_383, %c0_384] : memref<4x9x8x8xbf16, #tpu.memory_space<vmem>>, vector<1x1x8x8xbf16>
    %377 = vector.shape_cast %376 : vector<1x1x8x8xbf16> to vector<8x8xbf16>
    %cst_385 = arith.constant dense<0.000000e+00> : vector<64x8xf32>
    %378 = tpu.matmul %375, %377, %cst_385 {dimension_numbers = #tpu.dot_dimension_numbers<[1], [0], [0], [1], [0, 0, 1, 1], [], []>} : vector<64x8xbf16>, vector<8x8xbf16>, vector<64x8xf32> -> vector<64x8xf32>
    %379 = arith.addf %372, %378 : vector<64x8xf32>
    %c1_386 = arith.constant 1 : index
    %c0_387 = arith.constant 0 : index
    %c0_388 = arith.constant 0 : index
    %380 = vector.load %arg8[%c1_386, %c0_387, %c0_388] : memref<10x10x8xf32, #tpu.memory_space<vmem>>, vector<8x8x8xf32>
    %381 = vector.shape_cast %380 : vector<8x8x8xf32> to vector<64x8xf32>
    %382 = arith.truncf %381 : vector<64x8xf32> to vector<64x8xbf16>
    %c3_389 = arith.constant 3 : index
    %c3_390 = arith.constant 3 : index
    %c0_391 = arith.constant 0 : index
    %c0_392 = arith.constant 0 : index
    %383 = vector.load %arg4[%c3_389, %c3_390, %c0_391, %c0_392] : memref<4x9x8x8xbf16, #tpu.memory_space<vmem>>, vector<1x1x8x8xbf16>
    %384 = vector.shape_cast %383 : vector<1x1x8x8xbf16> to vector<8x8xbf16>
    %cst_393 = arith.constant dense<0.000000e+00> : vector<64x8xf32>
    %385 = tpu.matmul %382, %384, %cst_393 {dimension_numbers = #tpu.dot_dimension_numbers<[1], [0], [0], [1], [0, 0, 1, 1], [], []>} : vector<64x8xbf16>, vector<8x8xbf16>, vector<64x8xf32> -> vector<64x8xf32>
    %386 = arith.addf %379, %385 : vector<64x8xf32>
    %c1_394 = arith.constant 1 : index
    %c1_395 = arith.constant 1 : index
    %c0_396 = arith.constant 0 : index
    %387 = vector.load %arg8[%c1_394, %c1_395, %c0_396] : memref<10x10x8xf32, #tpu.memory_space<vmem>>, vector<8x8x8xf32>
    %388 = vector.shape_cast %387 : vector<8x8x8xf32> to vector<64x8xf32>
    %389 = arith.truncf %388 : vector<64x8xf32> to vector<64x8xbf16>
    %c3_397 = arith.constant 3 : index
    %c4_398 = arith.constant 4 : index
    %c0_399 = arith.constant 0 : index
    %c0_400 = arith.constant 0 : index
    %390 = vector.load %arg4[%c3_397, %c4_398, %c0_399, %c0_400] : memref<4x9x8x8xbf16, #tpu.memory_space<vmem>>, vector<1x1x8x8xbf16>
    %391 = vector.shape_cast %390 : vector<1x1x8x8xbf16> to vector<8x8xbf16>
    %cst_401 = arith.constant dense<0.000000e+00> : vector<64x8xf32>
    %392 = tpu.matmul %389, %391, %cst_401 {dimension_numbers = #tpu.dot_dimension_numbers<[1], [0], [0], [1], [0, 0, 1, 1], [], []>} : vector<64x8xbf16>, vector<8x8xbf16>, vector<64x8xf32> -> vector<64x8xf32>
    %393 = arith.addf %386, %392 : vector<64x8xf32>
    %c1_402 = arith.constant 1 : index
    %c2_403 = arith.constant 2 : index
    %c0_404 = arith.constant 0 : index
    %394 = vector.load %arg8[%c1_402, %c2_403, %c0_404] : memref<10x10x8xf32, #tpu.memory_space<vmem>>, vector<8x8x8xf32>
    %395 = vector.shape_cast %394 : vector<8x8x8xf32> to vector<64x8xf32>
    %396 = arith.truncf %395 : vector<64x8xf32> to vector<64x8xbf16>
    %c3_405 = arith.constant 3 : index
    %c5_406 = arith.constant 5 : index
    %c0_407 = arith.constant 0 : index
    %c0_408 = arith.constant 0 : index
    %397 = vector.load %arg4[%c3_405, %c5_406, %c0_407, %c0_408] : memref<4x9x8x8xbf16, #tpu.memory_space<vmem>>, vector<1x1x8x8xbf16>
    %398 = vector.shape_cast %397 : vector<1x1x8x8xbf16> to vector<8x8xbf16>
    %cst_409 = arith.constant dense<0.000000e+00> : vector<64x8xf32>
    %399 = tpu.matmul %396, %398, %cst_409 {dimension_numbers = #tpu.dot_dimension_numbers<[1], [0], [0], [1], [0, 0, 1, 1], [], []>} : vector<64x8xbf16>, vector<8x8xbf16>, vector<64x8xf32> -> vector<64x8xf32>
    %400 = arith.addf %393, %399 : vector<64x8xf32>
    %c2_410 = arith.constant 2 : index
    %c0_411 = arith.constant 0 : index
    %c0_412 = arith.constant 0 : index
    %401 = vector.load %arg8[%c2_410, %c0_411, %c0_412] : memref<10x10x8xf32, #tpu.memory_space<vmem>>, vector<8x8x8xf32>
    %402 = vector.shape_cast %401 : vector<8x8x8xf32> to vector<64x8xf32>
    %403 = arith.truncf %402 : vector<64x8xf32> to vector<64x8xbf16>
    %c3_413 = arith.constant 3 : index
    %c6_414 = arith.constant 6 : index
    %c0_415 = arith.constant 0 : index
    %c0_416 = arith.constant 0 : index
    %404 = vector.load %arg4[%c3_413, %c6_414, %c0_415, %c0_416] : memref<4x9x8x8xbf16, #tpu.memory_space<vmem>>, vector<1x1x8x8xbf16>
    %405 = vector.shape_cast %404 : vector<1x1x8x8xbf16> to vector<8x8xbf16>
    %cst_417 = arith.constant dense<0.000000e+00> : vector<64x8xf32>
    %406 = tpu.matmul %403, %405, %cst_417 {dimension_numbers = #tpu.dot_dimension_numbers<[1], [0], [0], [1], [0, 0, 1, 1], [], []>} : vector<64x8xbf16>, vector<8x8xbf16>, vector<64x8xf32> -> vector<64x8xf32>
    %407 = arith.addf %400, %406 : vector<64x8xf32>
    %c2_418 = arith.constant 2 : index
    %c1_419 = arith.constant 1 : index
    %c0_420 = arith.constant 0 : index
    %408 = vector.load %arg8[%c2_418, %c1_419, %c0_420] : memref<10x10x8xf32, #tpu.memory_space<vmem>>, vector<8x8x8xf32>
    %409 = vector.shape_cast %408 : vector<8x8x8xf32> to vector<64x8xf32>
    %410 = arith.truncf %409 : vector<64x8xf32> to vector<64x8xbf16>
    %c3_421 = arith.constant 3 : index
    %c7_422 = arith.constant 7 : index
    %c0_423 = arith.constant 0 : index
    %c0_424 = arith.constant 0 : index
    %411 = vector.load %arg4[%c3_421, %c7_422, %c0_423, %c0_424] : memref<4x9x8x8xbf16, #tpu.memory_space<vmem>>, vector<1x1x8x8xbf16>
    %412 = vector.shape_cast %411 : vector<1x1x8x8xbf16> to vector<8x8xbf16>
    %cst_425 = arith.constant dense<0.000000e+00> : vector<64x8xf32>
    %413 = tpu.matmul %410, %412, %cst_425 {dimension_numbers = #tpu.dot_dimension_numbers<[1], [0], [0], [1], [0, 0, 1, 1], [], []>} : vector<64x8xbf16>, vector<8x8xbf16>, vector<64x8xf32> -> vector<64x8xf32>
    %414 = arith.addf %407, %413 : vector<64x8xf32>
    %c2_426 = arith.constant 2 : index
    %c2_427 = arith.constant 2 : index
    %c0_428 = arith.constant 0 : index
    %415 = vector.load %arg8[%c2_426, %c2_427, %c0_428] : memref<10x10x8xf32, #tpu.memory_space<vmem>>, vector<8x8x8xf32>
    %416 = vector.shape_cast %415 : vector<8x8x8xf32> to vector<64x8xf32>
    %417 = arith.truncf %416 : vector<64x8xf32> to vector<64x8xbf16>
    %c3_429 = arith.constant 3 : index
    %c8_430 = arith.constant 8 : index
    %c0_431 = arith.constant 0 : index
    %c0_432 = arith.constant 0 : index
    %418 = vector.load %arg4[%c3_429, %c8_430, %c0_431, %c0_432] : memref<4x9x8x8xbf16, #tpu.memory_space<vmem>>, vector<1x1x8x8xbf16>
    %419 = vector.shape_cast %418 : vector<1x1x8x8xbf16> to vector<8x8xbf16>
    %cst_433 = arith.constant dense<0.000000e+00> : vector<64x8xf32>
    %420 = tpu.matmul %417, %419, %cst_433 {dimension_numbers = #tpu.dot_dimension_numbers<[1], [0], [0], [1], [0, 0, 1, 1], [], []>} : vector<64x8xbf16>, vector<8x8xbf16>, vector<64x8xf32> -> vector<64x8xf32>
    %421 = arith.addf %414, %420 : vector<64x8xf32>
    %422 = vector.broadcast %359 : vector<1x8xf32> to vector<64x8xf32>
    %423 = arith.addf %421, %422 : vector<64x8xf32>
    %cst_434 = arith.constant 0.000000e+00 : f32
    %424 = vector.broadcast %cst_434 : f32 to vector<64x8xf32>
    %425 = arith.maximumf %423, %424 : vector<64x8xf32>
    %c0_435 = arith.constant 0 : index
    %c0_436 = arith.constant 0 : index
    %c0_437 = arith.constant 0 : index
    %c0_438 = arith.constant 0 : index
    %426 = vector.load %arg6[%c0_435, %c0_436, %c0_437, %c0_438] : memref<1x8x8x8xf32, #tpu.memory_space<vmem>>, vector<1x8x8x8xf32>
    %427 = vector.shape_cast %426 : vector<1x8x8x8xf32> to vector<8x8x8xf32>
    %428 = vector.shape_cast %425 : vector<64x8xf32> to vector<8x8x8xf32>
    %429 = arith.addf %427, %428 : vector<8x8x8xf32>
    %c0_439 = arith.constant 0 : index
    %c0_440 = arith.constant 0 : index
    %c0_441 = arith.constant 0 : index
    %c0_442 = arith.constant 0 : index
    %430 = vector.load %arg6[%c0_439, %c0_440, %c0_441, %c0_442] : memref<1x8x8x8xf32, #tpu.memory_space<vmem>>, vector<1x8x8x8xf32>
    %431 = vector.shape_cast %430 : vector<1x8x8x8xf32> to vector<8x8x8xf32>
    %432 = vector.shape_cast %429 : vector<8x8x8xf32> to vector<1x8x8x8xf32>
    tpu.vector_store %arg6[%c0_439, %c0_440, %c0_441, %c0_442], %432 {strides = array<i32>} : memref<1x8x8x8xf32, #tpu.memory_space<vmem>>, vector<1x8x8x8xf32>,
    return
  }
  func.func @transform_0(%arg0: i32) -> (i32, i32, i32, i32) {
    %c0_i32 = arith.constant 0 : i32
    %c0_i32_0 = arith.constant 0 : i32
    %c0_i32_1 = arith.constant 0 : i32
    %c0_i32_2 = arith.constant 0 : i32
    return %arg0, %c0_i32, %c0_i32_0, %c0_i32_1 : i32, i32, i32, i32
  }
  func.func @transform_1(%arg0: i32) -> (i32, i32, i32) {
    %c0_i32 = arith.constant 0 : i32
    %c0_i32_0 = arith.constant 0 : i32
    %c0_i32_1 = arith.constant 0 : i32
    %c0_i32_2 = arith.constant 0 : i32
    return %c0_i32, %c0_i32_0, %c0_i32_1 : i32, i32, i32
  }
  func.func @transform_2(%arg0: i32) -> (i32, i32) {
    %c0_i32 = arith.constant 0 : i32
    %c0_i32_0 = arith.constant 0 : i32
    %c0_i32_1 = arith.constant 0 : i32
    return %c0_i32, %c0_i32_0 : i32, i32
  }
  func.func @transform_3(%arg0: i32) -> (i32, i32, i32, i32) {
    %c0_i32 = arith.constant 0 : i32
    %c0_i32_0 = arith.constant 0 : i32
    %c0_i32_1 = arith.constant 0 : i32
    %c0_i32_2 = arith.constant 0 : i32
    %c0_i32_3 = arith.constant 0 : i32
    return %c0_i32, %c0_i32_0, %c0_i32_1, %c0_i32_2 : i32, i32, i32, i32
  }
  func.func @transform_4(%arg0: i32) -> (i32, i32, i32) {
    %c0_i32 = arith.constant 0 : i32
    %c0_i32_0 = arith.constant 0 : i32
    %c0_i32_1 = arith.constant 0 : i32
    %c0_i32_2 = arith.constant 0 : i32
    return %c0_i32, %c0_i32_0, %c0_i32_1 : i32, i32, i32
  }
  func.func @transform_5(%arg0: i32) -> (i32, i32, i32, i32) {
    %c0_i32 = arith.constant 0 : i32
    %c0_i32_0 = arith.constant 0 : i32
    %c0_i32_1 = arith.constant 0 : i32
    %c0_i32_2 = arith.constant 0 : i32
    return %arg0, %c0_i32, %c0_i32_0, %c0_i32_1 : i32, i32, i32, i32
  }
}

</mosaic_0001>

<llo_original>
// kernel: tpu_custom_call.1
$region0: #{tpu_custom_call.1}
  #allocation0 [shape = 'u32[]', space=smem, size = 0x4, offset = 0x4, fixed_abs, tag = 'smem constant byte address 0x4 - core index']
  #allocation1 [shape = 'u32[72,128]{1,0:T(1,128)}', space=vmem, size = 0x9000, scoped, tag = 'internal scratch']
  #allocation2 [shape = 'f32[18,18,4]{2,1,0:T(8,128)}', space=vmem, size = 0x36000, scoped, tag = 'scratch operand']
  #allocation3 [shape = 'f32[10,10,8]{2,1,0:T(8,128)}', space=vmem, size = 0x14000, scoped, tag = 'scratch operand']
  %s0 = inlined_call_operand.vmem [shape: f32[2,16,16,4], index: 0, kind: input, shape index: {}]
  %s1 = inlined_call_operand.vmem [shape: bf16[9,4,8], index: 1, kind: input, shape index: {}]
  %s2 = inlined_call_operand.vmem [shape: f32[1,8], index: 2, kind: input, shape index: {}]
  %s3 = inlined_call_operand.vmem [shape: bf16[4,9,8,8], index: 3, kind: input, shape index: {}]
  %s4 = inlined_call_operand.vmem [shape: f32[4,1,8], index: 4, kind: input, shape index: {}]
  %s5 = inlined_call_operand.hbm [shape: f32[2,8,8,8], index: 5, kind: output, shape index: {}]
  %s6 = sld [smem:[#allocation0]]
  $region53: #{tpu_custom_call.1} parent=0
    _
  %s8 = ssub.s32 1, %s6
  %s9 = scalar_select 0, %s8, %s6
  $region1: #{tpu_custom_call.1} parent=0
    #allocation4 [shape = 'u8[65536]{0}', space=vmem, size = 0x10000, scoped, tag = 'output window, operand 0']
    #allocation5 [shape = 's32[2]{0}', space=sflag, size = 0x8, scoped, tag = 'scoped memory for tpu_custom_call.1']
    %10 = vsyncpa [#allocation5], 0
    %s11 = scalar_lea.sflag [#allocation5], 1
    %12 = vsyncpa %s11, 0
    loop: start=0, step=1, limit=4
    $region2: #{tpu_custom_call.1} parent=1 // loop_pre_header
      _
    $region3: #{tpu_custom_call.1} parent=1 // loop_header
      %s14 = sphi 0, %s18
      %p15 = scmp.ge.s32.totalorder %s14, 4
      %s24 = sphi 0, %s26
      %s27 = sphi 0, %s24
      %s28 = sphi 0, %s27
      %s44 = sphi 0, %s28
      %s48 = sphi 0, %s48
      %s50 = sphi 0, %s48
      %s51 = sphi 0, %s50
      %s65 = sphi 0, %s51
      %s69 = sphi 0, %s69
      %s71 = sphi 0, %s69
      %s72 = sphi 0, %s71
      %s86 = sphi 0, %s72
      %s90 = sphi 0, %s90
      %s92 = sphi 0, %s90
      %s93 = sphi 0, %s92
      %s107 = sphi 0, %s93
      %s111 = sphi 0, %s111
      %s113 = sphi 0, %s111
      %s114 = sphi 0, %s113
      %s128 = sphi 0, %s114
      %s134 = sphi 0, %s136
      %s137 = sphi 0, %s134
      %s138 = sphi 0, %s137
      %s154 = sphi 0, %s138
    $region4: #{tpu_custom_call.1} parent=1 // loop_header_branch
      %17 = sbr.rel (%p15) target = $region8
    $region5: #{tpu_custom_call.1} parent=1 // loop_body
      %s19 = ssub.s32 %s14, 1
      %s20 = ssub.s32 %s14, 2
      %s21 = sadd.s32 %s14, 1
      %s22 = ssub.s32 %s14, %s21
      %p23 = scmp.eq.s32.totalorder %s22, 0
      %s25 = sadd.s32 %s24, 1
      %s26 = scalar_select %p23, %s24, %s25
      %p29 = pneg %p23
      %p30 = scmp.eq.s32.totalorder %s14, 1
      %p31 = por %p29, %p30
      %p32 = scmp.ne.s32.totalorder %s24, %s27
      %p33 = scmp.eq.s32.totalorder %s14, 0
      %p34 = por %p32, %p33
      %p35 = scmp.ne.s32.totalorder %s24, %s27
      %p36 = scmp.eq.s32.totalorder %s19, 1
      %p37 = por %p35, %p36
      %p38 = scmp.ne.s32.totalorder %s27, %s28
      %p39 = scmp.eq.s32.totalorder %s19, 0
      %p40 = por %p38, %p39
      %p41 = scmp.ne.s32.totalorder %s27, %s28
      %p42 = scmp.eq.s32.totalorder %s20, 1
      %p43 = por %p41, %p42
      %p45 = scmp.ne.s32.totalorder %s28, %s44
      %p46 = scmp.eq.s32.totalorder %s20, 0
      %p47 = por %p45, %p46
      %s49 = sadd.s32 %s48, 1
      %p52 = scmp.eq.s32.totalorder %s14, 1
      %p53 = scmp.ne.s32.totalorder %s48, %s50
      %p54 = scmp.eq.s32.totalorder %s14, 0
      %p55 = por %p53, %p54
      %p56 = scmp.ne.s32.totalorder %s48, %s50
      %p57 = scmp.eq.s32.totalorder %s19, 1
      %p58 = por %p56, %p57
      %p59 = scmp.ne.s32.totalorder %s50, %s51
      %p60 = scmp.eq.s32.totalorder %s19, 0
      %p61 = por %p59, %p60
      %p62 = scmp.ne.s32.totalorder %s50, %s51
      %p63 = scmp.eq.s32.totalorder %s20, 1
      %p64 = por %p62, %p63
      %p66 = scmp.ne.s32.totalorder %s51, %s65
      %p67 = scmp.eq.s32.totalorder %s20, 0
      %p68 = por %p66, %p67
      %s70 = sadd.s32 %s69, 1
      %p73 = scmp.eq.s32.totalorder %s14, 1
      %p74 = scmp.ne.s32.totalorder %s69, %s71
      %p75 = scmp.eq.s32.totalorder %s14, 0
      %p76 = por %p74, %p75
      %p77 = scmp.ne.s32.totalorder %s69, %s71
      %p78 = scmp.eq.s32.totalorder %s19, 1
      %p79 = por %p77, %p78
      %p80 = scmp.ne.s32.totalorder %s71, %s72
      %p81 = scmp.eq.s32.totalorder %s19, 0
      %p82 = por %p80, %p81
      %p83 = scmp.ne.s32.totalorder %s71, %s72
      %p84 = scmp.eq.s32.totalorder %s20, 1
      %p85 = por %p83, %p84
      %p87 = scmp.ne.s32.totalorder %s72, %s86
      %p88 = scmp.eq.s32.totalorder %s20, 0
      %p89 = por %p87, %p88
      %s91 = sadd.s32 %s90, 1
      %p94 = scmp.eq.s32.totalorder %s14, 1
      %p95 = scmp.ne.s32.totalorder %s90, %s92
      %p96 = scmp.eq.s32.totalorder %s14, 0
      %p97 = por %p95, %p96
      %p98 = scmp.ne.s32.totalorder %s90, %s92
      %p99 = scmp.eq.s32.totalorder %s19, 1
      %p100 = por %p98, %p99
      %p101 = scmp.ne.s32.totalorder %s92, %s93
      %p102 = scmp.eq.s32.totalorder %s19, 0
      %p103 = por %p101, %p102
      %p104 = scmp.ne.s32.totalorder %s92, %s93
      %p105 = scmp.eq.s32.totalorder %s20, 1
      %p106 = por %p104, %p105
      %p108 = scmp.ne.s32.totalorder %s93, %s107
      %p109 = scmp.eq.s32.totalorder %s20, 0
      %p110 = por %p108, %p109
      %s112 = sadd.s32 %s111, 1
      %p115 = scmp.eq.s32.totalorder %s14, 1
      %p116 = scmp.ne.s32.totalorder %s111, %s113
      %p117 = scmp.eq.s32.totalorder %s14, 0
      %p118 = por %p116, %p117
      %p119 = scmp.ne.s32.totalorder %s111, %s113
      %p120 = scmp.eq.s32.totalorder %s19, 1
      %p121 = por %p119, %p120
      %p122 = scmp.ne.s32.totalorder %s113, %s114
      %p123 = scmp.eq.s32.totalorder %s19, 0
      %p124 = por %p122, %p123
      %p125 = scmp.ne.s32.totalorder %s113, %s114
      %p126 = scmp.eq.s32.totalorder %s20, 1
      %p127 = por %p125, %p126
      %p129 = scmp.ne.s32.totalorder %s114, %s128
      %p130 = scmp.eq.s32.totalorder %s20, 0
      %p131 = por %p129, %p130
      %s132 = ssub.s32 %s14, %s21
      %p133 = scmp.eq.s32.totalorder %s132, 0
      %s135 = sadd.s32 %s134, 1
      %s136 = scalar_select %p133, %s134, %s135
      %p139 = pneg %p133
      %p140 = scmp.eq.s32.totalorder %s14, 1
      %p141 = por %p139, %p140
      %p142 = scmp.ne.s32.totalorder %s134, %s137
      %p143 = scmp.eq.s32.totalorder %s14, 0
      %p144 = por %p142, %p143
      %p145 = scmp.ne.s32.totalorder %s134, %s137
      %p146 = scmp.eq.s32.totalorder %s19, 1
      %p147 = por %p145, %p146
      %p148 = scmp.ne.s32.totalorder %s137, %s138
      %p149 = scmp.eq.s32.totalorder %s19, 0
      %p150 = por %p148, %p149
      %p151 = scmp.ne.s32.totalorder %s137, %s138
      %p152 = scmp.eq.s32.totalorder %s20, 1
      %p153 = por %p151, %p152
      %p155 = scmp.ne.s32.totalorder %s138, %s154
      %p156 = scmp.eq.s32.totalorder %s20, 0
      %p157 = por %p155, %p156
      %p158 = scmp.le.s32.totalorder 1, %s14
      %p159 = scmp.lt.s32.totalorder %s14, 3
      %p160 = pnand %p158, %p159
      %p161 = pneg %p160
      // Predicated region
      $region9: #{tpu_custom_call.1} parent=5 // pred_check
        _
      $region10: #{tpu_custom_call.1} parent=5 // pred_check_branch
        %163 = sbr.rel (%p160) target = $region12
      $region11: #{tpu_custom_call.1} parent=5 // pred_region
        %s164 = ssub.s32 %s14, 1
        // Predicated region
        $region13: #{tpu_custom_call.1} parent=11 // pred_check
          %p165 = pneg %p61
        $region14: #{tpu_custom_call.1} parent=11 // pred_check_branch
          %167 = sbr.rel (%p165) target = $region16
        $region15: #{tpu_custom_call.1} parent=11 // pred_region
          _
        $region16: #{tpu_custom_call.1} parent=11 // pred_fallthru
          _
        // Predicated region
        $region17: #{tpu_custom_call.1} parent=11 // pred_check
          %p168 = pneg %p82
        $region18: #{tpu_custom_call.1} parent=11 // pred_check_branch
          %170 = sbr.rel (%p168) target = $region20
        $region19: #{tpu_custom_call.1} parent=11 // pred_region
          _
        $region20: #{tpu_custom_call.1} parent=11 // pred_fallthru
          _
        // Predicated region
        $region21: #{tpu_custom_call.1} parent=11 // pred_check
          %p171 = pneg %p103
        $region22: #{tpu_custom_call.1} parent=11 // pred_check_branch
          %173 = sbr.rel (%p171) target = $region24
        $region23: #{tpu_custom_call.1} parent=11 // pred_region
          _
        $region24: #{tpu_custom_call.1} parent=11 // pred_fallthru
          _
        // Predicated region
        $region25: #{tpu_custom_call.1} parent=11 // pred_check
          %p174 = pneg %p124
        $region26: #{tpu_custom_call.1} parent=11 // pred_check_branch
          %176 = sbr.rel (%p174) target = $region28
        $region27: #{tpu_custom_call.1} parent=11 // pred_region
          _
        $region28: #{tpu_custom_call.1} parent=11 // pred_fallthru
          _
      $region12: #{tpu_custom_call.1} parent=5 // pred_fallthru
        _
      %p177 = scmp.lt.s32.totalorder %s14, 2
      // Predicated region
      $region29: #{tpu_custom_call.1} parent=5 // pred_check
        %p178 = pneg %p177
      $region30: #{tpu_custom_call.1} parent=5 // pred_check_branch
        %180 = sbr.rel (%p178) target = $region32
      $region31: #{tpu_custom_call.1} parent=5 // pred_region
        // Predicated region
        $region33: #{tpu_custom_call.1} parent=31 // pred_check
          %p181 = pneg %p34
        $region34: #{tpu_custom_call.1} parent=31 // pred_check_branch
          %183 = sbr.rel (%p181) target = $region36
        $region35: #{tpu_custom_call.1} parent=31 // pred_region
          %p184 = scmp.lt.s32.totalorder %s14, 1
          %s185 = scalar_select %p184, %s14, 1
          %s186 = smul.addr %s185, 32
          %s187 = smul.addr %s186, 8
          %s188 = scalar_lea.vmem %s0, %s187
        $region36: #{tpu_custom_call.1} parent=31 // pred_fallthru
          _
      $region32: #{tpu_custom_call.1} parent=5 // pred_fallthru
        _
      %p189 = scmp.le.s32.totalorder 1, %s14
      %p190 = scmp.lt.s32.totalorder %s14, 3
      %p191 = pnand %p189, %p190
      %p192 = pneg %p191
      // Predicated region
      $region37: #{tpu_custom_call.1} parent=5 // pred_check
        _
      $region38: #{tpu_custom_call.1} parent=5 // pred_check_branch
        %194 = sbr.rel (%p191) target = $region40
      $region39: #{tpu_custom_call.1} parent=5 // pred_region
        %s195 = ssub.s32 %s14, 1
        %p196 = scmp.lt.s32.totalorder %s19, 1
        %s197 = scalar_select %p196, %s19, 1
        %s198 = smul.addr %s197, 32
        %s199 = smul.addr %s198, 8
        %s200 = scalar_lea.vmem %s0, %s199
        %p201 = pneg %p40
        %p202 = pneg %p37
        %p203 = pneg %p61
        %p204 = pneg %p58
        %p205 = pneg %p82
        %p206 = pneg %p79
        %p207 = pneg %p103
        %p208 = pneg %p100
        %p209 = pneg %p124
        %p210 = pneg %p121
        %p211 = pneg %p150
        %p212 = pneg %p147
        %s213 = sand.u32 %s137, 1
        %s214 = scalar_lea.sflag [#allocation5], %s213
        %s215 = sand.u32 %s137, 1
        %s216 = smul.addr %s215, 64
        %s217 = scalar_lea.vmem [#allocation4], %s216
        %p218 = scmp.lt.s32.totalorder %s19, 1
        %s219 = scalar_select %p218, %s19, 1
        %s220 = smul.addr %s219, 32
        %s221 = smul.addr %s220, 8
        %s222 = scalar_lea.vmem %s0, %s221
        %vm224 = vcmask 31744
        %225 = vst.msk [vmem:[#allocation2] sm:$0xff] %vm224, 0.0
        %226 = vst.msk [vmem:[#allocation2 + $0x8] sm:$0xff] %vm224, 0.0
        %vm227 = vcmask 25600
        %228 = vst.msk [vmem:[#allocation2 + $0x10] sm:$0x3] %vm227, 0.0
        %s229 = scalar_lea.vmem [#allocation2], 408
        %230 = vst.msk [vmem:[%s229] sm:$0xff] %vm224, 0.0
        %231 = vst.msk [vmem:[%s229 + $0x8] sm:$0xff] %vm224, 0.0
        %232 = vst.msk [vmem:[%s229 + $0x10] sm:$0x3] %vm227, 0.0
        %vm233 = vcmask 24576
        %234 = vst.msk [vmem:[#allocation2] sm:$0x1] %vm233, 0.0
        %235 = vst.msk [vmem:[#allocation2 + $0x18] sm:$0x1] %vm233, 0.0
        %236 = vst.msk [vmem:[#allocation2 + $0x30] sm:$0x1] %vm233, 0.0
        %237 = vst.msk [vmem:[#allocation2 + $0x48] sm:$0x1] %vm233, 0.0
        %238 = vst.msk [vmem:[#allocation2 + $0x60] sm:$0x1] %vm233, 0.0
        %239 = vst.msk [vmem:[#allocation2 + $0x78] sm:$0x1] %vm233, 0.0
        %240 = vst.msk [vmem:[#allocation2 + $0x90] sm:$0x1] %vm233, 0.0
        %241 = vst.msk [vmem:[#allocation2 + $0xa8] sm:$0x1] %vm233, 0.0
        %242 = vst.msk [vmem:[#allocation2 + $0xc0] sm:$0x1] %vm233, 0.0
        %243 = vst.msk [vmem:[#allocation2 + $0xd8] sm:$0x1] %vm233, 0.0
        %244 = vst.msk [vmem:[#allocation2 + $0xf0] sm:$0x1] %vm233, 0.0
        %245 = vst.msk [vmem:[#allocation2 + $0x108] sm:$0x1] %vm233, 0.0
        %246 = vst.msk [vmem:[#allocation2 + $0x120] sm:$0x1] %vm233, 0.0
        %247 = vst.msk [vmem:[#allocation2 + $0x138] sm:$0x1] %vm233, 0.0
        %248 = vst.msk [vmem:[#allocation2 + $0x150] sm:$0x1] %vm233, 0.0
        %249 = vst.msk [vmem:[#allocation2 + $0x168] sm:$0x1] %vm233, 0.0
        %250 = vst.msk [vmem:[#allocation2 + $0x180] sm:$0x1] %vm233, 0.0
        %251 = vst.msk [vmem:[#allocation2 + $0x198] sm:$0x1] %vm233, 0.0
        %252 = vst.msk [vmem:[#allocation2 + $0x11] sm:$0x1] %vm233, 0.0
        %253 = vst.msk [vmem:[#allocation2 + $0x29] sm:$0x1] %vm233, 0.0
        %254 = vst.msk [vmem:[#allocation2 + $0x41] sm:$0x1] %vm233, 0.0
        %255 = vst.msk [vmem:[#allocation2 + $0x59] sm:$0x1] %vm233, 0.0
        %256 = vst.msk [vmem:[#allocation2 + $0x71] sm:$0x1] %vm233, 0.0
        %257 = vst.msk [vmem:[#allocation2 + $0x89] sm:$0x1] %vm233, 0.0
        %258 = vst.msk [vmem:[#allocation2 + $0xa1] sm:$0x1] %vm233, 0.0
        %259 = vst.msk [vmem:[#allocation2 + $0xb9] sm:$0x1] %vm233, 0.0
        %260 = vst.msk [vmem:[#allocation2 + $0xd1] sm:$0x1] %vm233, 0.0
        %261 = vst.msk [vmem:[#allocation2 + $0xe9] sm:$0x1] %vm233, 0.0
        %262 = vst.msk [vmem:[#allocation2 + $0x101] sm:$0x1] %vm233, 0.0
        %263 = vst.msk [vmem:[#allocation2 + $0x119] sm:$0x1] %vm233, 0.0
        %264 = vst.msk [vmem:[#allocation2 + $0x131] sm:$0x1] %vm233, 0.0
        %265 = vst.msk [vmem:[#allocation2 + $0x149] sm:$0x1] %vm233, 0.0
        %266 = vst.msk [vmem:[#allocation2 + $0x161] sm:$0x1] %vm233, 0.0
        %267 = vst.msk [vmem:[#allocation2 + $0x179] sm:$0x1] %vm233, 0.0
        %268 = vst.msk [vmem:[#allocation2 + $0x191] sm:$0x1] %vm233, 0.0
        %269 = vst.msk [vmem:[#allocation2 + $0x1a9] sm:$0x1] %vm233, 0.0
        %v270 = vld [vmem:[%s222] sm:$0xff]
        %v271 = vld [vmem:[%s222 + $0x8] sm:$0xff]
        %v272 = vld [vmem:[%s222 + $0x10] sm:$0xff]
        %v273 = vld [vmem:[%s222 + $0x18] sm:$0xff]
        %v274 = vld [vmem:[%s222 + $0x20] sm:$0xff]
        %v275 = vld [vmem:[%s222 + $0x28] sm:$0xff]
        %v276 = vld [vmem:[%s222 + $0x30] sm:$0xff]
        %v277 = vld [vmem:[%s222 + $0x38] sm:$0xff]
        %v278 = vld [vmem:[%s222 + $0x40] sm:$0xff]
        %v279 = vld [vmem:[%s222 + $0x48] sm:$0xff]
        %v280 = vld [vmem:[%s222 + $0x50] sm:$0xff]
        %v281 = vld [vmem:[%s222 + $0x58] sm:$0xff]
        %v282 = vld [vmem:[%s222 + $0x60] sm:$0xff]
        %v283 = vld [vmem:[%s222 + $0x68] sm:$0xff]
        %v284 = vld [vmem:[%s222 + $0x70] sm:$0xff]
        %v285 = vld [vmem:[%s222 + $0x78] sm:$0xff]
        %v286 = vld [vmem:[%s222 + $0x80] sm:$0xff]
        %v287 = vld [vmem:[%s222 + $0x88] sm:$0xff]
        %v288 = vld [vmem:[%s222 + $0x90] sm:$0xff]
        %v289 = vld [vmem:[%s222 + $0x98] sm:$0xff]
        %v290 = vld [vmem:[%s222 + $0xa0] sm:$0xff]
        %v291 = vld [vmem:[%s222 + $0xa8] sm:$0xff]
        %v292 = vld [vmem:[%s222 + $0xb0] sm:$0xff]
        %v293 = vld [vmem:[%s222 + $0xb8] sm:$0xff]
        %v294 = vld [vmem:[%s222 + $0xc0] sm:$0xff]
        %v295 = vld [vmem:[%s222 + $0xc8] sm:$0xff]
        %v296 = vld [vmem:[%s222 + $0xd0] sm:$0xff]
        %v297 = vld [vmem:[%s222 + $0xd8] sm:$0xff]
        %v298 = vld [vmem:[%s222 + $0xe0] sm:$0xff]
        %v299 = vld [vmem:[%s222 + $0xe8] sm:$0xff]
        %v300 = vld [vmem:[%s222 + $0xf0] sm:$0xff]
        %v301 = vld [vmem:[%s222 + $0xf8] sm:$0xff]
        %s302 = scalar_lea.vmem [#allocation2], 24
        %303 = vst.msk [vmem:[%s302 + $0x1] sm:$0xff] %vm224, %v270
        %304 = vst.msk [vmem:[%s302 + $0x9] sm:$0xff] %vm224, %v271
        %305 = vst.msk [vmem:[%s302 + $0x19] sm:$0xff] %vm224, %v272
        %306 = vst.msk [vmem:[%s302 + $0x21] sm:$0xff] %vm224, %v273
        %307 = vst.msk [vmem:[%s302 + $0x31] sm:$0xff] %vm224, %v274
        %308 = vst.msk [vmem:[%s302 + $0x39] sm:$0xff] %vm224, %v275
        %309 = vst.msk [vmem:[%s302 + $0x49] sm:$0xff] %vm224, %v276
        %310 = vst.msk [vmem:[%s302 + $0x51] sm:$0xff] %vm224, %v277
        %311 = vst.msk [vmem:[%s302 + $0x61] sm:$0xff] %vm224, %v278
        %312 = vst.msk [vmem:[%s302 + $0x69] sm:$0xff] %vm224, %v279
        %313 = vst.msk [vmem:[%s302 + $0x79] sm:$0xff] %vm224, %v280
        %314 = vst.msk [vmem:[%s302 + $0x81] sm:$0xff] %vm224, %v281
        %315 = vst.msk [vmem:[%s302 + $0x91] sm:$0xff] %vm224, %v282
        %316 = vst.msk [vmem:[%s302 + $0x99] sm:$0xff] %vm224, %v283
        %317 = vst.msk [vmem:[%s302 + $0xa9] sm:$0xff] %vm224, %v284
        %318 = vst.msk [vmem:[%s302 + $0xb1] sm:$0xff] %vm224, %v285
        %319 = vst.msk [vmem:[%s302 + $0xc1] sm:$0xff] %vm224, %v286
        %320 = vst.msk [vmem:[%s302 + $0xc9] sm:$0xff] %vm224, %v287
        %321 = vst.msk [vmem:[%s302 + $0xd9] sm:$0xff] %vm224, %v288
        %322 = vst.msk [vmem:[%s302 + $0xe1] sm:$0xff] %vm224, %v289
        %323 = vst.msk [vmem:[%s302 + $0xf1] sm:$0xff] %vm224, %v290
        %324 = vst.msk [vmem:[%s302 + $0xf9] sm:$0xff] %vm224, %v291
        %325 = vst.msk [vmem:[%s302 + $0x109] sm:$0xff] %vm224, %v292
        %326 = vst.msk [vmem:[%s302 + $0x111] sm:$0xff] %vm224, %v293
        %327 = vst.msk [vmem:[%s302 + $0x121] sm:$0xff] %vm224, %v294
        %328 = vst.msk [vmem:[%s302 + $0x129] sm:$0xff] %vm224, %v295
        %329 = vst.msk [vmem:[%s302 + $0x139] sm:$0xff] %vm224, %v296
        %330 = vst.msk [vmem:[%s302 + $0x141] sm:$0xff] %vm224, %v297
        %331 = vst.msk [vmem:[%s302 + $0x151] sm:$0xff] %vm224, %v298
        %332 = vst.msk [vmem:[%s302 + $0x159] sm:$0xff] %vm224, %v299
        %333 = vst.msk [vmem:[%s302 + $0x169] sm:$0xff] %vm224, %v300
        %334 = vst.msk [vmem:[%s302 + $0x171] sm:$0xff] %vm224, %v301
        %v335 = vld [vmem:[%s2] sm:$0x1]
        %v336 = vld [vmem:[#allocation2] sm:$0xff]
        %v337 = vld [vmem:[#allocation2 + $0x8] sm:$0xff]
        %v338 = vld [vmem:[#allocation2 + $0x18] sm:$0xff]
        %v339 = vld [vmem:[#allocation2 + $0x20] sm:$0xff]
        %v340 = vld [vmem:[#allocation2 + $0x30] sm:$0xff]
        %v341 = vld [vmem:[#allocation2 + $0x38] sm:$0xff]
        %v342 = vld [vmem:[#allocation2 + $0x48] sm:$0xff]
        %v343 = vld [vmem:[#allocation2 + $0x50] sm:$0xff]
        %v344 = vld [vmem:[#allocation2 + $0x60] sm:$0xff]
        %v345 = vld [vmem:[#allocation2 + $0x68] sm:$0xff]
        %v346 = vld [vmem:[#allocation2 + $0x78] sm:$0xff]
        %v347 = vld [vmem:[#allocation2 + $0x80] sm:$0xff]
        %v348 = vld [vmem:[#allocation2 + $0x90] sm:$0xff]
        %v349 = vld [vmem:[#allocation2 + $0x98] sm:$0xff]
        %v350 = vld [vmem:[#allocation2 + $0xa8] sm:$0xff]
        %v351 = vld [vmem:[#allocation2 + $0xb0] sm:$0xff]
        %v352 = vld [vmem:[#allocation2 + $0xc0] sm:$0xff]
        %v353 = vld [vmem:[#allocation2 + $0xc8] sm:$0xff]
        %v354 = vld [vmem:[#allocation2 + $0xd8] sm:$0xff]
        %v355 = vld [vmem:[#allocation2 + $0xe0] sm:$0xff]
        %v356 = vld [vmem:[#allocation2 + $0xf0] sm:$0xff]
        %v357 = vld [vmem:[#allocation2 + $0xf8] sm:$0xff]
        %v358 = vld [vmem:[#allocation2 + $0x108] sm:$0xff]
        %v359 = vld [vmem:[#allocation2 + $0x110] sm:$0xff]
        %v360 = vld [vmem:[#allocation2 + $0x120] sm:$0xff]
        %v361 = vld [vmem:[#allocation2 + $0x128] sm:$0xff]
        %v362 = vld [vmem:[#allocation2 + $0x138] sm:$0xff]
        %v363 = vld [vmem:[#allocation2 + $0x140] sm:$0xff]
        %v364 = vld [vmem:[#allocation2 + $0x150] sm:$0xff]
        %v365 = vld [vmem:[#allocation2 + $0x158] sm:$0xff]
        %v366 = vld [vmem:[#allocation2 + $0x168] sm:$0xff]
        %v367 = vld [vmem:[#allocation2 + $0x170] sm:$0xff]
        %v368 = vpack.c.bf16 %v337, %v336
        %v369 = vpack.c.bf16 %v339, %v338
        %v370 = vpack.c.bf16 %v341, %v340
        %v371 = vpack.c.bf16 %v343, %v342
        %v372 = vpack.c.bf16 %v345, %v344
        %v373 = vpack.c.bf16 %v347, %v346
        %v374 = vpack.c.bf16 %v349, %v348
        %v375 = vpack.c.bf16 %v351, %v350
        %v376 = vpack.c.bf16 %v353, %v352
        %v377 = vpack.c.bf16 %v355, %v354
        %v378 = vpack.c.bf16 %v357, %v356
        %v379 = vpack.c.bf16 %v359, %v358
        %v380 = vpack.c.bf16 %v361, %v360
        %v381 = vpack.c.bf16 %v363, %v362
        %v382 = vpack.c.bf16 %v365, %v364
        %v383 = vpack.c.bf16 %v367, %v366
        %v384 = vld [vmem:[%s1] sm:$0x3]
        %v385 = vld [vmem:[#allocation2 + $0x1] sm:$0xff]
        %v386 = vld [vmem:[#allocation2 + $0x9] sm:$0xff]
        %v387 = vld [vmem:[#allocation2 + $0x19] sm:$0xff]
        %v388 = vld [vmem:[#allocation2 + $0x21] sm:$0xff]
        %v389 = vld [vmem:[#allocation2 + $0x31] sm:$0xff]
        %v390 = vld [vmem:[#allocation2 + $0x39] sm:$0xff]
        %v391 = vld [vmem:[#allocation2 + $0x49] sm:$0xff]
        %v392 = vld [vmem:[#allocation2 + $0x51] sm:$0xff]
        %v393 = vld [vmem:[#allocation2 + $0x61] sm:$0xff]
        %v394 = vld [vmem:[#allocation2 + $0x69] sm:$0xff]
        %v395 = vld [vmem:[#allocation2 + $0x79] sm:$0xff]
        %v396 = vld [vmem:[#allocation2 + $0x81] sm:$0xff]
        %v397 = vld [vmem:[#allocation2 + $0x91] sm:$0xff]
        %v398 = vld [vmem:[#allocation2 + $0x99] sm:$0xff]
        %v399 = vld [vmem:[#allocation2 + $0xa9] sm:$0xff]
        %v400 = vld [vmem:[#allocation2 + $0xb1] sm:$0xff]
        %v401 = vld [vmem:[#allocation2 + $0xc1] sm:$0xff]
        %v402 = vld [vmem:[#allocation2 + $0xc9] sm:$0xff]
        %v403 = vld [vmem:[#allocation2 + $0xd9] sm:$0xff]
        %v404 = vld [vmem:[#allocation2 + $0xe1] sm:$0xff]
        %v405 = vld [vmem:[#allocation2 + $0xf1] sm:$0xff]
        %v406 = vld [vmem:[#allocation2 + $0xf9] sm:$0xff]
        %v407 = vld [vmem:[#allocation2 + $0x109] sm:$0xff]
        %v408 = vld [vmem:[#allocation2 + $0x111] sm:$0xff]
        %v409 = vld [vmem:[#allocation2 + $0x121] sm:$0xff]
        %v410 = vld [vmem:[#allocation2 + $0x129] sm:$0xff]
        %v411 = vld [vmem:[#allocation2 + $0x139] sm:$0xff]
        %v412 = vld [vmem:[#allocation2 + $0x141] sm:$0xff]
        %v413 = vld [vmem:[#allocation2 + $0x151] sm:$0xff]
        %v414 = vld [vmem:[#allocation2 + $0x159] sm:$0xff]
        %v415 = vld [vmem:[#allocation2 + $0x169] sm:$0xff]
        %v416 = vld [vmem:[#allocation2 + $0x171] sm:$0xff]
        %v417 = vpack.c.bf16 %v386, %v385
        %v418 = vpack.c.bf16 %v388, %v387
        %v419 = vpack.c.bf16 %v390, %v389
        %v420 = vpack.c.bf16 %v392, %v391
        %v421 = vpack.c.bf16 %v394, %v393
        %v422 = vpack.c.bf16 %v396, %v395
        %v423 = vpack.c.bf16 %v398, %v397
        %v424 = vpack.c.bf16 %v400, %v399
        %v425 = vpack.c.bf16 %v402, %v401
        %v426 = vpack.c.bf16 %v404, %v403
        %v427 = vpack.c.bf16 %v406, %v405
        %v428 = vpack.c.bf16 %v408, %v407
        %v429 = vpack.c.bf16 %v410, %v409
        %v430 = vpack.c.bf16 %v412, %v411
        %v431 = vpack.c.bf16 %v414, %v413
        %v432 = vpack.c.bf16 %v416, %v415
        %s433 = scalar_lea.vmem %s1, 2
        %v434 = vld [vmem:[%s433] sm:$0x3]
        %v436 = vsel %vm224, %v417, 0
        %v439 = vsel %vm224, %v418, 0
        %v442 = vsel %vm224, %v419, 0
        %v445 = vsel %vm224, %v420, 0
        %v448 = vsel %vm224, %v421, 0
        %v451 = vsel %vm224, %v422, 0
        %v454 = vsel %vm224, %v423, 0
        %v457 = vsel %vm224, %v424, 0
        %v460 = vsel %vm224, %v425, 0
        %v463 = vsel %vm224, %v426, 0
        %v466 = vsel %vm224, %v427, 0
        %v469 = vsel %vm224, %v428, 0
        %v472 = vsel %vm224, %v429, 0
        %v475 = vsel %vm224, %v430, 0
        %v478 = vsel %vm224, %v431, 0
        %v481 = vsel %vm224, %v432, 0
        %vm483 = vcmask 1041408
        %v485 = vsel %vm483, %v434, 0
        %487 = vmatpush.bf16.msra.mxu0 0
        %488 = vmatpush.bf16.msra.mxu0 0
        %489 = vmatpush.bf16.msra.mxu0 0
        %490 = vmatpush.bf16.msra.mxu0 0
        %491 = vmatpush.bf16.msra.mxu0 0
        %492 = vmatpush.bf16.msra.mxu0 0
        %493 = vmatpush.bf16.msra.mxu0 0
        %494 = vmatpush.bf16.msra.mxu0 %v485
        %495 = vmatmul.bf16.gmra.mxu0 %v436
        %v496 = vpop.f32.mrf.mxu0
        %v497 = vadd.f32 0.0, %v496
        %v498 = vpop.f32.mrf.mxu0
        %v499 = vadd.f32 0.0, %v498
        %500 = vmatmul.bf16.gmra.mxu0 %v439
        %v501 = vpop.f32.mrf.mxu0
        %v502 = vadd.f32 0.0, %v501
        %v503 = vpop.f32.mrf.mxu0
        %v504 = vadd.f32 0.0, %v503
        %505 = vmatmul.bf16.gmra.mxu0 %v442
        %v506 = vpop.f32.mrf.mxu0
        %v507 = vadd.f32 0.0, %v506
        %v508 = vpop.f32.mrf.mxu0
        %v509 = vadd.f32 0.0, %v508
        %510 = vmatmul.bf16.gmra.mxu0 %v445
        %v511 = vpop.f32.mrf.mxu0
        %v512 = vadd.f32 0.0, %v511
        %v513 = vpop.f32.mrf.mxu0
        %v514 = vadd.f32 0.0, %v513
        %515 = vmatmul.bf16.gmra.mxu0 %v448
        %v516 = vpop.f32.mrf.mxu0
        %v517 = vadd.f32 0.0, %v516
        %v518 = vpop.f32.mrf.mxu0
        %v519 = vadd.f32 0.0, %v518
        %520 = vmatmul.bf16.gmra.mxu0 %v451
        %v521 = vpop.f32.mrf.mxu0
        %v522 = vadd.f32 0.0, %v521
        %v523 = vpop.f32.mrf.mxu0
        %v524 = vadd.f32 0.0, %v523
        %525 = vmatmul.bf16.gmra.mxu0 %v454
        %v526 = vpop.f32.mrf.mxu0
        %v527 = vadd.f32 0.0, %v526
        %v528 = vpop.f32.mrf.mxu0
        %v529 = vadd.f32 0.0, %v528
        %530 = vmatmul.bf16.gmra.mxu0 %v457
        %v531 = vpop.f32.mrf.mxu0
        %v532 = vadd.f32 0.0, %v531
        %v533 = vpop.f32.mrf.mxu0
        %v534 = vadd.f32 0.0, %v533
        %535 = vmatmul.bf16.gmra.mxu0 %v460
        %v536 = vpop.f32.mrf.mxu0
        %v537 = vadd.f32 0.0, %v536
        %v538 = vpop.f32.mrf.mxu0
        %v539 = vadd.f32 0.0, %v538
        %540 = vmatmul.bf16.gmra.mxu0 %v463
        %v541 = vpop.f32.mrf.mxu0
        %v542 = vadd.f32 0.0, %v541
        %v543 = vpop.f32.mrf.mxu0
        %v544 = vadd.f32 0.0, %v543
        %545 = vmatmul.bf16.gmra.mxu0 %v466
        %v546 = vpop.f32.mrf.mxu0
        %v547 = vadd.f32 0.0, %v546
        %v548 = vpop.f32.mrf.mxu0
        %v549 = vadd.f32 0.0, %v548
        %550 = vmatmul.bf16.gmra.mxu0 %v469
        %v551 = vpop.f32.mrf.mxu0
        %v552 = vadd.f32 0.0, %v551
        %v553 = vpop.f32.mrf.mxu0
        %v554 = vadd.f32 0.0, %v553
        %555 = vmatmul.bf16.gmra.mxu0 %v472
        %v556 = vpop.f32.mrf.mxu0
        %v557 = vadd.f32 0.0, %v556
        %v558 = vpop.f32.mrf.mxu0
        %v559 = vadd.f32 0.0, %v558
        %560 = vmatmul.bf16.gmra.mxu0 %v475
        %v561 = vpop.f32.mrf.mxu0
        %v562 = vadd.f32 0.0, %v561
        %v563 = vpop.f32.mrf.mxu0
        %v564 = vadd.f32 0.0, %v563
        %565 = vmatmul.bf16.gmra.mxu0 %v478
        %v566 = vpop.f32.mrf.mxu0
        %v567 = vadd.f32 0.0, %v566
        %v568 = vpop.f32.mrf.mxu0
        %v569 = vadd.f32 0.0, %v568
        %570 = vmatmul.bf16.gmra.mxu0 %v481
        %v571 = vpop.f32.mrf.mxu0
        %v572 = vadd.f32 0.0, %v571
        %v573 = vpop.f32.mrf.mxu0
        %v574 = vadd.f32 0.0, %v573
        %575 = vdwg.mxu0
        %v577 = vsel %vm224, %v368, 0
        %v580 = vsel %vm224, %v369, 0
        %v583 = vsel %vm224, %v370, 0
        %v586 = vsel %vm224, %v371, 0
        %v589 = vsel %vm224, %v372, 0
        %v592 = vsel %vm224, %v373, 0
        %v595 = vsel %vm224, %v374, 0
        %v598 = vsel %vm224, %v375, 0
        %v601 = vsel %vm224, %v376, 0
        %v604 = vsel %vm224, %v377, 0
        %v607 = vsel %vm224, %v378, 0
        %v610 = vsel %vm224, %v379, 0
        %v613 = vsel %vm224, %v380, 0
        %v616 = vsel %vm224, %v381, 0
        %v619 = vsel %vm224, %v382, 0
        %v622 = vsel %vm224, %v383, 0
        %v625 = vsel %vm483, %v384, 0
        %627 = vmatpush.bf16.msra.mxu0 0
        %628 = vmatpush.bf16.msra.mxu0 0
        %629 = vmatpush.bf16.msra.mxu0 0
        %630 = vmatpush.bf16.msra.mxu0 0
        %631 = vmatpush.bf16.msra.mxu0 0
        %632 = vmatpush.bf16.msra.mxu0 0
        %633 = vmatpush.bf16.msra.mxu0 0
        %634 = vmatpush.bf16.msra.mxu0 %v625
        %635 = vmatmul.bf16.gmra.mxu0 %v577
        %v636 = vpop.f32.mrf.mxu0
        %v637 = vadd.f32 %v497, %v636
        %v638 = vpop.f32.mrf.mxu0
        %v639 = vadd.f32 %v499, %v638
        %640 = vmatmul.bf16.gmra.mxu0 %v580
        %v641 = vpop.f32.mrf.mxu0
        %v642 = vadd.f32 %v502, %v641
        %v643 = vpop.f32.mrf.mxu0
        %v644 = vadd.f32 %v504, %v643
        %645 = vmatmul.bf16.gmra.mxu0 %v583
        %v646 = vpop.f32.mrf.mxu0
        %v647 = vadd.f32 %v507, %v646
        %v648 = vpop.f32.mrf.mxu0
        %v649 = vadd.f32 %v509, %v648
        %650 = vmatmul.bf16.gmra.mxu0 %v586
        %v651 = vpop.f32.mrf.mxu0
        %v652 = vadd.f32 %v512, %v651
        %v653 = vpop.f32.mrf.mxu0
        %v654 = vadd.f32 %v514, %v653
        %655 = vmatmul.bf16.gmra.mxu0 %v589
        %v656 = vpop.f32.mrf.mxu0
        %v657 = vadd.f32 %v517, %v656
        %v658 = vpop.f32.mrf.mxu0
        %v659 = vadd.f32 %v519, %v658
        %660 = vmatmul.bf16.gmra.mxu0 %v592
        %v661 = vpop.f32.mrf.mxu0
        %v662 = vadd.f32 %v522, %v661
        %v663 = vpop.f32.mrf.mxu0
        %v664 = vadd.f32 %v524, %v663
        %665 = vmatmul.bf16.gmra.mxu0 %v595
        %v666 = vpop.f32.mrf.mxu0
        %v667 = vadd.f32 %v527, %v666
        %v668 = vpop.f32.mrf.mxu0
        %v669 = vadd.f32 %v529, %v668
        %670 = vmatmul.bf16.gmra.mxu0 %v598
        %v671 = vpop.f32.mrf.mxu0
        %v672 = vadd.f32 %v532, %v671
        %v673 = vpop.f32.mrf.mxu0
        %v674 = vadd.f32 %v534, %v673
        %675 = vmatmul.bf16.gmra.mxu0 %v601
        %v676 = vpop.f32.mrf.mxu0
        %v677 = vadd.f32 %v537, %v676
        %v678 = vpop.f32.mrf.mxu0
        %v679 = vadd.f32 %v539, %v678
        %680 = vmatmul.bf16.gmra.mxu0 %v604
        %v681 = vpop.f32.mrf.mxu0
        %v682 = vadd.f32 %v542, %v681
        %v683 = vpop.f32.mrf.mxu0
        %v684 = vadd.f32 %v544, %v683
        %685 = vmatmul.bf16.gmra.mxu0 %v607
        %v686 = vpop.f32.mrf.mxu0
        %v687 = vadd.f32 %v547, %v686
        %v688 = vpop.f32.mrf.mxu0
        %v689 = vadd.f32 %v549, %v688
        %690 = vmatmul.bf16.gmra.mxu0 %v610
        %v691 = vpop.f32.mrf.mxu0
        %v692 = vadd.f32 %v552, %v691
        %v693 = vpop.f32.mrf.mxu0
        %v694 = vadd.f32 %v554, %v693
        %695 = vmatmul.bf16.gmra.mxu0 %v613
        %v696 = vpop.f32.mrf.mxu0
        %v697 = vadd.f32 %v557, %v696
        %v698 = vpop.f32.mrf.mxu0
        %v699 = vadd.f32 %v559, %v698
        %700 = vmatmul.bf16.gmra.mxu0 %v616
        %v701 = vpop.f32.mrf.mxu0
        %v702 = vadd.f32 %v562, %v701
        %v703 = vpop.f32.mrf.mxu0
        %v704 = vadd.f32 %v564, %v703
        %705 = vmatmul.bf16.gmra.mxu0 %v619
        %v706 = vpop.f32.mrf.mxu0
        %v707 = vadd.f32 %v567, %v706
        %v708 = vpop.f32.mrf.mxu0
        %v709 = vadd.f32 %v569, %v708
        %710 = vmatmul.bf16.gmra.mxu0 %v622
        %v711 = vpop.f32.mrf.mxu0
        %v712 = vadd.f32 %v572, %v711
        %v713 = vpop.f32.mrf.mxu0
        %v714 = vadd.f32 %v574, %v713
        %715 = vdwg.mxu0
        %v716 = vld [vmem:[#allocation2 + $0x2] sm:$0xff]
        %v717 = vld [vmem:[#allocation2 + $0xa] sm:$0xff]
        %v718 = vld [vmem:[#allocation2 + $0x1a] sm:$0xff]
        %v719 = vld [vmem:[#allocation2 + $0x22] sm:$0xff]
        %v720 = vld [vmem:[#allocation2 + $0x32] sm:$0xff]
        %v721 = vld [vmem:[#allocation2 + $0x3a] sm:$0xff]
        %v722 = vld [vmem:[#allocation2 + $0x4a] sm:$0xff]
        %v723 = vld [vmem:[#allocation2 + $0x52] sm:$0xff]
        %v724 = vld [vmem:[#allocation2 + $0x62] sm:$0xff]
        %v725 = vld [vmem:[#allocation2 + $0x6a] sm:$0xff]
        %v726 = vld [vmem:[#allocation2 + $0x7a] sm:$0xff]
        %v727 = vld [vmem:[#allocation2 + $0x82] sm:$0xff]
        %v728 = vld [vmem:[#allocation2 + $0x92] sm:$0xff]
        %v729 = vld [vmem:[#allocation2 + $0x9a] sm:$0xff]
        %v730 = vld [vmem:[#allocation2 + $0xaa] sm:$0xff]
        %v731 = vld [vmem:[#allocation2 + $0xb2] sm:$0xff]
        %v732 = vld [vmem:[#allocation2 + $0xc2] sm:$0xff]
        %v733 = vld [vmem:[#allocation2 + $0xca] sm:$0xff]
        %v734 = vld [vmem:[#allocation2 + $0xda] sm:$0xff]
        %v735 = vld [vmem:[#allocation2 + $0xe2] sm:$0xff]
        %v736 = vld [vmem:[#allocation2 + $0xf2] sm:$0xff]
        %v737 = vld [vmem:[#allocation2 + $0xfa] sm:$0xff]
        %v738 = vld [vmem:[#allocation2 + $0x10a] sm:$0xff]
        %v739 = vld [vmem:[#allocation2 + $0x112] sm:$0xff]
        %v740 = vld [vmem:[#allocation2 + $0x122] sm:$0xff]
        %v741 = vld [vmem:[#allocation2 + $0x12a] sm:$0xff]
        %v742 = vld [vmem:[#allocation2 + $0x13a] sm:$0xff]
        %v743 = vld [vmem:[#allocation2 + $0x142] sm:$0xff]
        %v744 = vld [vmem:[#allocation2 + $0x152] sm:$0xff]
        %v745 = vld [vmem:[#allocation2 + $0x15a] sm:$0xff]
        %v746 = vld [vmem:[#allocation2 + $0x16a] sm:$0xff]
        %v747 = vld [vmem:[#allocation2 + $0x172] sm:$0xff]
        %v748 = vpack.c.bf16 %v717, %v716
        %v749 = vpack.c.bf16 %v719, %v718
        %v750 = vpack.c.bf16 %v721, %v720
        %v751 = vpack.c.bf16 %v723, %v722
        %v752 = vpack.c.bf16 %v725, %v724
        %v753 = vpack.c.bf16 %v727, %v726
        %v754 = vpack.c.bf16 %v729, %v728
        %v755 = vpack.c.bf16 %v731, %v730
        %v756 = vpack.c.bf16 %v733, %v732
        %v757 = vpack.c.bf16 %v735, %v734
        %v758 = vpack.c.bf16 %v737, %v736
        %v759 = vpack.c.bf16 %v739, %v738
        %v760 = vpack.c.bf16 %v741, %v740
        %v761 = vpack.c.bf16 %v743, %v742
        %v762 = vpack.c.bf16 %v745, %v744
        %v763 = vpack.c.bf16 %v747, %v746
        %s764 = scalar_lea.vmem %s1, 4
        %v765 = vld [vmem:[%s764] sm:$0x3]
        %v767 = vsel %vm224, %v748, 0
        %v770 = vsel %vm224, %v749, 0
        %v773 = vsel %vm224, %v750, 0
        %v776 = vsel %vm224, %v751, 0
        %v779 = vsel %vm224, %v752, 0
        %v782 = vsel %vm224, %v753, 0
        %v785 = vsel %vm224, %v754, 0
        %v788 = vsel %vm224, %v755, 0
        %v791 = vsel %vm224, %v756, 0
        %v794 = vsel %vm224, %v757, 0
        %v797 = vsel %vm224, %v758, 0
        %v800 = vsel %vm224, %v759, 0
        %v803 = vsel %vm224, %v760, 0
        %v806 = vsel %vm224, %v761, 0
        %v809 = vsel %vm224, %v762, 0
        %v812 = vsel %vm224, %v763, 0
        %v815 = vsel %vm483, %v765, 0
        %817 = vmatpush.bf16.msra.mxu0 0
        %818 = vmatpush.bf16.msra.mxu0 0
        %819 = vmatpush.bf16.msra.mxu0 0
        %820 = vmatpush.bf16.msra.mxu0 0
        %821 = vmatpush.bf16.msra.mxu0 0
        %822 = vmatpush.bf16.msra.mxu0 0
        %823 = vmatpush.bf16.msra.mxu0 0
        %824 = vmatpush.bf16.msra.mxu0 %v815
        %825 = vmatmul.bf16.gmra.mxu0 %v767
        %v826 = vpop.f32.mrf.mxu0
        %v827 = vadd.f32 0.0, %v826
        %v828 = vpop.f32.mrf.mxu0
        %v829 = vadd.f32 0.0, %v828
        %830 = vmatmul.bf16.gmra.mxu0 %v770
        %v831 = vpop.f32.mrf.mxu0
        %v832 = vadd.f32 0.0, %v831
        %v833 = vpop.f32.mrf.mxu0
        %v834 = vadd.f32 0.0, %v833
        %835 = vmatmul.bf16.gmra.mxu0 %v773
        %v836 = vpop.f32.mrf.mxu0
        %v837 = vadd.f32 0.0, %v836
        %v838 = vpop.f32.mrf.mxu0
        %v839 = vadd.f32 0.0, %v838
        %840 = vmatmul.bf16.gmra.mxu0 %v776
        %v841 = vpop.f32.mrf.mxu0
        %v842 = vadd.f32 0.0, %v841
        %v843 = vpop.f32.mrf.mxu0
        %v844 = vadd.f32 0.0, %v843
        %845 = vmatmul.bf16.gmra.mxu0 %v779
        %v846 = vpop.f32.mrf.mxu0
        %v847 = vadd.f32 0.0, %v846
        %v848 = vpop.f32.mrf.mxu0
        %v849 = vadd.f32 0.0, %v848
        %850 = vmatmul.bf16.gmra.mxu0 %v782
        %v851 = vpop.f32.mrf.mxu0
        %v852 = vadd.f32 0.0, %v851
        %v853 = vpop.f32.mrf.mxu0
        %v854 = vadd.f32 0.0, %v853
        %855 = vmatmul.bf16.gmra.mxu0 %v785
        %v856 = vpop.f32.mrf.mxu0
        %v857 = vadd.f32 0.0, %v856
        %v858 = vpop.f32.mrf.mxu0
        %v859 = vadd.f32 0.0, %v858
        %860 = vmatmul.bf16.gmra.mxu0 %v788
        %v861 = vpop.f32.mrf.mxu0
        %v862 = vadd.f32 0.0, %v861
        %v863 = vpop.f32.mrf.mxu0
        %v864 = vadd.f32 0.0, %v863
        %865 = vmatmul.bf16.gmra.mxu0 %v791
        %v866 = vpop.f32.mrf.mxu0
        %v867 = vadd.f32 0.0, %v866
        %v868 = vpop.f32.mrf.mxu0
        %v869 = vadd.f32 0.0, %v868
        %870 = vmatmul.bf16.gmra.mxu0 %v794
        %v871 = vpop.f32.mrf.mxu0
        %v872 = vadd.f32 0.0, %v871
        %v873 = vpop.f32.mrf.mxu0
        %v874 = vadd.f32 0.0, %v873
        %875 = vmatmul.bf16.gmra.mxu0 %v797
        %v876 = vpop.f32.mrf.mxu0
        %v877 = vadd.f32 0.0, %v876
        %v878 = vpop.f32.mrf.mxu0
        %v879 = vadd.f32 0.0, %v878
        %880 = vmatmul.bf16.gmra.mxu0 %v800
        %v881 = vpop.f32.mrf.mxu0
        %v882 = vadd.f32 0.0, %v881
        %v883 = vpop.f32.mrf.mxu0
        %v884 = vadd.f32 0.0, %v883
        %885 = vmatmul.bf16.gmra.mxu0 %v803
        %v886 = vpop.f32.mrf.mxu0
        %v887 = vadd.f32 0.0, %v886
        %v888 = vpop.f32.mrf.mxu0
        %v889 = vadd.f32 0.0, %v888
        %890 = vmatmul.bf16.gmra.mxu0 %v806
        %v891 = vpop.f32.mrf.mxu0
        %v892 = vadd.f32 0.0, %v891
        %v893 = vpop.f32.mrf.mxu0
        %v894 = vadd.f32 0.0, %v893
        %895 = vmatmul.bf16.gmra.mxu0 %v809
        %v896 = vpop.f32.mrf.mxu0
        %v897 = vadd.f32 0.0, %v896
        %v898 = vpop.f32.mrf.mxu0
        %v899 = vadd.f32 0.0, %v898
        %900 = vmatmul.bf16.gmra.mxu0 %v812
        %v901 = vpop.f32.mrf.mxu0
        %v902 = vadd.f32 0.0, %v901
        %v903 = vpop.f32.mrf.mxu0
        %v904 = vadd.f32 0.0, %v903
        %905 = vdwg.mxu0
        %v906 = vadd.f32 %v637, %v827
        %v907 = vadd.f32 %v639, %v829
        %v908 = vadd.f32 %v642, %v832
        %v909 = vadd.f32 %v644, %v834
        %v910 = vadd.f32 %v647, %v837
        %v911 = vadd.f32 %v649, %v839
        %v912 = vadd.f32 %v652, %v842
        %v913 = vadd.f32 %v654, %v844
        %v914 = vadd.f32 %v657, %v847
        %v915 = vadd.f32 %v659, %v849
        %v916 = vadd.f32 %v662, %v852
        %v917 = vadd.f32 %v664, %v854
        %v918 = vadd.f32 %v667, %v857
        %v919 = vadd.f32 %v669, %v859
        %v920 = vadd.f32 %v672, %v862
        %v921 = vadd.f32 %v674, %v864
        %v922 = vadd.f32 %v677, %v867
        %v923 = vadd.f32 %v679, %v869
        %v924 = vadd.f32 %v682, %v872
        %v925 = vadd.f32 %v684, %v874
        %v926 = vadd.f32 %v687, %v877
        %v927 = vadd.f32 %v689, %v879
        %v928 = vadd.f32 %v692, %v882
        %v929 = vadd.f32 %v694, %v884
        %v930 = vadd.f32 %v697, %v887
        %v931 = vadd.f32 %v699, %v889
        %v932 = vadd.f32 %v702, %v892
        %v933 = vadd.f32 %v704, %v894
        %v934 = vadd.f32 %v707, %v897
        %v935 = vadd.f32 %v709, %v899
        %v936 = vadd.f32 %v712, %v902
        %v937 = vadd.f32 %v714, %v904
        %v938 = vld [vmem:[%s302] sm:$0xff]
        %v939 = vld [vmem:[%s302 + $0x8] sm:$0xff]
        %v940 = vld [vmem:[%s302 + $0x18] sm:$0xff]
        %v941 = vld [vmem:[%s302 + $0x20] sm:$0xff]
        %v942 = vld [vmem:[%s302 + $0x30] sm:$0xff]
        %v943 = vld [vmem:[%s302 + $0x38] sm:$0xff]
        %v944 = vld [vmem:[%s302 + $0x48] sm:$0xff]
        %v945 = vld [vmem:[%s302 + $0x50] sm:$0xff]
        %v946 = vld [vmem:[%s302 + $0x60] sm:$0xff]
        %v947 = vld [vmem:[%s302 + $0x68] sm:$0xff]
        %v948 = vld [vmem:[%s302 + $0x78] sm:$0xff]
        %v949 = vld [vmem:[%s302 + $0x80] sm:$0xff]
        %v950 = vld [vmem:[%s302 + $0x90] sm:$0xff]
        %v951 = vld [vmem:[%s302 + $0x98] sm:$0xff]
        %v952 = vld [vmem:[%s302 + $0xa8] sm:$0xff]
        %v953 = vld [vmem:[%s302 + $0xb0] sm:$0xff]
        %v954 = vld [vmem:[%s302 + $0xc0] sm:$0xff]
        %v955 = vld [vmem:[%s302 + $0xc8] sm:$0xff]
        %v956 = vld [vmem:[%s302 + $0xd8] sm:$0xff]
        %v957 = vld [vmem:[%s302 + $0xe0] sm:$0xff]
        %v958 = vld [vmem:[%s302 + $0xf0] sm:$0xff]
        %v959 = vld [vmem:[%s302 + $0xf8] sm:$0xff]
        %v960 = vld [vmem:[%s302 + $0x108] sm:$0xff]
        %v961 = vld [vmem:[%s302 + $0x110] sm:$0xff]
        %v962 = vld [vmem:[%s302 + $0x120] sm:$0xff]
        %v963 = vld [vmem:[%s302 + $0x128] sm:$0xff]
        %v964 = vld [vmem:[%s302 + $0x138] sm:$0xff]
        %v965 = vld [vmem:[%s302 + $0x140] sm:$0xff]
        %v966 = vld [vmem:[%s302 + $0x150] sm:$0xff]
        %v967 = vld [vmem:[%s302 + $0x158] sm:$0xff]
        %v968 = vld [vmem:[%s302 + $0x168] sm:$0xff]
        %v969 = vld [vmem:[%s302 + $0x170] sm:$0xff]
        %v970 = vpack.c.bf16 %v939, %v938
        %v971 = vpack.c.bf16 %v941, %v940
        %v972 = vpack.c.bf16 %v943, %v942
        %v973 = vpack.c.bf16 %v945, %v944
        %v974 = vpack.c.bf16 %v947, %v946
        %v975 = vpack.c.bf16 %v949, %v948
        %v976 = vpack.c.bf16 %v951, %v950
        %v977 = vpack.c.bf16 %v953, %v952
        %v978 = vpack.c.bf16 %v955, %v954
        %v979 = vpack.c.bf16 %v957, %v956
        %v980 = vpack.c.bf16 %v959, %v958
        %v981 = vpack.c.bf16 %v961, %v960
        %v982 = vpack.c.bf16 %v963, %v962
        %v983 = vpack.c.bf16 %v965, %v964
        %v984 = vpack.c.bf16 %v967, %v966
        %v985 = vpack.c.bf16 %v969, %v968
        %s986 = scalar_lea.vmem %s1, 6
        %v987 = vld [vmem:[%s986] sm:$0x3]
        %v989 = vsel %vm224, %v970, 0
        %v992 = vsel %vm224, %v971, 0
        %v995 = vsel %vm224, %v972, 0
        %v998 = vsel %vm224, %v973, 0
        %v1001 = vsel %vm224, %v974, 0
        %v1004 = vsel %vm224, %v975, 0
        %v1007 = vsel %vm224, %v976, 0
        %v1010 = vsel %vm224, %v977, 0
        %v1013 = vsel %vm224, %v978, 0
        %v1016 = vsel %vm224, %v979, 0
        %v1019 = vsel %vm224, %v980, 0
        %v1022 = vsel %vm224, %v981, 0
        %v1025 = vsel %vm224, %v982, 0
        %v1028 = vsel %vm224, %v983, 0
        %v1031 = vsel %vm224, %v984, 0
        %v1034 = vsel %vm224, %v985, 0
        %v1037 = vsel %vm483, %v987, 0
        %1039 = vmatpush.bf16.msra.mxu0 0
        %1040 = vmatpush.bf16.msra.mxu0 0
        %1041 = vmatpush.bf16.msra.mxu0 0
        %1042 = vmatpush.bf16.msra.mxu0 0
        %1043 = vmatpush.bf16.msra.mxu0 0
        %1044 = vmatpush.bf16.msra.mxu0 0
        %1045 = vmatpush.bf16.msra.mxu0 0
        %1046 = vmatpush.bf16.msra.mxu0 %v1037
        %1047 = vmatmul.bf16.gmra.mxu0 %v989
        %v1048 = vpop.f32.mrf.mxu0
        %v1049 = vadd.f32 0.0, %v1048
        %v1050 = vpop.f32.mrf.mxu0
        %v1051 = vadd.f32 0.0, %v1050
        %1052 = vmatmul.bf16.gmra.mxu0 %v992
        %v1053 = vpop.f32.mrf.mxu0
        %v1054 = vadd.f32 0.0, %v1053
        %v1055 = vpop.f32.mrf.mxu0
        %v1056 = vadd.f32 0.0, %v1055
        %1057 = vmatmul.bf16.gmra.mxu0 %v995
        %v1058 = vpop.f32.mrf.mxu0
        %v1059 = vadd.f32 0.0, %v1058
        %v1060 = vpop.f32.mrf.mxu0
        %v1061 = vadd.f32 0.0, %v1060
        %1062 = vmatmul.bf16.gmra.mxu0 %v998
        %v1063 = vpop.f32.mrf.mxu0
        %v1064 = vadd.f32 0.0, %v1063
        %v1065 = vpop.f32.mrf.mxu0
        %v1066 = vadd.f32 0.0, %v1065
        %1067 = vmatmul.bf16.gmra.mxu0 %v1001
        %v1068 = vpop.f32.mrf.mxu0
        %v1069 = vadd.f32 0.0, %v1068
        %v1070 = vpop.f32.mrf.mxu0
        %v1071 = vadd.f32 0.0, %v1070
        %1072 = vmatmul.bf16.gmra.mxu0 %v1004
        %v1073 = vpop.f32.mrf.mxu0
        %v1074 = vadd.f32 0.0, %v1073
        %v1075 = vpop.f32.mrf.mxu0
        %v1076 = vadd.f32 0.0, %v1075
        %1077 = vmatmul.bf16.gmra.mxu0 %v1007
        %v1078 = vpop.f32.mrf.mxu0
        %v1079 = vadd.f32 0.0, %v1078
        %v1080 = vpop.f32.mrf.mxu0
        %v1081 = vadd.f32 0.0, %v1080
        %1082 = vmatmul.bf16.gmra.mxu0 %v1010
        %v1083 = vpop.f32.mrf.mxu0
        %v1084 = vadd.f32 0.0, %v1083
        %v1085 = vpop.f32.mrf.mxu0
        %v1086 = vadd.f32 0.0, %v1085
        %1087 = vmatmul.bf16.gmra.mxu0 %v1013
        %v1088 = vpop.f32.mrf.mxu0
        %v1089 = vadd.f32 0.0, %v1088
        %v1090 = vpop.f32.mrf.mxu0
        %v1091 = vadd.f32 0.0, %v1090
        %1092 = vmatmul.bf16.gmra.mxu0 %v1016
        %v1093 = vpop.f32.mrf.mxu0
        %v1094 = vadd.f32 0.0, %v1093
        %v1095 = vpop.f32.mrf.mxu0
        %v1096 = vadd.f32 0.0, %v1095
        %1097 = vmatmul.bf16.gmra.mxu0 %v1019
        %v1098 = vpop.f32.mrf.mxu0
        %v1099 = vadd.f32 0.0, %v1098
        %v1100 = vpop.f32.mrf.mxu0
        %v1101 = vadd.f32 0.0, %v1100
        %1102 = vmatmul.bf16.gmra.mxu0 %v1022
        %v1103 = vpop.f32.mrf.mxu0
        %v1104 = vadd.f32 0.0, %v1103
        %v1105 = vpop.f32.mrf.mxu0
        %v1106 = vadd.f32 0.0, %v1105
        %1107 = vmatmul.bf16.gmra.mxu0 %v1025
        %v1108 = vpop.f32.mrf.mxu0
        %v1109 = vadd.f32 0.0, %v1108
        %v1110 = vpop.f32.mrf.mxu0
        %v1111 = vadd.f32 0.0, %v1110
        %1112 = vmatmul.bf16.gmra.mxu0 %v1028
        %v1113 = vpop.f32.mrf.mxu0
        %v1114 = vadd.f32 0.0, %v1113
        %v1115 = vpop.f32.mrf.mxu0
        %v1116 = vadd.f32 0.0, %v1115
        %1117 = vmatmul.bf16.gmra.mxu0 %v1031
        %v1118 = vpop.f32.mrf.mxu0
        %v1119 = vadd.f32 0.0, %v1118
        %v1120 = vpop.f32.mrf.mxu0
        %v1121 = vadd.f32 0.0, %v1120
        %1122 = vmatmul.bf16.gmra.mxu0 %v1034
        %v1123 = vpop.f32.mrf.mxu0
        %v1124 = vadd.f32 0.0, %v1123
        %v1125 = vpop.f32.mrf.mxu0
        %v1126 = vadd.f32 0.0, %v1125
        %1127 = vdwg.mxu0
        %v1128 = vadd.f32 %v906, %v1049
        %v1129 = vadd.f32 %v907, %v1051
        %v1130 = vadd.f32 %v908, %v1054
        %v1131 = vadd.f32 %v909, %v1056
        %v1132 = vadd.f32 %v910, %v1059
        %v1133 = vadd.f32 %v911, %v1061
        %v1134 = vadd.f32 %v912, %v1064
        %v1135 = vadd.f32 %v913, %v1066
        %v1136 = vadd.f32 %v914, %v1069
        %v1137 = vadd.f32 %v915, %v1071
        %v1138 = vadd.f32 %v916, %v1074
        %v1139 = vadd.f32 %v917, %v1076
        %v1140 = vadd.f32 %v918, %v1079
        %v1141 = vadd.f32 %v919, %v1081
        %v1142 = vadd.f32 %v920, %v1084
        %v1143 = vadd.f32 %v921, %v1086
        %v1144 = vadd.f32 %v922, %v1089
        %v1145 = vadd.f32 %v923, %v1091
        %v1146 = vadd.f32 %v924, %v1094
        %v1147 = vadd.f32 %v925, %v1096
        %v1148 = vadd.f32 %v926, %v1099
        %v1149 = vadd.f32 %v927, %v1101
        %v1150 = vadd.f32 %v928, %v1104
        %v1151 = vadd.f32 %v929, %v1106
        %v1152 = vadd.f32 %v930, %v1109
        %v1153 = vadd.f32 %v931, %v1111
        %v1154 = vadd.f32 %v932, %v1114
        %v1155 = vadd.f32 %v933, %v1116
        %v1156 = vadd.f32 %v934, %v1119
        %v1157 = vadd.f32 %v935, %v1121
        %v1158 = vadd.f32 %v936, %v1124
        %v1159 = vadd.f32 %v937, %v1126
        %v1160 = vld [vmem:[%s302 + $0x1] sm:$0xff]
        %v1161 = vld [vmem:[%s302 + $0x9] sm:$0xff]
        %v1162 = vld [vmem:[%s302 + $0x19] sm:$0xff]
        %v1163 = vld [vmem:[%s302 + $0x21] sm:$0xff]
        %v1164 = vld [vmem:[%s302 + $0x31] sm:$0xff]
        %v1165 = vld [vmem:[%s302 + $0x39] sm:$0xff]
        %v1166 = vld [vmem:[%s302 + $0x49] sm:$0xff]
        %v1167 = vld [vmem:[%s302 + $0x51] sm:$0xff]
        %v1168 = vld [vmem:[%s302 + $0x61] sm:$0xff]
        %v1169 = vld [vmem:[%s302 + $0x69] sm:$0xff]
        %v1170 = vld [vmem:[%s302 + $0x79] sm:$0xff]
        %v1171 = vld [vmem:[%s302 + $0x81] sm:$0xff]
        %v1172 = vld [vmem:[%s302 + $0x91] sm:$0xff]
        %v1173 = vld [vmem:[%s302 + $0x99] sm:$0xff]
        %v1174 = vld [vmem:[%s302 + $0xa9] sm:$0xff]
        %v1175 = vld [vmem:[%s302 + $0xb1] sm:$0xff]
        %v1176 = vld [vmem:[%s302 + $0xc1] sm:$0xff]
        %v1177 = vld [vmem:[%s302 + $0xc9] sm:$0xff]
        %v1178 = vld [vmem:[%s302 + $0xd9] sm:$0xff]
        %v1179 = vld [vmem:[%s302 + $0xe1] sm:$0xff]
        %v1180 = vld [vmem:[%s302 + $0xf1] sm:$0xff]
        %v1181 = vld [vmem:[%s302 + $0xf9] sm:$0xff]
        %v1182 = vld [vmem:[%s302 + $0x109] sm:$0xff]
        %v1183 = vld [vmem:[%s302 + $0x111] sm:$0xff]
        %v1184 = vld [vmem:[%s302 + $0x121] sm:$0xff]
        %v1185 = vld [vmem:[%s302 + $0x129] sm:$0xff]
        %v1186 = vld [vmem:[%s302 + $0x139] sm:$0xff]
        %v1187 = vld [vmem:[%s302 + $0x141] sm:$0xff]
        %v1188 = vld [vmem:[%s302 + $0x151] sm:$0xff]
        %v1189 = vld [vmem:[%s302 + $0x159] sm:$0xff]
        %v1190 = vld [vmem:[%s302 + $0x169] sm:$0xff]
        %v1191 = vld [vmem:[%s302 + $0x171] sm:$0xff]
        %v1192 = vpack.c.bf16 %v1161, %v1160
        %v1193 = vpack.c.bf16 %v1163, %v1162
        %v1194 = vpack.c.bf16 %v1165, %v1164
        %v1195 = vpack.c.bf16 %v1167, %v1166
        %v1196 = vpack.c.bf16 %v1169, %v1168
        %v1197 = vpack.c.bf16 %v1171, %v1170
        %v1198 = vpack.c.bf16 %v1173, %v1172
        %v1199 = vpack.c.bf16 %v1175, %v1174
        %v1200 = vpack.c.bf16 %v1177, %v1176
        %v1201 = vpack.c.bf16 %v1179, %v1178
        %v1202 = vpack.c.bf16 %v1181, %v1180
        %v1203 = vpack.c.bf16 %v1183, %v1182
        %v1204 = vpack.c.bf16 %v1185, %v1184
        %v1205 = vpack.c.bf16 %v1187, %v1186
        %v1206 = vpack.c.bf16 %v1189, %v1188
        %v1207 = vpack.c.bf16 %v1191, %v1190
        %s1208 = scalar_lea.vmem %s1, 8
        %v1209 = vld [vmem:[%s1208] sm:$0x3]
        %v1211 = vsel %vm224, %v1192, 0
        %v1214 = vsel %vm224, %v1193, 0
        %v1217 = vsel %vm224, %v1194, 0
        %v1220 = vsel %vm224, %v1195, 0
        %v1223 = vsel %vm224, %v1196, 0
        %v1226 = vsel %vm224, %v1197, 0
        %v1229 = vsel %vm224, %v1198, 0
        %v1232 = vsel %vm224, %v1199, 0
        %v1235 = vsel %vm224, %v1200, 0
        %v1238 = vsel %vm224, %v1201, 0
        %v1241 = vsel %vm224, %v1202, 0
        %v1244 = vsel %vm224, %v1203, 0
        %v1247 = vsel %vm224, %v1204, 0
        %v1250 = vsel %vm224, %v1205, 0
        %v1253 = vsel %vm224, %v1206, 0
        %v1256 = vsel %vm224, %v1207, 0
        %v1259 = vsel %vm483, %v1209, 0
        %1261 = vmatpush.bf16.msra.mxu0 0
        %1262 = vmatpush.bf16.msra.mxu0 0
        %1263 = vmatpush.bf16.msra.mxu0 0
        %1264 = vmatpush.bf16.msra.mxu0 0
        %1265 = vmatpush.bf16.msra.mxu0 0
        %1266 = vmatpush.bf16.msra.mxu0 0
        %1267 = vmatpush.bf16.msra.mxu0 0
        %1268 = vmatpush.bf16.msra.mxu0 %v1259
        %1269 = vmatmul.bf16.gmra.mxu0 %v1211
        %v1270 = vpop.f32.mrf.mxu0
        %v1271 = vadd.f32 0.0, %v1270
        %v1272 = vpop.f32.mrf.mxu0
        %v1273 = vadd.f32 0.0, %v1272
        %1274 = vmatmul.bf16.gmra.mxu0 %v1214
        %v1275 = vpop.f32.mrf.mxu0
        %v1276 = vadd.f32 0.0, %v1275
        %v1277 = vpop.f32.mrf.mxu0
        %v1278 = vadd.f32 0.0, %v1277
        %1279 = vmatmul.bf16.gmra.mxu0 %v1217
        %v1280 = vpop.f32.mrf.mxu0
        %v1281 = vadd.f32 0.0, %v1280
        %v1282 = vpop.f32.mrf.mxu0
        %v1283 = vadd.f32 0.0, %v1282
        %1284 = vmatmul.bf16.gmra.mxu0 %v1220
        %v1285 = vpop.f32.mrf.mxu0
        %v1286 = vadd.f32 0.0, %v1285
        %v1287 = vpop.f32.mrf.mxu0
        %v1288 = vadd.f32 0.0, %v1287
        %1289 = vmatmul.bf16.gmra.mxu0 %v1223
        %v1290 = vpop.f32.mrf.mxu0
        %v1291 = vadd.f32 0.0, %v1290
        %v1292 = vpop.f32.mrf.mxu0
        %v1293 = vadd.f32 0.0, %v1292
        %1294 = vmatmul.bf16.gmra.mxu0 %v1226
        %v1295 = vpop.f32.mrf.mxu0
        %v1296 = vadd.f32 0.0, %v1295
        %v1297 = vpop.f32.mrf.mxu0
        %v1298 = vadd.f32 0.0, %v1297
        %1299 = vmatmul.bf16.gmra.mxu0 %v1229
        %v1300 = vpop.f32.mrf.mxu0
        %v1301 = vadd.f32 0.0, %v1300
        %v1302 = vpop.f32.mrf.mxu0
        %v1303 = vadd.f32 0.0, %v1302
        %1304 = vmatmul.bf16.gmra.mxu0 %v1232
        %v1305 = vpop.f32.mrf.mxu0
        %v1306 = vadd.f32 0.0, %v1305
        %v1307 = vpop.f32.mrf.mxu0
        %v1308 = vadd.f32 0.0, %v1307
        %1309 = vmatmul.bf16.gmra.mxu0 %v1235
        %v1310 = vpop.f32.mrf.mxu0
        %v1311 = vadd.f32 0.0, %v1310
        %v1312 = vpop.f32.mrf.mxu0
        %v1313 = vadd.f32 0.0, %v1312
        %1314 = vmatmul.bf16.gmra.mxu0 %v1238
        %v1315 = vpop.f32.mrf.mxu0
        %v1316 = vadd.f32 0.0, %v1315
        %v1317 = vpop.f32.mrf.mxu0
        %v1318 = vadd.f32 0.0, %v1317
        %1319 = vmatmul.bf16.gmra.mxu0 %v1241
        %v1320 = vpop.f32.mrf.mxu0
        %v1321 = vadd.f32 0.0, %v1320
        %v1322 = vpop.f32.mrf.mxu0
        %v1323 = vadd.f32 0.0, %v1322
        %1324 = vmatmul.bf16.gmra.mxu0 %v1244
        %v1325 = vpop.f32.mrf.mxu0
        %v1326 = vadd.f32 0.0, %v1325
        %v1327 = vpop.f32.mrf.mxu0
        %v1328 = vadd.f32 0.0, %v1327
        %1329 = vmatmul.bf16.gmra.mxu0 %v1247
        %v1330 = vpop.f32.mrf.mxu0
        %v1331 = vadd.f32 0.0, %v1330
        %v1332 = vpop.f32.mrf.mxu0
        %v1333 = vadd.f32 0.0, %v1332
        %1334 = vmatmul.bf16.gmra.mxu0 %v1250
        %v1335 = vpop.f32.mrf.mxu0
        %v1336 = vadd.f32 0.0, %v1335
        %v1337 = vpop.f32.mrf.mxu0
        %v1338 = vadd.f32 0.0, %v1337
        %1339 = vmatmul.bf16.gmra.mxu0 %v1253
        %v1340 = vpop.f32.mrf.mxu0
        %v1341 = vadd.f32 0.0, %v1340
        %v1342 = vpop.f32.mrf.mxu0
        %v1343 = vadd.f32 0.0, %v1342
        %1344 = vmatmul.bf16.gmra.mxu0 %v1256
        %v1345 = vpop.f32.mrf.mxu0
        %v1346 = vadd.f32 0.0, %v1345
        %v1347 = vpop.f32.mrf.mxu0
        %v1348 = vadd.f32 0.0, %v1347
        %1349 = vdwg.mxu0
        %v1350 = vadd.f32 %v1128, %v1271
        %v1351 = vadd.f32 %v1129, %v1273
        %v1352 = vadd.f32 %v1130, %v1276
        %v1353 = vadd.f32 %v1131, %v1278
        %v1354 = vadd.f32 %v1132, %v1281
        %v1355 = vadd.f32 %v1133, %v1283
        %v1356 = vadd.f32 %v1134, %v1286
        %v1357 = vadd.f32 %v1135, %v1288
        %v1358 = vadd.f32 %v1136, %v1291
        %v1359 = vadd.f32 %v1137, %v1293
        %v1360 = vadd.f32 %v1138, %v1296
        %v1361 = vadd.f32 %v1139, %v1298
        %v1362 = vadd.f32 %v1140, %v1301
        %v1363 = vadd.f32 %v1141, %v1303
        %v1364 = vadd.f32 %v1142, %v1306
        %v1365 = vadd.f32 %v1143, %v1308
        %v1366 = vadd.f32 %v1144, %v1311
        %v1367 = vadd.f32 %v1145, %v1313
        %v1368 = vadd.f32 %v1146, %v1316
        %v1369 = vadd.f32 %v1147, %v1318
        %v1370 = vadd.f32 %v1148, %v1321
        %v1371 = vadd.f32 %v1149, %v1323
        %v1372 = vadd.f32 %v1150, %v1326
        %v1373 = vadd.f32 %v1151, %v1328
        %v1374 = vadd.f32 %v1152, %v1331
        %v1375 = vadd.f32 %v1153, %v1333
        %v1376 = vadd.f32 %v1154, %v1336
        %v1377 = vadd.f32 %v1155, %v1338
        %v1378 = vadd.f32 %v1156, %v1341
        %v1379 = vadd.f32 %v1157, %v1343
        %v1380 = vadd.f32 %v1158, %v1346
        %v1381 = vadd.f32 %v1159, %v1348
        %v1382 = vld [vmem:[%s302 + $0x2] sm:$0xff]
        %v1383 = vld [vmem:[%s302 + $0xa] sm:$0xff]
        %v1384 = vld [vmem:[%s302 + $0x1a] sm:$0xff]
        %v1385 = vld [vmem:[%s302 + $0x22] sm:$0xff]
        %v1386 = vld [vmem:[%s302 + $0x32] sm:$0xff]
        %v1387 = vld [vmem:[%s302 + $0x3a] sm:$0xff]
        %v1388 = vld [vmem:[%s302 + $0x4a] sm:$0xff]
        %v1389 = vld [vmem:[%s302 + $0x52] sm:$0xff]
        %v1390 = vld [vmem:[%s302 + $0x62] sm:$0xff]
        %v1391 = vld [vmem:[%s302 + $0x6a] sm:$0xff]
        %v1392 = vld [vmem:[%s302 + $0x7a] sm:$0xff]
        %v1393 = vld [vmem:[%s302 + $0x82] sm:$0xff]
        %v1394 = vld [vmem:[%s302 + $0x92] sm:$0xff]
        %v1395 = vld [vmem:[%s302 + $0x9a] sm:$0xff]
        %v1396 = vld [vmem:[%s302 + $0xaa] sm:$0xff]
        %v1397 = vld [vmem:[%s302 + $0xb2] sm:$0xff]
        %v1398 = vld [vmem:[%s302 + $0xc2] sm:$0xff]
        %v1399 = vld [vmem:[%s302 + $0xca] sm:$0xff]
        %v1400 = vld [vmem:[%s302 + $0xda] sm:$0xff]
        %v1401 = vld [vmem:[%s302 + $0xe2] sm:$0xff]
        %v1402 = vld [vmem:[%s302 + $0xf2] sm:$0xff]
        %v1403 = vld [vmem:[%s302 + $0xfa] sm:$0xff]
        %v1404 = vld [vmem:[%s302 + $0x10a] sm:$0xff]
        %v1405 = vld [vmem:[%s302 + $0x112] sm:$0xff]
        %v1406 = vld [vmem:[%s302 + $0x122] sm:$0xff]
        %v1407 = vld [vmem:[%s302 + $0x12a] sm:$0xff]
        %v1408 = vld [vmem:[%s302 + $0x13a] sm:$0xff]
        %v1409 = vld [vmem:[%s302 + $0x142] sm:$0xff]
        %v1410 = vld [vmem:[%s302 + $0x152] sm:$0xff]
        %v1411 = vld [vmem:[%s302 + $0x15a] sm:$0xff]
        %v1412 = vld [vmem:[%s302 + $0x16a] sm:$0xff]
        %v1413 = vld [vmem:[%s302 + $0x172] sm:$0xff]
        %v1414 = vpack.c.bf16 %v1383, %v1382
        %v1415 = vpack.c.bf16 %v1385, %v1384
        %v1416 = vpack.c.bf16 %v1387, %v1386
        %v1417 = vpack.c.bf16 %v1389, %v1388
        %v1418 = vpack.c.bf16 %v1391, %v1390
        %v1419 = vpack.c.bf16 %v1393, %v1392
        %v1420 = vpack.c.bf16 %v1395, %v1394
        %v1421 = vpack.c.bf16 %v1397, %v1396
        %v1422 = vpack.c.bf16 %v1399, %v1398
        %v1423 = vpack.c.bf16 %v1401, %v1400
        %v1424 = vpack.c.bf16 %v1403, %v1402
        %v1425 = vpack.c.bf16 %v1405, %v1404
        %v1426 = vpack.c.bf16 %v1407, %v1406
        %v1427 = vpack.c.bf16 %v1409, %v1408
        %v1428 = vpack.c.bf16 %v1411, %v1410
        %v1429 = vpack.c.bf16 %v1413, %v1412
        %s1430 = scalar_lea.vmem %s1, 10
        %v1431 = vld [vmem:[%s1430] sm:$0x3]
        %v1433 = vsel %vm224, %v1414, 0
        %v1436 = vsel %vm224, %v1415, 0
        %v1439 = vsel %vm224, %v1416, 0
        %v1442 = vsel %vm224, %v1417, 0
        %v1445 = vsel %vm224, %v1418, 0
        %v1448 = vsel %vm224, %v1419, 0
        %v1451 = vsel %vm224, %v1420, 0
        %v1454 = vsel %vm224, %v1421, 0
        %v1457 = vsel %vm224, %v1422, 0
        %v1460 = vsel %vm224, %v1423, 0
        %v1463 = vsel %vm224, %v1424, 0
        %v1466 = vsel %vm224, %v1425, 0
        %v1469 = vsel %vm224, %v1426, 0
        %v1472 = vsel %vm224, %v1427, 0
        %v1475 = vsel %vm224, %v1428, 0
        %v1478 = vsel %vm224, %v1429, 0
        %v1481 = vsel %vm483, %v1431, 0
        %1483 = vmatpush.bf16.msra.mxu0 0
        %1484 = vmatpush.bf16.msra.mxu0 0
        %1485 = vmatpush.bf16.msra.mxu0 0
        %1486 = vmatpush.bf16.msra.mxu0 0
        %1487 = vmatpush.bf16.msra.mxu0 0
        %1488 = vmatpush.bf16.msra.mxu0 0
        %1489 = vmatpush.bf16.msra.mxu0 0
        %1490 = vmatpush.bf16.msra.mxu0 %v1481
        %1491 = vmatmul.bf16.gmra.mxu0 %v1433
        %v1492 = vpop.f32.mrf.mxu0
        %v1493 = vadd.f32 0.0, %v1492
        %v1494 = vpop.f32.mrf.mxu0
        %v1495 = vadd.f32 0.0, %v1494
        %1496 = vmatmul.bf16.gmra.mxu0 %v1436
        %v1497 = vpop.f32.mrf.mxu0
        %v1498 = vadd.f32 0.0, %v1497
        %v1499 = vpop.f32.mrf.mxu0
        %v1500 = vadd.f32 0.0, %v1499
        %1501 = vmatmul.bf16.gmra.mxu0 %v1439
        %v1502 = vpop.f32.mrf.mxu0
        %v1503 = vadd.f32 0.0, %v1502
        %v1504 = vpop.f32.mrf.mxu0
        %v1505 = vadd.f32 0.0, %v1504
        %1506 = vmatmul.bf16.gmra.mxu0 %v1442
        %v1507 = vpop.f32.mrf.mxu0
        %v1508 = vadd.f32 0.0, %v1507
        %v1509 = vpop.f32.mrf.mxu0
        %v1510 = vadd.f32 0.0, %v1509
        %1511 = vmatmul.bf16.gmra.mxu0 %v1445
        %v1512 = vpop.f32.mrf.mxu0
        %v1513 = vadd.f32 0.0, %v1512
        %v1514 = vpop.f32.mrf.mxu0
        %v1515 = vadd.f32 0.0, %v1514
        %1516 = vmatmul.bf16.gmra.mxu0 %v1448
        %v1517 = vpop.f32.mrf.mxu0
        %v1518 = vadd.f32 0.0, %v1517
        %v1519 = vpop.f32.mrf.mxu0
        %v1520 = vadd.f32 0.0, %v1519
        %1521 = vmatmul.bf16.gmra.mxu0 %v1451
        %v1522 = vpop.f32.mrf.mxu0
        %v1523 = vadd.f32 0.0, %v1522
        %v1524 = vpop.f32.mrf.mxu0
        %v1525 = vadd.f32 0.0, %v1524
        %1526 = vmatmul.bf16.gmra.mxu0 %v1454
        %v1527 = vpop.f32.mrf.mxu0
        %v1528 = vadd.f32 0.0, %v1527
        %v1529 = vpop.f32.mrf.mxu0
        %v1530 = vadd.f32 0.0, %v1529
        %1531 = vmatmul.bf16.gmra.mxu0 %v1457
        %v1532 = vpop.f32.mrf.mxu0
        %v1533 = vadd.f32 0.0, %v1532
        %v1534 = vpop.f32.mrf.mxu0
        %v1535 = vadd.f32 0.0, %v1534
        %1536 = vmatmul.bf16.gmra.mxu0 %v1460
        %v1537 = vpop.f32.mrf.mxu0
        %v1538 = vadd.f32 0.0, %v1537
        %v1539 = vpop.f32.mrf.mxu0
        %v1540 = vadd.f32 0.0, %v1539
        %1541 = vmatmul.bf16.gmra.mxu0 %v1463
        %v1542 = vpop.f32.mrf.mxu0
        %v1543 = vadd.f32 0.0, %v1542
        %v1544 = vpop.f32.mrf.mxu0
        %v1545 = vadd.f32 0.0, %v1544
        %1546 = vmatmul.bf16.gmra.mxu0 %v1466
        %v1547 = vpop.f32.mrf.mxu0
        %v1548 = vadd.f32 0.0, %v1547
        %v1549 = vpop.f32.mrf.mxu0
        %v1550 = vadd.f32 0.0, %v1549
        %1551 = vmatmul.bf16.gmra.mxu0 %v1469
        %v1552 = vpop.f32.mrf.mxu0
        %v1553 = vadd.f32 0.0, %v1552
        %v1554 = vpop.f32.mrf.mxu0
        %v1555 = vadd.f32 0.0, %v1554
        %1556 = vmatmul.bf16.gmra.mxu0 %v1472
        %v1557 = vpop.f32.mrf.mxu0
        %v1558 = vadd.f32 0.0, %v1557
        %v1559 = vpop.f32.mrf.mxu0
        %v1560 = vadd.f32 0.0, %v1559
        %1561 = vmatmul.bf16.gmra.mxu0 %v1475
        %v1562 = vpop.f32.mrf.mxu0
        %v1563 = vadd.f32 0.0, %v1562
        %v1564 = vpop.f32.mrf.mxu0
        %v1565 = vadd.f32 0.0, %v1564
        %1566 = vmatmul.bf16.gmra.mxu0 %v1478
        %v1567 = vpop.f32.mrf.mxu0
        %v1568 = vadd.f32 0.0, %v1567
        %v1569 = vpop.f32.mrf.mxu0
        %v1570 = vadd.f32 0.0, %v1569
        %1571 = vdwg.mxu0
        %v1572 = vadd.f32 %v1350, %v1493
        %v1573 = vadd.f32 %v1351, %v1495
        %v1574 = vadd.f32 %v1352, %v1498
        %v1575 = vadd.f32 %v1353, %v1500
        %v1576 = vadd.f32 %v1354, %v1503
        %v1577 = vadd.f32 %v1355, %v1505
        %v1578 = vadd.f32 %v1356, %v1508
        %v1579 = vadd.f32 %v1357, %v1510
        %v1580 = vadd.f32 %v1358, %v1513
        %v1581 = vadd.f32 %v1359, %v1515
        %v1582 = vadd.f32 %v1360, %v1518
        %v1583 = vadd.f32 %v1361, %v1520
        %v1584 = vadd.f32 %v1362, %v1523
        %v1585 = vadd.f32 %v1363, %v1525
        %v1586 = vadd.f32 %v1364, %v1528
        %v1587 = vadd.f32 %v1365, %v1530
        %v1588 = vadd.f32 %v1366, %v1533
        %v1589 = vadd.f32 %v1367, %v1535
        %v1590 = vadd.f32 %v1368, %v1538
        %v1591 = vadd.f32 %v1369, %v1540
        %v1592 = vadd.f32 %v1370, %v1543
        %v1593 = vadd.f32 %v1371, %v1545
        %v1594 = vadd.f32 %v1372, %v1548
        %v1595 = vadd.f32 %v1373, %v1550
        %v1596 = vadd.f32 %v1374, %v1553
        %v1597 = vadd.f32 %v1375, %v1555
        %v1598 = vadd.f32 %v1376, %v1558
        %v1599 = vadd.f32 %v1377, %v1560
        %v1600 = vadd.f32 %v1378, %v1563
        %v1601 = vadd.f32 %v1379, %v1565
        %v1602 = vadd.f32 %v1380, %v1568
        %v1603 = vadd.f32 %v1381, %v1570
        %s1604 = scalar_lea.vmem [#allocation2], 48
        %v1605 = vld [vmem:[%s1604] sm:$0xff]
        %v1606 = vld [vmem:[%s1604 + $0x8] sm:$0xff]
        %v1607 = vld [vmem:[%s1604 + $0x18] sm:$0xff]
        %v1608 = vld [vmem:[%s1604 + $0x20] sm:$0xff]
        %v1609 = vld [vmem:[%s1604 + $0x30] sm:$0xff]
        %v1610 = vld [vmem:[%s1604 + $0x38] sm:$0xff]
        %v1611 = vld [vmem:[%s1604 + $0x48] sm:$0xff]
        %v1612 = vld [vmem:[%s1604 + $0x50] sm:$0xff]
        %v1613 = vld [vmem:[%s1604 + $0x60] sm:$0xff]
        %v1614 = vld [vmem:[%s1604 + $0x68] sm:$0xff]
        %v1615 = vld [vmem:[%s1604 + $0x78] sm:$0xff]
        %v1616 = vld [vmem:[%s1604 + $0x80] sm:$0xff]
        %v1617 = vld [vmem:[%s1604 + $0x90] sm:$0xff]
        %v1618 = vld [vmem:[%s1604 + $0x98] sm:$0xff]
        %v1619 = vld [vmem:[%s1604 + $0xa8] sm:$0xff]
        %v1620 = vld [vmem:[%s1604 + $0xb0] sm:$0xff]
        %v1621 = vld [vmem:[%s1604 + $0xc0] sm:$0xff]
        %v1622 = vld [vmem:[%s1604 + $0xc8] sm:$0xff]
        %v1623 = vld [vmem:[%s1604 + $0xd8] sm:$0xff]
        %v1624 = vld [vmem:[%s1604 + $0xe0] sm:$0xff]
        %v1625 = vld [vmem:[%s1604 + $0xf0] sm:$0xff]
        %v1626 = vld [vmem:[%s1604 + $0xf8] sm:$0xff]
        %v1627 = vld [vmem:[%s1604 + $0x108] sm:$0xff]
        %v1628 = vld [vmem:[%s1604 + $0x110] sm:$0xff]
        %v1629 = vld [vmem:[%s1604 + $0x120] sm:$0xff]
        %v1630 = vld [vmem:[%s1604 + $0x128] sm:$0xff]
        %v1631 = vld [vmem:[%s1604 + $0x138] sm:$0xff]
        %v1632 = vld [vmem:[%s1604 + $0x140] sm:$0xff]
        %v1633 = vld [vmem:[%s1604 + $0x150] sm:$0xff]
        %v1634 = vld [vmem:[%s1604 + $0x158] sm:$0xff]
        %v1635 = vld [vmem:[%s1604 + $0x168] sm:$0xff]
        %v1636 = vld [vmem:[%s1604 + $0x170] sm:$0xff]
        %v1637 = vpack.c.bf16 %v1606, %v1605
        %v1638 = vpack.c.bf16 %v1608, %v1607
        %v1639 = vpack.c.bf16 %v1610, %v1609
        %v1640 = vpack.c.bf16 %v1612, %v1611
        %v1641 = vpack.c.bf16 %v1614, %v1613
        %v1642 = vpack.c.bf16 %v1616, %v1615
        %v1643 = vpack.c.bf16 %v1618, %v1617
        %v1644 = vpack.c.bf16 %v1620, %v1619
        %v1645 = vpack.c.bf16 %v1622, %v1621
        %v1646 = vpack.c.bf16 %v1624, %v1623
        %v1647 = vpack.c.bf16 %v1626, %v1625
        %v1648 = vpack.c.bf16 %v1628, %v1627
        %v1649 = vpack.c.bf16 %v1630, %v1629
        %v1650 = vpack.c.bf16 %v1632, %v1631
        %v1651 = vpack.c.bf16 %v1634, %v1633
        %v1652 = vpack.c.bf16 %v1636, %v1635
        %s1653 = scalar_lea.vmem %s1, 12
        %v1654 = vld [vmem:[%s1653] sm:$0x3]
        %v1656 = vsel %vm224, %v1637, 0
        %v1659 = vsel %vm224, %v1638, 0
        %v1662 = vsel %vm224, %v1639, 0
        %v1665 = vsel %vm224, %v1640, 0
        %v1668 = vsel %vm224, %v1641, 0
        %v1671 = vsel %vm224, %v1642, 0
        %v1674 = vsel %vm224, %v1643, 0
        %v1677 = vsel %vm224, %v1644, 0
        %v1680 = vsel %vm224, %v1645, 0
        %v1683 = vsel %vm224, %v1646, 0
        %v1686 = vsel %vm224, %v1647, 0
        %v1689 = vsel %vm224, %v1648, 0
        %v1692 = vsel %vm224, %v1649, 0
        %v1695 = vsel %vm224, %v1650, 0
        %v1698 = vsel %vm224, %v1651, 0
        %v1701 = vsel %vm224, %v1652, 0
        %v1704 = vsel %vm483, %v1654, 0
        %1706 = vmatpush.bf16.msra.mxu0 0
        %1707 = vmatpush.bf16.msra.mxu0 0
        %1708 = vmatpush.bf16.msra.mxu0 0
        %1709 = vmatpush.bf16.msra.mxu0 0
        %1710 = vmatpush.bf16.msra.mxu0 0
        %1711 = vmatpush.bf16.msra.mxu0 0
        %1712 = vmatpush.bf16.msra.mxu0 0
        %1713 = vmatpush.bf16.msra.mxu0 %v1704
        %1714 = vmatmul.bf16.gmra.mxu0 %v1656
        %v1715 = vpop.f32.mrf.mxu0
        %v1716 = vadd.f32 0.0, %v1715
        %v1717 = vpop.f32.mrf.mxu0
        %v1718 = vadd.f32 0.0, %v1717
        %1719 = vmatmul.bf16.gmra.mxu0 %v1659
        %v1720 = vpop.f32.mrf.mxu0
        %v1721 = vadd.f32 0.0, %v1720
        %v1722 = vpop.f32.mrf.mxu0
        %v1723 = vadd.f32 0.0, %v1722
        %1724 = vmatmul.bf16.gmra.mxu0 %v1662
        %v1725 = vpop.f32.mrf.mxu0
        %v1726 = vadd.f32 0.0, %v1725
        %v1727 = vpop.f32.mrf.mxu0
        %v1728 = vadd.f32 0.0, %v1727
        %1729 = vmatmul.bf16.gmra.mxu0 %v1665
        %v1730 = vpop.f32.mrf.mxu0
        %v1731 = vadd.f32 0.0, %v1730
        %v1732 = vpop.f32.mrf.mxu0
        %v1733 = vadd.f32 0.0, %v1732
        %1734 = vmatmul.bf16.gmra.mxu0 %v1668
        %v1735 = vpop.f32.mrf.mxu0
        %v1736 = vadd.f32 0.0, %v1735
        %v1737 = vpop.f32.mrf.mxu0
        %v1738 = vadd.f32 0.0, %v1737
        %1739 = vmatmul.bf16.gmra.mxu0 %v1671
        %v1740 = vpop.f32.mrf.mxu0
        %v1741 = vadd.f32 0.0, %v1740
        %v1742 = vpop.f32.mrf.mxu0
        %v1743 = vadd.f32 0.0, %v1742
        %1744 = vmatmul.bf16.gmra.mxu0 %v1674
        %v1745 = vpop.f32.mrf.mxu0
        %v1746 = vadd.f32 0.0, %v1745
        %v1747 = vpop.f32.mrf.mxu0
        %v1748 = vadd.f32 0.0, %v1747
        %1749 = vmatmul.bf16.gmra.mxu0 %v1677
        %v1750 = vpop.f32.mrf.mxu0
        %v1751 = vadd.f32 0.0, %v1750
        %v1752 = vpop.f32.mrf.mxu0
        %v1753 = vadd.f32 0.0, %v1752
        %1754 = vmatmul.bf16.gmra.mxu0 %v1680
        %v1755 = vpop.f32.mrf.mxu0
        %v1756 = vadd.f32 0.0, %v1755
        %v1757 = vpop.f32.mrf.mxu0
        %v1758 = vadd.f32 0.0, %v1757
        %1759 = vmatmul.bf16.gmra.mxu0 %v1683
        %v1760 = vpop.f32.mrf.mxu0
        %v1761 = vadd.f32 0.0, %v1760
        %v1762 = vpop.f32.mrf.mxu0
        %v1763 = vadd.f32 0.0, %v1762
        %1764 = vmatmul.bf16.gmra.mxu0 %v1686
        %v1765 = vpop.f32.mrf.mxu0
        %v1766 = vadd.f32 0.0, %v1765
        %v1767 = vpop.f32.mrf.mxu0
        %v1768 = vadd.f32 0.0, %v1767
        %1769 = vmatmul.bf16.gmra.mxu0 %v1689
        %v1770 = vpop.f32.mrf.mxu0
        %v1771 = vadd.f32 0.0, %v1770
        %v1772 = vpop.f32.mrf.mxu0
        %v1773 = vadd.f32 0.0, %v1772
        %1774 = vmatmul.bf16.gmra.mxu0 %v1692
        %v1775 = vpop.f32.mrf.mxu0
        %v1776 = vadd.f32 0.0, %v1775
        %v1777 = vpop.f32.mrf.mxu0
        %v1778 = vadd.f32 0.0, %v1777
        %1779 = vmatmul.bf16.gmra.mxu0 %v1695
        %v1780 = vpop.f32.mrf.mxu0
        %v1781 = vadd.f32 0.0, %v1780
        %v1782 = vpop.f32.mrf.mxu0
        %v1783 = vadd.f32 0.0, %v1782
        %1784 = vmatmul.bf16.gmra.mxu0 %v1698
        %v1785 = vpop.f32.mrf.mxu0
        %v1786 = vadd.f32 0.0, %v1785
        %v1787 = vpop.f32.mrf.mxu0
        %v1788 = vadd.f32 0.0, %v1787
        %1789 = vmatmul.bf16.gmra.mxu0 %v1701
        %v1790 = vpop.f32.mrf.mxu0
        %v1791 = vadd.f32 0.0, %v1790
        %v1792 = vpop.f32.mrf.mxu0
        %v1793 = vadd.f32 0.0, %v1792
        %1794 = vdwg.mxu0
        %v1795 = vadd.f32 %v1572, %v1716
        %v1796 = vadd.f32 %v1573, %v1718
        %v1797 = vadd.f32 %v1574, %v1721
        %v1798 = vadd.f32 %v1575, %v1723
        %v1799 = vadd.f32 %v1576, %v1726
        %v1800 = vadd.f32 %v1577, %v1728
        %v1801 = vadd.f32 %v1578, %v1731
        %v1802 = vadd.f32 %v1579, %v1733
        %v1803 = vadd.f32 %v1580, %v1736
        %v1804 = vadd.f32 %v1581, %v1738
        %v1805 = vadd.f32 %v1582, %v1741
        %v1806 = vadd.f32 %v1583, %v1743
        %v1807 = vadd.f32 %v1584, %v1746
        %v1808 = vadd.f32 %v1585, %v1748
        %v1809 = vadd.f32 %v1586, %v1751
        %v1810 = vadd.f32 %v1587, %v1753
        %v1811 = vadd.f32 %v1588, %v1756
        %v1812 = vadd.f32 %v1589, %v1758
        %v1813 = vadd.f32 %v1590, %v1761
        %v1814 = vadd.f32 %v1591, %v1763
        %v1815 = vadd.f32 %v1592, %v1766
        %v1816 = vadd.f32 %v1593, %v1768
        %v1817 = vadd.f32 %v1594, %v1771
        %v1818 = vadd.f32 %v1595, %v1773
        %v1819 = vadd.f32 %v1596, %v1776
        %v1820 = vadd.f32 %v1597, %v1778
        %v1821 = vadd.f32 %v1598, %v1781
        %v1822 = vadd.f32 %v1599, %v1783
        %v1823 = vadd.f32 %v1600, %v1786
        %v1824 = vadd.f32 %v1601, %v1788
        %v1825 = vadd.f32 %v1602, %v1791
        %v1826 = vadd.f32 %v1603, %v1793
        %v1827 = vld [vmem:[%s1604 + $0x1] sm:$0xff]
        %v1828 = vld [vmem:[%s1604 + $0x9] sm:$0xff]
        %v1829 = vld [vmem:[%s1604 + $0x19] sm:$0xff]
        %v1830 = vld [vmem:[%s1604 + $0x21] sm:$0xff]
        %v1831 = vld [vmem:[%s1604 + $0x31] sm:$0xff]
        %v1832 = vld [vmem:[%s1604 + $0x39] sm:$0xff]
        %v1833 = vld [vmem:[%s1604 + $0x49] sm:$0xff]
        %v1834 = vld [vmem:[%s1604 + $0x51] sm:$0xff]
        %v1835 = vld [vmem:[%s1604 + $0x61] sm:$0xff]
        %v1836 = vld [vmem:[%s1604 + $0x69] sm:$0xff]
        %v1837 = vld [vmem:[%s1604 + $0x79] sm:$0xff]
        %v1838 = vld [vmem:[%s1604 + $0x81] sm:$0xff]
        %v1839 = vld [vmem:[%s1604 + $0x91] sm:$0xff]
        %v1840 = vld [vmem:[%s1604 + $0x99] sm:$0xff]
        %v1841 = vld [vmem:[%s1604 + $0xa9] sm:$0xff]
        %v1842 = vld [vmem:[%s1604 + $0xb1] sm:$0xff]
        %v1843 = vld [vmem:[%s1604 + $0xc1] sm:$0xff]
        %v1844 = vld [vmem:[%s1604 + $0xc9] sm:$0xff]
        %v1845 = vld [vmem:[%s1604 + $0xd9] sm:$0xff]
        %v1846 = vld [vmem:[%s1604 + $0xe1] sm:$0xff]
        %v1847 = vld [vmem:[%s1604 + $0xf1] sm:$0xff]
        %v1848 = vld [vmem:[%s1604 + $0xf9] sm:$0xff]
        %v1849 = vld [vmem:[%s1604 + $0x109] sm:$0xff]
        %v1850 = vld [vmem:[%s1604 + $0x111] sm:$0xff]
        %v1851 = vld [vmem:[%s1604 + $0x121] sm:$0xff]
        %v1852 = vld [vmem:[%s1604 + $0x129] sm:$0xff]
        %v1853 = vld [vmem:[%s1604 + $0x139] sm:$0xff]
        %v1854 = vld [vmem:[%s1604 + $0x141] sm:$0xff]
        %v1855 = vld [vmem:[%s1604 + $0x151] sm:$0xff]
        %v1856 = vld [vmem:[%s1604 + $0x159] sm:$0xff]
        %v1857 = vld [vmem:[%s1604 + $0x169] sm:$0xff]
        %v1858 = vld [vmem:[%s1604 + $0x171] sm:$0xff]
        %v1859 = vpack.c.bf16 %v1828, %v1827
        %v1860 = vpack.c.bf16 %v1830, %v1829
        %v1861 = vpack.c.bf16 %v1832, %v1831
        %v1862 = vpack.c.bf16 %v1834, %v1833
        %v1863 = vpack.c.bf16 %v1836, %v1835
        %v1864 = vpack.c.bf16 %v1838, %v1837
        %v1865 = vpack.c.bf16 %v1840, %v1839
        %v1866 = vpack.c.bf16 %v1842, %v1841
        %v1867 = vpack.c.bf16 %v1844, %v1843
        %v1868 = vpack.c.bf16 %v1846, %v1845
        %v1869 = vpack.c.bf16 %v1848, %v1847
        %v1870 = vpack.c.bf16 %v1850, %v1849
        %v1871 = vpack.c.bf16 %v1852, %v1851
        %v1872 = vpack.c.bf16 %v1854, %v1853
        %v1873 = vpack.c.bf16 %v1856, %v1855
        %v1874 = vpack.c.bf16 %v1858, %v1857
        %s1875 = scalar_lea.vmem %s1, 14
        %v1876 = vld [vmem:[%s1875] sm:$0x3]
        %v1878 = vsel %vm224, %v1859, 0
        %v1881 = vsel %vm224, %v1860, 0
        %v1884 = vsel %vm224, %v1861, 0
        %v1887 = vsel %vm224, %v1862, 0
        %v1890 = vsel %vm224, %v1863, 0
        %v1893 = vsel %vm224, %v1864, 0
        %v1896 = vsel %vm224, %v1865, 0
        %v1899 = vsel %vm224, %v1866, 0
        %v1902 = vsel %vm224, %v1867, 0
        %v1905 = vsel %vm224, %v1868, 0
        %v1908 = vsel %vm224, %v1869, 0
        %v1911 = vsel %vm224, %v1870, 0
        %v1914 = vsel %vm224, %v1871, 0
        %v1917 = vsel %vm224, %v1872, 0
        %v1920 = vsel %vm224, %v1873, 0
        %v1923 = vsel %vm224, %v1874, 0
        %v1926 = vsel %vm483, %v1876, 0
        %1928 = vmatpush.bf16.msra.mxu0 0
        %1929 = vmatpush.bf16.msra.mxu0 0
        %1930 = vmatpush.bf16.msra.mxu0 0
        %1931 = vmatpush.bf16.msra.mxu0 0
        %1932 = vmatpush.bf16.msra.mxu0 0
        %1933 = vmatpush.bf16.msra.mxu0 0
        %1934 = vmatpush.bf16.msra.mxu0 0
        %1935 = vmatpush.bf16.msra.mxu0 %v1926
        %1936 = vmatmul.bf16.gmra.mxu0 %v1878
        %v1937 = vpop.f32.mrf.mxu0
        %v1938 = vadd.f32 0.0, %v1937
        %v1939 = vpop.f32.mrf.mxu0
        %v1940 = vadd.f32 0.0, %v1939
        %1941 = vmatmul.bf16.gmra.mxu0 %v1881
        %v1942 = vpop.f32.mrf.mxu0
        %v1943 = vadd.f32 0.0, %v1942
        %v1944 = vpop.f32.mrf.mxu0
        %v1945 = vadd.f32 0.0, %v1944
        %1946 = vmatmul.bf16.gmra.mxu0 %v1884
        %v1947 = vpop.f32.mrf.mxu0
        %v1948 = vadd.f32 0.0, %v1947
        %v1949 = vpop.f32.mrf.mxu0
        %v1950 = vadd.f32 0.0, %v1949
        %1951 = vmatmul.bf16.gmra.mxu0 %v1887
        %v1952 = vpop.f32.mrf.mxu0
        %v1953 = vadd.f32 0.0, %v1952
        %v1954 = vpop.f32.mrf.mxu0
        %v1955 = vadd.f32 0.0, %v1954
        %1956 = vmatmul.bf16.gmra.mxu0 %v1890
        %v1957 = vpop.f32.mrf.mxu0
        %v1958 = vadd.f32 0.0, %v1957
        %v1959 = vpop.f32.mrf.mxu0
        %v1960 = vadd.f32 0.0, %v1959
        %1961 = vmatmul.bf16.gmra.mxu0 %v1893
        %v1962 = vpop.f32.mrf.mxu0
        %v1963 = vadd.f32 0.0, %v1962
        %v1964 = vpop.f32.mrf.mxu0
        %v1965 = vadd.f32 0.0, %v1964
        %1966 = vmatmul.bf16.gmra.mxu0 %v1896
        %v1967 = vpop.f32.mrf.mxu0
        %v1968 = vadd.f32 0.0, %v1967
        %v1969 = vpop.f32.mrf.mxu0
        %v1970 = vadd.f32 0.0, %v1969
        %1971 = vmatmul.bf16.gmra.mxu0 %v1899
        %v1972 = vpop.f32.mrf.mxu0
        %v1973 = vadd.f32 0.0, %v1972
        %v1974 = vpop.f32.mrf.mxu0
        %v1975 = vadd.f32 0.0, %v1974
        %1976 = vmatmul.bf16.gmra.mxu0 %v1902
        %v1977 = vpop.f32.mrf.mxu0
        %v1978 = vadd.f32 0.0, %v1977
        %v1979 = vpop.f32.mrf.mxu0
        %v1980 = vadd.f32 0.0, %v1979
        %1981 = vmatmul.bf16.gmra.mxu0 %v1905
        %v1982 = vpop.f32.mrf.mxu0
        %v1983 = vadd.f32 0.0, %v1982
        %v1984 = vpop.f32.mrf.mxu0
        %v1985 = vadd.f32 0.0, %v1984
        %1986 = vmatmul.bf16.gmra.mxu0 %v1908
        %v1987 = vpop.f32.mrf.mxu0
        %v1988 = vadd.f32 0.0, %v1987
        %v1989 = vpop.f32.mrf.mxu0
        %v1990 = vadd.f32 0.0, %v1989
        %1991 = vmatmul.bf16.gmra.mxu0 %v1911
        %v1992 = vpop.f32.mrf.mxu0
        %v1993 = vadd.f32 0.0, %v1992
        %v1994 = vpop.f32.mrf.mxu0
        %v1995 = vadd.f32 0.0, %v1994
        %1996 = vmatmul.bf16.gmra.mxu0 %v1914
        %v1997 = vpop.f32.mrf.mxu0
        %v1998 = vadd.f32 0.0, %v1997
        %v1999 = vpop.f32.mrf.mxu0
        %v2000 = vadd.f32 0.0, %v1999
        %2001 = vmatmul.bf16.gmra.mxu0 %v1917
        %v2002 = vpop.f32.mrf.mxu0
        %v2003 = vadd.f32 0.0, %v2002
        %v2004 = vpop.f32.mrf.mxu0
        %v2005 = vadd.f32 0.0, %v2004
        %2006 = vmatmul.bf16.gmra.mxu0 %v1920
        %v2007 = vpop.f32.mrf.mxu0
        %v2008 = vadd.f32 0.0, %v2007
        %v2009 = vpop.f32.mrf.mxu0
        %v2010 = vadd.f32 0.0, %v2009
        %2011 = vmatmul.bf16.gmra.mxu0 %v1923
        %v2012 = vpop.f32.mrf.mxu0
        %v2013 = vadd.f32 0.0, %v2012
        %v2014 = vpop.f32.mrf.mxu0
        %v2015 = vadd.f32 0.0, %v2014
        %2016 = vdwg.mxu0
        %v2017 = vadd.f32 %v1795, %v1938
        %v2018 = vadd.f32 %v1796, %v1940
        %v2019 = vadd.f32 %v1797, %v1943
        %v2020 = vadd.f32 %v1798, %v1945
        %v2021 = vadd.f32 %v1799, %v1948
        %v2022 = vadd.f32 %v1800, %v1950
        %v2023 = vadd.f32 %v1801, %v1953
        %v2024 = vadd.f32 %v1802, %v1955
        %v2025 = vadd.f32 %v1803, %v1958
        %v2026 = vadd.f32 %v1804, %v1960
        %v2027 = vadd.f32 %v1805, %v1963
        %v2028 = vadd.f32 %v1806, %v1965
        %v2029 = vadd.f32 %v1807, %v1968
        %v2030 = vadd.f32 %v1808, %v1970
        %v2031 = vadd.f32 %v1809, %v1973
        %v2032 = vadd.f32 %v1810, %v1975
        %v2033 = vadd.f32 %v1811, %v1978
        %v2034 = vadd.f32 %v1812, %v1980
        %v2035 = vadd.f32 %v1813, %v1983
        %v2036 = vadd.f32 %v1814, %v1985
        %v2037 = vadd.f32 %v1815, %v1988
        %v2038 = vadd.f32 %v1816, %v1990
        %v2039 = vadd.f32 %v1817, %v1993
        %v2040 = vadd.f32 %v1818, %v1995
        %v2041 = vadd.f32 %v1819, %v1998
        %v2042 = vadd.f32 %v1820, %v2000
        %v2043 = vadd.f32 %v1821, %v2003
        %v2044 = vadd.f32 %v1822, %v2005
        %v2045 = vadd.f32 %v1823, %v2008
        %v2046 = vadd.f32 %v1824, %v2010
        %v2047 = vadd.f32 %v1825, %v2013
        %v2048 = vadd.f32 %v1826, %v2015
        %v2049 = vld [vmem:[%s1604 + $0x2] sm:$0xff]
        %v2050 = vld [vmem:[%s1604 + $0xa] sm:$0xff]
        %v2051 = vld [vmem:[%s1604 + $0x1a] sm:$0xff]
        %v2052 = vld [vmem:[%s1604 + $0x22] sm:$0xff]
        %v2053 = vld [vmem:[%s1604 + $0x32] sm:$0xff]
        %v2054 = vld [vmem:[%s1604 + $0x3a] sm:$0xff]
        %v2055 = vld [vmem:[%s1604 + $0x4a] sm:$0xff]
        %v2056 = vld [vmem:[%s1604 + $0x52] sm:$0xff]
        %v2057 = vld [vmem:[%s1604 + $0x62] sm:$0xff]
        %v2058 = vld [vmem:[%s1604 + $0x6a] sm:$0xff]
        %v2059 = vld [vmem:[%s1604 + $0x7a] sm:$0xff]
        %v2060 = vld [vmem:[%s1604 + $0x82] sm:$0xff]
        %v2061 = vld [vmem:[%s1604 + $0x92] sm:$0xff]
        %v2062 = vld [vmem:[%s1604 + $0x9a] sm:$0xff]
        %v2063 = vld [vmem:[%s1604 + $0xaa] sm:$0xff]
        %v2064 = vld [vmem:[%s1604 + $0xb2] sm:$0xff]
        %v2065 = vld [vmem:[%s1604 + $0xc2] sm:$0xff]
        %v2066 = vld [vmem:[%s1604 + $0xca] sm:$0xff]
        %v2067 = vld [vmem:[%s1604 + $0xda] sm:$0xff]
        %v2068 = vld [vmem:[%s1604 + $0xe2] sm:$0xff]
        %v2069 = vld [vmem:[%s1604 + $0xf2] sm:$0xff]
        %v2070 = vld [vmem:[%s1604 + $0xfa] sm:$0xff]
        %v2071 = vld [vmem:[%s1604 + $0x10a] sm:$0xff]
        %v2072 = vld [vmem:[%s1604 + $0x112] sm:$0xff]
        %v2073 = vld [vmem:[%s1604 + $0x122] sm:$0xff]
        %v2074 = vld [vmem:[%s1604 + $0x12a] sm:$0xff]
        %v2075 = vld [vmem:[%s1604 + $0x13a] sm:$0xff]
        %v2076 = vld [vmem:[%s1604 + $0x142] sm:$0xff]
        %v2077 = vld [vmem:[%s1604 + $0x152] sm:$0xff]
        %v2078 = vld [vmem:[%s1604 + $0x15a] sm:$0xff]
        %v2079 = vld [vmem:[%s1604 + $0x16a] sm:$0xff]
        %v2080 = vld [vmem:[%s1604 + $0x172] sm:$0xff]
        %v2081 = vpack.c.bf16 %v2050, %v2049
        %v2082 = vpack.c.bf16 %v2052, %v2051
        %v2083 = vpack.c.bf16 %v2054, %v2053
        %v2084 = vpack.c.bf16 %v2056, %v2055
        %v2085 = vpack.c.bf16 %v2058, %v2057
        %v2086 = vpack.c.bf16 %v2060, %v2059
        %v2087 = vpack.c.bf16 %v2062, %v2061
        %v2088 = vpack.c.bf16 %v2064, %v2063
        %v2089 = vpack.c.bf16 %v2066, %v2065
        %v2090 = vpack.c.bf16 %v2068, %v2067
        %v2091 = vpack.c.bf16 %v2070, %v2069
        %v2092 = vpack.c.bf16 %v2072, %v2071
        %v2093 = vpack.c.bf16 %v2074, %v2073
        %v2094 = vpack.c.bf16 %v2076, %v2075
        %v2095 = vpack.c.bf16 %v2078, %v2077
        %v2096 = vpack.c.bf16 %v2080, %v2079
        %s2097 = scalar_lea.vmem %s1, 16
        %v2098 = vld [vmem:[%s2097] sm:$0x3]
        %v2100 = vsel %vm224, %v2081, 0
        %v2103 = vsel %vm224, %v2082, 0
        %v2106 = vsel %vm224, %v2083, 0
        %v2109 = vsel %vm224, %v2084, 0
        %v2112 = vsel %vm224, %v2085, 0
        %v2115 = vsel %vm224, %v2086, 0
        %v2118 = vsel %vm224, %v2087, 0
        %v2121 = vsel %vm224, %v2088, 0
        %v2124 = vsel %vm224, %v2089, 0
        %v2127 = vsel %vm224, %v2090, 0
        %v2130 = vsel %vm224, %v2091, 0
        %v2133 = vsel %vm224, %v2092, 0
        %v2136 = vsel %vm224, %v2093, 0
        %v2139 = vsel %vm224, %v2094, 0
        %v2142 = vsel %vm224, %v2095, 0
        %v2145 = vsel %vm224, %v2096, 0
        %v2148 = vsel %vm483, %v2098, 0
        %2150 = vmatpush.bf16.msra.mxu0 0
        %2151 = vmatpush.bf16.msra.mxu0 0
        %2152 = vmatpush.bf16.msra.mxu0 0
        %2153 = vmatpush.bf16.msra.mxu0 0
        %2154 = vmatpush.bf16.msra.mxu0 0
        %2155 = vmatpush.bf16.msra.mxu0 0
        %2156 = vmatpush.bf16.msra.mxu0 0
        %2157 = vmatpush.bf16.msra.mxu0 %v2148
        %2158 = vmatmul.bf16.gmra.mxu0 %v2100
        %v2159 = vpop.f32.mrf.mxu0
        %v2160 = vadd.f32 0.0, %v2159
        %v2161 = vpop.f32.mrf.mxu0
        %v2162 = vadd.f32 0.0, %v2161
        %2163 = vmatmul.bf16.gmra.mxu0 %v2103
        %v2164 = vpop.f32.mrf.mxu0
        %v2165 = vadd.f32 0.0, %v2164
        %v2166 = vpop.f32.mrf.mxu0
        %v2167 = vadd.f32 0.0, %v2166
        %2168 = vmatmul.bf16.gmra.mxu0 %v2106
        %v2169 = vpop.f32.mrf.mxu0
        %v2170 = vadd.f32 0.0, %v2169
        %v2171 = vpop.f32.mrf.mxu0
        %v2172 = vadd.f32 0.0, %v2171
        %2173 = vmatmul.bf16.gmra.mxu0 %v2109
        %v2174 = vpop.f32.mrf.mxu0
        %v2175 = vadd.f32 0.0, %v2174
        %v2176 = vpop.f32.mrf.mxu0
        %v2177 = vadd.f32 0.0, %v2176
        %2178 = vmatmul.bf16.gmra.mxu0 %v2112
        %v2179 = vpop.f32.mrf.mxu0
        %v2180 = vadd.f32 0.0, %v2179
        %v2181 = vpop.f32.mrf.mxu0
        %v2182 = vadd.f32 0.0, %v2181
        %2183 = vmatmul.bf16.gmra.mxu0 %v2115
        %v2184 = vpop.f32.mrf.mxu0
        %v2185 = vadd.f32 0.0, %v2184
        %v2186 = vpop.f32.mrf.mxu0
        %v2187 = vadd.f32 0.0, %v2186
        %2188 = vmatmul.bf16.gmra.mxu0 %v2118
        %v2189 = vpop.f32.mrf.mxu0
        %v2190 = vadd.f32 0.0, %v2189
        %v2191 = vpop.f32.mrf.mxu0
        %v2192 = vadd.f32 0.0, %v2191
        %2193 = vmatmul.bf16.gmra.mxu0 %v2121
        %v2194 = vpop.f32.mrf.mxu0
        %v2195 = vadd.f32 0.0, %v2194
        %v2196 = vpop.f32.mrf.mxu0
        %v2197 = vadd.f32 0.0, %v2196
        %2198 = vmatmul.bf16.gmra.mxu0 %v2124
        %v2199 = vpop.f32.mrf.mxu0
        %v2200 = vadd.f32 0.0, %v2199
        %v2201 = vpop.f32.mrf.mxu0
        %v2202 = vadd.f32 0.0, %v2201
        %2203 = vmatmul.bf16.gmra.mxu0 %v2127
        %v2204 = vpop.f32.mrf.mxu0
        %v2205 = vadd.f32 0.0, %v2204
        %v2206 = vpop.f32.mrf.mxu0
        %v2207 = vadd.f32 0.0, %v2206
        %2208 = vmatmul.bf16.gmra.mxu0 %v2130
        %v2209 = vpop.f32.mrf.mxu0
        %v2210 = vadd.f32 0.0, %v2209
        %v2211 = vpop.f32.mrf.mxu0
        %v2212 = vadd.f32 0.0, %v2211
        %2213 = vmatmul.bf16.gmra.mxu0 %v2133
        %v2214 = vpop.f32.mrf.mxu0
        %v2215 = vadd.f32 0.0, %v2214
        %v2216 = vpop.f32.mrf.mxu0
        %v2217 = vadd.f32 0.0, %v2216
        %2218 = vmatmul.bf16.gmra.mxu0 %v2136
        %v2219 = vpop.f32.mrf.mxu0
        %v2220 = vadd.f32 0.0, %v2219
        %v2221 = vpop.f32.mrf.mxu0
        %v2222 = vadd.f32 0.0, %v2221
        %2223 = vmatmul.bf16.gmra.mxu0 %v2139
        %v2224 = vpop.f32.mrf.mxu0
        %v2225 = vadd.f32 0.0, %v2224
        %v2226 = vpop.f32.mrf.mxu0
        %v2227 = vadd.f32 0.0, %v2226
        %2228 = vmatmul.bf16.gmra.mxu0 %v2142
        %v2229 = vpop.f32.mrf.mxu0
        %v2230 = vadd.f32 0.0, %v2229
        %v2231 = vpop.f32.mrf.mxu0
        %v2232 = vadd.f32 0.0, %v2231
        %2233 = vmatmul.bf16.gmra.mxu0 %v2145
        %v2234 = vpop.f32.mrf.mxu0
        %v2235 = vadd.f32 0.0, %v2234
        %v2236 = vpop.f32.mrf.mxu0
        %v2237 = vadd.f32 0.0, %v2236
        %2238 = vdwg.mxu0
        %v2239 = vadd.f32 %v2017, %v2160
        %v2240 = vadd.f32 %v2018, %v2162
        %v2241 = vadd.f32 %v2019, %v2165
        %v2242 = vadd.f32 %v2020, %v2167
        %v2243 = vadd.f32 %v2021, %v2170
        %v2244 = vadd.f32 %v2022, %v2172
        %v2245 = vadd.f32 %v2023, %v2175
        %v2246 = vadd.f32 %v2024, %v2177
        %v2247 = vadd.f32 %v2025, %v2180
        %v2248 = vadd.f32 %v2026, %v2182
        %v2249 = vadd.f32 %v2027, %v2185
        %v2250 = vadd.f32 %v2028, %v2187
        %v2251 = vadd.f32 %v2029, %v2190
        %v2252 = vadd.f32 %v2030, %v2192
        %v2253 = vadd.f32 %v2031, %v2195
        %v2254 = vadd.f32 %v2032, %v2197
        %v2255 = vadd.f32 %v2033, %v2200
        %v2256 = vadd.f32 %v2034, %v2202
        %v2257 = vadd.f32 %v2035, %v2205
        %v2258 = vadd.f32 %v2036, %v2207
        %v2259 = vadd.f32 %v2037, %v2210
        %v2260 = vadd.f32 %v2038, %v2212
        %v2261 = vadd.f32 %v2039, %v2215
        %v2262 = vadd.f32 %v2040, %v2217
        %v2263 = vadd.f32 %v2041, %v2220
        %v2264 = vadd.f32 %v2042, %v2222
        %v2265 = vadd.f32 %v2043, %v2225
        %v2266 = vadd.f32 %v2044, %v2227
        %v2267 = vadd.f32 %v2045, %v2230
        %v2268 = vadd.f32 %v2046, %v2232
        %v2269 = vadd.f32 %v2047, %v2235
        %v2270 = vadd.f32 %v2048, %v2237
        %v2272 = vperm.slane %v335, 0
        %v2274 = vadd.f32 %v2239, %v2272
        %v2275 = vadd.f32 %v2240, %v2272
        %v2276 = vadd.f32 %v2241, %v2272
        %v2277 = vadd.f32 %v2242, %v2272
        %v2278 = vadd.f32 %v2243, %v2272
        %v2279 = vadd.f32 %v2244, %v2272
        %v2280 = vadd.f32 %v2245, %v2272
        %v2281 = vadd.f32 %v2246, %v2272
        %v2282 = vadd.f32 %v2247, %v2272
        %v2283 = vadd.f32 %v2248, %v2272
        %v2284 = vadd.f32 %v2249, %v2272
        %v2285 = vadd.f32 %v2250, %v2272
        %v2286 = vadd.f32 %v2251, %v2272
        %v2287 = vadd.f32 %v2252, %v2272
        %v2288 = vadd.f32 %v2253, %v2272
        %v2289 = vadd.f32 %v2254, %v2272
        %v2290 = vadd.f32 %v2255, %v2272
        %v2291 = vadd.f32 %v2256, %v2272
        %v2292 = vadd.f32 %v2257, %v2272
        %v2293 = vadd.f32 %v2258, %v2272
        %v2294 = vadd.f32 %v2259, %v2272
        %v2295 = vadd.f32 %v2260, %v2272
        %v2296 = vadd.f32 %v2261, %v2272
        %v2297 = vadd.f32 %v2262, %v2272
        %v2298 = vadd.f32 %v2263, %v2272
        %v2299 = vadd.f32 %v2264, %v2272
        %v2300 = vadd.f32 %v2265, %v2272
        %v2301 = vadd.f32 %v2266, %v2272
        %v2302 = vadd.f32 %v2267, %v2272
        %v2303 = vadd.f32 %v2268, %v2272
        %v2304 = vadd.f32 %v2269, %v2272
        %v2305 = vadd.f32 %v2270, %v2272
        %v2306 = vmax.f32 %v2274, 0.0
        %v2307 = vmax.f32 %v2275, 0.0
        %v2308 = vmax.f32 %v2276, 0.0
        %v2309 = vmax.f32 %v2277, 0.0
        %v2310 = vmax.f32 %v2278, 0.0
        %v2311 = vmax.f32 %v2279, 0.0
        %v2312 = vmax.f32 %v2280, 0.0
        %v2313 = vmax.f32 %v2281, 0.0
        %v2314 = vmax.f32 %v2282, 0.0
        %v2315 = vmax.f32 %v2283, 0.0
        %v2316 = vmax.f32 %v2284, 0.0
        %v2317 = vmax.f32 %v2285, 0.0
        %v2318 = vmax.f32 %v2286, 0.0
        %v2319 = vmax.f32 %v2287, 0.0
        %v2320 = vmax.f32 %v2288, 0.0
        %v2321 = vmax.f32 %v2289, 0.0
        %v2322 = vmax.f32 %v2290, 0.0
        %v2323 = vmax.f32 %v2291, 0.0
        %v2324 = vmax.f32 %v2292, 0.0
        %v2325 = vmax.f32 %v2293, 0.0
        %v2326 = vmax.f32 %v2294, 0.0
        %v2327 = vmax.f32 %v2295, 0.0
        %v2328 = vmax.f32 %v2296, 0.0
        %v2329 = vmax.f32 %v2297, 0.0
        %v2330 = vmax.f32 %v2298, 0.0
        %v2331 = vmax.f32 %v2299, 0.0
        %v2332 = vmax.f32 %v2300, 0.0
        %v2333 = vmax.f32 %v2301, 0.0
        %v2334 = vmax.f32 %v2302, 0.0
        %v2335 = vmax.f32 %v2303, 0.0
        %v2336 = vmax.f32 %v2304, 0.0
        %v2337 = vmax.f32 %v2305, 0.0
        %v2338 = vmax.f32 %v2306, %v2308
        %v2339 = vmax.f32 %v2307, %v2309
        %v2340 = vmax.f32 %v2310, %v2312
        %v2341 = vmax.f32 %v2311, %v2313
        %v2342 = vmax.f32 %v2314, %v2316
        %v2343 = vmax.f32 %v2315, %v2317
        %v2344 = vmax.f32 %v2318, %v2320
        %v2345 = vmax.f32 %v2319, %v2321
        %v2346 = vmax.f32 %v2322, %v2324
        %v2347 = vmax.f32 %v2323, %v2325
        %v2348 = vmax.f32 %v2326, %v2328
        %v2349 = vmax.f32 %v2327, %v2329
        %v2350 = vmax.f32 %v2330, %v2332
        %v2351 = vmax.f32 %v2331, %v2333
        %v2352 = vmax.f32 %v2334, %v2336
        %v2353 = vmax.f32 %v2335, %v2337
        %v2354 = vmax.f32 %v2338, 0.0
        %v2355 = vmax.f32 %v2339, 0.0
        %v2356 = vmax.f32 %v2340, %v2308
        %v2357 = vmax.f32 %v2341, %v2309
        %v2358 = vmax.f32 %v2342, %v2312
        %v2359 = vmax.f32 %v2343, %v2313
        %v2360 = vmax.f32 %v2344, %v2316
        %v2361 = vmax.f32 %v2345, %v2317
        %v2362 = vmax.f32 %v2346, %v2320
        %v2363 = vmax.f32 %v2347, %v2321
        %v2364 = vmax.f32 %v2348, %v2324
        %v2365 = vmax.f32 %v2349, %v2325
        %v2366 = vmax.f32 %v2350, %v2328
        %v2367 = vmax.f32 %v2351, %v2329
        %v2368 = vmax.f32 %v2352, %v2332
        %v2369 = vmax.f32 %v2353, %v2333
        %v2370 = vlaneseq
        %v2371 = vshrl.u32 %v2370, 7
        %v2372 = vlaneseq
        %v2373 = vand.u32 %v2372, 127
        %v2374 = vmul.u32 %v2371, 2
        %v2375 = vadd.s32 %v2374, 4294967295
        %vm2376 = vcmp.eq.s32.totalorder %v2373, %v2375
        %v2377 = vsel %vm2376, 1, 0
        %v2378 = vcvt.s32.f32 %v2377
        %vm2379 = vcmask 130048
        %v2381 = vsel %vm2379, %v2378, 0
        %2383 = vmatpush.msra.mxu0 0.0
        %2384 = vmatpush.msra.mxu0 0.0
        %2385 = vmatpush.msra.mxu0 0.0
        %2386 = vmatpush.msra.mxu0 0.0
        %2387 = vmatpush.msra.mxu0 0.0
        %2388 = vmatpush.msra.mxu0 0.0
        %2389 = vmatpush.msra.mxu0 0.0
        %2390 = vmatpush.msra.mxu0 0.0
        %2391 = vmatpush.msra.mxu0 0.0
        %2392 = vmatpush.msra.mxu0 0.0
        %2393 = vmatpush.msra.mxu0 0.0
        %2394 = vmatpush.msra.mxu0 0.0
        %2395 = vmatpush.msra.mxu0 0.0
        %2396 = vmatpush.msra.mxu0 0.0
        %2397 = vmatpush.msra.mxu0 %v2355
        %2398 = vmatpush.msra.mxu0 %v2354
        %2399 = vmatmul.f32.gmra.mxu0 %v2381
        %v2400 = vpop.f32.mrf.mxu0
        %v2401 = vadd.f32 0.0, %v2400
        %2402 = vdwg.mxu0
        %2403 = vmatpush.msra.mxu0 0.0
        %2404 = vmatpush.msra.mxu0 0.0
        %2405 = vmatpush.msra.mxu0 0.0
        %2406 = vmatpush.msra.mxu0 0.0
        %2407 = vmatpush.msra.mxu0 0.0
        %2408 = vmatpush.msra.mxu0 0.0
        %2409 = vmatpush.msra.mxu0 0.0
        %2410 = vmatpush.msra.mxu0 0.0
        %2411 = vmatpush.msra.mxu0 0.0
        %2412 = vmatpush.msra.mxu0 0.0
        %2413 = vmatpush.msra.mxu0 0.0
        %2414 = vmatpush.msra.mxu0 0.0
        %2415 = vmatpush.msra.mxu0 0.0
        %2416 = vmatpush.msra.mxu0 0.0
        %2417 = vmatpush.msra.mxu0 %v2357
        %2418 = vmatpush.msra.mxu0 %v2356
        %2419 = vmatmul.f32.gmra.mxu0 %v2381
        %v2420 = vpop.f32.mrf.mxu0
        %v2421 = vadd.f32 0.0, %v2420
        %2422 = vdwg.mxu0
        %2423 = vmatpush.msra.mxu0 0.0
        %2424 = vmatpush.msra.mxu0 0.0
        %2425 = vmatpush.msra.mxu0 0.0
        %2426 = vmatpush.msra.mxu0 0.0
        %2427 = vmatpush.msra.mxu0 0.0
        %2428 = vmatpush.msra.mxu0 0.0
        %2429 = vmatpush.msra.mxu0 0.0
        %2430 = vmatpush.msra.mxu0 0.0
        %2431 = vmatpush.msra.mxu0 0.0
        %2432 = vmatpush.msra.mxu0 0.0
        %2433 = vmatpush.msra.mxu0 0.0
        %2434 = vmatpush.msra.mxu0 0.0
        %2435 = vmatpush.msra.mxu0 0.0
        %2436 = vmatpush.msra.mxu0 0.0
        %2437 = vmatpush.msra.mxu0 %v2359
        %2438 = vmatpush.msra.mxu0 %v2358
        %2439 = vmatmul.f32.gmra.mxu0 %v2381
        %v2440 = vpop.f32.mrf.mxu0
        %v2441 = vadd.f32 0.0, %v2440
        %2442 = vdwg.mxu0
        %2443 = vmatpush.msra.mxu0 0.0
        %2444 = vmatpush.msra.mxu0 0.0
        %2445 = vmatpush.msra.mxu0 0.0
        %2446 = vmatpush.msra.mxu0 0.0
        %2447 = vmatpush.msra.mxu0 0.0
        %2448 = vmatpush.msra.mxu0 0.0
        %2449 = vmatpush.msra.mxu0 0.0
        %2450 = vmatpush.msra.mxu0 0.0
        %2451 = vmatpush.msra.mxu0 0.0
        %2452 = vmatpush.msra.mxu0 0.0
        %2453 = vmatpush.msra.mxu0 0.0
        %2454 = vmatpush.msra.mxu0 0.0
        %2455 = vmatpush.msra.mxu0 0.0
        %2456 = vmatpush.msra.mxu0 0.0
        %2457 = vmatpush.msra.mxu0 %v2361
        %2458 = vmatpush.msra.mxu0 %v2360
        %2459 = vmatmul.f32.gmra.mxu0 %v2381
        %v2460 = vpop.f32.mrf.mxu0
        %v2461 = vadd.f32 0.0, %v2460
        %2462 = vdwg.mxu0
        %2463 = vmatpush.msra.mxu0 0.0
        %2464 = vmatpush.msra.mxu0 0.0
        %2465 = vmatpush.msra.mxu0 0.0
        %2466 = vmatpush.msra.mxu0 0.0
        %2467 = vmatpush.msra.mxu0 0.0
        %2468 = vmatpush.msra.mxu0 0.0
        %2469 = vmatpush.msra.mxu0 0.0
        %2470 = vmatpush.msra.mxu0 0.0
        %2471 = vmatpush.msra.mxu0 0.0
        %2472 = vmatpush.msra.mxu0 0.0
        %2473 = vmatpush.msra.mxu0 0.0
        %2474 = vmatpush.msra.mxu0 0.0
        %2475 = vmatpush.msra.mxu0 0.0
        %2476 = vmatpush.msra.mxu0 0.0
        %2477 = vmatpush.msra.mxu0 %v2363
        %2478 = vmatpush.msra.mxu0 %v2362
        %2479 = vmatmul.f32.gmra.mxu0 %v2381
        %v2480 = vpop.f32.mrf.mxu0
        %v2481 = vadd.f32 0.0, %v2480
        %2482 = vdwg.mxu0
        %2483 = vmatpush.msra.mxu0 0.0
        %2484 = vmatpush.msra.mxu0 0.0
        %2485 = vmatpush.msra.mxu0 0.0
        %2486 = vmatpush.msra.mxu0 0.0
        %2487 = vmatpush.msra.mxu0 0.0
        %2488 = vmatpush.msra.mxu0 0.0
        %2489 = vmatpush.msra.mxu0 0.0
        %2490 = vmatpush.msra.mxu0 0.0
        %2491 = vmatpush.msra.mxu0 0.0
        %2492 = vmatpush.msra.mxu0 0.0
        %2493 = vmatpush.msra.mxu0 0.0
        %2494 = vmatpush.msra.mxu0 0.0
        %2495 = vmatpush.msra.mxu0 0.0
        %2496 = vmatpush.msra.mxu0 0.0
        %2497 = vmatpush.msra.mxu0 %v2365
        %2498 = vmatpush.msra.mxu0 %v2364
        %2499 = vmatmul.f32.gmra.mxu0 %v2381
        %v2500 = vpop.f32.mrf.mxu0
        %v2501 = vadd.f32 0.0, %v2500
        %2502 = vdwg.mxu0
        %2503 = vmatpush.msra.mxu0 0.0
        %2504 = vmatpush.msra.mxu0 0.0
        %2505 = vmatpush.msra.mxu0 0.0
        %2506 = vmatpush.msra.mxu0 0.0
        %2507 = vmatpush.msra.mxu0 0.0
        %2508 = vmatpush.msra.mxu0 0.0
        %2509 = vmatpush.msra.mxu0 0.0
        %2510 = vmatpush.msra.mxu0 0.0
        %2511 = vmatpush.msra.mxu0 0.0
        %2512 = vmatpush.msra.mxu0 0.0
        %2513 = vmatpush.msra.mxu0 0.0
        %2514 = vmatpush.msra.mxu0 0.0
        %2515 = vmatpush.msra.mxu0 0.0
        %2516 = vmatpush.msra.mxu0 0.0
        %2517 = vmatpush.msra.mxu0 %v2367
        %2518 = vmatpush.msra.mxu0 %v2366
        %2519 = vmatmul.f32.gmra.mxu0 %v2381
        %v2520 = vpop.f32.mrf.mxu0
        %v2521 = vadd.f32 0.0, %v2520
        %2522 = vdwg.mxu0
        %2523 = vmatpush.msra.mxu0 0.0
        %2524 = vmatpush.msra.mxu0 0.0
        %2525 = vmatpush.msra.mxu0 0.0
        %2526 = vmatpush.msra.mxu0 0.0
        %2527 = vmatpush.msra.mxu0 0.0
        %2528 = vmatpush.msra.mxu0 0.0
        %2529 = vmatpush.msra.mxu0 0.0
        %2530 = vmatpush.msra.mxu0 0.0
        %2531 = vmatpush.msra.mxu0 0.0
        %2532 = vmatpush.msra.mxu0 0.0
        %2533 = vmatpush.msra.mxu0 0.0
        %2534 = vmatpush.msra.mxu0 0.0
        %2535 = vmatpush.msra.mxu0 0.0
        %2536 = vmatpush.msra.mxu0 0.0
        %2537 = vmatpush.msra.mxu0 %v2369
        %2538 = vmatpush.msra.mxu0 %v2368
        %2539 = vmatmul.f32.gmra.mxu0 %v2381
        %v2540 = vpop.f32.mrf.mxu0
        %v2541 = vadd.f32 0.0, %v2540
        %2542 = vdwg.mxu0
        %vm2543 = vcmp.eq.s32.totalorder %v2373, %v2374
        %v2544 = vsel %vm2543, 1, 0
        %v2545 = vcvt.s32.f32 %v2544
        %v2547 = vsel %vm2379, %v2545, 0
        %2549 = vmatpush.msra.mxu0 0.0
        %2550 = vmatpush.msra.mxu0 0.0
        %2551 = vmatpush.msra.mxu0 0.0
        %2552 = vmatpush.msra.mxu0 0.0
        %2553 = vmatpush.msra.mxu0 0.0
        %2554 = vmatpush.msra.mxu0 0.0
        %2555 = vmatpush.msra.mxu0 0.0
        %2556 = vmatpush.msra.mxu0 0.0
        %2557 = vmatpush.msra.mxu0 0.0
        %2558 = vmatpush.msra.mxu0 0.0
        %2559 = vmatpush.msra.mxu0 0.0
        %2560 = vmatpush.msra.mxu0 0.0
        %2561 = vmatpush.msra.mxu0 0.0
        %2562 = vmatpush.msra.mxu0 0.0
        %2563 = vmatpush.msra.mxu0 %v2355
        %2564 = vmatpush.msra.mxu0 %v2354
        %2565 = vmatmul.f32.gmra.mxu0 %v2547
        %v2566 = vpop.f32.mrf.mxu0
        %v2567 = vadd.f32 0.0, %v2566
        %2568 = vdwg.mxu0
        %2569 = vmatpush.msra.mxu0 0.0
        %2570 = vmatpush.msra.mxu0 0.0
        %2571 = vmatpush.msra.mxu0 0.0
        %2572 = vmatpush.msra.mxu0 0.0
        %2573 = vmatpush.msra.mxu0 0.0
        %2574 = vmatpush.msra.mxu0 0.0
        %2575 = vmatpush.msra.mxu0 0.0
        %2576 = vmatpush.msra.mxu0 0.0
        %2577 = vmatpush.msra.mxu0 0.0
        %2578 = vmatpush.msra.mxu0 0.0
        %2579 = vmatpush.msra.mxu0 0.0
        %2580 = vmatpush.msra.mxu0 0.0
        %2581 = vmatpush.msra.mxu0 0.0
        %2582 = vmatpush.msra.mxu0 0.0
        %2583 = vmatpush.msra.mxu0 %v2357
        %2584 = vmatpush.msra.mxu0 %v2356
        %2585 = vmatmul.f32.gmra.mxu0 %v2547
        %v2586 = vpop.f32.mrf.mxu0
        %v2587 = vadd.f32 0.0, %v2586
        %2588 = vdwg.mxu0
        %2589 = vmatpush.msra.mxu0 0.0
        %2590 = vmatpush.msra.mxu0 0.0
        %2591 = vmatpush.msra.mxu0 0.0
        %2592 = vmatpush.msra.mxu0 0.0
        %2593 = vmatpush.msra.mxu0 0.0
        %2594 = vmatpush.msra.mxu0 0.0
        %2595 = vmatpush.msra.mxu0 0.0
        %2596 = vmatpush.msra.mxu0 0.0
        %2597 = vmatpush.msra.mxu0 0.0
        %2598 = vmatpush.msra.mxu0 0.0
        %2599 = vmatpush.msra.mxu0 0.0
        %2600 = vmatpush.msra.mxu0 0.0
        %2601 = vmatpush.msra.mxu0 0.0
        %2602 = vmatpush.msra.mxu0 0.0
        %2603 = vmatpush.msra.mxu0 %v2359
        %2604 = vmatpush.msra.mxu0 %v2358
        %2605 = vmatmul.f32.gmra.mxu0 %v2547
        %v2606 = vpop.f32.mrf.mxu0
        %v2607 = vadd.f32 0.0, %v2606
        %2608 = vdwg.mxu0
        %2609 = vmatpush.msra.mxu0 0.0
        %2610 = vmatpush.msra.mxu0 0.0
        %2611 = vmatpush.msra.mxu0 0.0
        %2612 = vmatpush.msra.mxu0 0.0
        %2613 = vmatpush.msra.mxu0 0.0
        %2614 = vmatpush.msra.mxu0 0.0
        %2615 = vmatpush.msra.mxu0 0.0
        %2616 = vmatpush.msra.mxu0 0.0
        %2617 = vmatpush.msra.mxu0 0.0
        %2618 = vmatpush.msra.mxu0 0.0
        %2619 = vmatpush.msra.mxu0 0.0
        %2620 = vmatpush.msra.mxu0 0.0
        %2621 = vmatpush.msra.mxu0 0.0
        %2622 = vmatpush.msra.mxu0 0.0
        %2623 = vmatpush.msra.mxu0 %v2361
        %2624 = vmatpush.msra.mxu0 %v2360
        %2625 = vmatmul.f32.gmra.mxu0 %v2547
        %v2626 = vpop.f32.mrf.mxu0
        %v2627 = vadd.f32 0.0, %v2626
        %2628 = vdwg.mxu0
        %2629 = vmatpush.msra.mxu0 0.0
        %2630 = vmatpush.msra.mxu0 0.0
        %2631 = vmatpush.msra.mxu0 0.0
        %2632 = vmatpush.msra.mxu0 0.0
        %2633 = vmatpush.msra.mxu0 0.0
        %2634 = vmatpush.msra.mxu0 0.0
        %2635 = vmatpush.msra.mxu0 0.0
        %2636 = vmatpush.msra.mxu0 0.0
        %2637 = vmatpush.msra.mxu0 0.0
        %2638 = vmatpush.msra.mxu0 0.0
        %2639 = vmatpush.msra.mxu0 0.0
        %2640 = vmatpush.msra.mxu0 0.0
        %2641 = vmatpush.msra.mxu0 0.0
        %2642 = vmatpush.msra.mxu0 0.0
        %2643 = vmatpush.msra.mxu0 %v2363
        %2644 = vmatpush.msra.mxu0 %v2362
        %2645 = vmatmul.f32.gmra.mxu0 %v2547
        %v2646 = vpop.f32.mrf.mxu0
        %v2647 = vadd.f32 0.0, %v2646
        %2648 = vdwg.mxu0
        %2649 = vmatpush.msra.mxu0 0.0
        %2650 = vmatpush.msra.mxu0 0.0
        %2651 = vmatpush.msra.mxu0 0.0
        %2652 = vmatpush.msra.mxu0 0.0
        %2653 = vmatpush.msra.mxu0 0.0
        %2654 = vmatpush.msra.mxu0 0.0
        %2655 = vmatpush.msra.mxu0 0.0
        %2656 = vmatpush.msra.mxu0 0.0
        %2657 = vmatpush.msra.mxu0 0.0
        %2658 = vmatpush.msra.mxu0 0.0
        %2659 = vmatpush.msra.mxu0 0.0
        %2660 = vmatpush.msra.mxu0 0.0
        %2661 = vmatpush.msra.mxu0 0.0
        %2662 = vmatpush.msra.mxu0 0.0
        %2663 = vmatpush.msra.mxu0 %v2365
        %2664 = vmatpush.msra.mxu0 %v2364
        %2665 = vmatmul.f32.gmra.mxu0 %v2547
        %v2666 = vpop.f32.mrf.mxu0
        %v2667 = vadd.f32 0.0, %v2666
        %2668 = vdwg.mxu0
        %2669 = vmatpush.msra.mxu0 0.0
        %2670 = vmatpush.msra.mxu0 0.0
        %2671 = vmatpush.msra.mxu0 0.0
        %2672 = vmatpush.msra.mxu0 0.0
        %2673 = vmatpush.msra.mxu0 0.0
        %2674 = vmatpush.msra.mxu0 0.0
        %2675 = vmatpush.msra.mxu0 0.0
        %2676 = vmatpush.msra.mxu0 0.0
        %2677 = vmatpush.msra.mxu0 0.0
        %2678 = vmatpush.msra.mxu0 0.0
        %2679 = vmatpush.msra.mxu0 0.0
        %2680 = vmatpush.msra.mxu0 0.0
        %2681 = vmatpush.msra.mxu0 0.0
        %2682 = vmatpush.msra.mxu0 0.0
        %2683 = vmatpush.msra.mxu0 %v2367
        %2684 = vmatpush.msra.mxu0 %v2366
        %2685 = vmatmul.f32.gmra.mxu0 %v2547
        %v2686 = vpop.f32.mrf.mxu0
        %v2687 = vadd.f32 0.0, %v2686
        %2688 = vdwg.mxu0
        %2689 = vmatpush.msra.mxu0 0.0
        %2690 = vmatpush.msra.mxu0 0.0
        %2691 = vmatpush.msra.mxu0 0.0
        %2692 = vmatpush.msra.mxu0 0.0
        %2693 = vmatpush.msra.mxu0 0.0
        %2694 = vmatpush.msra.mxu0 0.0
        %2695 = vmatpush.msra.mxu0 0.0
        %2696 = vmatpush.msra.mxu0 0.0
        %2697 = vmatpush.msra.mxu0 0.0
        %2698 = vmatpush.msra.mxu0 0.0
        %2699 = vmatpush.msra.mxu0 0.0
        %2700 = vmatpush.msra.mxu0 0.0
        %2701 = vmatpush.msra.mxu0 0.0
        %2702 = vmatpush.msra.mxu0 0.0
        %2703 = vmatpush.msra.mxu0 %v2369
        %2704 = vmatpush.msra.mxu0 %v2368
        %2705 = vmatmul.f32.gmra.mxu0 %v2547
        %v2706 = vpop.f32.mrf.mxu0
        %v2707 = vadd.f32 0.0, %v2706
        %2708 = vdwg.mxu0
        %v2709 = vmax.f32 %v2401, %v2567
        %v2710 = vmax.f32 %v2421, %v2587
        %v2711 = vmax.f32 %v2441, %v2607
        %v2712 = vmax.f32 %v2461, %v2627
        %v2713 = vmax.f32 %v2481, %v2647
        %v2714 = vmax.f32 %v2501, %v2667
        %v2715 = vmax.f32 %v2521, %v2687
        %v2716 = vmax.f32 %v2541, %v2707
        %v2717 = vadd.s32 %v2374, 1
        %vm2718 = vcmp.eq.s32.totalorder %v2373, %v2717
        %v2719 = vsel %vm2718, 1, 0
        %v2720 = vcvt.s32.f32 %v2719
        %v2722 = vsel %vm2379, %v2720, 0
        %2724 = vmatpush.msra.mxu0 0.0
        %2725 = vmatpush.msra.mxu0 0.0
        %2726 = vmatpush.msra.mxu0 0.0
        %2727 = vmatpush.msra.mxu0 0.0
        %2728 = vmatpush.msra.mxu0 0.0
        %2729 = vmatpush.msra.mxu0 0.0
        %2730 = vmatpush.msra.mxu0 0.0
        %2731 = vmatpush.msra.mxu0 0.0
        %2732 = vmatpush.msra.mxu0 0.0
        %2733 = vmatpush.msra.mxu0 0.0
        %2734 = vmatpush.msra.mxu0 0.0
        %2735 = vmatpush.msra.mxu0 0.0
        %2736 = vmatpush.msra.mxu0 0.0
        %2737 = vmatpush.msra.mxu0 0.0
        %2738 = vmatpush.msra.mxu0 %v2355
        %2739 = vmatpush.msra.mxu0 %v2354
        %2740 = vmatmul.f32.gmra.mxu0 %v2722
        %v2741 = vpop.f32.mrf.mxu0
        %v2742 = vadd.f32 0.0, %v2741
        %2743 = vdwg.mxu0
        %2744 = vmatpush.msra.mxu0 0.0
        %2745 = vmatpush.msra.mxu0 0.0
        %2746 = vmatpush.msra.mxu0 0.0
        %2747 = vmatpush.msra.mxu0 0.0
        %2748 = vmatpush.msra.mxu0 0.0
        %2749 = vmatpush.msra.mxu0 0.0
        %2750 = vmatpush.msra.mxu0 0.0
        %2751 = vmatpush.msra.mxu0 0.0
        %2752 = vmatpush.msra.mxu0 0.0
        %2753 = vmatpush.msra.mxu0 0.0
        %2754 = vmatpush.msra.mxu0 0.0
        %2755 = vmatpush.msra.mxu0 0.0
        %2756 = vmatpush.msra.mxu0 0.0
        %2757 = vmatpush.msra.mxu0 0.0
        %2758 = vmatpush.msra.mxu0 %v2357
        %2759 = vmatpush.msra.mxu0 %v2356
        %2760 = vmatmul.f32.gmra.mxu0 %v2722
        %v2761 = vpop.f32.mrf.mxu0
        %v2762 = vadd.f32 0.0, %v2761
        %2763 = vdwg.mxu0
        %2764 = vmatpush.msra.mxu0 0.0
        %2765 = vmatpush.msra.mxu0 0.0
        %2766 = vmatpush.msra.mxu0 0.0
        %2767 = vmatpush.msra.mxu0 0.0
        %2768 = vmatpush.msra.mxu0 0.0
        %2769 = vmatpush.msra.mxu0 0.0
        %2770 = vmatpush.msra.mxu0 0.0
        %2771 = vmatpush.msra.mxu0 0.0
        %2772 = vmatpush.msra.mxu0 0.0
        %2773 = vmatpush.msra.mxu0 0.0
        %2774 = vmatpush.msra.mxu0 0.0
        %2775 = vmatpush.msra.mxu0 0.0
        %2776 = vmatpush.msra.mxu0 0.0
        %2777 = vmatpush.msra.mxu0 0.0
        %2778 = vmatpush.msra.mxu0 %v2359
        %2779 = vmatpush.msra.mxu0 %v2358
        %2780 = vmatmul.f32.gmra.mxu0 %v2722
        %v2781 = vpop.f32.mrf.mxu0
        %v2782 = vadd.f32 0.0, %v2781
        %2783 = vdwg.mxu0
        %2784 = vmatpush.msra.mxu0 0.0
        %2785 = vmatpush.msra.mxu0 0.0
        %2786 = vmatpush.msra.mxu0 0.0
        %2787 = vmatpush.msra.mxu0 0.0
        %2788 = vmatpush.msra.mxu0 0.0
        %2789 = vmatpush.msra.mxu0 0.0
        %2790 = vmatpush.msra.mxu0 0.0
        %2791 = vmatpush.msra.mxu0 0.0
        %2792 = vmatpush.msra.mxu0 0.0
        %2793 = vmatpush.msra.mxu0 0.0
        %2794 = vmatpush.msra.mxu0 0.0
        %2795 = vmatpush.msra.mxu0 0.0
        %2796 = vmatpush.msra.mxu0 0.0
        %2797 = vmatpush.msra.mxu0 0.0
        %2798 = vmatpush.msra.mxu0 %v2361
        %2799 = vmatpush.msra.mxu0 %v2360
        %2800 = vmatmul.f32.gmra.mxu0 %v2722
        %v2801 = vpop.f32.mrf.mxu0
        %v2802 = vadd.f32 0.0, %v2801
        %2803 = vdwg.mxu0
        %2804 = vmatpush.msra.mxu0 0.0
        %2805 = vmatpush.msra.mxu0 0.0
        %2806 = vmatpush.msra.mxu0 0.0
        %2807 = vmatpush.msra.mxu0 0.0
        %2808 = vmatpush.msra.mxu0 0.0
        %2809 = vmatpush.msra.mxu0 0.0
        %2810 = vmatpush.msra.mxu0 0.0
        %2811 = vmatpush.msra.mxu0 0.0
        %2812 = vmatpush.msra.mxu0 0.0
        %2813 = vmatpush.msra.mxu0 0.0
        %2814 = vmatpush.msra.mxu0 0.0
        %2815 = vmatpush.msra.mxu0 0.0
        %2816 = vmatpush.msra.mxu0 0.0
        %2817 = vmatpush.msra.mxu0 0.0
        %2818 = vmatpush.msra.mxu0 %v2363
        %2819 = vmatpush.msra.mxu0 %v2362
        %2820 = vmatmul.f32.gmra.mxu0 %v2722
        %v2821 = vpop.f32.mrf.mxu0
        %v2822 = vadd.f32 0.0, %v2821
        %2823 = vdwg.mxu0
        %2824 = vmatpush.msra.mxu0 0.0
        %2825 = vmatpush.msra.mxu0 0.0
        %2826 = vmatpush.msra.mxu0 0.0
        %2827 = vmatpush.msra.mxu0 0.0
        %2828 = vmatpush.msra.mxu0 0.0
        %2829 = vmatpush.msra.mxu0 0.0
        %2830 = vmatpush.msra.mxu0 0.0
        %2831 = vmatpush.msra.mxu0 0.0
        %2832 = vmatpush.msra.mxu0 0.0
        %2833 = vmatpush.msra.mxu0 0.0
        %2834 = vmatpush.msra.mxu0 0.0
        %2835 = vmatpush.msra.mxu0 0.0
        %2836 = vmatpush.msra.mxu0 0.0
        %2837 = vmatpush.msra.mxu0 0.0
        %2838 = vmatpush.msra.mxu0 %v2365
        %2839 = vmatpush.msra.mxu0 %v2364
        %2840 = vmatmul.f32.gmra.mxu0 %v2722
        %v2841 = vpop.f32.mrf.mxu0
        %v2842 = vadd.f32 0.0, %v2841
        %2843 = vdwg.mxu0
        %2844 = vmatpush.msra.mxu0 0.0
        %2845 = vmatpush.msra.mxu0 0.0
        %2846 = vmatpush.msra.mxu0 0.0
        %2847 = vmatpush.msra.mxu0 0.0
        %2848 = vmatpush.msra.mxu0 0.0
        %2849 = vmatpush.msra.mxu0 0.0
        %2850 = vmatpush.msra.mxu0 0.0
        %2851 = vmatpush.msra.mxu0 0.0
        %2852 = vmatpush.msra.mxu0 0.0
        %2853 = vmatpush.msra.mxu0 0.0
        %2854 = vmatpush.msra.mxu0 0.0
        %2855 = vmatpush.msra.mxu0 0.0
        %2856 = vmatpush.msra.mxu0 0.0
        %2857 = vmatpush.msra.mxu0 0.0
        %2858 = vmatpush.msra.mxu0 %v2367
        %2859 = vmatpush.msra.mxu0 %v2366
        %2860 = vmatmul.f32.gmra.mxu0 %v2722
        %v2861 = vpop.f32.mrf.mxu0
        %v2862 = vadd.f32 0.0, %v2861
        %2863 = vdwg.mxu0
        %2864 = vmatpush.msra.mxu0 0.0
        %2865 = vmatpush.msra.mxu0 0.0
        %2866 = vmatpush.msra.mxu0 0.0
        %2867 = vmatpush.msra.mxu0 0.0
        %2868 = vmatpush.msra.mxu0 0.0
        %2869 = vmatpush.msra.mxu0 0.0
        %2870 = vmatpush.msra.mxu0 0.0
        %2871 = vmatpush.msra.mxu0 0.0
        %2872 = vmatpush.msra.mxu0 0.0
        %2873 = vmatpush.msra.mxu0 0.0
        %2874 = vmatpush.msra.mxu0 0.0
        %2875 = vmatpush.msra.mxu0 0.0
        %2876 = vmatpush.msra.mxu0 0.0
        %2877 = vmatpush.msra.mxu0 0.0
        %2878 = vmatpush.msra.mxu0 %v2369
        %2879 = vmatpush.msra.mxu0 %v2368
        %2880 = vmatmul.f32.gmra.mxu0 %v2722
        %v2881 = vpop.f32.mrf.mxu0
        %v2882 = vadd.f32 0.0, %v2881
        %2883 = vdwg.mxu0
        %v2884 = vmax.f32 %v2709, %v2742
        %v2885 = vmax.f32 %v2710, %v2762
        %v2886 = vmax.f32 %v2711, %v2782
        %v2887 = vmax.f32 %v2712, %v2802
        %v2888 = vmax.f32 %v2713, %v2822
        %v2889 = vmax.f32 %v2714, %v2842
        %v2890 = vmax.f32 %v2715, %v2862
        %v2891 = vmax.f32 %v2716, %v2882
        %vm2892 = vcmask 64512
        %2893 = vst.msk [vmem:[%s217] sm:$0xff] %vm2892, %v2884
        %2894 = vst.msk [vmem:[%s217 + $0x8] sm:$0xff] %vm2892, %v2885
        %2895 = vst.msk [vmem:[%s217 + $0x10] sm:$0xff] %vm2892, %v2886
        %2896 = vst.msk [vmem:[%s217 + $0x18] sm:$0xff] %vm2892, %v2887
        %2897 = vst.msk [vmem:[%s217 + $0x20] sm:$0xff] %vm2892, %v2888
        %2898 = vst.msk [vmem:[%s217 + $0x28] sm:$0xff] %vm2892, %v2889
        %2899 = vst.msk [vmem:[%s217 + $0x30] sm:$0xff] %vm2892, %v2890
        %2900 = vst.msk [vmem:[%s217 + $0x38] sm:$0xff] %vm2892, %v2891
        %2901 = vst.msk [vmem:[#allocation3] sm:$0xff] %vm2892, 0.0
        %vm2902 = vcmask 58368
        %2903 = vst.msk [vmem:[#allocation3 + $0x8] sm:$0x3] %vm2902, 0.0
        %s2904 = scalar_lea.vmem [#allocation3], 144
        %2905 = vst.msk [vmem:[%s2904] sm:$0xff] %vm2892, 0.0
        %2906 = vst.msk [vmem:[%s2904 + $0x8] sm:$0x3] %vm2902, 0.0
        %vm2907 = vcmask 57344
        %2908 = vst.msk [vmem:[#allocation3] sm:$0x1] %vm2907, 0.0
        %2909 = vst.msk [vmem:[#allocation3 + $0x10] sm:$0x1] %vm2907, 0.0
        %2910 = vst.msk [vmem:[#allocation3 + $0x20] sm:$0x1] %vm2907, 0.0
        %2911 = vst.msk [vmem:[#allocation3 + $0x30] sm:$0x1] %vm2907, 0.0
        %2912 = vst.msk [vmem:[#allocation3 + $0x40] sm:$0x1] %vm2907, 0.0
        %2913 = vst.msk [vmem:[#allocation3 + $0x50] sm:$0x1] %vm2907, 0.0
        %2914 = vst.msk [vmem:[#allocation3 + $0x60] sm:$0x1] %vm2907, 0.0
        %2915 = vst.msk [vmem:[#allocation3 + $0x70] sm:$0x1] %vm2907, 0.0
        %2916 = vst.msk [vmem:[#allocation3 + $0x80] sm:$0x1] %vm2907, 0.0
        %2917 = vst.msk [vmem:[#allocation3 + $0x90] sm:$0x1] %vm2907, 0.0
        %2918 = vst.msk [vmem:[#allocation3 + $0x9] sm:$0x1] %vm2907, 0.0
        %2919 = vst.msk [vmem:[#allocation3 + $0x19] sm:$0x1] %vm2907, 0.0
        %2920 = vst.msk [vmem:[#allocation3 + $0x29] sm:$0x1] %vm2907, 0.0
        %2921 = vst.msk [vmem:[#allocation3 + $0x39] sm:$0x1] %vm2907, 0.0
        %2922 = vst.msk [vmem:[#allocation3 + $0x49] sm:$0x1] %vm2907, 0.0
        %2923 = vst.msk [vmem:[#allocation3 + $0x59] sm:$0x1] %vm2907, 0.0
        %2924 = vst.msk [vmem:[#allocation3 + $0x69] sm:$0x1] %vm2907, 0.0
        %2925 = vst.msk [vmem:[#allocation3 + $0x79] sm:$0x1] %vm2907, 0.0
        %2926 = vst.msk [vmem:[#allocation3 + $0x89] sm:$0x1] %vm2907, 0.0
        %2927 = vst.msk [vmem:[#allocation3 + $0x99] sm:$0x1] %vm2907, 0.0
        %v2928 = vld [vmem:[%s217] sm:$0xff]
        %v2929 = vld [vmem:[%s217 + $0x8] sm:$0xff]
        %v2930 = vld [vmem:[%s217 + $0x10] sm:$0xff]
        %v2931 = vld [vmem:[%s217 + $0x18] sm:$0xff]
        %v2932 = vld [vmem:[%s217 + $0x20] sm:$0xff]
        %v2933 = vld [vmem:[%s217 + $0x28] sm:$0xff]
        %v2934 = vld [vmem:[%s217 + $0x30] sm:$0xff]
        %v2935 = vld [vmem:[%s217 + $0x38] sm:$0xff]
        %s2936 = scalar_lea.vmem [#allocation3], 16
        %2937 = vst.msk [vmem:[%s2936 + $0x1] sm:$0xff] %vm2892, %v2928
        %2938 = vst.msk [vmem:[%s2936 + $0x11] sm:$0xff] %vm2892, %v2929
        %2939 = vst.msk [vmem:[%s2936 + $0x21] sm:$0xff] %vm2892, %v2930
        %2940 = vst.msk [vmem:[%s2936 + $0x31] sm:$0xff] %vm2892, %v2931
        %2941 = vst.msk [vmem:[%s2936 + $0x41] sm:$0xff] %vm2892, %v2932
        %2942 = vst.msk [vmem:[%s2936 + $0x51] sm:$0xff] %vm2892, %v2933
        %2943 = vst.msk [vmem:[%s2936 + $0x61] sm:$0xff] %vm2892, %v2934
        %2944 = vst.msk [vmem:[%s2936 + $0x71] sm:$0xff] %vm2892, %v2935
        %v2945 = vld [vmem:[%s4] sm:$0x1]
        %v2946 = vld [vmem:[#allocation3] sm:$0xff]
        %v2947 = vld [vmem:[#allocation3 + $0x10] sm:$0xff]
        %v2948 = vld [vmem:[#allocation3 + $0x20] sm:$0xff]
        %v2949 = vld [vmem:[#allocation3 + $0x30] sm:$0xff]
        %v2950 = vld [vmem:[#allocation3 + $0x40] sm:$0xff]
        %v2951 = vld [vmem:[#allocation3 + $0x50] sm:$0xff]
        %v2952 = vld [vmem:[#allocation3 + $0x60] sm:$0xff]
        %v2953 = vld [vmem:[#allocation3 + $0x70] sm:$0xff]
        %v2954 = vpack.c.bf16 %v2947, %v2946
        %v2955 = vpack.c.bf16 %v2949, %v2948
        %v2956 = vpack.c.bf16 %v2951, %v2950
        %v2957 = vpack.c.bf16 %v2953, %v2952
        %v2958 = vld [vmem:[%s3] sm:$0xf]
        %v2959 = vld [vmem:[#allocation3 + $0x1] sm:$0xff]
        %v2960 = vld [vmem:[#allocation3 + $0x11] sm:$0xff]
        %v2961 = vld [vmem:[#allocation3 + $0x21] sm:$0xff]
        %v2962 = vld [vmem:[#allocation3 + $0x31] sm:$0xff]
        %v2963 = vld [vmem:[#allocation3 + $0x41] sm:$0xff]
        %v2964 = vld [vmem:[#allocation3 + $0x51] sm:$0xff]
        %v2965 = vld [vmem:[#allocation3 + $0x61] sm:$0xff]
        %v2966 = vld [vmem:[#allocation3 + $0x71] sm:$0xff]
        %v2967 = vpack.c.bf16 %v2960, %v2959
        %v2968 = vpack.c.bf16 %v2962, %v2961
        %v2969 = vpack.c.bf16 %v2964, %v2963
        %v2970 = vpack.c.bf16 %v2966, %v2965
        %s2971 = scalar_lea.vmem %s3, 4
        %v2972 = vld [vmem:[%s2971] sm:$0xf]
        %v2974 = vsel %vm2892, %v2967, 0
        %v2977 = vsel %vm2892, %v2968, 0
        %v2980 = vsel %vm2892, %v2969, 0
        %v2983 = vsel %vm2892, %v2970, 0
        %vm2985 = vcmask 1043456
        %v2987 = vsel %vm2985, %v2972, 0
        %2989 = vmatpush.bf16.msra.mxu0 0
        %2990 = vmatpush.bf16.msra.mxu0 0
        %2991 = vmatpush.bf16.msra.mxu0 0
        %2992 = vmatpush.bf16.msra.mxu0 0
        %2993 = vmatpush.bf16.msra.mxu0 0
        %2994 = vmatpush.bf16.msra.mxu0 0
        %2995 = vmatpush.bf16.msra.mxu0 0
        %2996 = vmatpush.bf16.msra.mxu0 %v2987
        %2997 = vmatmul.bf16.gmra.mxu0 %v2974
        %v2998 = vpop.f32.mrf.mxu0
        %v2999 = vadd.f32 0.0, %v2998
        %v3000 = vpop.f32.mrf.mxu0
        %v3001 = vadd.f32 0.0, %v3000
        %3002 = vmatmul.bf16.gmra.mxu0 %v2977
        %v3003 = vpop.f32.mrf.mxu0
        %v3004 = vadd.f32 0.0, %v3003
        %v3005 = vpop.f32.mrf.mxu0
        %v3006 = vadd.f32 0.0, %v3005
        %3007 = vmatmul.bf16.gmra.mxu0 %v2980
        %v3008 = vpop.f32.mrf.mxu0
        %v3009 = vadd.f32 0.0, %v3008
        %v3010 = vpop.f32.mrf.mxu0
        %v3011 = vadd.f32 0.0, %v3010
        %3012 = vmatmul.bf16.gmra.mxu0 %v2983
        %v3013 = vpop.f32.mrf.mxu0
        %v3014 = vadd.f32 0.0, %v3013
        %v3015 = vpop.f32.mrf.mxu0
        %v3016 = vadd.f32 0.0, %v3015
        %3017 = vdwg.mxu0
        %v3019 = vsel %vm2892, %v2954, 0
        %v3022 = vsel %vm2892, %v2955, 0
        %v3025 = vsel %vm2892, %v2956, 0
        %v3028 = vsel %vm2892, %v2957, 0
        %v3031 = vsel %vm2985, %v2958, 0
        %3033 = vmatpush.bf16.msra.mxu0 0
        %3034 = vmatpush.bf16.msra.mxu0 0
        %3035 = vmatpush.bf16.msra.mxu0 0
        %3036 = vmatpush.bf16.msra.mxu0 0
        %3037 = vmatpush.bf16.msra.mxu0 0
        %3038 = vmatpush.bf16.msra.mxu0 0
        %3039 = vmatpush.bf16.msra.mxu0 0
        %3040 = vmatpush.bf16.msra.mxu0 %v3031
        %3041 = vmatmul.bf16.gmra.mxu0 %v3019
        %v3042 = vpop.f32.mrf.mxu0
        %v3043 = vadd.f32 %v2999, %v3042
        %v3044 = vpop.f32.mrf.mxu0
        %v3045 = vadd.f32 %v3001, %v3044
        %3046 = vmatmul.bf16.gmra.mxu0 %v3022
        %v3047 = vpop.f32.mrf.mxu0
        %v3048 = vadd.f32 %v3004, %v3047
        %v3049 = vpop.f32.mrf.mxu0
        %v3050 = vadd.f32 %v3006, %v3049
        %3051 = vmatmul.bf16.gmra.mxu0 %v3025
        %v3052 = vpop.f32.mrf.mxu0
        %v3053 = vadd.f32 %v3009, %v3052
        %v3054 = vpop.f32.mrf.mxu0
        %v3055 = vadd.f32 %v3011, %v3054
        %3056 = vmatmul.bf16.gmra.mxu0 %v3028
        %v3057 = vpop.f32.mrf.mxu0
        %v3058 = vadd.f32 %v3014, %v3057
        %v3059 = vpop.f32.mrf.mxu0
        %v3060 = vadd.f32 %v3016, %v3059
        %3061 = vdwg.mxu0
        %v3062 = vld [vmem:[#allocation3 + $0x2] sm:$0xff]
        %v3063 = vld [vmem:[#allocation3 + $0x12] sm:$0xff]
        %v3064 = vld [vmem:[#allocation3 + $0x22] sm:$0xff]
        %v3065 = vld [vmem:[#allocation3 + $0x32] sm:$0xff]
        %v3066 = vld [vmem:[#allocation3 + $0x42] sm:$0xff]
        %v3067 = vld [vmem:[#allocation3 + $0x52] sm:$0xff]
        %v3068 = vld [vmem:[#allocation3 + $0x62] sm:$0xff]
        %v3069 = vld [vmem:[#allocation3 + $0x72] sm:$0xff]
        %v3070 = vpack.c.bf16 %v3063, %v3062
        %v3071 = vpack.c.bf16 %v3065, %v3064
        %v3072 = vpack.c.bf16 %v3067, %v3066
        %v3073 = vpack.c.bf16 %v3069, %v3068
        %s3074 = scalar_lea.vmem %s3, 8
        %v3075 = vld [vmem:[%s3074] sm:$0xf]
        %v3077 = vsel %vm2892, %v3070, 0
        %v3080 = vsel %vm2892, %v3071, 0
        %v3083 = vsel %vm2892, %v3072, 0
        %v3086 = vsel %vm2892, %v3073, 0
        %v3089 = vsel %vm2985, %v3075, 0
        %3091 = vmatpush.bf16.msra.mxu0 0
        %3092 = vmatpush.bf16.msra.mxu0 0
        %3093 = vmatpush.bf16.msra.mxu0 0
        %3094 = vmatpush.bf16.msra.mxu0 0
        %3095 = vmatpush.bf16.msra.mxu0 0
        %3096 = vmatpush.bf16.msra.mxu0 0
        %3097 = vmatpush.bf16.msra.mxu0 0
        %3098 = vmatpush.bf16.msra.mxu0 %v3089
        %3099 = vmatmul.bf16.gmra.mxu0 %v3077
        %v3100 = vpop.f32.mrf.mxu0
        %v3101 = vadd.f32 0.0, %v3100
        %v3102 = vpop.f32.mrf.mxu0
        %v3103 = vadd.f32 0.0, %v3102
        %3104 = vmatmul.bf16.gmra.mxu0 %v3080
        %v3105 = vpop.f32.mrf.mxu0
        %v3106 = vadd.f32 0.0, %v3105
        %v3107 = vpop.f32.mrf.mxu0
        %v3108 = vadd.f32 0.0, %v3107
        %3109 = vmatmul.bf16.gmra.mxu0 %v3083
        %v3110 = vpop.f32.mrf.mxu0
        %v3111 = vadd.f32 0.0, %v3110
        %v3112 = vpop.f32.mrf.mxu0
        %v3113 = vadd.f32 0.0, %v3112
        %3114 = vmatmul.bf16.gmra.mxu0 %v3086
        %v3115 = vpop.f32.mrf.mxu0
        %v3116 = vadd.f32 0.0, %v3115
        %v3117 = vpop.f32.mrf.mxu0
        %v3118 = vadd.f32 0.0, %v3117
        %3119 = vdwg.mxu0
        %v3120 = vadd.f32 %v3043, %v3101
        %v3121 = vadd.f32 %v3045, %v3103
        %v3122 = vadd.f32 %v3048, %v3106
        %v3123 = vadd.f32 %v3050, %v3108
        %v3124 = vadd.f32 %v3053, %v3111
        %v3125 = vadd.f32 %v3055, %v3113
        %v3126 = vadd.f32 %v3058, %v3116
        %v3127 = vadd.f32 %v3060, %v3118
        %v3128 = vld [vmem:[%s2936] sm:$0xff]
        %v3129 = vld [vmem:[%s2936 + $0x10] sm:$0xff]
        %v3130 = vld [vmem:[%s2936 + $0x20] sm:$0xff]
        %v3131 = vld [vmem:[%s2936 + $0x30] sm:$0xff]
        %v3132 = vld [vmem:[%s2936 + $0x40] sm:$0xff]
        %v3133 = vld [vmem:[%s2936 + $0x50] sm:$0xff]
        %v3134 = vld [vmem:[%s2936 + $0x60] sm:$0xff]
        %v3135 = vld [vmem:[%s2936 + $0x70] sm:$0xff]
        %v3136 = vpack.c.bf16 %v3129, %v3128
        %v3137 = vpack.c.bf16 %v3131, %v3130
        %v3138 = vpack.c.bf16 %v3133, %v3132
        %v3139 = vpack.c.bf16 %v3135, %v3134
        %s3140 = scalar_lea.vmem %s3, 12
        %v3141 = vld [vmem:[%s3140] sm:$0xf]
        %v3143 = vsel %vm2892, %v3136, 0
        %v3146 = vsel %vm2892, %v3137, 0
        %v3149 = vsel %vm2892, %v3138, 0
        %v3152 = vsel %vm2892, %v3139, 0
        %v3155 = vsel %vm2985, %v3141, 0
        %3157 = vmatpush.bf16.msra.mxu0 0
        %3158 = vmatpush.bf16.msra.mxu0 0
        %3159 = vmatpush.bf16.msra.mxu0 0
        %3160 = vmatpush.bf16.msra.mxu0 0
        %3161 = vmatpush.bf16.msra.mxu0 0
        %3162 = vmatpush.bf16.msra.mxu0 0
        %3163 = vmatpush.bf16.msra.mxu0 0
        %3164 = vmatpush.bf16.msra.mxu0 %v3155
        %3165 = vmatmul.bf16.gmra.mxu0 %v3143
        %v3166 = vpop.f32.mrf.mxu0
        %v3167 = vadd.f32 0.0, %v3166
        %v3168 = vpop.f32.mrf.mxu0
        %v3169 = vadd.f32 0.0, %v3168
        %3170 = vmatmul.bf16.gmra.mxu0 %v3146
        %v3171 = vpop.f32.mrf.mxu0
        %v3172 = vadd.f32 0.0, %v3171
        %v3173 = vpop.f32.mrf.mxu0
        %v3174 = vadd.f32 0.0, %v3173
        %3175 = vmatmul.bf16.gmra.mxu0 %v3149
        %v3176 = vpop.f32.mrf.mxu0
        %v3177 = vadd.f32 0.0, %v3176
        %v3178 = vpop.f32.mrf.mxu0
        %v3179 = vadd.f32 0.0, %v3178
        %3180 = vmatmul.bf16.gmra.mxu0 %v3152
        %v3181 = vpop.f32.mrf.mxu0
        %v3182 = vadd.f32 0.0, %v3181
        %v3183 = vpop.f32.mrf.mxu0
        %v3184 = vadd.f32 0.0, %v3183
        %3185 = vdwg.mxu0
        %v3186 = vadd.f32 %v3120, %v3167
        %v3187 = vadd.f32 %v3121, %v3169
        %v3188 = vadd.f32 %v3122, %v3172
        %v3189 = vadd.f32 %v3123, %v3174
        %v3190 = vadd.f32 %v3124, %v3177
        %v3191 = vadd.f32 %v3125, %v3179
        %v3192 = vadd.f32 %v3126, %v3182
        %v3193 = vadd.f32 %v3127, %v3184
        %v3194 = vld [vmem:[%s2936 + $0x1] sm:$0xff]
        %v3195 = vld [vmem:[%s2936 + $0x11] sm:$0xff]
        %v3196 = vld [vmem:[%s2936 + $0x21] sm:$0xff]
        %v3197 = vld [vmem:[%s2936 + $0x31] sm:$0xff]
        %v3198 = vld [vmem:[%s2936 + $0x41] sm:$0xff]
        %v3199 = vld [vmem:[%s2936 + $0x51] sm:$0xff]
        %v3200 = vld [vmem:[%s2936 + $0x61] sm:$0xff]
        %v3201 = vld [vmem:[%s2936 + $0x71] sm:$0xff]
        %v3202 = vpack.c.bf16 %v3195, %v3194
        %v3203 = vpack.c.bf16 %v3197, %v3196
        %v3204 = vpack.c.bf16 %v3199, %v3198
        %v3205 = vpack.c.bf16 %v3201, %v3200
        %s3206 = scalar_lea.vmem %s3, 16
        %v3207 = vld [vmem:[%s3206] sm:$0xf]
        %v3209 = vsel %vm2892, %v3202, 0
        %v3212 = vsel %vm2892, %v3203, 0
        %v3215 = vsel %vm2892, %v3204, 0
        %v3218 = vsel %vm2892, %v3205, 0
        %v3221 = vsel %vm2985, %v3207, 0
        %3223 = vmatpush.bf16.msra.mxu0 0
        %3224 = vmatpush.bf16.msra.mxu0 0
        %3225 = vmatpush.bf16.msra.mxu0 0
        %3226 = vmatpush.bf16.msra.mxu0 0
        %3227 = vmatpush.bf16.msra.mxu0 0
        %3228 = vmatpush.bf16.msra.mxu0 0
        %3229 = vmatpush.bf16.msra.mxu0 0
        %3230 = vmatpush.bf16.msra.mxu0 %v3221
        %3231 = vmatmul.bf16.gmra.mxu0 %v3209
        %v3232 = vpop.f32.mrf.mxu0
        %v3233 = vadd.f32 0.0, %v3232
        %v3234 = vpop.f32.mrf.mxu0
        %v3235 = vadd.f32 0.0, %v3234
        %3236 = vmatmul.bf16.gmra.mxu0 %v3212
        %v3237 = vpop.f32.mrf.mxu0
        %v3238 = vadd.f32 0.0, %v3237
        %v3239 = vpop.f32.mrf.mxu0
        %v3240 = vadd.f32 0.0, %v3239
        %3241 = vmatmul.bf16.gmra.mxu0 %v3215
        %v3242 = vpop.f32.mrf.mxu0
        %v3243 = vadd.f32 0.0, %v3242
        %v3244 = vpop.f32.mrf.mxu0
        %v3245 = vadd.f32 0.0, %v3244
        %3246 = vmatmul.bf16.gmra.mxu0 %v3218
        %v3247 = vpop.f32.mrf.mxu0
        %v3248 = vadd.f32 0.0, %v3247
        %v3249 = vpop.f32.mrf.mxu0
        %v3250 = vadd.f32 0.0, %v3249
        %3251 = vdwg.mxu0
        %v3252 = vadd.f32 %v3186, %v3233
        %v3253 = vadd.f32 %v3187, %v3235
        %v3254 = vadd.f32 %v3188, %v3238
        %v3255 = vadd.f32 %v3189, %v3240
        %v3256 = vadd.f32 %v3190, %v3243
        %v3257 = vadd.f32 %v3191, %v3245
        %v3258 = vadd.f32 %v3192, %v3248
        %v3259 = vadd.f32 %v3193, %v3250
        %v3260 = vld [vmem:[%s2936 + $0x2] sm:$0xff]
        %v3261 = vld [vmem:[%s2936 + $0x12] sm:$0xff]
        %v3262 = vld [vmem:[%s2936 + $0x22] sm:$0xff]
        %v3263 = vld [vmem:[%s2936 + $0x32] sm:$0xff]
        %v3264 = vld [vmem:[%s2936 + $0x42] sm:$0xff]
        %v3265 = vld [vmem:[%s2936 + $0x52] sm:$0xff]
        %v3266 = vld [vmem:[%s2936 + $0x62] sm:$0xff]
        %v3267 = vld [vmem:[%s2936 + $0x72] sm:$0xff]
        %v3268 = vpack.c.bf16 %v3261, %v3260
        %v3269 = vpack.c.bf16 %v3263, %v3262
        %v3270 = vpack.c.bf16 %v3265, %v3264
        %v3271 = vpack.c.bf16 %v3267, %v3266
        %s3272 = scalar_lea.vmem %s3, 20
        %v3273 = vld [vmem:[%s3272] sm:$0xf]
        %v3275 = vsel %vm2892, %v3268, 0
        %v3278 = vsel %vm2892, %v3269, 0
        %v3281 = vsel %vm2892, %v3270, 0
        %v3284 = vsel %vm2892, %v3271, 0
        %v3287 = vsel %vm2985, %v3273, 0
        %3289 = vmatpush.bf16.msra.mxu0 0
        %3290 = vmatpush.bf16.msra.mxu0 0
        %3291 = vmatpush.bf16.msra.mxu0 0
        %3292 = vmatpush.bf16.msra.mxu0 0
        %3293 = vmatpush.bf16.msra.mxu0 0
        %3294 = vmatpush.bf16.msra.mxu0 0
        %3295 = vmatpush.bf16.msra.mxu0 0
        %3296 = vmatpush.bf16.msra.mxu0 %v3287
        %3297 = vmatmul.bf16.gmra.mxu0 %v3275
        %v3298 = vpop.f32.mrf.mxu0
        %v3299 = vadd.f32 0.0, %v3298
        %v3300 = vpop.f32.mrf.mxu0
        %v3301 = vadd.f32 0.0, %v3300
        %3302 = vmatmul.bf16.gmra.mxu0 %v3278
        %v3303 = vpop.f32.mrf.mxu0
        %v3304 = vadd.f32 0.0, %v3303
        %v3305 = vpop.f32.mrf.mxu0
        %v3306 = vadd.f32 0.0, %v3305
        %3307 = vmatmul.bf16.gmra.mxu0 %v3281
        %v3308 = vpop.f32.mrf.mxu0
        %v3309 = vadd.f32 0.0, %v3308
        %v3310 = vpop.f32.mrf.mxu0
        %v3311 = vadd.f32 0.0, %v3310
        %3312 = vmatmul.bf16.gmra.mxu0 %v3284
        %v3313 = vpop.f32.mrf.mxu0
        %v3314 = vadd.f32 0.0, %v3313
        %v3315 = vpop.f32.mrf.mxu0
        %v3316 = vadd.f32 0.0, %v3315
        %3317 = vdwg.mxu0
        %v3318 = vadd.f32 %v3252, %v3299
        %v3319 = vadd.f32 %v3253, %v3301
        %v3320 = vadd.f32 %v3254, %v3304
        %v3321 = vadd.f32 %v3255, %v3306
        %v3322 = vadd.f32 %v3256, %v3309
        %v3323 = vadd.f32 %v3257, %v3311
        %v3324 = vadd.f32 %v3258, %v3314
        %v3325 = vadd.f32 %v3259, %v3316
        %s3326 = scalar_lea.vmem [#allocation3], 32
        %v3327 = vld [vmem:[%s3326] sm:$0xff]
        %v3328 = vld [vmem:[%s3326 + $0x10] sm:$0xff]
        %v3329 = vld [vmem:[%s3326 + $0x20] sm:$0xff]
        %v3330 = vld [vmem:[%s3326 + $0x30] sm:$0xff]
        %v3331 = vld [vmem:[%s3326 + $0x40] sm:$0xff]
        %v3332 = vld [vmem:[%s3326 + $0x50] sm:$0xff]
        %v3333 = vld [vmem:[%s3326 + $0x60] sm:$0xff]
        %v3334 = vld [vmem:[%s3326 + $0x70] sm:$0xff]
        %v3335 = vpack.c.bf16 %v3328, %v3327
        %v3336 = vpack.c.bf16 %v3330, %v3329
        %v3337 = vpack.c.bf16 %v3332, %v3331
        %v3338 = vpack.c.bf16 %v3334, %v3333
        %s3339 = scalar_lea.vmem %s3, 24
        %v3340 = vld [vmem:[%s3339] sm:$0xf]
        %v3342 = vsel %vm2892, %v3335, 0
        %v3345 = vsel %vm2892, %v3336, 0
        %v3348 = vsel %vm2892, %v3337, 0
        %v3351 = vsel %vm2892, %v3338, 0
        %v3354 = vsel %vm2985, %v3340, 0
        %3356 = vmatpush.bf16.msra.mxu0 0
        %3357 = vmatpush.bf16.msra.mxu0 0
        %3358 = vmatpush.bf16.msra.mxu0 0
        %3359 = vmatpush.bf16.msra.mxu0 0
        %3360 = vmatpush.bf16.msra.mxu0 0
        %3361 = vmatpush.bf16.msra.mxu0 0
        %3362 = vmatpush.bf16.msra.mxu0 0
        %3363 = vmatpush.bf16.msra.mxu0 %v3354
        %3364 = vmatmul.bf16.gmra.mxu0 %v3342
        %v3365 = vpop.f32.mrf.mxu0
        %v3366 = vadd.f32 0.0, %v3365
        %v3367 = vpop.f32.mrf.mxu0
        %v3368 = vadd.f32 0.0, %v3367
        %3369 = vmatmul.bf16.gmra.mxu0 %v3345
        %v3370 = vpop.f32.mrf.mxu0
        %v3371 = vadd.f32 0.0, %v3370
        %v3372 = vpop.f32.mrf.mxu0
        %v3373 = vadd.f32 0.0, %v3372
        %3374 = vmatmul.bf16.gmra.mxu0 %v3348
        %v3375 = vpop.f32.mrf.mxu0
        %v3376 = vadd.f32 0.0, %v3375
        %v3377 = vpop.f32.mrf.mxu0
        %v3378 = vadd.f32 0.0, %v3377
        %3379 = vmatmul.bf16.gmra.mxu0 %v3351
        %v3380 = vpop.f32.mrf.mxu0
        %v3381 = vadd.f32 0.0, %v3380
        %v3382 = vpop.f32.mrf.mxu0
        %v3383 = vadd.f32 0.0, %v3382
        %3384 = vdwg.mxu0
        %v3385 = vadd.f32 %v3318, %v3366
        %v3386 = vadd.f32 %v3319, %v3368
        %v3387 = vadd.f32 %v3320, %v3371
        %v3388 = vadd.f32 %v3321, %v3373
        %v3389 = vadd.f32 %v3322, %v3376
        %v3390 = vadd.f32 %v3323, %v3378
        %v3391 = vadd.f32 %v3324, %v3381
        %v3392 = vadd.f32 %v3325, %v3383
        %v3393 = vld [vmem:[%s3326 + $0x1] sm:$0xff]
        %v3394 = vld [vmem:[%s3326 + $0x11] sm:$0xff]
        %v3395 = vld [vmem:[%s3326 + $0x21] sm:$0xff]
        %v3396 = vld [vmem:[%s3326 + $0x31] sm:$0xff]
        %v3397 = vld [vmem:[%s3326 + $0x41] sm:$0xff]
        %v3398 = vld [vmem:[%s3326 + $0x51] sm:$0xff]
        %v3399 = vld [vmem:[%s3326 + $0x61] sm:$0xff]
        %v3400 = vld [vmem:[%s3326 + $0x71] sm:$0xff]
        %v3401 = vpack.c.bf16 %v3394, %v3393
        %v3402 = vpack.c.bf16 %v3396, %v3395
        %v3403 = vpack.c.bf16 %v3398, %v3397
        %v3404 = vpack.c.bf16 %v3400, %v3399
        %s3405 = scalar_lea.vmem %s3, 28
        %v3406 = vld [vmem:[%s3405] sm:$0xf]
        %v3408 = vsel %vm2892, %v3401, 0
        %v3411 = vsel %vm2892, %v3402, 0
        %v3414 = vsel %vm2892, %v3403, 0
        %v3417 = vsel %vm2892, %v3404, 0
        %v3420 = vsel %vm2985, %v3406, 0
        %3422 = vmatpush.bf16.msra.mxu0 0
        %3423 = vmatpush.bf16.msra.mxu0 0
        %3424 = vmatpush.bf16.msra.mxu0 0
        %3425 = vmatpush.bf16.msra.mxu0 0
        %3426 = vmatpush.bf16.msra.mxu0 0
        %3427 = vmatpush.bf16.msra.mxu0 0
        %3428 = vmatpush.bf16.msra.mxu0 0
        %3429 = vmatpush.bf16.msra.mxu0 %v3420
        %3430 = vmatmul.bf16.gmra.mxu0 %v3408
        %v3431 = vpop.f32.mrf.mxu0
        %v3432 = vadd.f32 0.0, %v3431
        %v3433 = vpop.f32.mrf.mxu0
        %v3434 = vadd.f32 0.0, %v3433
        %3435 = vmatmul.bf16.gmra.mxu0 %v3411
        %v3436 = vpop.f32.mrf.mxu0
        %v3437 = vadd.f32 0.0, %v3436
        %v3438 = vpop.f32.mrf.mxu0
        %v3439 = vadd.f32 0.0, %v3438
        %3440 = vmatmul.bf16.gmra.mxu0 %v3414
        %v3441 = vpop.f32.mrf.mxu0
        %v3442 = vadd.f32 0.0, %v3441
        %v3443 = vpop.f32.mrf.mxu0
        %v3444 = vadd.f32 0.0, %v3443
        %3445 = vmatmul.bf16.gmra.mxu0 %v3417
        %v3446 = vpop.f32.mrf.mxu0
        %v3447 = vadd.f32 0.0, %v3446
        %v3448 = vpop.f32.mrf.mxu0
        %v3449 = vadd.f32 0.0, %v3448
        %3450 = vdwg.mxu0
        %v3451 = vadd.f32 %v3385, %v3432
        %v3452 = vadd.f32 %v3386, %v3434
        %v3453 = vadd.f32 %v3387, %v3437
        %v3454 = vadd.f32 %v3388, %v3439
        %v3455 = vadd.f32 %v3389, %v3442
        %v3456 = vadd.f32 %v3390, %v3444
        %v3457 = vadd.f32 %v3391, %v3447
        %v3458 = vadd.f32 %v3392, %v3449
        %v3459 = vld [vmem:[%s3326 + $0x2] sm:$0xff]
        %v3460 = vld [vmem:[%s3326 + $0x12] sm:$0xff]
        %v3461 = vld [vmem:[%s3326 + $0x22] sm:$0xff]
        %v3462 = vld [vmem:[%s3326 + $0x32] sm:$0xff]
        %v3463 = vld [vmem:[%s3326 + $0x42] sm:$0xff]
        %v3464 = vld [vmem:[%s3326 + $0x52] sm:$0xff]
        %v3465 = vld [vmem:[%s3326 + $0x62] sm:$0xff]
        %v3466 = vld [vmem:[%s3326 + $0x72] sm:$0xff]
        %v3467 = vpack.c.bf16 %v3460, %v3459
        %v3468 = vpack.c.bf16 %v3462, %v3461
        %v3469 = vpack.c.bf16 %v3464, %v3463
        %v3470 = vpack.c.bf16 %v3466, %v3465
        %s3471 = scalar_lea.vmem %s3, 32
        %v3472 = vld [vmem:[%s3471] sm:$0xf]
        %v3474 = vsel %vm2892, %v3467, 0
        %v3477 = vsel %vm2892, %v3468, 0
        %v3480 = vsel %vm2892, %v3469, 0
        %v3483 = vsel %vm2892, %v3470, 0
        %v3486 = vsel %vm2985, %v3472, 0
        %3488 = vmatpush.bf16.msra.mxu0 0
        %3489 = vmatpush.bf16.msra.mxu0 0
        %3490 = vmatpush.bf16.msra.mxu0 0
        %3491 = vmatpush.bf16.msra.mxu0 0
        %3492 = vmatpush.bf16.msra.mxu0 0
        %3493 = vmatpush.bf16.msra.mxu0 0
        %3494 = vmatpush.bf16.msra.mxu0 0
        %3495 = vmatpush.bf16.msra.mxu0 %v3486
        %3496 = vmatmul.bf16.gmra.mxu0 %v3474
        %v3497 = vpop.f32.mrf.mxu0
        %v3498 = vadd.f32 0.0, %v3497
        %v3499 = vpop.f32.mrf.mxu0
        %v3500 = vadd.f32 0.0, %v3499
        %3501 = vmatmul.bf16.gmra.mxu0 %v3477
        %v3502 = vpop.f32.mrf.mxu0
        %v3503 = vadd.f32 0.0, %v3502
        %v3504 = vpop.f32.mrf.mxu0
        %v3505 = vadd.f32 0.0, %v3504
        %3506 = vmatmul.bf16.gmra.mxu0 %v3480
        %v3507 = vpop.f32.mrf.mxu0
        %v3508 = vadd.f32 0.0, %v3507
        %v3509 = vpop.f32.mrf.mxu0
        %v3510 = vadd.f32 0.0, %v3509
        %3511 = vmatmul.bf16.gmra.mxu0 %v3483
        %v3512 = vpop.f32.mrf.mxu0
        %v3513 = vadd.f32 0.0, %v3512
        %v3514 = vpop.f32.mrf.mxu0
        %v3515 = vadd.f32 0.0, %v3514
        %3516 = vdwg.mxu0
        %v3517 = vadd.f32 %v3451, %v3498
        %v3518 = vadd.f32 %v3452, %v3500
        %v3519 = vadd.f32 %v3453, %v3503
        %v3520 = vadd.f32 %v3454, %v3505
        %v3521 = vadd.f32 %v3455, %v3508
        %v3522 = vadd.f32 %v3456, %v3510
        %v3523 = vadd.f32 %v3457, %v3513
        %v3524 = vadd.f32 %v3458, %v3515
        %v3526 = vperm.slane %v2945, 0
        %v3528 = vadd.f32 %v3517, %v3526
        %v3529 = vadd.f32 %v3518, %v3526
        %v3530 = vadd.f32 %v3519, %v3526
        %v3531 = vadd.f32 %v3520, %v3526
        %v3532 = vadd.f32 %v3521, %v3526
        %v3533 = vadd.f32 %v3522, %v3526
        %v3534 = vadd.f32 %v3523, %v3526
        %v3535 = vadd.f32 %v3524, %v3526
        %v3536 = vmax.f32 %v3528, 0.0
        %v3537 = vmax.f32 %v3529, 0.0
        %v3538 = vmax.f32 %v3530, 0.0
        %v3539 = vmax.f32 %v3531, 0.0
        %v3540 = vmax.f32 %v3532, 0.0
        %v3541 = vmax.f32 %v3533, 0.0
        %v3542 = vmax.f32 %v3534, 0.0
        %v3543 = vmax.f32 %v3535, 0.0
        %3544 = vst.msk [vmem:[%s2936 + $0x1] sm:$0xff] %vm2892, %v3536
        %3545 = vst.msk [vmem:[%s2936 + $0x11] sm:$0xff] %vm2892, %v3537
        %3546 = vst.msk [vmem:[%s2936 + $0x21] sm:$0xff] %vm2892, %v3538
        %3547 = vst.msk [vmem:[%s2936 + $0x31] sm:$0xff] %vm2892, %v3539
        %3548 = vst.msk [vmem:[%s2936 + $0x41] sm:$0xff] %vm2892, %v3540
        %3549 = vst.msk [vmem:[%s2936 + $0x51] sm:$0xff] %vm2892, %v3541
        %3550 = vst.msk [vmem:[%s2936 + $0x61] sm:$0xff] %vm2892, %v3542
        %3551 = vst.msk [vmem:[%s2936 + $0x71] sm:$0xff] %vm2892, %v3543
        %s3552 = scalar_lea.vmem %s4, 1
        %v3553 = vld [vmem:[%s3552] sm:$0x1]
        %v3554 = vld [vmem:[#allocation3] sm:$0xff]
        %v3555 = vld [vmem:[#allocation3 + $0x10] sm:$0xff]
        %v3556 = vld [vmem:[#allocation3 + $0x20] sm:$0xff]
        %v3557 = vld [vmem:[#allocation3 + $0x30] sm:$0xff]
        %v3558 = vld [vmem:[#allocation3 + $0x40] sm:$0xff]
        %v3559 = vld [vmem:[#allocation3 + $0x50] sm:$0xff]
        %v3560 = vld [vmem:[#allocation3 + $0x60] sm:$0xff]
        %v3561 = vld [vmem:[#allocation3 + $0x70] sm:$0xff]
        %v3562 = vpack.c.bf16 %v3555, %v3554
        %v3563 = vpack.c.bf16 %v3557, %v3556
        %v3564 = vpack.c.bf16 %v3559, %v3558
        %v3565 = vpack.c.bf16 %v3561, %v3560
        %s3566 = scalar_lea.vmem %s3, 36
        %v3567 = vld [vmem:[%s3566] sm:$0xf]
        %v3568 = vld [vmem:[#allocation3 + $0x1] sm:$0xff]
        %v3569 = vld [vmem:[#allocation3 + $0x11] sm:$0xff]
        %v3570 = vld [vmem:[#allocation3 + $0x21] sm:$0xff]
        %v3571 = vld [vmem:[#allocation3 + $0x31] sm:$0xff]
        %v3572 = vld [vmem:[#allocation3 + $0x41] sm:$0xff]
        %v3573 = vld [vmem:[#allocation3 + $0x51] sm:$0xff]
        %v3574 = vld [vmem:[#allocation3 + $0x61] sm:$0xff]
        %v3575 = vld [vmem:[#allocation3 + $0x71] sm:$0xff]
        %v3576 = vpack.c.bf16 %v3569, %v3568
        %v3577 = vpack.c.bf16 %v3571, %v3570
        %v3578 = vpack.c.bf16 %v3573, %v3572
        %v3579 = vpack.c.bf16 %v3575, %v3574
        %s3580 = scalar_lea.vmem %s3, 40
        %v3581 = vld [vmem:[%s3580] sm:$0xf]
        %v3583 = vsel %vm2892, %v3576, 0
        %v3586 = vsel %vm2892, %v3577, 0
        %v3589 = vsel %vm2892, %v3578, 0
        %v3592 = vsel %vm2892, %v3579, 0
        %v3595 = vsel %vm2985, %v3581, 0
        %3597 = vmatpush.bf16.msra.mxu0 0
        %3598 = vmatpush.bf16.msra.mxu0 0
        %3599 = vmatpush.bf16.msra.mxu0 0
        %3600 = vmatpush.bf16.msra.mxu0 0
        %3601 = vmatpush.bf16.msra.mxu0 0
        %3602 = vmatpush.bf16.msra.mxu0 0
        %3603 = vmatpush.bf16.msra.mxu0 0
        %3604 = vmatpush.bf16.msra.mxu0 %v3595
        %3605 = vmatmul.bf16.gmra.mxu0 %v3583
        %v3606 = vpop.f32.mrf.mxu0
        %v3607 = vadd.f32 0.0, %v3606
        %v3608 = vpop.f32.mrf.mxu0
        %v3609 = vadd.f32 0.0, %v3608
        %3610 = vmatmul.bf16.gmra.mxu0 %v3586
        %v3611 = vpop.f32.mrf.mxu0
        %v3612 = vadd.f32 0.0, %v3611
        %v3613 = vpop.f32.mrf.mxu0
        %v3614 = vadd.f32 0.0, %v3613
        %3615 = vmatmul.bf16.gmra.mxu0 %v3589
        %v3616 = vpop.f32.mrf.mxu0
        %v3617 = vadd.f32 0.0, %v3616
        %v3618 = vpop.f32.mrf.mxu0
        %v3619 = vadd.f32 0.0, %v3618
        %3620 = vmatmul.bf16.gmra.mxu0 %v3592
        %v3621 = vpop.f32.mrf.mxu0
        %v3622 = vadd.f32 0.0, %v3621
        %v3623 = vpop.f32.mrf.mxu0
        %v3624 = vadd.f32 0.0, %v3623
        %3625 = vdwg.mxu0
        %v3627 = vsel %vm2892, %v3562, 0
        %v3630 = vsel %vm2892, %v3563, 0
        %v3633 = vsel %vm2892, %v3564, 0
        %v3636 = vsel %vm2892, %v3565, 0
        %v3639 = vsel %vm2985, %v3567, 0
        %3641 = vmatpush.bf16.msra.mxu0 0
        %3642 = vmatpush.bf16.msra.mxu0 0
        %3643 = vmatpush.bf16.msra.mxu0 0
        %3644 = vmatpush.bf16.msra.mxu0 0
        %3645 = vmatpush.bf16.msra.mxu0 0
        %3646 = vmatpush.bf16.msra.mxu0 0
        %3647 = vmatpush.bf16.msra.mxu0 0
        %3648 = vmatpush.bf16.msra.mxu0 %v3639
        %3649 = vmatmul.bf16.gmra.mxu0 %v3627
        %v3650 = vpop.f32.mrf.mxu0
        %v3651 = vadd.f32 %v3607, %v3650
        %v3652 = vpop.f32.mrf.mxu0
        %v3653 = vadd.f32 %v3609, %v3652
        %3654 = vmatmul.bf16.gmra.mxu0 %v3630
        %v3655 = vpop.f32.mrf.mxu0
        %v3656 = vadd.f32 %v3612, %v3655
        %v3657 = vpop.f32.mrf.mxu0
        %v3658 = vadd.f32 %v3614, %v3657
        %3659 = vmatmul.bf16.gmra.mxu0 %v3633
        %v3660 = vpop.f32.mrf.mxu0
        %v3661 = vadd.f32 %v3617, %v3660
        %v3662 = vpop.f32.mrf.mxu0
        %v3663 = vadd.f32 %v3619, %v3662
        %3664 = vmatmul.bf16.gmra.mxu0 %v3636
        %v3665 = vpop.f32.mrf.mxu0
        %v3666 = vadd.f32 %v3622, %v3665
        %v3667 = vpop.f32.mrf.mxu0
        %v3668 = vadd.f32 %v3624, %v3667
        %3669 = vdwg.mxu0
        %v3670 = vld [vmem:[#allocation3 + $0x2] sm:$0xff]
        %v3671 = vld [vmem:[#allocation3 + $0x12] sm:$0xff]
        %v3672 = vld [vmem:[#allocation3 + $0x22] sm:$0xff]
        %v3673 = vld [vmem:[#allocation3 + $0x32] sm:$0xff]
        %v3674 = vld [vmem:[#allocation3 + $0x42] sm:$0xff]
        %v3675 = vld [vmem:[#allocation3 + $0x52] sm:$0xff]
        %v3676 = vld [vmem:[#allocation3 + $0x62] sm:$0xff]
        %v3677 = vld [vmem:[#allocation3 + $0x72] sm:$0xff]
        %v3678 = vpack.c.bf16 %v3671, %v3670
        %v3679 = vpack.c.bf16 %v3673, %v3672
        %v3680 = vpack.c.bf16 %v3675, %v3674
        %v3681 = vpack.c.bf16 %v3677, %v3676
        %s3682 = scalar_lea.vmem %s3, 44
        %v3683 = vld [vmem:[%s3682] sm:$0xf]
        %v3685 = vsel %vm2892, %v3678, 0
        %v3688 = vsel %vm2892, %v3679, 0
        %v3691 = vsel %vm2892, %v3680, 0
        %v3694 = vsel %vm2892, %v3681, 0
        %v3697 = vsel %vm2985, %v3683, 0
        %3699 = vmatpush.bf16.msra.mxu0 0
        %3700 = vmatpush.bf16.msra.mxu0 0
        %3701 = vmatpush.bf16.msra.mxu0 0
        %3702 = vmatpush.bf16.msra.mxu0 0
        %3703 = vmatpush.bf16.msra.mxu0 0
        %3704 = vmatpush.bf16.msra.mxu0 0
        %3705 = vmatpush.bf16.msra.mxu0 0
        %3706 = vmatpush.bf16.msra.mxu0 %v3697
        %3707 = vmatmul.bf16.gmra.mxu0 %v3685
        %v3708 = vpop.f32.mrf.mxu0
        %v3709 = vadd.f32 0.0, %v3708
        %v3710 = vpop.f32.mrf.mxu0
        %v3711 = vadd.f32 0.0, %v3710
        %3712 = vmatmul.bf16.gmra.mxu0 %v3688
        %v3713 = vpop.f32.mrf.mxu0
        %v3714 = vadd.f32 0.0, %v3713
        %v3715 = vpop.f32.mrf.mxu0
        %v3716 = vadd.f32 0.0, %v3715
        %3717 = vmatmul.bf16.gmra.mxu0 %v3691
        %v3718 = vpop.f32.mrf.mxu0
        %v3719 = vadd.f32 0.0, %v3718
        %v3720 = vpop.f32.mrf.mxu0
        %v3721 = vadd.f32 0.0, %v3720
        %3722 = vmatmul.bf16.gmra.mxu0 %v3694
        %v3723 = vpop.f32.mrf.mxu0
        %v3724 = vadd.f32 0.0, %v3723
        %v3725 = vpop.f32.mrf.mxu0
        %v3726 = vadd.f32 0.0, %v3725
        %3727 = vdwg.mxu0
        %v3728 = vadd.f32 %v3651, %v3709
        %v3729 = vadd.f32 %v3653, %v3711
        %v3730 = vadd.f32 %v3656, %v3714
        %v3731 = vadd.f32 %v3658, %v3716
        %v3732 = vadd.f32 %v3661, %v3719
        %v3733 = vadd.f32 %v3663, %v3721
        %v3734 = vadd.f32 %v3666, %v3724
        %v3735 = vadd.f32 %v3668, %v3726
        %v3736 = vld [vmem:[%s2936] sm:$0xff]
        %v3737 = vld [vmem:[%s2936 + $0x10] sm:$0xff]
        %v3738 = vld [vmem:[%s2936 + $0x20] sm:$0xff]
        %v3739 = vld [vmem:[%s2936 + $0x30] sm:$0xff]
        %v3740 = vld [vmem:[%s2936 + $0x40] sm:$0xff]
        %v3741 = vld [vmem:[%s2936 + $0x50] sm:$0xff]
        %v3742 = vld [vmem:[%s2936 + $0x60] sm:$0xff]
        %v3743 = vld [vmem:[%s2936 + $0x70] sm:$0xff]
        %v3744 = vpack.c.bf16 %v3737, %v3736
        %v3745 = vpack.c.bf16 %v3739, %v3738
        %v3746 = vpack.c.bf16 %v3741, %v3740
        %v3747 = vpack.c.bf16 %v3743, %v3742
        %s3748 = scalar_lea.vmem %s3, 48
        %v3749 = vld [vmem:[%s3748] sm:$0xf]
        %v3751 = vsel %vm2892, %v3744, 0
        %v3754 = vsel %vm2892, %v3745, 0
        %v3757 = vsel %vm2892, %v3746, 0
        %v3760 = vsel %vm2892, %v3747, 0
        %v3763 = vsel %vm2985, %v3749, 0
        %3765 = vmatpush.bf16.msra.mxu0 0
        %3766 = vmatpush.bf16.msra.mxu0 0
        %3767 = vmatpush.bf16.msra.mxu0 0
        %3768 = vmatpush.bf16.msra.mxu0 0
        %3769 = vmatpush.bf16.msra.mxu0 0
        %3770 = vmatpush.bf16.msra.mxu0 0
        %3771 = vmatpush.bf16.msra.mxu0 0
        %3772 = vmatpush.bf16.msra.mxu0 %v3763
        %3773 = vmatmul.bf16.gmra.mxu0 %v3751
        %v3774 = vpop.f32.mrf.mxu0
        %v3775 = vadd.f32 0.0, %v3774
        %v3776 = vpop.f32.mrf.mxu0
        %v3777 = vadd.f32 0.0, %v3776
        %3778 = vmatmul.bf16.gmra.mxu0 %v3754
        %v3779 = vpop.f32.mrf.mxu0
        %v3780 = vadd.f32 0.0, %v3779
        %v3781 = vpop.f32.mrf.mxu0
        %v3782 = vadd.f32 0.0, %v3781
        %3783 = vmatmul.bf16.gmra.mxu0 %v3757
        %v3784 = vpop.f32.mrf.mxu0
        %v3785 = vadd.f32 0.0, %v3784
        %v3786 = vpop.f32.mrf.mxu0
        %v3787 = vadd.f32 0.0, %v3786
        %3788 = vmatmul.bf16.gmra.mxu0 %v3760
        %v3789 = vpop.f32.mrf.mxu0
        %v3790 = vadd.f32 0.0, %v3789
        %v3791 = vpop.f32.mrf.mxu0
        %v3792 = vadd.f32 0.0, %v3791
        %3793 = vdwg.mxu0
        %v3794 = vadd.f32 %v3728, %v3775
        %v3795 = vadd.f32 %v3729, %v3777
        %v3796 = vadd.f32 %v3730, %v3780
        %v3797 = vadd.f32 %v3731, %v3782
        %v3798 = vadd.f32 %v3732, %v3785
        %v3799 = vadd.f32 %v3733, %v3787
        %v3800 = vadd.f32 %v3734, %v3790
        %v3801 = vadd.f32 %v3735, %v3792
        %v3802 = vld [vmem:[%s2936 + $0x1] sm:$0xff]
        %v3803 = vld [vmem:[%s2936 + $0x11] sm:$0xff]
        %v3804 = vld [vmem:[%s2936 + $0x21] sm:$0xff]
        %v3805 = vld [vmem:[%s2936 + $0x31] sm:$0xff]
        %v3806 = vld [vmem:[%s2936 + $0x41] sm:$0xff]
        %v3807 = vld [vmem:[%s2936 + $0x51] sm:$0xff]
        %v3808 = vld [vmem:[%s2936 + $0x61] sm:$0xff]
        %v3809 = vld [vmem:[%s2936 + $0x71] sm:$0xff]
        %v3810 = vpack.c.bf16 %v3803, %v3802
        %v3811 = vpack.c.bf16 %v3805, %v3804
        %v3812 = vpack.c.bf16 %v3807, %v3806
        %v3813 = vpack.c.bf16 %v3809, %v3808
        %s3814 = scalar_lea.vmem %s3, 52
        %v3815 = vld [vmem:[%s3814] sm:$0xf]
        %v3817 = vsel %vm2892, %v3810, 0
        %v3820 = vsel %vm2892, %v3811, 0
        %v3823 = vsel %vm2892, %v3812, 0
        %v3826 = vsel %vm2892, %v3813, 0
        %v3829 = vsel %vm2985, %v3815, 0
        %3831 = vmatpush.bf16.msra.mxu0 0
        %3832 = vmatpush.bf16.msra.mxu0 0
        %3833 = vmatpush.bf16.msra.mxu0 0
        %3834 = vmatpush.bf16.msra.mxu0 0
        %3835 = vmatpush.bf16.msra.mxu0 0
        %3836 = vmatpush.bf16.msra.mxu0 0
        %3837 = vmatpush.bf16.msra.mxu0 0
        %3838 = vmatpush.bf16.msra.mxu0 %v3829
        %3839 = vmatmul.bf16.gmra.mxu0 %v3817
        %v3840 = vpop.f32.mrf.mxu0
        %v3841 = vadd.f32 0.0, %v3840
        %v3842 = vpop.f32.mrf.mxu0
        %v3843 = vadd.f32 0.0, %v3842
        %3844 = vmatmul.bf16.gmra.mxu0 %v3820
        %v3845 = vpop.f32.mrf.mxu0
        %v3846 = vadd.f32 0.0, %v3845
        %v3847 = vpop.f32.mrf.mxu0
        %v3848 = vadd.f32 0.0, %v3847
        %3849 = vmatmul.bf16.gmra.mxu0 %v3823
        %v3850 = vpop.f32.mrf.mxu0
        %v3851 = vadd.f32 0.0, %v3850
        %v3852 = vpop.f32.mrf.mxu0
        %v3853 = vadd.f32 0.0, %v3852
        %3854 = vmatmul.bf16.gmra.mxu0 %v3826
        %v3855 = vpop.f32.mrf.mxu0
        %v3856 = vadd.f32 0.0, %v3855
        %v3857 = vpop.f32.mrf.mxu0
        %v3858 = vadd.f32 0.0, %v3857
        %3859 = vdwg.mxu0
        %v3860 = vadd.f32 %v3794, %v3841
        %v3861 = vadd.f32 %v3795, %v3843
        %v3862 = vadd.f32 %v3796, %v3846
        %v3863 = vadd.f32 %v3797, %v3848
        %v3864 = vadd.f32 %v3798, %v3851
        %v3865 = vadd.f32 %v3799, %v3853
        %v3866 = vadd.f32 %v3800, %v3856
        %v3867 = vadd.f32 %v3801, %v3858
        %v3868 = vld [vmem:[%s2936 + $0x2] sm:$0xff]
        %v3869 = vld [vmem:[%s2936 + $0x12] sm:$0xff]
        %v3870 = vld [vmem:[%s2936 + $0x22] sm:$0xff]
        %v3871 = vld [vmem:[%s2936 + $0x32] sm:$0xff]
        %v3872 = vld [vmem:[%s2936 + $0x42] sm:$0xff]
        %v3873 = vld [vmem:[%s2936 + $0x52] sm:$0xff]
        %v3874 = vld [vmem:[%s2936 + $0x62] sm:$0xff]
        %v3875 = vld [vmem:[%s2936 + $0x72] sm:$0xff]
        %v3876 = vpack.c.bf16 %v3869, %v3868
        %v3877 = vpack.c.bf16 %v3871, %v3870
        %v3878 = vpack.c.bf16 %v3873, %v3872
        %v3879 = vpack.c.bf16 %v3875, %v3874
        %s3880 = scalar_lea.vmem %s3, 56
        %v3881 = vld [vmem:[%s3880] sm:$0xf]
        %v3883 = vsel %vm2892, %v3876, 0
        %v3886 = vsel %vm2892, %v3877, 0
        %v3889 = vsel %vm2892, %v3878, 0
        %v3892 = vsel %vm2892, %v3879, 0
        %v3895 = vsel %vm2985, %v3881, 0
        %3897 = vmatpush.bf16.msra.mxu0 0
        %3898 = vmatpush.bf16.msra.mxu0 0
        %3899 = vmatpush.bf16.msra.mxu0 0
        %3900 = vmatpush.bf16.msra.mxu0 0
        %3901 = vmatpush.bf16.msra.mxu0 0
        %3902 = vmatpush.bf16.msra.mxu0 0
        %3903 = vmatpush.bf16.msra.mxu0 0
        %3904 = vmatpush.bf16.msra.mxu0 %v3895
        %3905 = vmatmul.bf16.gmra.mxu0 %v3883
        %v3906 = vpop.f32.mrf.mxu0
        %v3907 = vadd.f32 0.0, %v3906
        %v3908 = vpop.f32.mrf.mxu0
        %v3909 = vadd.f32 0.0, %v3908
        %3910 = vmatmul.bf16.gmra.mxu0 %v3886
        %v3911 = vpop.f32.mrf.mxu0
        %v3912 = vadd.f32 0.0, %v3911
        %v3913 = vpop.f32.mrf.mxu0
        %v3914 = vadd.f32 0.0, %v3913
        %3915 = vmatmul.bf16.gmra.mxu0 %v3889
        %v3916 = vpop.f32.mrf.mxu0
        %v3917 = vadd.f32 0.0, %v3916
        %v3918 = vpop.f32.mrf.mxu0
        %v3919 = vadd.f32 0.0, %v3918
        %3920 = vmatmul.bf16.gmra.mxu0 %v3892
        %v3921 = vpop.f32.mrf.mxu0
        %v3922 = vadd.f32 0.0, %v3921
        %v3923 = vpop.f32.mrf.mxu0
        %v3924 = vadd.f32 0.0, %v3923
        %3925 = vdwg.mxu0
        %v3926 = vadd.f32 %v3860, %v3907
        %v3927 = vadd.f32 %v3861, %v3909
        %v3928 = vadd.f32 %v3862, %v3912
        %v3929 = vadd.f32 %v3863, %v3914
        %v3930 = vadd.f32 %v3864, %v3917
        %v3931 = vadd.f32 %v3865, %v3919
        %v3932 = vadd.f32 %v3866, %v3922
        %v3933 = vadd.f32 %v3867, %v3924
        %v3934 = vld [vmem:[%s3326] sm:$0xff]
        %v3935 = vld [vmem:[%s3326 + $0x10] sm:$0xff]
        %v3936 = vld [vmem:[%s3326 + $0x20] sm:$0xff]
        %v3937 = vld [vmem:[%s3326 + $0x30] sm:$0xff]
        %v3938 = vld [vmem:[%s3326 + $0x40] sm:$0xff]
        %v3939 = vld [vmem:[%s3326 + $0x50] sm:$0xff]
        %v3940 = vld [vmem:[%s3326 + $0x60] sm:$0xff]
        %v3941 = vld [vmem:[%s3326 + $0x70] sm:$0xff]
        %v3942 = vpack.c.bf16 %v3935, %v3934
        %v3943 = vpack.c.bf16 %v3937, %v3936
        %v3944 = vpack.c.bf16 %v3939, %v3938
        %v3945 = vpack.c.bf16 %v3941, %v3940
        %s3946 = scalar_lea.vmem %s3, 60
        %v3947 = vld [vmem:[%s3946] sm:$0xf]
        %v3949 = vsel %vm2892, %v3942, 0
        %v3952 = vsel %vm2892, %v3943, 0
        %v3955 = vsel %vm2892, %v3944, 0
        %v3958 = vsel %vm2892, %v3945, 0
        %v3961 = vsel %vm2985, %v3947, 0
        %3963 = vmatpush.bf16.msra.mxu0 0
        %3964 = vmatpush.bf16.msra.mxu0 0
        %3965 = vmatpush.bf16.msra.mxu0 0
        %3966 = vmatpush.bf16.msra.mxu0 0
        %3967 = vmatpush.bf16.msra.mxu0 0
        %3968 = vmatpush.bf16.msra.mxu0 0
        %3969 = vmatpush.bf16.msra.mxu0 0
        %3970 = vmatpush.bf16.msra.mxu0 %v3961
        %3971 = vmatmul.bf16.gmra.mxu0 %v3949
        %v3972 = vpop.f32.mrf.mxu0
        %v3973 = vadd.f32 0.0, %v3972
        %v3974 = vpop.f32.mrf.mxu0
        %v3975 = vadd.f32 0.0, %v3974
        %3976 = vmatmul.bf16.gmra.mxu0 %v3952
        %v3977 = vpop.f32.mrf.mxu0
        %v3978 = vadd.f32 0.0, %v3977
        %v3979 = vpop.f32.mrf.mxu0
        %v3980 = vadd.f32 0.0, %v3979
        %3981 = vmatmul.bf16.gmra.mxu0 %v3955
        %v3982 = vpop.f32.mrf.mxu0
        %v3983 = vadd.f32 0.0, %v3982
        %v3984 = vpop.f32.mrf.mxu0
        %v3985 = vadd.f32 0.0, %v3984
        %3986 = vmatmul.bf16.gmra.mxu0 %v3958
        %v3987 = vpop.f32.mrf.mxu0
        %v3988 = vadd.f32 0.0, %v3987
        %v3989 = vpop.f32.mrf.mxu0
        %v3990 = vadd.f32 0.0, %v3989
        %3991 = vdwg.mxu0
        %v3992 = vadd.f32 %v3926, %v3973
        %v3993 = vadd.f32 %v3927, %v3975
        %v3994 = vadd.f32 %v3928, %v3978
        %v3995 = vadd.f32 %v3929, %v3980
        %v3996 = vadd.f32 %v3930, %v3983
        %v3997 = vadd.f32 %v3931, %v3985
        %v3998 = vadd.f32 %v3932, %v3988
        %v3999 = vadd.f32 %v3933, %v3990
        %v4000 = vld [vmem:[%s3326 + $0x1] sm:$0xff]
        %v4001 = vld [vmem:[%s3326 + $0x11] sm:$0xff]
        %v4002 = vld [vmem:[%s3326 + $0x21] sm:$0xff]
        %v4003 = vld [vmem:[%s3326 + $0x31] sm:$0xff]
        %v4004 = vld [vmem:[%s3326 + $0x41] sm:$0xff]
        %v4005 = vld [vmem:[%s3326 + $0x51] sm:$0xff]
        %v4006 = vld [vmem:[%s3326 + $0x61] sm:$0xff]
        %v4007 = vld [vmem:[%s3326 + $0x71] sm:$0xff]
        %v4008 = vpack.c.bf16 %v4001, %v4000
        %v4009 = vpack.c.bf16 %v4003, %v4002
        %v4010 = vpack.c.bf16 %v4005, %v4004
        %v4011 = vpack.c.bf16 %v4007, %v4006
        %s4012 = scalar_lea.vmem %s3, 64
        %v4013 = vld [vmem:[%s4012] sm:$0xf]
        %v4015 = vsel %vm2892, %v4008, 0
        %v4018 = vsel %vm2892, %v4009, 0
        %v4021 = vsel %vm2892, %v4010, 0
        %v4024 = vsel %vm2892, %v4011, 0
        %v4027 = vsel %vm2985, %v4013, 0
        %4029 = vmatpush.bf16.msra.mxu0 0
        %4030 = vmatpush.bf16.msra.mxu0 0
        %4031 = vmatpush.bf16.msra.mxu0 0
        %4032 = vmatpush.bf16.msra.mxu0 0
        %4033 = vmatpush.bf16.msra.mxu0 0
        %4034 = vmatpush.bf16.msra.mxu0 0
        %4035 = vmatpush.bf16.msra.mxu0 0
        %4036 = vmatpush.bf16.msra.mxu0 %v4027
        %4037 = vmatmul.bf16.gmra.mxu0 %v4015
        %v4038 = vpop.f32.mrf.mxu0
        %v4039 = vadd.f32 0.0, %v4038
        %v4040 = vpop.f32.mrf.mxu0
        %v4041 = vadd.f32 0.0, %v4040
        %4042 = vmatmul.bf16.gmra.mxu0 %v4018
        %v4043 = vpop.f32.mrf.mxu0
        %v4044 = vadd.f32 0.0, %v4043
        %v4045 = vpop.f32.mrf.mxu0
        %v4046 = vadd.f32 0.0, %v4045
        %4047 = vmatmul.bf16.gmra.mxu0 %v4021
        %v4048 = vpop.f32.mrf.mxu0
        %v4049 = vadd.f32 0.0, %v4048
        %v4050 = vpop.f32.mrf.mxu0
        %v4051 = vadd.f32 0.0, %v4050
        %4052 = vmatmul.bf16.gmra.mxu0 %v4024
        %v4053 = vpop.f32.mrf.mxu0
        %v4054 = vadd.f32 0.0, %v4053
        %v4055 = vpop.f32.mrf.mxu0
        %v4056 = vadd.f32 0.0, %v4055
        %4057 = vdwg.mxu0
        %v4058 = vadd.f32 %v3992, %v4039
        %v4059 = vadd.f32 %v3993, %v4041
        %v4060 = vadd.f32 %v3994, %v4044
        %v4061 = vadd.f32 %v3995, %v4046
        %v4062 = vadd.f32 %v3996, %v4049
        %v4063 = vadd.f32 %v3997, %v4051
        %v4064 = vadd.f32 %v3998, %v4054
        %v4065 = vadd.f32 %v3999, %v4056
        %v4066 = vld [vmem:[%s3326 + $0x2] sm:$0xff]
        %v4067 = vld [vmem:[%s3326 + $0x12] sm:$0xff]
        %v4068 = vld [vmem:[%s3326 + $0x22] sm:$0xff]
        %v4069 = vld [vmem:[%s3326 + $0x32] sm:$0xff]
        %v4070 = vld [vmem:[%s3326 + $0x42] sm:$0xff]
        %v4071 = vld [vmem:[%s3326 + $0x52] sm:$0xff]
        %v4072 = vld [vmem:[%s3326 + $0x62] sm:$0xff]
        %v4073 = vld [vmem:[%s3326 + $0x72] sm:$0xff]
        %v4074 = vpack.c.bf16 %v4067, %v4066
        %v4075 = vpack.c.bf16 %v4069, %v4068
        %v4076 = vpack.c.bf16 %v4071, %v4070
        %v4077 = vpack.c.bf16 %v4073, %v4072
        %s4078 = scalar_lea.vmem %s3, 68
        %v4079 = vld [vmem:[%s4078] sm:$0xf]
        %v4081 = vsel %vm2892, %v4074, 0
        %v4084 = vsel %vm2892, %v4075, 0
        %v4087 = vsel %vm2892, %v4076, 0
        %v4090 = vsel %vm2892, %v4077, 0
        %v4093 = vsel %vm2985, %v4079, 0
        %4095 = vmatpush.bf16.msra.mxu0 0
        %4096 = vmatpush.bf16.msra.mxu0 0
        %4097 = vmatpush.bf16.msra.mxu0 0
        %4098 = vmatpush.bf16.msra.mxu0 0
        %4099 = vmatpush.bf16.msra.mxu0 0
        %4100 = vmatpush.bf16.msra.mxu0 0
        %4101 = vmatpush.bf16.msra.mxu0 0
        %4102 = vmatpush.bf16.msra.mxu0 %v4093
        %4103 = vmatmul.bf16.gmra.mxu0 %v4081
        %v4104 = vpop.f32.mrf.mxu0
        %v4105 = vadd.f32 0.0, %v4104
        %v4106 = vpop.f32.mrf.mxu0
        %v4107 = vadd.f32 0.0, %v4106
        %4108 = vmatmul.bf16.gmra.mxu0 %v4084
        %v4109 = vpop.f32.mrf.mxu0
        %v4110 = vadd.f32 0.0, %v4109
        %v4111 = vpop.f32.mrf.mxu0
        %v4112 = vadd.f32 0.0, %v4111
        %4113 = vmatmul.bf16.gmra.mxu0 %v4087
        %v4114 = vpop.f32.mrf.mxu0
        %v4115 = vadd.f32 0.0, %v4114
        %v4116 = vpop.f32.mrf.mxu0
        %v4117 = vadd.f32 0.0, %v4116
        %4118 = vmatmul.bf16.gmra.mxu0 %v4090
        %v4119 = vpop.f32.mrf.mxu0
        %v4120 = vadd.f32 0.0, %v4119
        %v4121 = vpop.f32.mrf.mxu0
        %v4122 = vadd.f32 0.0, %v4121
        %4123 = vdwg.mxu0
        %v4124 = vadd.f32 %v4058, %v4105
        %v4125 = vadd.f32 %v4059, %v4107
        %v4126 = vadd.f32 %v4060, %v4110
        %v4127 = vadd.f32 %v4061, %v4112
        %v4128 = vadd.f32 %v4062, %v4115
        %v4129 = vadd.f32 %v4063, %v4117
        %v4130 = vadd.f32 %v4064, %v4120
        %v4131 = vadd.f32 %v4065, %v4122
        %v4133 = vperm.slane %v3553, 0
        %v4135 = vadd.f32 %v4124, %v4133
        %v4136 = vadd.f32 %v4125, %v4133
        %v4137 = vadd.f32 %v4126, %v4133
        %v4138 = vadd.f32 %v4127, %v4133
        %v4139 = vadd.f32 %v4128, %v4133
        %v4140 = vadd.f32 %v4129, %v4133
        %v4141 = vadd.f32 %v4130, %v4133
        %v4142 = vadd.f32 %v4131, %v4133
        %v4143 = vmax.f32 %v4135, 0.0
        %v4144 = vmax.f32 %v4136, 0.0
        %v4145 = vmax.f32 %v4137, 0.0
        %v4146 = vmax.f32 %v4138, 0.0
        %v4147 = vmax.f32 %v4139, 0.0
        %v4148 = vmax.f32 %v4140, 0.0
        %v4149 = vmax.f32 %v4141, 0.0
        %v4150 = vmax.f32 %v4142, 0.0
        %v4151 = vld [vmem:[%s217] sm:$0xff]
        %v4152 = vld [vmem:[%s217 + $0x8] sm:$0xff]
        %v4153 = vld [vmem:[%s217 + $0x10] sm:$0xff]
        %v4154 = vld [vmem:[%s217 + $0x18] sm:$0xff]
        %v4155 = vld [vmem:[%s217 + $0x20] sm:$0xff]
        %v4156 = vld [vmem:[%s217 + $0x28] sm:$0xff]
        %v4157 = vld [vmem:[%s217 + $0x30] sm:$0xff]
        %v4158 = vld [vmem:[%s217 + $0x38] sm:$0xff]
        %v4159 = vadd.f32 %v4151, %v4143
        %v4160 = vadd.f32 %v4152, %v4144
        %v4161 = vadd.f32 %v4153, %v4145
        %v4162 = vadd.f32 %v4154, %v4146
        %v4163 = vadd.f32 %v4155, %v4147
        %v4164 = vadd.f32 %v4156, %v4148
        %v4165 = vadd.f32 %v4157, %v4149
        %v4166 = vadd.f32 %v4158, %v4150
        %4167 = vst.msk [vmem:[%s217] sm:$0xff] %vm2892, %v4159
        %4168 = vst.msk [vmem:[%s217 + $0x8] sm:$0xff] %vm2892, %v4160
        %4169 = vst.msk [vmem:[%s217 + $0x10] sm:$0xff] %vm2892, %v4161
        %4170 = vst.msk [vmem:[%s217 + $0x18] sm:$0xff] %vm2892, %v4162
        %4171 = vst.msk [vmem:[%s217 + $0x20] sm:$0xff] %vm2892, %v4163
        %4172 = vst.msk [vmem:[%s217 + $0x28] sm:$0xff] %vm2892, %v4164
        %4173 = vst.msk [vmem:[%s217 + $0x30] sm:$0xff] %vm2892, %v4165
        %4174 = vst.msk [vmem:[%s217 + $0x38] sm:$0xff] %vm2892, %v4166
        %v4175 = vld [vmem:[%s217] sm:$0xff]
        %v4176 = vld [vmem:[%s217 + $0x8] sm:$0xff]
        %v4177 = vld [vmem:[%s217 + $0x10] sm:$0xff]
        %v4178 = vld [vmem:[%s217 + $0x18] sm:$0xff]
        %v4179 = vld [vmem:[%s217 + $0x20] sm:$0xff]
        %v4180 = vld [vmem:[%s217 + $0x28] sm:$0xff]
        %v4181 = vld [vmem:[%s217 + $0x30] sm:$0xff]
        %v4182 = vld [vmem:[%s217 + $0x38] sm:$0xff]
        %4183 = vst.msk [vmem:[%s2936 + $0x1] sm:$0xff] %vm2892, %v4175
        %4184 = vst.msk [vmem:[%s2936 + $0x11] sm:$0xff] %vm2892, %v4176
        %4185 = vst.msk [vmem:[%s2936 + $0x21] sm:$0xff] %vm2892, %v4177
        %4186 = vst.msk [vmem:[%s2936 + $0x31] sm:$0xff] %vm2892, %v4178
        %4187 = vst.msk [vmem:[%s2936 + $0x41] sm:$0xff] %vm2892, %v4179
        %4188 = vst.msk [vmem:[%s2936 + $0x51] sm:$0xff] %vm2892, %v4180
        %4189 = vst.msk [vmem:[%s2936 + $0x61] sm:$0xff] %vm2892, %v4181
        %4190 = vst.msk [vmem:[%s2936 + $0x71] sm:$0xff] %vm2892, %v4182
        %s4191 = scalar_lea.vmem %s4, 2
        %v4192 = vld [vmem:[%s4191] sm:$0x1]
        %v4193 = vld [vmem:[#allocation3] sm:$0xff]
        %v4194 = vld [vmem:[#allocation3 + $0x10] sm:$0xff]
        %v4195 = vld [vmem:[#allocation3 + $0x20] sm:$0xff]
        %v4196 = vld [vmem:[#allocation3 + $0x30] sm:$0xff]
        %v4197 = vld [vmem:[#allocation3 + $0x40] sm:$0xff]
        %v4198 = vld [vmem:[#allocation3 + $0x50] sm:$0xff]
        %v4199 = vld [vmem:[#allocation3 + $0x60] sm:$0xff]
        %v4200 = vld [vmem:[#allocation3 + $0x70] sm:$0xff]
        %v4201 = vpack.c.bf16 %v4194, %v4193
        %v4202 = vpack.c.bf16 %v4196, %v4195
        %v4203 = vpack.c.bf16 %v4198, %v4197
        %v4204 = vpack.c.bf16 %v4200, %v4199
        %s4205 = scalar_lea.vmem %s3, 72
        %v4206 = vld [vmem:[%s4205] sm:$0xf]
        %v4207 = vld [vmem:[#allocation3 + $0x1] sm:$0xff]
        %v4208 = vld [vmem:[#allocation3 + $0x11] sm:$0xff]
        %v4209 = vld [vmem:[#allocation3 + $0x21] sm:$0xff]
        %v4210 = vld [vmem:[#allocation3 + $0x31] sm:$0xff]
        %v4211 = vld [vmem:[#allocation3 + $0x41] sm:$0xff]
        %v4212 = vld [vmem:[#allocation3 + $0x51] sm:$0xff]
        %v4213 = vld [vmem:[#allocation3 + $0x61] sm:$0xff]
        %v4214 = vld [vmem:[#allocation3 + $0x71] sm:$0xff]
        %v4215 = vpack.c.bf16 %v4208, %v4207
        %v4216 = vpack.c.bf16 %v4210, %v4209
        %v4217 = vpack.c.bf16 %v4212, %v4211
        %v4218 = vpack.c.bf16 %v4214, %v4213
        %s4219 = scalar_lea.vmem %s3, 76
        %v4220 = vld [vmem:[%s4219] sm:$0xf]
        %v4222 = vsel %vm2892, %v4215, 0
        %v4225 = vsel %vm2892, %v4216, 0
        %v4228 = vsel %vm2892, %v4217, 0
        %v4231 = vsel %vm2892, %v4218, 0
        %v4234 = vsel %vm2985, %v4220, 0
        %4236 = vmatpush.bf16.msra.mxu0 0
        %4237 = vmatpush.bf16.msra.mxu0 0
        %4238 = vmatpush.bf16.msra.mxu0 0
        %4239 = vmatpush.bf16.msra.mxu0 0
        %4240 = vmatpush.bf16.msra.mxu0 0
        %4241 = vmatpush.bf16.msra.mxu0 0
        %4242 = vmatpush.bf16.msra.mxu0 0
        %4243 = vmatpush.bf16.msra.mxu0 %v4234
        %4244 = vmatmul.bf16.gmra.mxu0 %v4222
        %v4245 = vpop.f32.mrf.mxu0
        %v4246 = vadd.f32 0.0, %v4245
        %v4247 = vpop.f32.mrf.mxu0
        %v4248 = vadd.f32 0.0, %v4247
        %4249 = vmatmul.bf16.gmra.mxu0 %v4225
        %v4250 = vpop.f32.mrf.mxu0
        %v4251 = vadd.f32 0.0, %v4250
        %v4252 = vpop.f32.mrf.mxu0
        %v4253 = vadd.f32 0.0, %v4252
        %4254 = vmatmul.bf16.gmra.mxu0 %v4228
        %v4255 = vpop.f32.mrf.mxu0
        %v4256 = vadd.f32 0.0, %v4255
        %v4257 = vpop.f32.mrf.mxu0
        %v4258 = vadd.f32 0.0, %v4257
        %4259 = vmatmul.bf16.gmra.mxu0 %v4231
        %v4260 = vpop.f32.mrf.mxu0
        %v4261 = vadd.f32 0.0, %v4260
        %v4262 = vpop.f32.mrf.mxu0
        %v4263 = vadd.f32 0.0, %v4262
        %4264 = vdwg.mxu0
        %v4266 = vsel %vm2892, %v4201, 0
        %v4269 = vsel %vm2892, %v4202, 0
        %v4272 = vsel %vm2892, %v4203, 0
        %v4275 = vsel %vm2892, %v4204, 0
        %v4278 = vsel %vm2985, %v4206, 0
        %4280 = vmatpush.bf16.msra.mxu0 0
        %4281 = vmatpush.bf16.msra.mxu0 0
        %4282 = vmatpush.bf16.msra.mxu0 0
        %4283 = vmatpush.bf16.msra.mxu0 0
        %4284 = vmatpush.bf16.msra.mxu0 0
        %4285 = vmatpush.bf16.msra.mxu0 0
        %4286 = vmatpush.bf16.msra.mxu0 0
        %4287 = vmatpush.bf16.msra.mxu0 %v4278
        %4288 = vmatmul.bf16.gmra.mxu0 %v4266
        %v4289 = vpop.f32.mrf.mxu0
        %v4290 = vadd.f32 %v4246, %v4289
        %v4291 = vpop.f32.mrf.mxu0
        %v4292 = vadd.f32 %v4248, %v4291
        %4293 = vmatmul.bf16.gmra.mxu0 %v4269
        %v4294 = vpop.f32.mrf.mxu0
        %v4295 = vadd.f32 %v4251, %v4294
        %v4296 = vpop.f32.mrf.mxu0
        %v4297 = vadd.f32 %v4253, %v4296
        %4298 = vmatmul.bf16.gmra.mxu0 %v4272
        %v4299 = vpop.f32.mrf.mxu0
        %v4300 = vadd.f32 %v4256, %v4299
        %v4301 = vpop.f32.mrf.mxu0
        %v4302 = vadd.f32 %v4258, %v4301
        %4303 = vmatmul.bf16.gmra.mxu0 %v4275
        %v4304 = vpop.f32.mrf.mxu0
        %v4305 = vadd.f32 %v4261, %v4304
        %v4306 = vpop.f32.mrf.mxu0
        %v4307 = vadd.f32 %v4263, %v4306
        %4308 = vdwg.mxu0
        %v4309 = vld [vmem:[#allocation3 + $0x2] sm:$0xff]
        %v4310 = vld [vmem:[#allocation3 + $0x12] sm:$0xff]
        %v4311 = vld [vmem:[#allocation3 + $0x22] sm:$0xff]
        %v4312 = vld [vmem:[#allocation3 + $0x32] sm:$0xff]
        %v4313 = vld [vmem:[#allocation3 + $0x42] sm:$0xff]
        %v4314 = vld [vmem:[#allocation3 + $0x52] sm:$0xff]
        %v4315 = vld [vmem:[#allocation3 + $0x62] sm:$0xff]
        %v4316 = vld [vmem:[#allocation3 + $0x72] sm:$0xff]
        %v4317 = vpack.c.bf16 %v4310, %v4309
        %v4318 = vpack.c.bf16 %v4312, %v4311
        %v4319 = vpack.c.bf16 %v4314, %v4313
        %v4320 = vpack.c.bf16 %v4316, %v4315
        %s4321 = scalar_lea.vmem %s3, 80
        %v4322 = vld [vmem:[%s4321] sm:$0xf]
        %v4324 = vsel %vm2892, %v4317, 0
        %v4327 = vsel %vm2892, %v4318, 0
        %v4330 = vsel %vm2892, %v4319, 0
        %v4333 = vsel %vm2892, %v4320, 0
        %v4336 = vsel %vm2985, %v4322, 0
        %4338 = vmatpush.bf16.msra.mxu0 0
        %4339 = vmatpush.bf16.msra.mxu0 0
        %4340 = vmatpush.bf16.msra.mxu0 0
        %4341 = vmatpush.bf16.msra.mxu0 0
        %4342 = vmatpush.bf16.msra.mxu0 0
        %4343 = vmatpush.bf16.msra.mxu0 0
        %4344 = vmatpush.bf16.msra.mxu0 0
        %4345 = vmatpush.bf16.msra.mxu0 %v4336
        %4346 = vmatmul.bf16.gmra.mxu0 %v4324
        %v4347 = vpop.f32.mrf.mxu0
        %v4348 = vadd.f32 0.0, %v4347
        %v4349 = vpop.f32.mrf.mxu0
        %v4350 = vadd.f32 0.0, %v4349
        %4351 = vmatmul.bf16.gmra.mxu0 %v4327
        %v4352 = vpop.f32.mrf.mxu0
        %v4353 = vadd.f32 0.0, %v4352
        %v4354 = vpop.f32.mrf.mxu0
        %v4355 = vadd.f32 0.0, %v4354
        %4356 = vmatmul.bf16.gmra.mxu0 %v4330
        %v4357 = vpop.f32.mrf.mxu0
        %v4358 = vadd.f32 0.0, %v4357
        %v4359 = vpop.f32.mrf.mxu0
        %v4360 = vadd.f32 0.0, %v4359
        %4361 = vmatmul.bf16.gmra.mxu0 %v4333
        %v4362 = vpop.f32.mrf.mxu0
        %v4363 = vadd.f32 0.0, %v4362
        %v4364 = vpop.f32.mrf.mxu0
        %v4365 = vadd.f32 0.0, %v4364
        %4366 = vdwg.mxu0
        %v4367 = vadd.f32 %v4290, %v4348
        %v4368 = vadd.f32 %v4292, %v4350
        %v4369 = vadd.f32 %v4295, %v4353
        %v4370 = vadd.f32 %v4297, %v4355
        %v4371 = vadd.f32 %v4300, %v4358
        %v4372 = vadd.f32 %v4302, %v4360
        %v4373 = vadd.f32 %v4305, %v4363
        %v4374 = vadd.f32 %v4307, %v4365
        %v4375 = vld [vmem:[%s2936] sm:$0xff]
        %v4376 = vld [vmem:[%s2936 + $0x10] sm:$0xff]
        %v4377 = vld [vmem:[%s2936 + $0x20] sm:$0xff]
        %v4378 = vld [vmem:[%s2936 + $0x30] sm:$0xff]
        %v4379 = vld [vmem:[%s2936 + $0x40] sm:$0xff]
        %v4380 = vld [vmem:[%s2936 + $0x50] sm:$0xff]
        %v4381 = vld [vmem:[%s2936 + $0x60] sm:$0xff]
        %v4382 = vld [vmem:[%s2936 + $0x70] sm:$0xff]
        %v4383 = vpack.c.bf16 %v4376, %v4375
        %v4384 = vpack.c.bf16 %v4378, %v4377
        %v4385 = vpack.c.bf16 %v4380, %v4379
        %v4386 = vpack.c.bf16 %v4382, %v4381
        %s4387 = scalar_lea.vmem %s3, 84
        %v4388 = vld [vmem:[%s4387] sm:$0xf]
        %v4390 = vsel %vm2892, %v4383, 0
        %v4393 = vsel %vm2892, %v4384, 0
        %v4396 = vsel %vm2892, %v4385, 0
        %v4399 = vsel %vm2892, %v4386, 0
        %v4402 = vsel %vm2985, %v4388, 0
        %4404 = vmatpush.bf16.msra.mxu0 0
        %4405 = vmatpush.bf16.msra.mxu0 0
        %4406 = vmatpush.bf16.msra.mxu0 0
        %4407 = vmatpush.bf16.msra.mxu0 0
        %4408 = vmatpush.bf16.msra.mxu0 0
        %4409 = vmatpush.bf16.msra.mxu0 0
        %4410 = vmatpush.bf16.msra.mxu0 0
        %4411 = vmatpush.bf16.msra.mxu0 %v4402
        %4412 = vmatmul.bf16.gmra.mxu0 %v4390
        %v4413 = vpop.f32.mrf.mxu0
        %v4414 = vadd.f32 0.0, %v4413
        %v4415 = vpop.f32.mrf.mxu0
        %v4416 = vadd.f32 0.0, %v4415
        %4417 = vmatmul.bf16.gmra.mxu0 %v4393
        %v4418 = vpop.f32.mrf.mxu0
        %v4419 = vadd.f32 0.0, %v4418
        %v4420 = vpop.f32.mrf.mxu0
        %v4421 = vadd.f32 0.0, %v4420
        %4422 = vmatmul.bf16.gmra.mxu0 %v4396
        %v4423 = vpop.f32.mrf.mxu0
        %v4424 = vadd.f32 0.0, %v4423
        %v4425 = vpop.f32.mrf.mxu0
        %v4426 = vadd.f32 0.0, %v4425
        %4427 = vmatmul.bf16.gmra.mxu0 %v4399
        %v4428 = vpop.f32.mrf.mxu0
        %v4429 = vadd.f32 0.0, %v4428
        %v4430 = vpop.f32.mrf.mxu0
        %v4431 = vadd.f32 0.0, %v4430
        %4432 = vdwg.mxu0
        %v4433 = vadd.f32 %v4367, %v4414
        %v4434 = vadd.f32 %v4368, %v4416
        %v4435 = vadd.f32 %v4369, %v4419
        %v4436 = vadd.f32 %v4370, %v4421
        %v4437 = vadd.f32 %v4371, %v4424
        %v4438 = vadd.f32 %v4372, %v4426
        %v4439 = vadd.f32 %v4373, %v4429
        %v4440 = vadd.f32 %v4374, %v4431
        %v4441 = vld [vmem:[%s2936 + $0x1] sm:$0xff]
        %v4442 = vld [vmem:[%s2936 + $0x11] sm:$0xff]
        %v4443 = vld [vmem:[%s2936 + $0x21] sm:$0xff]
        %v4444 = vld [vmem:[%s2936 + $0x31] sm:$0xff]
        %v4445 = vld [vmem:[%s2936 + $0x41] sm:$0xff]
        %v4446 = vld [vmem:[%s2936 + $0x51] sm:$0xff]
        %v4447 = vld [vmem:[%s2936 + $0x61] sm:$0xff]
        %v4448 = vld [vmem:[%s2936 + $0x71] sm:$0xff]
        %v4449 = vpack.c.bf16 %v4442, %v4441
        %v4450 = vpack.c.bf16 %v4444, %v4443
        %v4451 = vpack.c.bf16 %v4446, %v4445
        %v4452 = vpack.c.bf16 %v4448, %v4447
        %s4453 = scalar_lea.vmem %s3, 88
        %v4454 = vld [vmem:[%s4453] sm:$0xf]
        %v4456 = vsel %vm2892, %v4449, 0
        %v4459 = vsel %vm2892, %v4450, 0
        %v4462 = vsel %vm2892, %v4451, 0
        %v4465 = vsel %vm2892, %v4452, 0
        %v4468 = vsel %vm2985, %v4454, 0
        %4470 = vmatpush.bf16.msra.mxu0 0
        %4471 = vmatpush.bf16.msra.mxu0 0
        %4472 = vmatpush.bf16.msra.mxu0 0
        %4473 = vmatpush.bf16.msra.mxu0 0
        %4474 = vmatpush.bf16.msra.mxu0 0
        %4475 = vmatpush.bf16.msra.mxu0 0
        %4476 = vmatpush.bf16.msra.mxu0 0
        %4477 = vmatpush.bf16.msra.mxu0 %v4468
        %4478 = vmatmul.bf16.gmra.mxu0 %v4456
        %v4479 = vpop.f32.mrf.mxu0
        %v4480 = vadd.f32 0.0, %v4479
        %v4481 = vpop.f32.mrf.mxu0
        %v4482 = vadd.f32 0.0, %v4481
        %4483 = vmatmul.bf16.gmra.mxu0 %v4459
        %v4484 = vpop.f32.mrf.mxu0
        %v4485 = vadd.f32 0.0, %v4484
        %v4486 = vpop.f32.mrf.mxu0
        %v4487 = vadd.f32 0.0, %v4486
        %4488 = vmatmul.bf16.gmra.mxu0 %v4462
        %v4489 = vpop.f32.mrf.mxu0
        %v4490 = vadd.f32 0.0, %v4489
        %v4491 = vpop.f32.mrf.mxu0
        %v4492 = vadd.f32 0.0, %v4491
        %4493 = vmatmul.bf16.gmra.mxu0 %v4465
        %v4494 = vpop.f32.mrf.mxu0
        %v4495 = vadd.f32 0.0, %v4494
        %v4496 = vpop.f32.mrf.mxu0
        %v4497 = vadd.f32 0.0, %v4496
        %4498 = vdwg.mxu0
        %v4499 = vadd.f32 %v4433, %v4480
        %v4500 = vadd.f32 %v4434, %v4482
        %v4501 = vadd.f32 %v4435, %v4485
        %v4502 = vadd.f32 %v4436, %v4487
        %v4503 = vadd.f32 %v4437, %v4490
        %v4504 = vadd.f32 %v4438, %v4492
        %v4505 = vadd.f32 %v4439, %v4495
        %v4506 = vadd.f32 %v4440, %v4497
        %v4507 = vld [vmem:[%s2936 + $0x2] sm:$0xff]
        %v4508 = vld [vmem:[%s2936 + $0x12] sm:$0xff]
        %v4509 = vld [vmem:[%s2936 + $0x22] sm:$0xff]
        %v4510 = vld [vmem:[%s2936 + $0x32] sm:$0xff]
        %v4511 = vld [vmem:[%s2936 + $0x42] sm:$0xff]
        %v4512 = vld [vmem:[%s2936 + $0x52] sm:$0xff]
        %v4513 = vld [vmem:[%s2936 + $0x62] sm:$0xff]
        %v4514 = vld [vmem:[%s2936 + $0x72] sm:$0xff]
        %v4515 = vpack.c.bf16 %v4508, %v4507
        %v4516 = vpack.c.bf16 %v4510, %v4509
        %v4517 = vpack.c.bf16 %v4512, %v4511
        %v4518 = vpack.c.bf16 %v4514, %v4513
        %s4519 = scalar_lea.vmem %s3, 92
        %v4520 = vld [vmem:[%s4519] sm:$0xf]
        %v4522 = vsel %vm2892, %v4515, 0
        %v4525 = vsel %vm2892, %v4516, 0
        %v4528 = vsel %vm2892, %v4517, 0
        %v4531 = vsel %vm2892, %v4518, 0
        %v4534 = vsel %vm2985, %v4520, 0
        %4536 = vmatpush.bf16.msra.mxu0 0
        %4537 = vmatpush.bf16.msra.mxu0 0
        %4538 = vmatpush.bf16.msra.mxu0 0
        %4539 = vmatpush.bf16.msra.mxu0 0
        %4540 = vmatpush.bf16.msra.mxu0 0
        %4541 = vmatpush.bf16.msra.mxu0 0
        %4542 = vmatpush.bf16.msra.mxu0 0
        %4543 = vmatpush.bf16.msra.mxu0 %v4534
        %4544 = vmatmul.bf16.gmra.mxu0 %v4522
        %v4545 = vpop.f32.mrf.mxu0
        %v4546 = vadd.f32 0.0, %v4545
        %v4547 = vpop.f32.mrf.mxu0
        %v4548 = vadd.f32 0.0, %v4547
        %4549 = vmatmul.bf16.gmra.mxu0 %v4525
        %v4550 = vpop.f32.mrf.mxu0
        %v4551 = vadd.f32 0.0, %v4550
        %v4552 = vpop.f32.mrf.mxu0
        %v4553 = vadd.f32 0.0, %v4552
        %4554 = vmatmul.bf16.gmra.mxu0 %v4528
        %v4555 = vpop.f32.mrf.mxu0
        %v4556 = vadd.f32 0.0, %v4555
        %v4557 = vpop.f32.mrf.mxu0
        %v4558 = vadd.f32 0.0, %v4557
        %4559 = vmatmul.bf16.gmra.mxu0 %v4531
        %v4560 = vpop.f32.mrf.mxu0
        %v4561 = vadd.f32 0.0, %v4560
        %v4562 = vpop.f32.mrf.mxu0
        %v4563 = vadd.f32 0.0, %v4562
        %4564 = vdwg.mxu0
        %v4565 = vadd.f32 %v4499, %v4546
        %v4566 = vadd.f32 %v4500, %v4548
        %v4567 = vadd.f32 %v4501, %v4551
        %v4568 = vadd.f32 %v4502, %v4553
        %v4569 = vadd.f32 %v4503, %v4556
        %v4570 = vadd.f32 %v4504, %v4558
        %v4571 = vadd.f32 %v4505, %v4561
        %v4572 = vadd.f32 %v4506, %v4563
        %v4573 = vld [vmem:[%s3326] sm:$0xff]
        %v4574 = vld [vmem:[%s3326 + $0x10] sm:$0xff]
        %v4575 = vld [vmem:[%s3326 + $0x20] sm:$0xff]
        %v4576 = vld [vmem:[%s3326 + $0x30] sm:$0xff]
        %v4577 = vld [vmem:[%s3326 + $0x40] sm:$0xff]
        %v4578 = vld [vmem:[%s3326 + $0x50] sm:$0xff]
        %v4579 = vld [vmem:[%s3326 + $0x60] sm:$0xff]
        %v4580 = vld [vmem:[%s3326 + $0x70] sm:$0xff]
        %v4581 = vpack.c.bf16 %v4574, %v4573
        %v4582 = vpack.c.bf16 %v4576, %v4575
        %v4583 = vpack.c.bf16 %v4578, %v4577
        %v4584 = vpack.c.bf16 %v4580, %v4579
        %s4585 = scalar_lea.vmem %s3, 96
        %v4586 = vld [vmem:[%s4585] sm:$0xf]
        %v4588 = vsel %vm2892, %v4581, 0
        %v4591 = vsel %vm2892, %v4582, 0
        %v4594 = vsel %vm2892, %v4583, 0
        %v4597 = vsel %vm2892, %v4584, 0
        %v4600 = vsel %vm2985, %v4586, 0
        %4602 = vmatpush.bf16.msra.mxu0 0
        %4603 = vmatpush.bf16.msra.mxu0 0
        %4604 = vmatpush.bf16.msra.mxu0 0
        %4605 = vmatpush.bf16.msra.mxu0 0
        %4606 = vmatpush.bf16.msra.mxu0 0
        %4607 = vmatpush.bf16.msra.mxu0 0
        %4608 = vmatpush.bf16.msra.mxu0 0
        %4609 = vmatpush.bf16.msra.mxu0 %v4600
        %4610 = vmatmul.bf16.gmra.mxu0 %v4588
        %v4611 = vpop.f32.mrf.mxu0
        %v4612 = vadd.f32 0.0, %v4611
        %v4613 = vpop.f32.mrf.mxu0
        %v4614 = vadd.f32 0.0, %v4613
        %4615 = vmatmul.bf16.gmra.mxu0 %v4591
        %v4616 = vpop.f32.mrf.mxu0
        %v4617 = vadd.f32 0.0, %v4616
        %v4618 = vpop.f32.mrf.mxu0
        %v4619 = vadd.f32 0.0, %v4618
        %4620 = vmatmul.bf16.gmra.mxu0 %v4594
        %v4621 = vpop.f32.mrf.mxu0
        %v4622 = vadd.f32 0.0, %v4621
        %v4623 = vpop.f32.mrf.mxu0
        %v4624 = vadd.f32 0.0, %v4623
        %4625 = vmatmul.bf16.gmra.mxu0 %v4597
        %v4626 = vpop.f32.mrf.mxu0
        %v4627 = vadd.f32 0.0, %v4626
        %v4628 = vpop.f32.mrf.mxu0
        %v4629 = vadd.f32 0.0, %v4628
        %4630 = vdwg.mxu0
        %v4631 = vadd.f32 %v4565, %v4612
        %v4632 = vadd.f32 %v4566, %v4614
        %v4633 = vadd.f32 %v4567, %v4617
        %v4634 = vadd.f32 %v4568, %v4619
        %v4635 = vadd.f32 %v4569, %v4622
        %v4636 = vadd.f32 %v4570, %v4624
        %v4637 = vadd.f32 %v4571, %v4627
        %v4638 = vadd.f32 %v4572, %v4629
        %v4639 = vld [vmem:[%s3326 + $0x1] sm:$0xff]
        %v4640 = vld [vmem:[%s3326 + $0x11] sm:$0xff]
        %v4641 = vld [vmem:[%s3326 + $0x21] sm:$0xff]
        %v4642 = vld [vmem:[%s3326 + $0x31] sm:$0xff]
        %v4643 = vld [vmem:[%s3326 + $0x41] sm:$0xff]
        %v4644 = vld [vmem:[%s3326 + $0x51] sm:$0xff]
        %v4645 = vld [vmem:[%s3326 + $0x61] sm:$0xff]
        %v4646 = vld [vmem:[%s3326 + $0x71] sm:$0xff]
        %v4647 = vpack.c.bf16 %v4640, %v4639
        %v4648 = vpack.c.bf16 %v4642, %v4641
        %v4649 = vpack.c.bf16 %v4644, %v4643
        %v4650 = vpack.c.bf16 %v4646, %v4645
        %s4651 = scalar_lea.vmem %s3, 100
        %v4652 = vld [vmem:[%s4651] sm:$0xf]
        %v4654 = vsel %vm2892, %v4647, 0
        %v4657 = vsel %vm2892, %v4648, 0
        %v4660 = vsel %vm2892, %v4649, 0
        %v4663 = vsel %vm2892, %v4650, 0
        %v4666 = vsel %vm2985, %v4652, 0
        %4668 = vmatpush.bf16.msra.mxu0 0
        %4669 = vmatpush.bf16.msra.mxu0 0
        %4670 = vmatpush.bf16.msra.mxu0 0
        %4671 = vmatpush.bf16.msra.mxu0 0
        %4672 = vmatpush.bf16.msra.mxu0 0
        %4673 = vmatpush.bf16.msra.mxu0 0
        %4674 = vmatpush.bf16.msra.mxu0 0
        %4675 = vmatpush.bf16.msra.mxu0 %v4666
        %4676 = vmatmul.bf16.gmra.mxu0 %v4654
        %v4677 = vpop.f32.mrf.mxu0
        %v4678 = vadd.f32 0.0, %v4677
        %v4679 = vpop.f32.mrf.mxu0
        %v4680 = vadd.f32 0.0, %v4679
        %4681 = vmatmul.bf16.gmra.mxu0 %v4657
        %v4682 = vpop.f32.mrf.mxu0
        %v4683 = vadd.f32 0.0, %v4682
        %v4684 = vpop.f32.mrf.mxu0
        %v4685 = vadd.f32 0.0, %v4684
        %4686 = vmatmul.bf16.gmra.mxu0 %v4660
        %v4687 = vpop.f32.mrf.mxu0
        %v4688 = vadd.f32 0.0, %v4687
        %v4689 = vpop.f32.mrf.mxu0
        %v4690 = vadd.f32 0.0, %v4689
        %4691 = vmatmul.bf16.gmra.mxu0 %v4663
        %v4692 = vpop.f32.mrf.mxu0
        %v4693 = vadd.f32 0.0, %v4692
        %v4694 = vpop.f32.mrf.mxu0
        %v4695 = vadd.f32 0.0, %v4694
        %4696 = vdwg.mxu0
        %v4697 = vadd.f32 %v4631, %v4678
        %v4698 = vadd.f32 %v4632, %v4680
        %v4699 = vadd.f32 %v4633, %v4683
        %v4700 = vadd.f32 %v4634, %v4685
        %v4701 = vadd.f32 %v4635, %v4688
        %v4702 = vadd.f32 %v4636, %v4690
        %v4703 = vadd.f32 %v4637, %v4693
        %v4704 = vadd.f32 %v4638, %v4695
        %v4705 = vld [vmem:[%s3326 + $0x2] sm:$0xff]
        %v4706 = vld [vmem:[%s3326 + $0x12] sm:$0xff]
        %v4707 = vld [vmem:[%s3326 + $0x22] sm:$0xff]
        %v4708 = vld [vmem:[%s3326 + $0x32] sm:$0xff]
        %v4709 = vld [vmem:[%s3326 + $0x42] sm:$0xff]
        %v4710 = vld [vmem:[%s3326 + $0x52] sm:$0xff]
        %v4711 = vld [vmem:[%s3326 + $0x62] sm:$0xff]
        %v4712 = vld [vmem:[%s3326 + $0x72] sm:$0xff]
        %v4713 = vpack.c.bf16 %v4706, %v4705
        %v4714 = vpack.c.bf16 %v4708, %v4707
        %v4715 = vpack.c.bf16 %v4710, %v4709
        %v4716 = vpack.c.bf16 %v4712, %v4711
        %s4717 = scalar_lea.vmem %s3, 104
        %v4718 = vld [vmem:[%s4717] sm:$0xf]
        %v4720 = vsel %vm2892, %v4713, 0
        %v4723 = vsel %vm2892, %v4714, 0
        %v4726 = vsel %vm2892, %v4715, 0
        %v4729 = vsel %vm2892, %v4716, 0
        %v4732 = vsel %vm2985, %v4718, 0
        %4734 = vmatpush.bf16.msra.mxu0 0
        %4735 = vmatpush.bf16.msra.mxu0 0
        %4736 = vmatpush.bf16.msra.mxu0 0
        %4737 = vmatpush.bf16.msra.mxu0 0
        %4738 = vmatpush.bf16.msra.mxu0 0
        %4739 = vmatpush.bf16.msra.mxu0 0
        %4740 = vmatpush.bf16.msra.mxu0 0
        %4741 = vmatpush.bf16.msra.mxu0 %v4732
        %4742 = vmatmul.bf16.gmra.mxu0 %v4720
        %v4743 = vpop.f32.mrf.mxu0
        %v4744 = vadd.f32 0.0, %v4743
        %v4745 = vpop.f32.mrf.mxu0
        %v4746 = vadd.f32 0.0, %v4745
        %4747 = vmatmul.bf16.gmra.mxu0 %v4723
        %v4748 = vpop.f32.mrf.mxu0
        %v4749 = vadd.f32 0.0, %v4748
        %v4750 = vpop.f32.mrf.mxu0
        %v4751 = vadd.f32 0.0, %v4750
        %4752 = vmatmul.bf16.gmra.mxu0 %v4726
        %v4753 = vpop.f32.mrf.mxu0
        %v4754 = vadd.f32 0.0, %v4753
        %v4755 = vpop.f32.mrf.mxu0
        %v4756 = vadd.f32 0.0, %v4755
        %4757 = vmatmul.bf16.gmra.mxu0 %v4729
        %v4758 = vpop.f32.mrf.mxu0
        %v4759 = vadd.f32 0.0, %v4758
        %v4760 = vpop.f32.mrf.mxu0
        %v4761 = vadd.f32 0.0, %v4760
        %4762 = vdwg.mxu0
        %v4763 = vadd.f32 %v4697, %v4744
        %v4764 = vadd.f32 %v4698, %v4746
        %v4765 = vadd.f32 %v4699, %v4749
        %v4766 = vadd.f32 %v4700, %v4751
        %v4767 = vadd.f32 %v4701, %v4754
        %v4768 = vadd.f32 %v4702, %v4756
        %v4769 = vadd.f32 %v4703, %v4759
        %v4770 = vadd.f32 %v4704, %v4761
        %v4772 = vperm.slane %v4192, 0
        %v4774 = vadd.f32 %v4763, %v4772
        %v4775 = vadd.f32 %v4764, %v4772
        %v4776 = vadd.f32 %v4765, %v4772
        %v4777 = vadd.f32 %v4766, %v4772
        %v4778 = vadd.f32 %v4767, %v4772
        %v4779 = vadd.f32 %v4768, %v4772
        %v4780 = vadd.f32 %v4769, %v4772
        %v4781 = vadd.f32 %v4770, %v4772
        %v4782 = vmax.f32 %v4774, 0.0
        %v4783 = vmax.f32 %v4775, 0.0
        %v4784 = vmax.f32 %v4776, 0.0
        %v4785 = vmax.f32 %v4777, 0.0
        %v4786 = vmax.f32 %v4778, 0.0
        %v4787 = vmax.f32 %v4779, 0.0
        %v4788 = vmax.f32 %v4780, 0.0
        %v4789 = vmax.f32 %v4781, 0.0
        %4790 = vst.msk [vmem:[%s2936 + $0x1] sm:$0xff] %vm2892, %v4782
        %4791 = vst.msk [vmem:[%s2936 + $0x11] sm:$0xff] %vm2892, %v4783
        %4792 = vst.msk [vmem:[%s2936 + $0x21] sm:$0xff] %vm2892, %v4784
        %4793 = vst.msk [vmem:[%s2936 + $0x31] sm:$0xff] %vm2892, %v4785
        %4794 = vst.msk [vmem:[%s2936 + $0x41] sm:$0xff] %vm2892, %v4786
        %4795 = vst.msk [vmem:[%s2936 + $0x51] sm:$0xff] %vm2892, %v4787
        %4796 = vst.msk [vmem:[%s2936 + $0x61] sm:$0xff] %vm2892, %v4788
        %4797 = vst.msk [vmem:[%s2936 + $0x71] sm:$0xff] %vm2892, %v4789
        %s4798 = scalar_lea.vmem %s4, 3
        %v4799 = vld [vmem:[%s4798] sm:$0x1]
        %v4800 = vld [vmem:[#allocation3] sm:$0xff]
        %v4801 = vld [vmem:[#allocation3 + $0x10] sm:$0xff]
        %v4802 = vld [vmem:[#allocation3 + $0x20] sm:$0xff]
        %v4803 = vld [vmem:[#allocation3 + $0x30] sm:$0xff]
        %v4804 = vld [vmem:[#allocation3 + $0x40] sm:$0xff]
        %v4805 = vld [vmem:[#allocation3 + $0x50] sm:$0xff]
        %v4806 = vld [vmem:[#allocation3 + $0x60] sm:$0xff]
        %v4807 = vld [vmem:[#allocation3 + $0x70] sm:$0xff]
        %v4808 = vpack.c.bf16 %v4801, %v4800
        %v4809 = vpack.c.bf16 %v4803, %v4802
        %v4810 = vpack.c.bf16 %v4805, %v4804
        %v4811 = vpack.c.bf16 %v4807, %v4806
        %s4812 = scalar_lea.vmem %s3, 108
        %v4813 = vld [vmem:[%s4812] sm:$0xf]
        %v4814 = vld [vmem:[#allocation3 + $0x1] sm:$0xff]
        %v4815 = vld [vmem:[#allocation3 + $0x11] sm:$0xff]
        %v4816 = vld [vmem:[#allocation3 + $0x21] sm:$0xff]
        %v4817 = vld [vmem:[#allocation3 + $0x31] sm:$0xff]
        %v4818 = vld [vmem:[#allocation3 + $0x41] sm:$0xff]
        %v4819 = vld [vmem:[#allocation3 + $0x51] sm:$0xff]
        %v4820 = vld [vmem:[#allocation3 + $0x61] sm:$0xff]
        %v4821 = vld [vmem:[#allocation3 + $0x71] sm:$0xff]
        %v4822 = vpack.c.bf16 %v4815, %v4814
        %v4823 = vpack.c.bf16 %v4817, %v4816
        %v4824 = vpack.c.bf16 %v4819, %v4818
        %v4825 = vpack.c.bf16 %v4821, %v4820
        %s4826 = scalar_lea.vmem %s3, 112
        %v4827 = vld [vmem:[%s4826] sm:$0xf]
        %v4829 = vsel %vm2892, %v4822, 0
        %v4832 = vsel %vm2892, %v4823, 0
        %v4835 = vsel %vm2892, %v4824, 0
        %v4838 = vsel %vm2892, %v4825, 0
        %v4841 = vsel %vm2985, %v4827, 0
        %4843 = vmatpush.bf16.msra.mxu0 0
        %4844 = vmatpush.bf16.msra.mxu0 0
        %4845 = vmatpush.bf16.msra.mxu0 0
        %4846 = vmatpush.bf16.msra.mxu0 0
        %4847 = vmatpush.bf16.msra.mxu0 0
        %4848 = vmatpush.bf16.msra.mxu0 0
        %4849 = vmatpush.bf16.msra.mxu0 0
        %4850 = vmatpush.bf16.msra.mxu0 %v4841
        %4851 = vmatmul.bf16.gmra.mxu0 %v4829
        %v4852 = vpop.f32.mrf.mxu0
        %v4853 = vadd.f32 0.0, %v4852
        %v4854 = vpop.f32.mrf.mxu0
        %v4855 = vadd.f32 0.0, %v4854
        %4856 = vmatmul.bf16.gmra.mxu0 %v4832
        %v4857 = vpop.f32.mrf.mxu0
        %v4858 = vadd.f32 0.0, %v4857
        %v4859 = vpop.f32.mrf.mxu0
        %v4860 = vadd.f32 0.0, %v4859
        %4861 = vmatmul.bf16.gmra.mxu0 %v4835
        %v4862 = vpop.f32.mrf.mxu0
        %v4863 = vadd.f32 0.0, %v4862
        %v4864 = vpop.f32.mrf.mxu0
        %v4865 = vadd.f32 0.0, %v4864
        %4866 = vmatmul.bf16.gmra.mxu0 %v4838
        %v4867 = vpop.f32.mrf.mxu0
        %v4868 = vadd.f32 0.0, %v4867
        %v4869 = vpop.f32.mrf.mxu0
        %v4870 = vadd.f32 0.0, %v4869
        %4871 = vdwg.mxu0
        %v4873 = vsel %vm2892, %v4808, 0
        %v4876 = vsel %vm2892, %v4809, 0
        %v4879 = vsel %vm2892, %v4810, 0
        %v4882 = vsel %vm2892, %v4811, 0
        %v4885 = vsel %vm2985, %v4813, 0
        %4887 = vmatpush.bf16.msra.mxu0 0
        %4888 = vmatpush.bf16.msra.mxu0 0
        %4889 = vmatpush.bf16.msra.mxu0 0
        %4890 = vmatpush.bf16.msra.mxu0 0
        %4891 = vmatpush.bf16.msra.mxu0 0
        %4892 = vmatpush.bf16.msra.mxu0 0
        %4893 = vmatpush.bf16.msra.mxu0 0
        %4894 = vmatpush.bf16.msra.mxu0 %v4885
        %4895 = vmatmul.bf16.gmra.mxu0 %v4873
        %v4896 = vpop.f32.mrf.mxu0
        %v4897 = vadd.f32 %v4853, %v4896
        %v4898 = vpop.f32.mrf.mxu0
        %v4899 = vadd.f32 %v4855, %v4898
        %4900 = vmatmul.bf16.gmra.mxu0 %v4876
        %v4901 = vpop.f32.mrf.mxu0
        %v4902 = vadd.f32 %v4858, %v4901
        %v4903 = vpop.f32.mrf.mxu0
        %v4904 = vadd.f32 %v4860, %v4903
        %4905 = vmatmul.bf16.gmra.mxu0 %v4879
        %v4906 = vpop.f32.mrf.mxu0
        %v4907 = vadd.f32 %v4863, %v4906
        %v4908 = vpop.f32.mrf.mxu0
        %v4909 = vadd.f32 %v4865, %v4908
        %4910 = vmatmul.bf16.gmra.mxu0 %v4882
        %v4911 = vpop.f32.mrf.mxu0
        %v4912 = vadd.f32 %v4868, %v4911
        %v4913 = vpop.f32.mrf.mxu0
        %v4914 = vadd.f32 %v4870, %v4913
        %4915 = vdwg.mxu0
        %v4916 = vld [vmem:[#allocation3 + $0x2] sm:$0xff]
        %v4917 = vld [vmem:[#allocation3 + $0x12] sm:$0xff]
        %v4918 = vld [vmem:[#allocation3 + $0x22] sm:$0xff]
        %v4919 = vld [vmem:[#allocation3 + $0x32] sm:$0xff]
        %v4920 = vld [vmem:[#allocation3 + $0x42] sm:$0xff]
        %v4921 = vld [vmem:[#allocation3 + $0x52] sm:$0xff]
        %v4922 = vld [vmem:[#allocation3 + $0x62] sm:$0xff]
        %v4923 = vld [vmem:[#allocation3 + $0x72] sm:$0xff]
        %v4924 = vpack.c.bf16 %v4917, %v4916
        %v4925 = vpack.c.bf16 %v4919, %v4918
        %v4926 = vpack.c.bf16 %v4921, %v4920
        %v4927 = vpack.c.bf16 %v4923, %v4922
        %s4928 = scalar_lea.vmem %s3, 116
        %v4929 = vld [vmem:[%s4928] sm:$0xf]
        %v4931 = vsel %vm2892, %v4924, 0
        %v4934 = vsel %vm2892, %v4925, 0
        %v4937 = vsel %vm2892, %v4926, 0
        %v4940 = vsel %vm2892, %v4927, 0
        %v4943 = vsel %vm2985, %v4929, 0
        %4945 = vmatpush.bf16.msra.mxu0 0
        %4946 = vmatpush.bf16.msra.mxu0 0
        %4947 = vmatpush.bf16.msra.mxu0 0
        %4948 = vmatpush.bf16.msra.mxu0 0
        %4949 = vmatpush.bf16.msra.mxu0 0
        %4950 = vmatpush.bf16.msra.mxu0 0
        %4951 = vmatpush.bf16.msra.mxu0 0
        %4952 = vmatpush.bf16.msra.mxu0 %v4943
        %4953 = vmatmul.bf16.gmra.mxu0 %v4931
        %v4954 = vpop.f32.mrf.mxu0
        %v4955 = vadd.f32 0.0, %v4954
        %v4956 = vpop.f32.mrf.mxu0
        %v4957 = vadd.f32 0.0, %v4956
        %4958 = vmatmul.bf16.gmra.mxu0 %v4934
        %v4959 = vpop.f32.mrf.mxu0
        %v4960 = vadd.f32 0.0, %v4959
        %v4961 = vpop.f32.mrf.mxu0
        %v4962 = vadd.f32 0.0, %v4961
        %4963 = vmatmul.bf16.gmra.mxu0 %v4937
        %v4964 = vpop.f32.mrf.mxu0
        %v4965 = vadd.f32 0.0, %v4964
        %v4966 = vpop.f32.mrf.mxu0
        %v4967 = vadd.f32 0.0, %v4966
        %4968 = vmatmul.bf16.gmra.mxu0 %v4940
        %v4969 = vpop.f32.mrf.mxu0
        %v4970 = vadd.f32 0.0, %v4969
        %v4971 = vpop.f32.mrf.mxu0
        %v4972 = vadd.f32 0.0, %v4971
        %4973 = vdwg.mxu0
        %v4974 = vadd.f32 %v4897, %v4955
        %v4975 = vadd.f32 %v4899, %v4957
        %v4976 = vadd.f32 %v4902, %v4960
        %v4977 = vadd.f32 %v4904, %v4962
        %v4978 = vadd.f32 %v4907, %v4965
        %v4979 = vadd.f32 %v4909, %v4967
        %v4980 = vadd.f32 %v4912, %v4970
        %v4981 = vadd.f32 %v4914, %v4972
        %v4982 = vld [vmem:[%s2936] sm:$0xff]
        %v4983 = vld [vmem:[%s2936 + $0x10] sm:$0xff]
        %v4984 = vld [vmem:[%s2936 + $0x20] sm:$0xff]
        %v4985 = vld [vmem:[%s2936 + $0x30] sm:$0xff]
        %v4986 = vld [vmem:[%s2936 + $0x40] sm:$0xff]
        %v4987 = vld [vmem:[%s2936 + $0x50] sm:$0xff]
        %v4988 = vld [vmem:[%s2936 + $0x60] sm:$0xff]
        %v4989 = vld [vmem:[%s2936 + $0x70] sm:$0xff]
        %v4990 = vpack.c.bf16 %v4983, %v4982
        %v4991 = vpack.c.bf16 %v4985, %v4984
        %v4992 = vpack.c.bf16 %v4987, %v4986
        %v4993 = vpack.c.bf16 %v4989, %v4988
        %s4994 = scalar_lea.vmem %s3, 120
        %v4995 = vld [vmem:[%s4994] sm:$0xf]
        %v4997 = vsel %vm2892, %v4990, 0
        %v5000 = vsel %vm2892, %v4991, 0
        %v5003 = vsel %vm2892, %v4992, 0
        %v5006 = vsel %vm2892, %v4993, 0
        %v5009 = vsel %vm2985, %v4995, 0
        %5011 = vmatpush.bf16.msra.mxu0 0
        %5012 = vmatpush.bf16.msra.mxu0 0
        %5013 = vmatpush.bf16.msra.mxu0 0
        %5014 = vmatpush.bf16.msra.mxu0 0
        %5015 = vmatpush.bf16.msra.mxu0 0
        %5016 = vmatpush.bf16.msra.mxu0 0
        %5017 = vmatpush.bf16.msra.mxu0 0
        %5018 = vmatpush.bf16.msra.mxu0 %v5009
        %5019 = vmatmul.bf16.gmra.mxu0 %v4997
        %v5020 = vpop.f32.mrf.mxu0
        %v5021 = vadd.f32 0.0, %v5020
        %v5022 = vpop.f32.mrf.mxu0
        %v5023 = vadd.f32 0.0, %v5022
        %5024 = vmatmul.bf16.gmra.mxu0 %v5000
        %v5025 = vpop.f32.mrf.mxu0
        %v5026 = vadd.f32 0.0, %v5025
        %v5027 = vpop.f32.mrf.mxu0
        %v5028 = vadd.f32 0.0, %v5027
        %5029 = vmatmul.bf16.gmra.mxu0 %v5003
        %v5030 = vpop.f32.mrf.mxu0
        %v5031 = vadd.f32 0.0, %v5030
        %v5032 = vpop.f32.mrf.mxu0
        %v5033 = vadd.f32 0.0, %v5032
        %5034 = vmatmul.bf16.gmra.mxu0 %v5006
        %v5035 = vpop.f32.mrf.mxu0
        %v5036 = vadd.f32 0.0, %v5035
        %v5037 = vpop.f32.mrf.mxu0
        %v5038 = vadd.f32 0.0, %v5037
        %5039 = vdwg.mxu0
        %v5040 = vadd.f32 %v4974, %v5021
        %v5041 = vadd.f32 %v4975, %v5023
        %v5042 = vadd.f32 %v4976, %v5026
        %v5043 = vadd.f32 %v4977, %v5028
        %v5044 = vadd.f32 %v4978, %v5031
        %v5045 = vadd.f32 %v4979, %v5033
        %v5046 = vadd.f32 %v4980, %v5036
        %v5047 = vadd.f32 %v4981, %v5038
        %v5048 = vld [vmem:[%s2936 + $0x1] sm:$0xff]
        %v5049 = vld [vmem:[%s2936 + $0x11] sm:$0xff]
        %v5050 = vld [vmem:[%s2936 + $0x21] sm:$0xff]
        %v5051 = vld [vmem:[%s2936 + $0x31] sm:$0xff]
        %v5052 = vld [vmem:[%s2936 + $0x41] sm:$0xff]
        %v5053 = vld [vmem:[%s2936 + $0x51] sm:$0xff]
        %v5054 = vld [vmem:[%s2936 + $0x61] sm:$0xff]
        %v5055 = vld [vmem:[%s2936 + $0x71] sm:$0xff]
        %v5056 = vpack.c.bf16 %v5049, %v5048
        %v5057 = vpack.c.bf16 %v5051, %v5050
        %v5058 = vpack.c.bf16 %v5053, %v5052
        %v5059 = vpack.c.bf16 %v5055, %v5054
        %s5060 = scalar_lea.vmem %s3, 124
        %v5061 = vld [vmem:[%s5060] sm:$0xf]
        %v5063 = vsel %vm2892, %v5056, 0
        %v5066 = vsel %vm2892, %v5057, 0
        %v5069 = vsel %vm2892, %v5058, 0
        %v5072 = vsel %vm2892, %v5059, 0
        %v5075 = vsel %vm2985, %v5061, 0
        %5077 = vmatpush.bf16.msra.mxu0 0
        %5078 = vmatpush.bf16.msra.mxu0 0
        %5079 = vmatpush.bf16.msra.mxu0 0
        %5080 = vmatpush.bf16.msra.mxu0 0
        %5081 = vmatpush.bf16.msra.mxu0 0
        %5082 = vmatpush.bf16.msra.mxu0 0
        %5083 = vmatpush.bf16.msra.mxu0 0
        %5084 = vmatpush.bf16.msra.mxu0 %v5075
        %5085 = vmatmul.bf16.gmra.mxu0 %v5063
        %v5086 = vpop.f32.mrf.mxu0
        %v5087 = vadd.f32 0.0, %v5086
        %v5088 = vpop.f32.mrf.mxu0
        %v5089 = vadd.f32 0.0, %v5088
        %5090 = vmatmul.bf16.gmra.mxu0 %v5066
        %v5091 = vpop.f32.mrf.mxu0
        %v5092 = vadd.f32 0.0, %v5091
        %v5093 = vpop.f32.mrf.mxu0
        %v5094 = vadd.f32 0.0, %v5093
        %5095 = vmatmul.bf16.gmra.mxu0 %v5069
        %v5096 = vpop.f32.mrf.mxu0
        %v5097 = vadd.f32 0.0, %v5096
        %v5098 = vpop.f32.mrf.mxu0
        %v5099 = vadd.f32 0.0, %v5098
        %5100 = vmatmul.bf16.gmra.mxu0 %v5072
        %v5101 = vpop.f32.mrf.mxu0
        %v5102 = vadd.f32 0.0, %v5101
        %v5103 = vpop.f32.mrf.mxu0
        %v5104 = vadd.f32 0.0, %v5103
        %5105 = vdwg.mxu0
        %v5106 = vadd.f32 %v5040, %v5087
        %v5107 = vadd.f32 %v5041, %v5089
        %v5108 = vadd.f32 %v5042, %v5092
        %v5109 = vadd.f32 %v5043, %v5094
        %v5110 = vadd.f32 %v5044, %v5097
        %v5111 = vadd.f32 %v5045, %v5099
        %v5112 = vadd.f32 %v5046, %v5102
        %v5113 = vadd.f32 %v5047, %v5104
        %v5114 = vld [vmem:[%s2936 + $0x2] sm:$0xff]
        %v5115 = vld [vmem:[%s2936 + $0x12] sm:$0xff]
        %v5116 = vld [vmem:[%s2936 + $0x22] sm:$0xff]
        %v5117 = vld [vmem:[%s2936 + $0x32] sm:$0xff]
        %v5118 = vld [vmem:[%s2936 + $0x42] sm:$0xff]
        %v5119 = vld [vmem:[%s2936 + $0x52] sm:$0xff]
        %v5120 = vld [vmem:[%s2936 + $0x62] sm:$0xff]
        %v5121 = vld [vmem:[%s2936 + $0x72] sm:$0xff]
        %v5122 = vpack.c.bf16 %v5115, %v5114
        %v5123 = vpack.c.bf16 %v5117, %v5116
        %v5124 = vpack.c.bf16 %v5119, %v5118
        %v5125 = vpack.c.bf16 %v5121, %v5120
        %s5126 = scalar_lea.vmem %s3, 128
        %v5127 = vld [vmem:[%s5126] sm:$0xf]
        %v5129 = vsel %vm2892, %v5122, 0
        %v5132 = vsel %vm2892, %v5123, 0
        %v5135 = vsel %vm2892, %v5124, 0
        %v5138 = vsel %vm2892, %v5125, 0
        %v5141 = vsel %vm2985, %v5127, 0
        %5143 = vmatpush.bf16.msra.mxu0 0
        %5144 = vmatpush.bf16.msra.mxu0 0
        %5145 = vmatpush.bf16.msra.mxu0 0
        %5146 = vmatpush.bf16.msra.mxu0 0
        %5147 = vmatpush.bf16.msra.mxu0 0
        %5148 = vmatpush.bf16.msra.mxu0 0
        %5149 = vmatpush.bf16.msra.mxu0 0
        %5150 = vmatpush.bf16.msra.mxu0 %v5141
        %5151 = vmatmul.bf16.gmra.mxu0 %v5129
        %v5152 = vpop.f32.mrf.mxu0
        %v5153 = vadd.f32 0.0, %v5152
        %v5154 = vpop.f32.mrf.mxu0
        %v5155 = vadd.f32 0.0, %v5154
        %5156 = vmatmul.bf16.gmra.mxu0 %v5132
        %v5157 = vpop.f32.mrf.mxu0
        %v5158 = vadd.f32 0.0, %v5157
        %v5159 = vpop.f32.mrf.mxu0
        %v5160 = vadd.f32 0.0, %v5159
        %5161 = vmatmul.bf16.gmra.mxu0 %v5135
        %v5162 = vpop.f32.mrf.mxu0
        %v5163 = vadd.f32 0.0, %v5162
        %v5164 = vpop.f32.mrf.mxu0
        %v5165 = vadd.f32 0.0, %v5164
        %5166 = vmatmul.bf16.gmra.mxu0 %v5138
        %v5167 = vpop.f32.mrf.mxu0
        %v5168 = vadd.f32 0.0, %v5167
        %v5169 = vpop.f32.mrf.mxu0
        %v5170 = vadd.f32 0.0, %v5169
        %5171 = vdwg.mxu0
        %v5172 = vadd.f32 %v5106, %v5153
        %v5173 = vadd.f32 %v5107, %v5155
        %v5174 = vadd.f32 %v5108, %v5158
        %v5175 = vadd.f32 %v5109, %v5160
        %v5176 = vadd.f32 %v5110, %v5163
        %v5177 = vadd.f32 %v5111, %v5165
        %v5178 = vadd.f32 %v5112, %v5168
        %v5179 = vadd.f32 %v5113, %v5170
        %v5180 = vld [vmem:[%s3326] sm:$0xff]
        %v5181 = vld [vmem:[%s3326 + $0x10] sm:$0xff]
        %v5182 = vld [vmem:[%s3326 + $0x20] sm:$0xff]
        %v5183 = vld [vmem:[%s3326 + $0x30] sm:$0xff]
        %v5184 = vld [vmem:[%s3326 + $0x40] sm:$0xff]
        %v5185 = vld [vmem:[%s3326 + $0x50] sm:$0xff]
        %v5186 = vld [vmem:[%s3326 + $0x60] sm:$0xff]
        %v5187 = vld [vmem:[%s3326 + $0x70] sm:$0xff]
        %v5188 = vpack.c.bf16 %v5181, %v5180
        %v5189 = vpack.c.bf16 %v5183, %v5182
        %v5190 = vpack.c.bf16 %v5185, %v5184
        %v5191 = vpack.c.bf16 %v5187, %v5186
        %s5192 = scalar_lea.vmem %s3, 132
        %v5193 = vld [vmem:[%s5192] sm:$0xf]
        %v5195 = vsel %vm2892, %v5188, 0
        %v5198 = vsel %vm2892, %v5189, 0
        %v5201 = vsel %vm2892, %v5190, 0
        %v5204 = vsel %vm2892, %v5191, 0
        %v5207 = vsel %vm2985, %v5193, 0
        %5209 = vmatpush.bf16.msra.mxu0 0
        %5210 = vmatpush.bf16.msra.mxu0 0
        %5211 = vmatpush.bf16.msra.mxu0 0
        %5212 = vmatpush.bf16.msra.mxu0 0
        %5213 = vmatpush.bf16.msra.mxu0 0
        %5214 = vmatpush.bf16.msra.mxu0 0
        %5215 = vmatpush.bf16.msra.mxu0 0
        %5216 = vmatpush.bf16.msra.mxu0 %v5207
        %5217 = vmatmul.bf16.gmra.mxu0 %v5195
        %v5218 = vpop.f32.mrf.mxu0
        %v5219 = vadd.f32 0.0, %v5218
        %v5220 = vpop.f32.mrf.mxu0
        %v5221 = vadd.f32 0.0, %v5220
        %5222 = vmatmul.bf16.gmra.mxu0 %v5198
        %v5223 = vpop.f32.mrf.mxu0
        %v5224 = vadd.f32 0.0, %v5223
        %v5225 = vpop.f32.mrf.mxu0
        %v5226 = vadd.f32 0.0, %v5225
        %5227 = vmatmul.bf16.gmra.mxu0 %v5201
        %v5228 = vpop.f32.mrf.mxu0
        %v5229 = vadd.f32 0.0, %v5228
        %v5230 = vpop.f32.mrf.mxu0
        %v5231 = vadd.f32 0.0, %v5230
        %5232 = vmatmul.bf16.gmra.mxu0 %v5204
        %v5233 = vpop.f32.mrf.mxu0
        %v5234 = vadd.f32 0.0, %v5233
        %v5235 = vpop.f32.mrf.mxu0
        %v5236 = vadd.f32 0.0, %v5235
        %5237 = vdwg.mxu0
        %v5238 = vadd.f32 %v5172, %v5219
        %v5239 = vadd.f32 %v5173, %v5221
        %v5240 = vadd.f32 %v5174, %v5224
        %v5241 = vadd.f32 %v5175, %v5226
        %v5242 = vadd.f32 %v5176, %v5229
        %v5243 = vadd.f32 %v5177, %v5231
        %v5244 = vadd.f32 %v5178, %v5234
        %v5245 = vadd.f32 %v5179, %v5236
        %v5246 = vld [vmem:[%s3326 + $0x1] sm:$0xff]
        %v5247 = vld [vmem:[%s3326 + $0x11] sm:$0xff]
        %v5248 = vld [vmem:[%s3326 + $0x21] sm:$0xff]
        %v5249 = vld [vmem:[%s3326 + $0x31] sm:$0xff]
        %v5250 = vld [vmem:[%s3326 + $0x41] sm:$0xff]
        %v5251 = vld [vmem:[%s3326 + $0x51] sm:$0xff]
        %v5252 = vld [vmem:[%s3326 + $0x61] sm:$0xff]
        %v5253 = vld [vmem:[%s3326 + $0x71] sm:$0xff]
        %v5254 = vpack.c.bf16 %v5247, %v5246
        %v5255 = vpack.c.bf16 %v5249, %v5248
        %v5256 = vpack.c.bf16 %v5251, %v5250
        %v5257 = vpack.c.bf16 %v5253, %v5252
        %s5258 = scalar_lea.vmem %s3, 136
        %v5259 = vld [vmem:[%s5258] sm:$0xf]
        %v5261 = vsel %vm2892, %v5254, 0
        %v5264 = vsel %vm2892, %v5255, 0
        %v5267 = vsel %vm2892, %v5256, 0
        %v5270 = vsel %vm2892, %v5257, 0
        %v5273 = vsel %vm2985, %v5259, 0
        %5275 = vmatpush.bf16.msra.mxu0 0
        %5276 = vmatpush.bf16.msra.mxu0 0
        %5277 = vmatpush.bf16.msra.mxu0 0
        %5278 = vmatpush.bf16.msra.mxu0 0
        %5279 = vmatpush.bf16.msra.mxu0 0
        %5280 = vmatpush.bf16.msra.mxu0 0
        %5281 = vmatpush.bf16.msra.mxu0 0
        %5282 = vmatpush.bf16.msra.mxu0 %v5273
        %5283 = vmatmul.bf16.gmra.mxu0 %v5261
        %v5284 = vpop.f32.mrf.mxu0
        %v5285 = vadd.f32 0.0, %v5284
        %v5286 = vpop.f32.mrf.mxu0
        %v5287 = vadd.f32 0.0, %v5286
        %5288 = vmatmul.bf16.gmra.mxu0 %v5264
        %v5289 = vpop.f32.mrf.mxu0
        %v5290 = vadd.f32 0.0, %v5289
        %v5291 = vpop.f32.mrf.mxu0
        %v5292 = vadd.f32 0.0, %v5291
        %5293 = vmatmul.bf16.gmra.mxu0 %v5267
        %v5294 = vpop.f32.mrf.mxu0
        %v5295 = vadd.f32 0.0, %v5294
        %v5296 = vpop.f32.mrf.mxu0
        %v5297 = vadd.f32 0.0, %v5296
        %5298 = vmatmul.bf16.gmra.mxu0 %v5270
        %v5299 = vpop.f32.mrf.mxu0
        %v5300 = vadd.f32 0.0, %v5299
        %v5301 = vpop.f32.mrf.mxu0
        %v5302 = vadd.f32 0.0, %v5301
        %5303 = vdwg.mxu0
        %v5304 = vadd.f32 %v5238, %v5285
        %v5305 = vadd.f32 %v5239, %v5287
        %v5306 = vadd.f32 %v5240, %v5290
        %v5307 = vadd.f32 %v5241, %v5292
        %v5308 = vadd.f32 %v5242, %v5295
        %v5309 = vadd.f32 %v5243, %v5297
        %v5310 = vadd.f32 %v5244, %v5300
        %v5311 = vadd.f32 %v5245, %v5302
        %v5312 = vld [vmem:[%s3326 + $0x2] sm:$0xff]
        %v5313 = vld [vmem:[%s3326 + $0x12] sm:$0xff]
        %v5314 = vld [vmem:[%s3326 + $0x22] sm:$0xff]
        %v5315 = vld [vmem:[%s3326 + $0x32] sm:$0xff]
        %v5316 = vld [vmem:[%s3326 + $0x42] sm:$0xff]
        %v5317 = vld [vmem:[%s3326 + $0x52] sm:$0xff]
        %v5318 = vld [vmem:[%s3326 + $0x62] sm:$0xff]
        %v5319 = vld [vmem:[%s3326 + $0x72] sm:$0xff]
        %v5320 = vpack.c.bf16 %v5313, %v5312
        %v5321 = vpack.c.bf16 %v5315, %v5314
        %v5322 = vpack.c.bf16 %v5317, %v5316
        %v5323 = vpack.c.bf16 %v5319, %v5318
        %s5324 = scalar_lea.vmem %s3, 140
        %v5325 = vld [vmem:[%s5324] sm:$0xf]
        %v5327 = vsel %vm2892, %v5320, 0
        %v5330 = vsel %vm2892, %v5321, 0
        %v5333 = vsel %vm2892, %v5322, 0
        %v5336 = vsel %vm2892, %v5323, 0
        %v5339 = vsel %vm2985, %v5325, 0
        %5341 = vmatpush.bf16.msra.mxu0 0
        %5342 = vmatpush.bf16.msra.mxu0 0
        %5343 = vmatpush.bf16.msra.mxu0 0
        %5344 = vmatpush.bf16.msra.mxu0 0
        %5345 = vmatpush.bf16.msra.mxu0 0
        %5346 = vmatpush.bf16.msra.mxu0 0
        %5347 = vmatpush.bf16.msra.mxu0 0
        %5348 = vmatpush.bf16.msra.mxu0 %v5339
        %5349 = vmatmul.bf16.gmra.mxu0 %v5327
        %v5350 = vpop.f32.mrf.mxu0
        %v5351 = vadd.f32 0.0, %v5350
        %v5352 = vpop.f32.mrf.mxu0
        %v5353 = vadd.f32 0.0, %v5352
        %5354 = vmatmul.bf16.gmra.mxu0 %v5330
        %v5355 = vpop.f32.mrf.mxu0
        %v5356 = vadd.f32 0.0, %v5355
        %v5357 = vpop.f32.mrf.mxu0
        %v5358 = vadd.f32 0.0, %v5357
        %5359 = vmatmul.bf16.gmra.mxu0 %v5333
        %v5360 = vpop.f32.mrf.mxu0
        %v5361 = vadd.f32 0.0, %v5360
        %v5362 = vpop.f32.mrf.mxu0
        %v5363 = vadd.f32 0.0, %v5362
        %5364 = vmatmul.bf16.gmra.mxu0 %v5336
        %v5365 = vpop.f32.mrf.mxu0
        %v5366 = vadd.f32 0.0, %v5365
        %v5367 = vpop.f32.mrf.mxu0
        %v5368 = vadd.f32 0.0, %v5367
        %5369 = vdwg.mxu0
        %v5370 = vadd.f32 %v5304, %v5351
        %v5371 = vadd.f32 %v5305, %v5353
        %v5372 = vadd.f32 %v5306, %v5356
        %v5373 = vadd.f32 %v5307, %v5358
        %v5374 = vadd.f32 %v5308, %v5361
        %v5375 = vadd.f32 %v5309, %v5363
        %v5376 = vadd.f32 %v5310, %v5366
        %v5377 = vadd.f32 %v5311, %v5368
        %v5379 = vperm.slane %v4799, 0
        %v5381 = vadd.f32 %v5370, %v5379
        %v5382 = vadd.f32 %v5371, %v5379
        %v5383 = vadd.f32 %v5372, %v5379
        %v5384 = vadd.f32 %v5373, %v5379
        %v5385 = vadd.f32 %v5374, %v5379
        %v5386 = vadd.f32 %v5375, %v5379
        %v5387 = vadd.f32 %v5376, %v5379
        %v5388 = vadd.f32 %v5377, %v5379
        %v5389 = vmax.f32 %v5381, 0.0
        %v5390 = vmax.f32 %v5382, 0.0
        %v5391 = vmax.f32 %v5383, 0.0
        %v5392 = vmax.f32 %v5384, 0.0
        %v5393 = vmax.f32 %v5385, 0.0
        %v5394 = vmax.f32 %v5386, 0.0
        %v5395 = vmax.f32 %v5387, 0.0
        %v5396 = vmax.f32 %v5388, 0.0
        %v5397 = vld [vmem:[%s217] sm:$0xff]
        %v5398 = vld [vmem:[%s217 + $0x8] sm:$0xff]
        %v5399 = vld [vmem:[%s217 + $0x10] sm:$0xff]
        %v5400 = vld [vmem:[%s217 + $0x18] sm:$0xff]
        %v5401 = vld [vmem:[%s217 + $0x20] sm:$0xff]
        %v5402 = vld [vmem:[%s217 + $0x28] sm:$0xff]
        %v5403 = vld [vmem:[%s217 + $0x30] sm:$0xff]
        %v5404 = vld [vmem:[%s217 + $0x38] sm:$0xff]
        %v5405 = vadd.f32 %v5397, %v5389
        %v5406 = vadd.f32 %v5398, %v5390
        %v5407 = vadd.f32 %v5399, %v5391
        %v5408 = vadd.f32 %v5400, %v5392
        %v5409 = vadd.f32 %v5401, %v5393
        %v5410 = vadd.f32 %v5402, %v5394
        %v5411 = vadd.f32 %v5403, %v5395
        %v5412 = vadd.f32 %v5404, %v5396
        %5413 = vst.msk [vmem:[%s217] sm:$0xff] %vm2892, %v5405
        %5414 = vst.msk [vmem:[%s217 + $0x8] sm:$0xff] %vm2892, %v5406
        %5415 = vst.msk [vmem:[%s217 + $0x10] sm:$0xff] %vm2892, %v5407
        %5416 = vst.msk [vmem:[%s217 + $0x18] sm:$0xff] %vm2892, %v5408
        %5417 = vst.msk [vmem:[%s217 + $0x20] sm:$0xff] %vm2892, %v5409
        %5418 = vst.msk [vmem:[%s217 + $0x28] sm:$0xff] %vm2892, %v5410
        %5419 = vst.msk [vmem:[%s217 + $0x30] sm:$0xff] %vm2892, %v5411
        %5420 = vst.msk [vmem:[%s217 + $0x38] sm:$0xff] %vm2892, %v5412
        %s5421 = sand.u32 %s137, 1
        %s5422 = scalar_lea.sflag [#allocation5], %s5421
        %s5423 = sand.u32 %s137, 1
        %s5424 = smul.addr %s5423, 64
        %s5425 = scalar_lea.vmem [#allocation4], %s5424
        // Predicated region
        $region41: #{tpu_custom_call.1} parent=39 // pred_check
          %p5426 = pneg %p147
        $region42: #{tpu_custom_call.1} parent=39 // pred_check_branch
          %5428 = sbr.rel (%p5426) target = $region44
        $region43: #{tpu_custom_call.1} parent=39 // pred_region
          %5430 = vsyncadd %s5422, 0
          %s5431 = smul.addr %s19, 8
          %s5432 = smul.addr %s5431, 8
          %s5433 = scalar_lea.hbm %s5, %s5432
          %s5434 = sshll.u32 %s5425, 4
          %s5435 = int_to_ptr.vmem [resolvable:$true] %s5434
          %s5436 = sshll.u32 %s5433, 4
          %s5437 = int_to_ptr.hbm [resolvable:$true] %s5436
          %5442 = dma.vmem_to_hbm [thread:$0]  %s5435, 1024, %s5437, %s5422, 128, 128, 8
        $region44: #{tpu_custom_call.1} parent=39 // pred_fallthru
          _
      $region40: #{tpu_custom_call.1} parent=5 // pred_fallthru
        _
      %p5443 = scmp.le.s32.totalorder 2, %s14
      // Predicated region
      $region45: #{tpu_custom_call.1} parent=5 // pred_check
        %p5444 = pneg %p5443
      $region46: #{tpu_custom_call.1} parent=5 // pred_check_branch
        %5446 = sbr.rel (%p5444) target = $region48
      $region47: #{tpu_custom_call.1} parent=5 // pred_region
        %s5447 = ssub.s32 %s14, 2
        // Predicated region
        $region49: #{tpu_custom_call.1} parent=47 // pred_check
          %p5448 = pneg %p153
        $region50: #{tpu_custom_call.1} parent=47 // pred_check_branch
          %5450 = sbr.rel (%p5448) target = $region52
        $region51: #{tpu_custom_call.1} parent=47 // pred_region
          %s5451 = sand.u32 %s138, 1
          %s5452 = scalar_lea.sflag [#allocation5], %s5451
          %s5453 = sand.u32 %s138, 1
          %s5454 = smul.addr %s5453, 64
          %s5455 = scalar_lea.vmem [#allocation4], %s5454
          %5457 = dma.done %s5452, 1024
        $region52: #{tpu_custom_call.1} parent=47 // pred_fallthru
          _
      $region48: #{tpu_custom_call.1} parent=5 // pred_fallthru
        _
    $region6: #{tpu_custom_call.1} parent=1 // loop_footer
      %s18 = sadd.s32 1, %s14
    $region7: #{tpu_custom_call.1} parent=1 // loop_footer_branch
      %13 = sbr.rel target = $region3
    $region8: #{tpu_custom_call.1} parent=1 // loop_exit
      _
    %5458 = vsyncpa [#allocation5], 1
    %s5459 = scalar_lea.sflag [#allocation5], 1
    %5460 = vsyncpa %s5459, 1

</llo_original>
